<compile_context>
chip_gen: v7x
topology: tpu7x:2x2x1
jax: 0.10.0
libtpu: 0.0.40
codegen_flags: <defaults>
</compile_context>

<pallas_src>
import functools

import jax
import jax.numpy as jnp
from jax import lax
from jax.experimental import pallas as pl
from jax.experimental.pallas import tpu as pltpu


def _triplet_loss_kernel(x_tile_ref, x_all_ref, sq_col_ref, sq_row_ref,
                         valid_row_ref, lab_col_ref, lab_row_ref, out_ref,
                         *, margin, n_valid, precision):
    x_i = x_tile_ref[...]               # (TM, Dp)  anchor tile (streams)
    x_all = x_all_ref[...]              # (Bp, Dp)  all points (resident)
    sq_i = sq_col_ref[...]              # (TM, 1)   |x_i|^2  (streams, precomputed)
    sq_j = sq_row_ref[...]              # (1, Bp)   |x_j|^2  (resident, precomputed)
    col_ok = valid_row_ref[...] > 0.5   # (1, Bp)   real (non-padded) columns
    lab_i = lab_col_ref[...]            # (TM, 1)   anchor labels (streams)
    lab_j = lab_row_ref[...]            # (1, Bp)   all labels    (resident)

    tm = x_i.shape[0]

    # MXU Gram contraction over the feature dim (NT form, no transpose of x_all).
    gram = lax.dot_general(x_i, x_all, (((1,), (1,)), ((), ())),
                           preferred_element_type=jnp.float32,
                           precision=precision)                       # (TM, Bp)

    # d2[i,j] = |x_i|^2 + |x_j|^2 - 2<x_i,x_j>; clamp tiny negative cancellation.
    d2 = jnp.maximum(sq_i + sq_j - 2.0 * gram, 0.0)
    dist = jnp.sqrt(d2)                                               # (TM, Bp)

    same = lab_i == lab_j                                             # (TM, Bp)
    pos_mask = jnp.logical_and(same, col_ok)
    neg_mask = jnp.logical_and(jnp.logical_not(same), col_ok)

    pos_f = pos_mask.astype(jnp.float32)
    pos_cnt = jnp.sum(pos_f, axis=1, keepdims=True)                   # >=1 for real anchors (self)
    ap_sum = jnp.sum(dist * pos_f, axis=1, keepdims=True)
    ap_mean = ap_sum / jnp.maximum(pos_cnt, 1.0)                      # exact division

    big = jnp.float32(1.0e30)                                         # finite sentinel, no overflow
    an_min = jnp.min(jnp.where(neg_mask, dist, big), axis=1, keepdims=True)

    hinge = jnp.maximum(ap_mean - an_min + jnp.float32(margin), 0.0)  # (TM, 1)

    # Zero padded anchor rows in-kernel -> wrapper can sum the whole output.
    row_idx = pl.program_id(0) * tm + lax.broadcasted_iota(jnp.int32, (tm, 1), 0)
    row_ok = (row_idx < n_valid).astype(jnp.float32)
    out_ref[...] = hinge * row_ok


def _pick_vmem_limit():
    """Per-generation VMEM limit: ~100 MiB on 128-MiB parts, ~50 MiB on v7x."""
    cap = 128 * 1024 * 1024
    try:
        cap = int(getattr(pltpu.get_tpu_info(), "vmem_capacity_bytes", cap))
    except Exception:
        pass
    return min(int(cap * 0.78), 100 * 1024 * 1024)


def triplet_loss(inputs, labels, margin=1.0, *, highest_precision=True):
    """inputs: (B, D) float features, labels: (B,) int class ids -> scalar loss."""
    B, D = inputs.shape
    x = inputs.astype(jnp.float32)
    lab = labels.astype(jnp.int32)

    # Pad features to a lane multiple (zeros do not change norms / distances) and
    # the batch to a multiple of 256 (v6e/v7x MXU result-dim alignment; also a
    # multiple of v5e's 128).
    D_pad = ((D + 127) // 128) * 128
    B_pad = ((B + 255) // 256) * 256
    TM = 256
    num_tiles = B_pad // TM

    if D_pad != D:
        x = jnp.pad(x, ((0, 0), (0, D_pad - D)))
    if B_pad != B:
        x = jnp.pad(x, ((0, B_pad - B), (0, 0)))
        lab = jnp.pad(lab, (0, B_pad - B), constant_values=-1)  # value irrelevant (masked)

    # Hoisted once (review item 1): squared norms + explicit column-validity mask.
    sq = jnp.sum(x * x, axis=1)                                  # (Bp,)
    valid = (jnp.arange(B_pad) < B).astype(jnp.float32)          # (Bp,)

    sq_col = sq.reshape(B_pad, 1)
    sq_row = sq.reshape(1, B_pad)
    valid_row = valid.reshape(1, B_pad)
    lab_col = lab.reshape(B_pad, 1)
    lab_row = lab.reshape(1, B_pad)

    precision = lax.Precision.HIGHEST if highest_precision else lax.Precision.DEFAULT
    kernel = functools.partial(_triplet_loss_kernel, margin=float(margin),
                               n_valid=B, precision=precision)

    def _call(single_buffer_resident):
        # Resident operands (constant index_map): single-buffer if supported.
        res_kw = {"pipeline_mode": pl.Buffered(1)} if single_buffer_resident else {}
        in_specs = [
            pl.BlockSpec((TM, D_pad), lambda i: (i, 0)),                 # anchor tile   (streams)
            pl.BlockSpec((B_pad, D_pad), lambda i: (0, 0), **res_kw),    # all points    (resident)
            pl.BlockSpec((TM, 1), lambda i: (i, 0)),                     # |x_i|^2       (streams)
            pl.BlockSpec((1, B_pad), lambda i: (0, 0), **res_kw),        # |x_j|^2       (resident)
            pl.BlockSpec((1, B_pad), lambda i: (0, 0), **res_kw),        # col validity  (resident)
            pl.BlockSpec((TM, 1), lambda i: (i, 0)),                     # anchor labels (streams)
            pl.BlockSpec((1, B_pad), lambda i: (0, 0), **res_kw),        # all labels    (resident)
        ]
        return pl.pallas_call(
            kernel,
            out_shape=jax.ShapeDtypeStruct((B_pad, 1), jnp.float32),
            grid=(num_tiles,),
            in_specs=in_specs,
            out_specs=pl.BlockSpec((TM, 1), lambda i: (i, 0)),
            compiler_params=pltpu.CompilerParams(
                dimension_semantics=("parallel",),          # megacore / 2-TC anchor sharding
                vmem_limit_bytes=_pick_vmem_limit(),
            ),
        )(x, x, sq_col, sq_row, valid_row, lab_col, lab_row)

    try:
        per_anchor = _call(True)
    except Exception:
        # Fallback if this JAX build rejects pipeline_mode=pl.Buffered(1);
        # identical kernel, default (double-buffered) resident blocks.
        per_anchor = _call(False)

    # Padded rows are exact zeros (masked in-kernel) -> plain sum.
    return jnp.sum(per_anchor)


def triplet_loss_ref(inputs, labels, margin=1.0):
    """Pure-JAX reference mirroring the PyTorch forward."""
    mask = labels[:, None] == labels[None, :]
    dist = jnp.sqrt(
        jnp.sum((inputs[:, None, :] - inputs[None, :, :]) ** 2, axis=-1)
    )
    pos_cnt = jnp.sum(mask.astype(jnp.float32), axis=1)
    ap_mean = jnp.sum(jnp.where(mask, dist, 0.0), axis=1) / pos_cnt
    an_min = jnp.min(jnp.where(mask, jnp.inf, dist), axis=1)
    tmp = ap_mean - an_min + margin
    return jnp.sum(jnp.maximum(tmp, 0.0))


if __name__ == "__main__":
    key = jax.random.PRNGKey(0)
    B, D = 8, 32
    inputs = jax.random.normal(key, (B, D), dtype=jnp.float32)
    # deterministic labels with both positives and negatives for every anchor
    labels = jnp.array([0, 0, 1, 1, 2, 2, 0, 1], dtype=jnp.int32)

    ok = True
    for margin in (1.0, 3.0):
        loss = triplet_loss(inputs, labels, margin=margin)
        jax.block_until_ready(loss)
        ref = triplet_loss_ref(inputs, labels, margin=margin)
        # HIGHEST-precision Gram + exact division -> tight tolerance
        assert jnp.allclose(loss, ref, rtol=1e-3, atol=1e-3), (margin, loss, ref)

    print("KERNEL_OK")
</pallas_src>

<mosaic_0001>
module attributes {stable_mosaic.version = 11 : i64} {
  func.func @_triplet_loss_kernel(%arg0: i32, %arg1: memref<256x128xf32, #tpu.memory_space<vmem>>, %arg2: memref<256x128xf32, #tpu.memory_space<vmem>>, %arg3: memref<256x1xf32, #tpu.memory_space<vmem>>, %arg4: memref<1x256xf32, #tpu.memory_space<vmem>>, %arg5: memref<1x256xf32, #tpu.memory_space<vmem>>, %arg6: memref<256x1xi32, #tpu.memory_space<vmem>>, %arg7: memref<1x256xi32, #tpu.memory_space<vmem>>, %arg8: memref<256x1xf32, #tpu.memory_space<vmem>>) attributes {dimension_semantics = [#tpu.dimension_semantics<parallel>], iteration_bounds = array<i64: 1>, scalar_prefetch = 0 : i64, scratch_operands = 0 : i64, tpu.core_type = #tpu.core_type<tc>, window_params = [{transform_indices = @transform_0, window_bounds = array<i64: 256, 128>}, {pipeline_mode = #tpu.pipeline_mode<synchronous>, transform_indices = @transform_1, window_bounds = array<i64: 256, 128>}, {transform_indices = @transform_2, window_bounds = array<i64: 256, 1>}, {pipeline_mode = #tpu.pipeline_mode<synchronous>, transform_indices = @transform_3, window_bounds = array<i64: 1, 256>}, {pipeline_mode = #tpu.pipeline_mode<synchronous>, transform_indices = @transform_4, window_bounds = array<i64: 1, 256>}, {transform_indices = @transform_5, window_bounds = array<i64: 256, 1>}, {pipeline_mode = #tpu.pipeline_mode<synchronous>, transform_indices = @transform_6, window_bounds = array<i64: 1, 256>}, {transform_indices = @transform_7, window_bounds = array<i64: 256, 1>}]} {
    %c0 = arith.constant 0 : index
    %c0_0 = arith.constant 0 : index
    %0 = vector.load %arg1[%c0, %c0_0] : memref<256x128xf32, #tpu.memory_space<vmem>>, vector<256x128xf32>
    %c0_1 = arith.constant 0 : index
    %c0_2 = arith.constant 0 : index
    %1 = vector.load %arg2[%c0_1, %c0_2] : memref<256x128xf32, #tpu.memory_space<vmem>>, vector<256x128xf32>
    %c0_3 = arith.constant 0 : index
    %c0_4 = arith.constant 0 : index
    %2 = vector.load %arg3[%c0_3, %c0_4] : memref<256x1xf32, #tpu.memory_space<vmem>>, vector<256x1xf32>
    %c0_5 = arith.constant 0 : index
    %c0_6 = arith.constant 0 : index
    %3 = vector.load %arg4[%c0_5, %c0_6] : memref<1x256xf32, #tpu.memory_space<vmem>>, vector<1x256xf32>
    %c0_7 = arith.constant 0 : index
    %c0_8 = arith.constant 0 : index
    %4 = vector.load %arg5[%c0_7, %c0_8] : memref<1x256xf32, #tpu.memory_space<vmem>>, vector<1x256xf32>
    %cst = arith.constant 5.000000e-01 : f32
    %5 = vector.broadcast %cst : f32 to vector<1x256xf32>
    %6 = arith.cmpf ogt, %4, %5 : vector<1x256xf32>
    %c0_9 = arith.constant 0 : index
    %c0_10 = arith.constant 0 : index
    %7 = vector.load %arg6[%c0_9, %c0_10] : memref<256x1xi32, #tpu.memory_space<vmem>>, vector<256x1xi32>
    %c0_11 = arith.constant 0 : index
    %c0_12 = arith.constant 0 : index
    %8 = vector.load %arg7[%c0_11, %c0_12] : memref<1x256xi32, #tpu.memory_space<vmem>>, vector<1x256xi32>
    %cst_13 = arith.constant dense<0.000000e+00> : vector<256x256xf32>
    %9 = tpu.matmul %0, %1, %cst_13 {dimension_numbers = #tpu.dot_dimension_numbers<[1], [1], [0], [0], [0, 0, 1, 0], [], []>, precision = #tpu.contract_precision<fp32>} : vector<256x128xf32>, vector<256x128xf32>, vector<256x256xf32> -> vector<256x256xf32>
    %10 = vector.broadcast %2 : vector<256x1xf32> to vector<256x256xf32>
    %11 = vector.broadcast %3 : vector<1x256xf32> to vector<256x256xf32>
    %12 = arith.addf %10, %11 : vector<256x256xf32>
    %cst_14 = arith.constant 2.000000e+00 : f32
    %13 = vector.broadcast %cst_14 : f32 to vector<256x256xf32>
    %14 = arith.mulf %13, %9 : vector<256x256xf32>
    %15 = arith.subf %12, %14 : vector<256x256xf32>
    %cst_15 = arith.constant 0.000000e+00 : f32
    %16 = vector.broadcast %cst_15 : f32 to vector<256x256xf32>
    %17 = arith.maximumf %15, %16 : vector<256x256xf32>
    %18 = math.sqrt %17 : vector<256x256xf32>
    %19 = vector.broadcast %7 : vector<256x1xi32> to vector<256x256xi32>
    %20 = vector.broadcast %8 : vector<1x256xi32> to vector<256x256xi32>
    %21 = arith.cmpi eq, %19, %20 : vector<256x256xi32>
    %22 = vector.broadcast %6 : vector<1x256xi1> to vector<256x256xi1>
    %23 = arith.andi %21, %22 : vector<256x256xi1>
    %cst_16 = arith.constant dense<true> : vector<256x256xi1>
    %24 = arith.xori %21, %cst_16 : vector<256x256xi1>
    %25 = vector.broadcast %6 : vector<1x256xi1> to vector<256x256xi1>
    %26 = arith.andi %24, %25 : vector<256x256xi1>
    %27 = arith.extui %23 : vector<256x256xi1> to vector<256x256xi32>
    %28 = arith.sitofp %27 : vector<256x256xi32> to vector<256x256xf32>
    %cst_17 = arith.constant dense<0.000000e+00> : vector<256xf32>
    %29 = vector.multi_reduction <add>, %28, %cst_17 [1] : vector<256x256xf32> to vector<256xf32>
    %30 = vector.shape_cast %29 : vector<256xf32> to vector<256x1xf32>
    %31 = arith.mulf %18, %28 : vector<256x256xf32>
    %cst_18 = arith.constant dense<0.000000e+00> : vector<256xf32>
    %32 = vector.multi_reduction <add>, %31, %cst_18 [1] : vector<256x256xf32> to vector<256xf32>
    %33 = vector.shape_cast %32 : vector<256xf32> to vector<256x1xf32>
    %cst_19 = arith.constant 1.000000e+00 : f32
    %34 = vector.broadcast %cst_19 : f32 to vector<256x1xf32>
    %35 = arith.maximumf %30, %34 : vector<256x1xf32>
    %36 = arith.divf %33, %35 : vector<256x1xf32>
    %cst_20 = arith.constant 1.000000e+30 : f32
    %37 = vector.broadcast %cst_20 : f32 to vector<256x256xf32>
    %38 = arith.select %26, %18, %37 : vector<256x256xi1>, vector<256x256xf32>
    %cst_21 = arith.constant dense<0x7F800000> : vector<256xf32>
    %39 = vector.multi_reduction <minimumf>, %38, %cst_21 [1] : vector<256x256xf32> to vector<256xf32>
    %40 = vector.shape_cast %39 : vector<256xf32> to vector<256x1xf32>
    %41 = arith.subf %36, %40 : vector<256x1xf32>
    %cst_22 = arith.constant 1.000000e+00 : f32
    %42 = vector.broadcast %cst_22 : f32 to vector<256x1xf32>
    %43 = arith.addf %41, %42 : vector<256x1xf32>
    %cst_23 = arith.constant 0.000000e+00 : f32
    %44 = vector.broadcast %cst_23 : f32 to vector<256x1xf32>
    %45 = arith.maximumf %43, %44 : vector<256x1xf32>
    %c256_i32 = arith.constant 256 : i32
    %46 = arith.muli %arg0, %c256_i32 : i32
    %47 = tpu.iota {dimensions = array<i32: 0>} : vector<256x1xi32>
    %48 = vector.broadcast %46 : i32 to vector<256x1xi32>
    %49 = arith.addi %48, %47 : vector<256x1xi32>
    %c8_i32 = arith.constant 8 : i32
    %50 = vector.broadcast %c8_i32 : i32 to vector<256x1xi32>
    %51 = arith.cmpi slt, %49, %50 : vector<256x1xi32>
    %52 = arith.extui %51 : vector<256x1xi1> to vector<256x1xi32>
    %53 = arith.sitofp %52 : vector<256x1xi32> to vector<256x1xf32>
    %54 = arith.mulf %45, %53 : vector<256x1xf32>
    %c0_24 = arith.constant 0 : index
    %c0_25 = arith.constant 0 : index
    %55 = vector.load %arg8[%c0_24, %c0_25] : memref<256x1xf32, #tpu.memory_space<vmem>>, vector<256x1xf32>
    tpu.vector_store %arg8[%c0_24, %c0_25], %54 {strides = array<i32>} : memref<256x1xf32, #tpu.memory_space<vmem>>, vector<256x1xf32>,
    return
  }
  func.func @transform_0(%arg0: i32) -> (i32, i32) {
    %c0_i32 = arith.constant 0 : i32
    %c0_i32_0 = arith.constant 0 : i32
    return %arg0, %c0_i32 : i32, i32
  }
  func.func @transform_1(%arg0: i32) -> (i32, i32) {
    %c0_i32 = arith.constant 0 : i32
    %c0_i32_0 = arith.constant 0 : i32
    %c0_i32_1 = arith.constant 0 : i32
    return %c0_i32, %c0_i32_0 : i32, i32
  }
  func.func @transform_2(%arg0: i32) -> (i32, i32) {
    %c0_i32 = arith.constant 0 : i32
    %c0_i32_0 = arith.constant 0 : i32
    return %arg0, %c0_i32 : i32, i32
  }
  func.func @transform_3(%arg0: i32) -> (i32, i32) {
    %c0_i32 = arith.constant 0 : i32
    %c0_i32_0 = arith.constant 0 : i32
    %c0_i32_1 = arith.constant 0 : i32
    return %c0_i32, %c0_i32_0 : i32, i32
  }
  func.func @transform_4(%arg0: i32) -> (i32, i32) {
    %c0_i32 = arith.constant 0 : i32
    %c0_i32_0 = arith.constant 0 : i32
    %c0_i32_1 = arith.constant 0 : i32
    return %c0_i32, %c0_i32_0 : i32, i32
  }
  func.func @transform_5(%arg0: i32) -> (i32, i32) {
    %c0_i32 = arith.constant 0 : i32
    %c0_i32_0 = arith.constant 0 : i32
    return %arg0, %c0_i32 : i32, i32
  }
  func.func @transform_6(%arg0: i32) -> (i32, i32) {
    %c0_i32 = arith.constant 0 : i32
    %c0_i32_0 = arith.constant 0 : i32
    %c0_i32_1 = arith.constant 0 : i32
    return %c0_i32, %c0_i32_0 : i32, i32
  }
  func.func @transform_7(%arg0: i32) -> (i32, i32) {
    %c0_i32 = arith.constant 0 : i32
    %c0_i32_0 = arith.constant 0 : i32
    return %arg0, %c0_i32 : i32, i32
  }
}

module attributes {stable_mosaic.version = 11 : i64} {
  func.func @_triplet_loss_kernel(%arg0: i32, %arg1: memref<256x128xf32, #tpu.memory_space<vmem>>, %arg2: memref<256x128xf32, #tpu.memory_space<vmem>>, %arg3: memref<256x1xf32, #tpu.memory_space<vmem>>, %arg4: memref<1x256xf32, #tpu.memory_space<vmem>>, %arg5: memref<1x256xf32, #tpu.memory_space<vmem>>, %arg6: memref<256x1xi32, #tpu.memory_space<vmem>>, %arg7: memref<1x256xi32, #tpu.memory_space<vmem>>, %arg8: memref<256x1xf32, #tpu.memory_space<vmem>>) attributes {dimension_semantics = [#tpu.dimension_semantics<parallel>], iteration_bounds = array<i64: 1>, scalar_prefetch = 0 : i64, scratch_operands = 0 : i64, tpu.core_type = #tpu.core_type<tc>, window_params = [{transform_indices = @transform_0, window_bounds = array<i64: 256, 128>}, {pipeline_mode = #tpu.pipeline_mode<synchronous>, transform_indices = @transform_1, window_bounds = array<i64: 256, 128>}, {transform_indices = @transform_2, window_bounds = array<i64: 256, 1>}, {pipeline_mode = #tpu.pipeline_mode<synchronous>, transform_indices = @transform_3, window_bounds = array<i64: 1, 256>}, {pipeline_mode = #tpu.pipeline_mode<synchronous>, transform_indices = @transform_4, window_bounds = array<i64: 1, 256>}, {transform_indices = @transform_5, window_bounds = array<i64: 256, 1>}, {pipeline_mode = #tpu.pipeline_mode<synchronous>, transform_indices = @transform_6, window_bounds = array<i64: 1, 256>}, {transform_indices = @transform_7, window_bounds = array<i64: 256, 1>}]} {
    %c0 = arith.constant 0 : index
    %c0_0 = arith.constant 0 : index
    %0 = vector.load %arg1[%c0, %c0_0] : memref<256x128xf32, #tpu.memory_space<vmem>>, vector<256x128xf32>
    %c0_1 = arith.constant 0 : index
    %c0_2 = arith.constant 0 : index
    %1 = vector.load %arg2[%c0_1, %c0_2] : memref<256x128xf32, #tpu.memory_space<vmem>>, vector<256x128xf32>
    %c0_3 = arith.constant 0 : index
    %c0_4 = arith.constant 0 : index
    %2 = vector.load %arg3[%c0_3, %c0_4] : memref<256x1xf32, #tpu.memory_space<vmem>>, vector<256x1xf32>
    %c0_5 = arith.constant 0 : index
    %c0_6 = arith.constant 0 : index
    %3 = vector.load %arg4[%c0_5, %c0_6] : memref<1x256xf32, #tpu.memory_space<vmem>>, vector<1x256xf32>
    %c0_7 = arith.constant 0 : index
    %c0_8 = arith.constant 0 : index
    %4 = vector.load %arg5[%c0_7, %c0_8] : memref<1x256xf32, #tpu.memory_space<vmem>>, vector<1x256xf32>
    %cst = arith.constant 5.000000e-01 : f32
    %5 = vector.broadcast %cst : f32 to vector<1x256xf32>
    %6 = arith.cmpf ogt, %4, %5 : vector<1x256xf32>
    %c0_9 = arith.constant 0 : index
    %c0_10 = arith.constant 0 : index
    %7 = vector.load %arg6[%c0_9, %c0_10] : memref<256x1xi32, #tpu.memory_space<vmem>>, vector<256x1xi32>
    %c0_11 = arith.constant 0 : index
    %c0_12 = arith.constant 0 : index
    %8 = vector.load %arg7[%c0_11, %c0_12] : memref<1x256xi32, #tpu.memory_space<vmem>>, vector<1x256xi32>
    %cst_13 = arith.constant dense<0.000000e+00> : vector<256x256xf32>
    %9 = tpu.matmul %0, %1, %cst_13 {dimension_numbers = #tpu.dot_dimension_numbers<[1], [1], [0], [0], [0, 0, 1, 0], [], []>, precision = #tpu.contract_precision<fp32>} : vector<256x128xf32>, vector<256x128xf32>, vector<256x256xf32> -> vector<256x256xf32>
    %10 = vector.broadcast %2 : vector<256x1xf32> to vector<256x256xf32>
    %11 = vector.broadcast %3 : vector<1x256xf32> to vector<256x256xf32>
    %12 = arith.addf %10, %11 : vector<256x256xf32>
    %cst_14 = arith.constant 2.000000e+00 : f32
    %13 = vector.broadcast %cst_14 : f32 to vector<256x256xf32>
    %14 = arith.mulf %13, %9 : vector<256x256xf32>
    %15 = arith.subf %12, %14 : vector<256x256xf32>
    %cst_15 = arith.constant 0.000000e+00 : f32
    %16 = vector.broadcast %cst_15 : f32 to vector<256x256xf32>
    %17 = arith.maximumf %15, %16 : vector<256x256xf32>
    %18 = math.sqrt %17 : vector<256x256xf32>
    %19 = vector.broadcast %7 : vector<256x1xi32> to vector<256x256xi32>
    %20 = vector.broadcast %8 : vector<1x256xi32> to vector<256x256xi32>
    %21 = arith.cmpi eq, %19, %20 : vector<256x256xi32>
    %22 = vector.broadcast %6 : vector<1x256xi1> to vector<256x256xi1>
    %23 = arith.andi %21, %22 : vector<256x256xi1>
    %cst_16 = arith.constant dense<true> : vector<256x256xi1>
    %24 = arith.xori %21, %cst_16 : vector<256x256xi1>
    %25 = vector.broadcast %6 : vector<1x256xi1> to vector<256x256xi1>
    %26 = arith.andi %24, %25 : vector<256x256xi1>
    %27 = arith.extui %23 : vector<256x256xi1> to vector<256x256xi32>
    %28 = arith.sitofp %27 : vector<256x256xi32> to vector<256x256xf32>
    %cst_17 = arith.constant dense<0.000000e+00> : vector<256xf32>
    %29 = vector.multi_reduction <add>, %28, %cst_17 [1] : vector<256x256xf32> to vector<256xf32>
    %30 = vector.shape_cast %29 : vector<256xf32> to vector<256x1xf32>
    %31 = arith.mulf %18, %28 : vector<256x256xf32>
    %cst_18 = arith.constant dense<0.000000e+00> : vector<256xf32>
    %32 = vector.multi_reduction <add>, %31, %cst_18 [1] : vector<256x256xf32> to vector<256xf32>
    %33 = vector.shape_cast %32 : vector<256xf32> to vector<256x1xf32>
    %cst_19 = arith.constant 1.000000e+00 : f32
    %34 = vector.broadcast %cst_19 : f32 to vector<256x1xf32>
    %35 = arith.maximumf %30, %34 : vector<256x1xf32>
    %36 = arith.divf %33, %35 : vector<256x1xf32>
    %cst_20 = arith.constant 1.000000e+30 : f32
    %37 = vector.broadcast %cst_20 : f32 to vector<256x256xf32>
    %38 = arith.select %26, %18, %37 : vector<256x256xi1>, vector<256x256xf32>
    %cst_21 = arith.constant dense<0x7F800000> : vector<256xf32>
    %39 = vector.multi_reduction <minimumf>, %38, %cst_21 [1] : vector<256x256xf32> to vector<256xf32>
    %40 = vector.shape_cast %39 : vector<256xf32> to vector<256x1xf32>
    %41 = arith.subf %36, %40 : vector<256x1xf32>
    %cst_22 = arith.constant 1.000000e+00 : f32
    %42 = vector.broadcast %cst_22 : f32 to vector<256x1xf32>
    %43 = arith.addf %41, %42 : vector<256x1xf32>
    %cst_23 = arith.constant 0.000000e+00 : f32
    %44 = vector.broadcast %cst_23 : f32 to vector<256x1xf32>
    %45 = arith.maximumf %43, %44 : vector<256x1xf32>
    %c256_i32 = arith.constant 256 : i32
    %46 = arith.muli %arg0, %c256_i32 : i32
    %47 = tpu.iota {dimensions = array<i32: 0>} : vector<256x1xi32>
    %48 = vector.broadcast %46 : i32 to vector<256x1xi32>
    %49 = arith.addi %48, %47 : vector<256x1xi32>
    %c8_i32 = arith.constant 8 : i32
    %50 = vector.broadcast %c8_i32 : i32 to vector<256x1xi32>
    %51 = arith.cmpi slt, %49, %50 : vector<256x1xi32>
    %52 = arith.extui %51 : vector<256x1xi1> to vector<256x1xi32>
    %53 = arith.sitofp %52 : vector<256x1xi32> to vector<256x1xf32>
    %54 = arith.mulf %45, %53 : vector<256x1xf32>
    %c0_24 = arith.constant 0 : index
    %c0_25 = arith.constant 0 : index
    %55 = vector.load %arg8[%c0_24, %c0_25] : memref<256x1xf32, #tpu.memory_space<vmem>>, vector<256x1xf32>
    tpu.vector_store %arg8[%c0_24, %c0_25], %54 {strides = array<i32>} : memref<256x1xf32, #tpu.memory_space<vmem>>, vector<256x1xf32>,
    return
  }
  func.func @transform_0(%arg0: i32) -> (i32, i32) {
    %c0_i32 = arith.constant 0 : i32
    %c0_i32_0 = arith.constant 0 : i32
    return %arg0, %c0_i32 : i32, i32
  }
  func.func @transform_1(%arg0: i32) -> (i32, i32) {
    %c0_i32 = arith.constant 0 : i32
    %c0_i32_0 = arith.constant 0 : i32
    %c0_i32_1 = arith.constant 0 : i32
    return %c0_i32, %c0_i32_0 : i32, i32
  }
  func.func @transform_2(%arg0: i32) -> (i32, i32) {
    %c0_i32 = arith.constant 0 : i32
    %c0_i32_0 = arith.constant 0 : i32
    return %arg0, %c0_i32 : i32, i32
  }
  func.func @transform_3(%arg0: i32) -> (i32, i32) {
    %c0_i32 = arith.constant 0 : i32
    %c0_i32_0 = arith.constant 0 : i32
    %c0_i32_1 = arith.constant 0 : i32
    return %c0_i32, %c0_i32_0 : i32, i32
  }
  func.func @transform_4(%arg0: i32) -> (i32, i32) {
    %c0_i32 = arith.constant 0 : i32
    %c0_i32_0 = arith.constant 0 : i32
    %c0_i32_1 = arith.constant 0 : i32
    return %c0_i32, %c0_i32_0 : i32, i32
  }
  func.func @transform_5(%arg0: i32) -> (i32, i32) {
    %c0_i32 = arith.constant 0 : i32
    %c0_i32_0 = arith.constant 0 : i32
    return %arg0, %c0_i32 : i32, i32
  }
  func.func @transform_6(%arg0: i32) -> (i32, i32) {
    %c0_i32 = arith.constant 0 : i32
    %c0_i32_0 = arith.constant 0 : i32
    %c0_i32_1 = arith.constant 0 : i32
    return %c0_i32, %c0_i32_0 : i32, i32
  }
  func.func @transform_7(%arg0: i32) -> (i32, i32) {
    %c0_i32 = arith.constant 0 : i32
    %c0_i32_0 = arith.constant 0 : i32
    return %arg0, %c0_i32 : i32, i32
  }
}

</mosaic_0001>

<llo_original>
// kernel: tpu_custom_call.1
$region0: #{tpu_custom_call.1}
  #allocation0 [shape = 'u32[]', space=smem, size = 0x4, offset = 0x4, fixed_abs, tag = 'smem constant byte address 0x4 - core index']
  #allocation1 [shape = 'u32[144,128]{1,0:T(1,128)}', space=vmem, size = 0x12000, scoped, tag = 'internal scratch']
  %s0 = inlined_call_operand.hbm [shape: f32[256,128], index: 0, kind: input, shape index: {}]
  %s1 = inlined_call_operand.hbm [shape: f32[256,128], index: 1, kind: input, shape index: {}]
  %s2 = inlined_call_operand.hbm [shape: f32[256,1], index: 2, kind: input, shape index: {}]
  %s3 = inlined_call_operand.hbm [shape: f32[1,256], index: 3, kind: input, shape index: {}]
  %s4 = inlined_call_operand.hbm [shape: f32[1,256], index: 4, kind: input, shape index: {}]
  %s5 = inlined_call_operand.hbm [shape: s32[256,1], index: 5, kind: input, shape index: {}]
  %s6 = inlined_call_operand.hbm [shape: s32[1,256], index: 6, kind: input, shape index: {}]
  %s7 = inlined_call_operand.hbm [shape: f32[256,1], index: 7, kind: output, shape index: {}]
  %s8 = sld [smem:[#allocation0]]
  $region66: #{tpu_custom_call.1} parent=0
    _
  %s10 = ssub.s32 1, %s8
  %s11 = scalar_select 0, %s10, %s8
  $region1: #{tpu_custom_call.1} parent=0
    #allocation2 [shape = 'u8[131072]{0}', space=vmem, size = 0x20000, scoped, tag = 'input window, operand 0, single buffered']
    #allocation3 [shape = 's32[1]{0}', space=sflag, size = 0x4, scoped, tag = 'scoped memory for tpu_custom_call.1']
    #allocation4 [shape = 's32[1]{0}', space=sflag, size = 0x4, scoped, tag = 'scoped memory for tpu_custom_call.1']
    #allocation5 [shape = 'u8[131072]{0}', space=vmem, size = 0x20000, scoped, tag = 'input window, operand 1, single buffered']
    #allocation6 [shape = 's32[1]{0}', space=sflag, size = 0x4, scoped, tag = 'scoped memory for tpu_custom_call.1']
    #allocation7 [shape = 'u8[131072]{0}', space=vmem, size = 0x20000, scoped, tag = 'input window, operand 2, single buffered']
    #allocation8 [shape = 'u8[1024]{0}', space=vmem, size = 0x400, scoped, tag = 'input window, operand 3, single buffered']
    #allocation9 [shape = 's32[1]{0}', space=sflag, size = 0x4, scoped, tag = 'scoped memory for tpu_custom_call.1']
    #allocation10 [shape = 'u8[1024]{0}', space=vmem, size = 0x400, scoped, tag = 'input window, operand 4, single buffered']
    #allocation11 [shape = 'u8[131072]{0}', space=vmem, size = 0x20000, scoped, tag = 'input window, operand 5, single buffered']
    #allocation12 [shape = 's32[1]{0}', space=sflag, size = 0x4, scoped, tag = 'scoped memory for tpu_custom_call.1']
    #allocation13 [shape = 'u8[1024]{0}', space=vmem, size = 0x400, scoped, tag = 'input window, operand 6, single buffered']
    #allocation14 [shape = 'u8[131072]{0}', space=vmem, size = 0x20000, scoped, tag = 'output window, operand 0, single buffered']
    %12 = vsyncpa [#allocation3], 0
    %13 = vsyncpa [#allocation6], 0
    %14 = vsyncpa [#allocation9], 0
    %15 = vsyncpa [#allocation12], 0
    %16 = vsyncpa [#allocation4], 0
    // Predicated region
    $region2: #{tpu_custom_call.1} parent=1 // pred_check
      _
    $region3: #{tpu_custom_call.1} parent=1 // pred_check_branch
      %18 = sbr.rel (0) target = $region5
    $region4: #{tpu_custom_call.1} parent=1 // pred_region
      %s20 = ssub.s32 4096, 4096
      %21 = vsyncadd [#allocation3], %s20
      %s22 = sshll.u32 [#allocation2], 4
      %s23 = int_to_ptr.vmem [resolvable:$true] %s22
      %28 = dma.hbm_to_vmem [thread:$0]  %s0, 4096, %s23, [#allocation3], 128, 128, 8
    $region5: #{tpu_custom_call.1} parent=1 // pred_fallthru
      _
    // Predicated region
    $region6: #{tpu_custom_call.1} parent=1 // pred_check
      _
    $region7: #{tpu_custom_call.1} parent=1 // pred_check_branch
      %30 = sbr.rel (0) target = $region9
    $region8: #{tpu_custom_call.1} parent=1 // pred_region
      %s32 = ssub.s32 4096, 4096
      %33 = vsyncadd [#allocation6], %s32
      %s34 = sshll.u32 [#allocation5], 4
      %s35 = int_to_ptr.vmem [resolvable:$true] %s34
      %40 = dma.hbm_to_vmem [thread:$0]  %s1, 4096, %s35, [#allocation6], 128, 128, 8
    $region9: #{tpu_custom_call.1} parent=1 // pred_fallthru
      _
    // Predicated region
    $region10: #{tpu_custom_call.1} parent=1 // pred_check
      _
    $region11: #{tpu_custom_call.1} parent=1 // pred_check_branch
      %42 = sbr.rel (0) target = $region13
    $region12: #{tpu_custom_call.1} parent=1 // pred_region
      %s44 = ssub.s32 4096, 4096
      %45 = vsyncadd [#allocation6], %s44
      %s46 = sshll.u32 [#allocation7], 4
      %s47 = int_to_ptr.vmem [resolvable:$true] %s46
      %52 = dma.hbm_to_vmem [thread:$0]  %s2, 4096, %s47, [#allocation6], 128, 128, 8
    $region13: #{tpu_custom_call.1} parent=1 // pred_fallthru
      _
    // Predicated region
    $region14: #{tpu_custom_call.1} parent=1 // pred_check
      _
    $region15: #{tpu_custom_call.1} parent=1 // pred_check_branch
      %54 = sbr.rel (0) target = $region17
    $region16: #{tpu_custom_call.1} parent=1 // pred_region
      %s56 = ssub.s32 32, 32
      %57 = vsyncadd [#allocation9], %s56
      %s59 = sshll.u32 [#allocation8], 4
      %s60 = int_to_ptr.vmem [resolvable:$true] %s59
      %62 = dma.hbm_to_vmem [thread:$0]  %s3, 32, %s60, [#allocation9]
    $region17: #{tpu_custom_call.1} parent=1 // pred_fallthru
      _
    // Predicated region
    $region18: #{tpu_custom_call.1} parent=1 // pred_check
      _
    $region19: #{tpu_custom_call.1} parent=1 // pred_check_branch
      %64 = sbr.rel (0) target = $region21
    $region20: #{tpu_custom_call.1} parent=1 // pred_region
      %s66 = ssub.s32 32, 32
      %67 = vsyncadd [#allocation9], %s66
      %s69 = sshll.u32 [#allocation10], 4
      %s70 = int_to_ptr.vmem [resolvable:$true] %s69
      %72 = dma.hbm_to_vmem [thread:$0]  %s4, 32, %s70, [#allocation9]
    $region21: #{tpu_custom_call.1} parent=1 // pred_fallthru
      _
    // Predicated region
    $region22: #{tpu_custom_call.1} parent=1 // pred_check
      _
    $region23: #{tpu_custom_call.1} parent=1 // pred_check_branch
      %74 = sbr.rel (0) target = $region25
    $region24: #{tpu_custom_call.1} parent=1 // pred_region
      %s76 = ssub.s32 4096, 4096
      %77 = vsyncadd [#allocation12], %s76
      %s78 = sshll.u32 [#allocation11], 4
      %s79 = int_to_ptr.vmem [resolvable:$true] %s78
      %84 = dma.hbm_to_vmem [thread:$0]  %s5, 4096, %s79, [#allocation12], 128, 128, 8
    $region25: #{tpu_custom_call.1} parent=1 // pred_fallthru
      _
    // Predicated region
    $region26: #{tpu_custom_call.1} parent=1 // pred_check
      _
    $region27: #{tpu_custom_call.1} parent=1 // pred_check_branch
      %86 = sbr.rel (0) target = $region29
    $region28: #{tpu_custom_call.1} parent=1 // pred_region
      %s88 = ssub.s32 32, 32
      %89 = vsyncadd [#allocation12], %s88
      %s91 = sshll.u32 [#allocation13], 4
      %s92 = int_to_ptr.vmem [resolvable:$true] %s91
      %94 = dma.hbm_to_vmem [thread:$0]  %s6, 32, %s92, [#allocation12]
    $region29: #{tpu_custom_call.1} parent=1 // pred_fallthru
      _
    // Predicated region
    $region30: #{tpu_custom_call.1} parent=1 // pred_check
      _
    $region31: #{tpu_custom_call.1} parent=1 // pred_check_branch
      %96 = sbr.rel (0) target = $region33
    $region32: #{tpu_custom_call.1} parent=1 // pred_region
      %97 = dma.done [#allocation3], 4096
    $region33: #{tpu_custom_call.1} parent=1 // pred_fallthru
      _
    // Predicated region
    $region34: #{tpu_custom_call.1} parent=1 // pred_check
      _
    $region35: #{tpu_custom_call.1} parent=1 // pred_check_branch
      %99 = sbr.rel (0) target = $region37
    $region36: #{tpu_custom_call.1} parent=1 // pred_region
      %100 = dma.done [#allocation6], 4096
    $region37: #{tpu_custom_call.1} parent=1 // pred_fallthru
      _
    // Predicated region
    $region38: #{tpu_custom_call.1} parent=1 // pred_check
      _
    $region39: #{tpu_custom_call.1} parent=1 // pred_check_branch
      %102 = sbr.rel (0) target = $region41
    $region40: #{tpu_custom_call.1} parent=1 // pred_region
      %103 = dma.done [#allocation6], 4096
    $region41: #{tpu_custom_call.1} parent=1 // pred_fallthru
      _
    // Predicated region
    $region42: #{tpu_custom_call.1} parent=1 // pred_check
      _
    $region43: #{tpu_custom_call.1} parent=1 // pred_check_branch
      %105 = sbr.rel (0) target = $region45
    $region44: #{tpu_custom_call.1} parent=1 // pred_region
      %106 = dma.done [#allocation9], 32
    $region45: #{tpu_custom_call.1} parent=1 // pred_fallthru
      _
    // Predicated region
    $region46: #{tpu_custom_call.1} parent=1 // pred_check
      _
    $region47: #{tpu_custom_call.1} parent=1 // pred_check_branch
      %108 = sbr.rel (0) target = $region49
    $region48: #{tpu_custom_call.1} parent=1 // pred_region
      %109 = dma.done [#allocation9], 32
    $region49: #{tpu_custom_call.1} parent=1 // pred_fallthru
      _
    // Predicated region
    $region50: #{tpu_custom_call.1} parent=1 // pred_check
      _
    $region51: #{tpu_custom_call.1} parent=1 // pred_check_branch
      %111 = sbr.rel (0) target = $region53
    $region52: #{tpu_custom_call.1} parent=1 // pred_region
      %112 = dma.done [#allocation12], 4096
    $region53: #{tpu_custom_call.1} parent=1 // pred_fallthru
      _
    // Predicated region
    $region54: #{tpu_custom_call.1} parent=1 // pred_check
      _
    $region55: #{tpu_custom_call.1} parent=1 // pred_check_branch
      %114 = sbr.rel (0) target = $region57
    $region56: #{tpu_custom_call.1} parent=1 // pred_region
      %115 = dma.done [#allocation12], 32
    $region57: #{tpu_custom_call.1} parent=1 // pred_fallthru
      _
    %v116 = vld [vmem:[#allocation2] sm:$0xff]
    %v117 = vld [vmem:[#allocation2 + $0x8] sm:$0xff]
    %v118 = vld [vmem:[#allocation2 + $0x10] sm:$0xff]
    %v119 = vld [vmem:[#allocation2 + $0x18] sm:$0xff]
    %v120 = vld [vmem:[#allocation2 + $0x20] sm:$0xff]
    %v121 = vld [vmem:[#allocation2 + $0x28] sm:$0xff]
    %v122 = vld [vmem:[#allocation2 + $0x30] sm:$0xff]
    %v123 = vld [vmem:[#allocation2 + $0x38] sm:$0xff]
    %v124 = vld [vmem:[#allocation2 + $0x40] sm:$0xff]
    %v125 = vld [vmem:[#allocation2 + $0x48] sm:$0xff]
    %v126 = vld [vmem:[#allocation2 + $0x50] sm:$0xff]
    %v127 = vld [vmem:[#allocation2 + $0x58] sm:$0xff]
    %v128 = vld [vmem:[#allocation2 + $0x60] sm:$0xff]
    %v129 = vld [vmem:[#allocation2 + $0x68] sm:$0xff]
    %v130 = vld [vmem:[#allocation2 + $0x70] sm:$0xff]
    %v131 = vld [vmem:[#allocation2 + $0x78] sm:$0xff]
    %v132 = vld [vmem:[#allocation2 + $0x80] sm:$0xff]
    %v133 = vld [vmem:[#allocation2 + $0x88] sm:$0xff]
    %v134 = vld [vmem:[#allocation2 + $0x90] sm:$0xff]
    %v135 = vld [vmem:[#allocation2 + $0x98] sm:$0xff]
    %v136 = vld [vmem:[#allocation2 + $0xa0] sm:$0xff]
    %v137 = vld [vmem:[#allocation2 + $0xa8] sm:$0xff]
    %v138 = vld [vmem:[#allocation2 + $0xb0] sm:$0xff]
    %v139 = vld [vmem:[#allocation2 + $0xb8] sm:$0xff]
    %v140 = vld [vmem:[#allocation2 + $0xc0] sm:$0xff]
    %v141 = vld [vmem:[#allocation2 + $0xc8] sm:$0xff]
    %v142 = vld [vmem:[#allocation2 + $0xd0] sm:$0xff]
    %v143 = vld [vmem:[#allocation2 + $0xd8] sm:$0xff]
    %v144 = vld [vmem:[#allocation2 + $0xe0] sm:$0xff]
    %v145 = vld [vmem:[#allocation2 + $0xe8] sm:$0xff]
    %v146 = vld [vmem:[#allocation2 + $0xf0] sm:$0xff]
    %v147 = vld [vmem:[#allocation2 + $0xf8] sm:$0xff]
    %v148 = vld [vmem:[#allocation5] sm:$0xff]
    %v149 = vld [vmem:[#allocation5 + $0x8] sm:$0xff]
    %v150 = vld [vmem:[#allocation5 + $0x10] sm:$0xff]
    %v151 = vld [vmem:[#allocation5 + $0x18] sm:$0xff]
    %v152 = vld [vmem:[#allocation5 + $0x20] sm:$0xff]
    %v153 = vld [vmem:[#allocation5 + $0x28] sm:$0xff]
    %v154 = vld [vmem:[#allocation5 + $0x30] sm:$0xff]
    %v155 = vld [vmem:[#allocation5 + $0x38] sm:$0xff]
    %v156 = vld [vmem:[#allocation5 + $0x40] sm:$0xff]
    %v157 = vld [vmem:[#allocation5 + $0x48] sm:$0xff]
    %v158 = vld [vmem:[#allocation5 + $0x50] sm:$0xff]
    %v159 = vld [vmem:[#allocation5 + $0x58] sm:$0xff]
    %v160 = vld [vmem:[#allocation5 + $0x60] sm:$0xff]
    %v161 = vld [vmem:[#allocation5 + $0x68] sm:$0xff]
    %v162 = vld [vmem:[#allocation5 + $0x70] sm:$0xff]
    %v163 = vld [vmem:[#allocation5 + $0x78] sm:$0xff]
    %v164 = vld [vmem:[#allocation5 + $0x80] sm:$0xff]
    %v165 = vld [vmem:[#allocation5 + $0x88] sm:$0xff]
    %v166 = vld [vmem:[#allocation5 + $0x90] sm:$0xff]
    %v167 = vld [vmem:[#allocation5 + $0x98] sm:$0xff]
    %v168 = vld [vmem:[#allocation5 + $0xa0] sm:$0xff]
    %v169 = vld [vmem:[#allocation5 + $0xa8] sm:$0xff]
    %v170 = vld [vmem:[#allocation5 + $0xb0] sm:$0xff]
    %v171 = vld [vmem:[#allocation5 + $0xb8] sm:$0xff]
    %v172 = vld [vmem:[#allocation5 + $0xc0] sm:$0xff]
    %v173 = vld [vmem:[#allocation5 + $0xc8] sm:$0xff]
    %v174 = vld [vmem:[#allocation5 + $0xd0] sm:$0xff]
    %v175 = vld [vmem:[#allocation5 + $0xd8] sm:$0xff]
    %v176 = vld [vmem:[#allocation5 + $0xe0] sm:$0xff]
    %v177 = vld [vmem:[#allocation5 + $0xe8] sm:$0xff]
    %v178 = vld [vmem:[#allocation5 + $0xf0] sm:$0xff]
    %v179 = vld [vmem:[#allocation5 + $0xf8] sm:$0xff]
    %v180 = vld [vmem:[#allocation7] sm:$0xff]
    %v181 = vld [vmem:[#allocation7 + $0x8] sm:$0xff]
    %v182 = vld [vmem:[#allocation7 + $0x10] sm:$0xff]
    %v183 = vld [vmem:[#allocation7 + $0x18] sm:$0xff]
    %v184 = vld [vmem:[#allocation7 + $0x20] sm:$0xff]
    %v185 = vld [vmem:[#allocation7 + $0x28] sm:$0xff]
    %v186 = vld [vmem:[#allocation7 + $0x30] sm:$0xff]
    %v187 = vld [vmem:[#allocation7 + $0x38] sm:$0xff]
    %v188 = vld [vmem:[#allocation7 + $0x40] sm:$0xff]
    %v189 = vld [vmem:[#allocation7 + $0x48] sm:$0xff]
    %v190 = vld [vmem:[#allocation7 + $0x50] sm:$0xff]
    %v191 = vld [vmem:[#allocation7 + $0x58] sm:$0xff]
    %v192 = vld [vmem:[#allocation7 + $0x60] sm:$0xff]
    %v193 = vld [vmem:[#allocation7 + $0x68] sm:$0xff]
    %v194 = vld [vmem:[#allocation7 + $0x70] sm:$0xff]
    %v195 = vld [vmem:[#allocation7 + $0x78] sm:$0xff]
    %v196 = vld [vmem:[#allocation7 + $0x80] sm:$0xff]
    %v197 = vld [vmem:[#allocation7 + $0x88] sm:$0xff]
    %v198 = vld [vmem:[#allocation7 + $0x90] sm:$0xff]
    %v199 = vld [vmem:[#allocation7 + $0x98] sm:$0xff]
    %v200 = vld [vmem:[#allocation7 + $0xa0] sm:$0xff]
    %v201 = vld [vmem:[#allocation7 + $0xa8] sm:$0xff]
    %v202 = vld [vmem:[#allocation7 + $0xb0] sm:$0xff]
    %v203 = vld [vmem:[#allocation7 + $0xb8] sm:$0xff]
    %v204 = vld [vmem:[#allocation7 + $0xc0] sm:$0xff]
    %v205 = vld [vmem:[#allocation7 + $0xc8] sm:$0xff]
    %v206 = vld [vmem:[#allocation7 + $0xd0] sm:$0xff]
    %v207 = vld [vmem:[#allocation7 + $0xd8] sm:$0xff]
    %v208 = vld [vmem:[#allocation7 + $0xe0] sm:$0xff]
    %v209 = vld [vmem:[#allocation7 + $0xe8] sm:$0xff]
    %v210 = vld [vmem:[#allocation7 + $0xf0] sm:$0xff]
    %v211 = vld [vmem:[#allocation7 + $0xf8] sm:$0xff]
    %v212 = vld [vmem:[#allocation8] sm:$0x3]
    %v213 = vld [vmem:[#allocation10] sm:$0x3]
    %vm214 = vcmp.gt.f32.partialorder %v213, 0.5
    %v215 = vld [vmem:[#allocation11] sm:$0xff]
    %v216 = vld [vmem:[#allocation11 + $0x8] sm:$0xff]
    %v217 = vld [vmem:[#allocation11 + $0x10] sm:$0xff]
    %v218 = vld [vmem:[#allocation11 + $0x18] sm:$0xff]
    %v219 = vld [vmem:[#allocation11 + $0x20] sm:$0xff]
    %v220 = vld [vmem:[#allocation11 + $0x28] sm:$0xff]
    %v221 = vld [vmem:[#allocation11 + $0x30] sm:$0xff]
    %v222 = vld [vmem:[#allocation11 + $0x38] sm:$0xff]
    %v223 = vld [vmem:[#allocation11 + $0x40] sm:$0xff]
    %v224 = vld [vmem:[#allocation11 + $0x48] sm:$0xff]
    %v225 = vld [vmem:[#allocation11 + $0x50] sm:$0xff]
    %v226 = vld [vmem:[#allocation11 + $0x58] sm:$0xff]
    %v227 = vld [vmem:[#allocation11 + $0x60] sm:$0xff]
    %v228 = vld [vmem:[#allocation11 + $0x68] sm:$0xff]
    %v229 = vld [vmem:[#allocation11 + $0x70] sm:$0xff]
    %v230 = vld [vmem:[#allocation11 + $0x78] sm:$0xff]
    %v231 = vld [vmem:[#allocation11 + $0x80] sm:$0xff]
    %v232 = vld [vmem:[#allocation11 + $0x88] sm:$0xff]
    %v233 = vld [vmem:[#allocation11 + $0x90] sm:$0xff]
    %v234 = vld [vmem:[#allocation11 + $0x98] sm:$0xff]
    %v235 = vld [vmem:[#allocation11 + $0xa0] sm:$0xff]
    %v236 = vld [vmem:[#allocation11 + $0xa8] sm:$0xff]
    %v237 = vld [vmem:[#allocation11 + $0xb0] sm:$0xff]
    %v238 = vld [vmem:[#allocation11 + $0xb8] sm:$0xff]
    %v239 = vld [vmem:[#allocation11 + $0xc0] sm:$0xff]
    %v240 = vld [vmem:[#allocation11 + $0xc8] sm:$0xff]
    %v241 = vld [vmem:[#allocation11 + $0xd0] sm:$0xff]
    %v242 = vld [vmem:[#allocation11 + $0xd8] sm:$0xff]
    %v243 = vld [vmem:[#allocation11 + $0xe0] sm:$0xff]
    %v244 = vld [vmem:[#allocation11 + $0xe8] sm:$0xff]
    %v245 = vld [vmem:[#allocation11 + $0xf0] sm:$0xff]
    %v246 = vld [vmem:[#allocation11 + $0xf8] sm:$0xff]
    %v247 = vld [vmem:[#allocation13] sm:$0x3]
    %248 = vmatprep.subr.mxu0 0.0
    %v249 = vand.u32 %v148, 4294901760
    %250 = vmatpush1.xpose.msra.mxu0 %v249
    %251 = vmatprep.subr.mxu0 0.0
    %v252 = vand.u32 %v149, 4294901760
    %253 = vmatpush1.xpose.msra.mxu0 %v252
    %254 = vmatprep.subr.mxu0 0.0
    %v255 = vand.u32 %v150, 4294901760
    %256 = vmatpush1.xpose.msra.mxu0 %v255
    %257 = vmatprep.subr.mxu0 0.0
    %v258 = vand.u32 %v151, 4294901760
    %259 = vmatpush1.xpose.msra.mxu0 %v258
    %260 = vmatprep.subr.mxu0 0.0
    %v261 = vand.u32 %v152, 4294901760
    %262 = vmatpush1.xpose.msra.mxu0 %v261
    %263 = vmatprep.subr.mxu0 0.0
    %v264 = vand.u32 %v153, 4294901760
    %265 = vmatpush1.xpose.msra.mxu0 %v264
    %266 = vmatprep.subr.mxu0 0.0
    %v267 = vand.u32 %v154, 4294901760
    %268 = vmatpush1.xpose.msra.mxu0 %v267
    %269 = vmatprep.subr.mxu0 0.0
    %v270 = vand.u32 %v155, 4294901760
    %271 = vmatpush1.xpose.msra.mxu0 %v270
    %272 = vmatprep.subr.mxu0 0.0
    %v273 = vand.u32 %v156, 4294901760
    %274 = vmatpush1.xpose.msra.mxu0 %v273
    %275 = vmatprep.subr.mxu0 0.0
    %v276 = vand.u32 %v157, 4294901760
    %277 = vmatpush1.xpose.msra.mxu0 %v276
    %278 = vmatprep.subr.mxu0 0.0
    %v279 = vand.u32 %v158, 4294901760
    %280 = vmatpush1.xpose.msra.mxu0 %v279
    %281 = vmatprep.subr.mxu0 0.0
    %v282 = vand.u32 %v159, 4294901760
    %283 = vmatpush1.xpose.msra.mxu0 %v282
    %284 = vmatprep.subr.mxu0 0.0
    %v285 = vand.u32 %v160, 4294901760
    %286 = vmatpush1.xpose.msra.mxu0 %v285
    %287 = vmatprep.subr.mxu0 0.0
    %v288 = vand.u32 %v161, 4294901760
    %289 = vmatpush1.xpose.msra.mxu0 %v288
    %290 = vmatprep.subr.mxu0 0.0
    %v291 = vand.u32 %v162, 4294901760
    %292 = vmatpush1.xpose.msra.mxu0 %v291
    %293 = vmatprep.subr.mxu0 0.0
    %v294 = vand.u32 %v163, 4294901760
    %295 = vmatpush1.xpose.msra.mxu0 %v294
    %296 = vmatprep.subr.mxu0 0.0
    %v297 = vand.u32 %v164, 4294901760
    %298 = vmatpush1.xpose.msra.mxu0 %v297
    %299 = vmatprep.subr.mxu0 0.0
    %v300 = vand.u32 %v165, 4294901760
    %301 = vmatpush1.xpose.msra.mxu0 %v300
    %302 = vmatprep.subr.mxu0 0.0
    %v303 = vand.u32 %v166, 4294901760
    %304 = vmatpush1.xpose.msra.mxu0 %v303
    %305 = vmatprep.subr.mxu0 0.0
    %v306 = vand.u32 %v167, 4294901760
    %307 = vmatpush1.xpose.msra.mxu0 %v306
    %308 = vmatprep.subr.mxu0 0.0
    %v309 = vand.u32 %v168, 4294901760
    %310 = vmatpush1.xpose.msra.mxu0 %v309
    %311 = vmatprep.subr.mxu0 0.0
    %v312 = vand.u32 %v169, 4294901760
    %313 = vmatpush1.xpose.msra.mxu0 %v312
    %314 = vmatprep.subr.mxu0 0.0
    %v315 = vand.u32 %v170, 4294901760
    %316 = vmatpush1.xpose.msra.mxu0 %v315
    %317 = vmatprep.subr.mxu0 0.0
    %v318 = vand.u32 %v171, 4294901760
    %319 = vmatpush1.xpose.msra.mxu0 %v318
    %320 = vmatprep.subr.mxu0 0.0
    %v321 = vand.u32 %v172, 4294901760
    %322 = vmatpush1.xpose.msra.mxu0 %v321
    %323 = vmatprep.subr.mxu0 0.0
    %v324 = vand.u32 %v173, 4294901760
    %325 = vmatpush1.xpose.msra.mxu0 %v324
    %326 = vmatprep.subr.mxu0 0.0
    %v327 = vand.u32 %v174, 4294901760
    %328 = vmatpush1.xpose.msra.mxu0 %v327
    %329 = vmatprep.subr.mxu0 0.0
    %v330 = vand.u32 %v175, 4294901760
    %331 = vmatpush1.xpose.msra.mxu0 %v330
    %332 = vmatprep.subr.mxu0 0.0
    %v333 = vand.u32 %v176, 4294901760
    %334 = vmatpush1.xpose.msra.mxu0 %v333
    %335 = vmatprep.subr.mxu0 0.0
    %v336 = vand.u32 %v177, 4294901760
    %337 = vmatpush1.xpose.msra.mxu0 %v336
    %338 = vmatprep.subr.mxu0 0.0
    %v339 = vand.u32 %v178, 4294901760
    %340 = vmatpush1.xpose.msra.mxu0 %v339
    %341 = vmatprep.subr.mxu0 0.0
    %v342 = vand.u32 %v179, 4294901760
    %343 = vmatpush1.xpose.msra.mxu0 %v342
    %344 = vmatprep.mubr.f32.mxu0 0.0
    %v345 = vand.u32 %v116, 4294901760
    %v346 = vsub.f32 %v116, %v345
    %v347 = vand.u32 %v346, 4294901760
    %v348 = vsub.f32 %v346, %v347
    %v349 = vand.u32 %v348, 4294901760
    %350 = vmatmul.mubr.f32.gmra.mrb[0].mxu0 %v349
    %v351 = vpop.f32.mrb[0].mxu0
    %v352 = vadd.f32 0.0, %v351
    %v353 = vpop.f32.mrb[0].mxu0
    %v354 = vadd.f32 0.0, %v353
    %355 = vmatprep.mubr.f32.mxu0 0.0
    %v356 = vand.u32 %v117, 4294901760
    %v357 = vsub.f32 %v117, %v356
    %v358 = vand.u32 %v357, 4294901760
    %v359 = vsub.f32 %v357, %v358
    %v360 = vand.u32 %v359, 4294901760
    %361 = vmatmul.mubr.f32.gmra.mrb[0].mxu0 %v360
    %v362 = vpop.f32.mrb[0].mxu0
    %v363 = vadd.f32 0.0, %v362
    %v364 = vpop.f32.mrb[0].mxu0
    %v365 = vadd.f32 0.0, %v364
    %366 = vmatprep.mubr.f32.mxu0 0.0
    %v367 = vand.u32 %v118, 4294901760
    %v368 = vsub.f32 %v118, %v367
    %v369 = vand.u32 %v368, 4294901760
    %v370 = vsub.f32 %v368, %v369
    %v371 = vand.u32 %v370, 4294901760
    %372 = vmatmul.mubr.f32.gmra.mrb[0].mxu0 %v371
    %v373 = vpop.f32.mrb[0].mxu0
    %v374 = vadd.f32 0.0, %v373
    %v375 = vpop.f32.mrb[0].mxu0
    %v376 = vadd.f32 0.0, %v375
    %377 = vmatprep.mubr.f32.mxu0 0.0
    %v378 = vand.u32 %v119, 4294901760
    %v379 = vsub.f32 %v119, %v378
    %v380 = vand.u32 %v379, 4294901760
    %v381 = vsub.f32 %v379, %v380
    %v382 = vand.u32 %v381, 4294901760
    %383 = vmatmul.mubr.f32.gmra.mrb[0].mxu0 %v382
    %v384 = vpop.f32.mrb[0].mxu0
    %v385 = vadd.f32 0.0, %v384
    %v386 = vpop.f32.mrb[0].mxu0
    %v387 = vadd.f32 0.0, %v386
    %388 = vmatprep.mubr.f32.mxu0 0.0
    %v389 = vand.u32 %v120, 4294901760
    %v390 = vsub.f32 %v120, %v389
    %v391 = vand.u32 %v390, 4294901760
    %v392 = vsub.f32 %v390, %v391
    %v393 = vand.u32 %v392, 4294901760
    %394 = vmatmul.mubr.f32.gmra.mrb[0].mxu0 %v393
    %v395 = vpop.f32.mrb[0].mxu0
    %v396 = vadd.f32 0.0, %v395
    %v397 = vpop.f32.mrb[0].mxu0
    %v398 = vadd.f32 0.0, %v397
    %399 = vmatprep.mubr.f32.mxu0 0.0
    %v400 = vand.u32 %v121, 4294901760
    %v401 = vsub.f32 %v121, %v400
    %v402 = vand.u32 %v401, 4294901760
    %v403 = vsub.f32 %v401, %v402
    %v404 = vand.u32 %v403, 4294901760
    %405 = vmatmul.mubr.f32.gmra.mrb[0].mxu0 %v404
    %v406 = vpop.f32.mrb[0].mxu0
    %v407 = vadd.f32 0.0, %v406
    %v408 = vpop.f32.mrb[0].mxu0
    %v409 = vadd.f32 0.0, %v408
    %410 = vmatprep.mubr.f32.mxu0 0.0
    %v411 = vand.u32 %v122, 4294901760
    %v412 = vsub.f32 %v122, %v411
    %v413 = vand.u32 %v412, 4294901760
    %v414 = vsub.f32 %v412, %v413
    %v415 = vand.u32 %v414, 4294901760
    %416 = vmatmul.mubr.f32.gmra.mrb[0].mxu0 %v415
    %v417 = vpop.f32.mrb[0].mxu0
    %v418 = vadd.f32 0.0, %v417
    %v419 = vpop.f32.mrb[0].mxu0
    %v420 = vadd.f32 0.0, %v419
    %421 = vmatprep.mubr.f32.mxu0 0.0
    %v422 = vand.u32 %v123, 4294901760
    %v423 = vsub.f32 %v123, %v422
    %v424 = vand.u32 %v423, 4294901760
    %v425 = vsub.f32 %v423, %v424
    %v426 = vand.u32 %v425, 4294901760
    %427 = vmatmul.mubr.f32.gmra.mrb[0].mxu0 %v426
    %v428 = vpop.f32.mrb[0].mxu0
    %v429 = vadd.f32 0.0, %v428
    %v430 = vpop.f32.mrb[0].mxu0
    %v431 = vadd.f32 0.0, %v430
    %432 = vmatprep.mubr.f32.mxu0 0.0
    %v433 = vand.u32 %v124, 4294901760
    %v434 = vsub.f32 %v124, %v433
    %v435 = vand.u32 %v434, 4294901760
    %v436 = vsub.f32 %v434, %v435
    %v437 = vand.u32 %v436, 4294901760
    %438 = vmatmul.mubr.f32.gmra.mrb[0].mxu0 %v437
    %v439 = vpop.f32.mrb[0].mxu0
    %v440 = vadd.f32 0.0, %v439
    %v441 = vpop.f32.mrb[0].mxu0
    %v442 = vadd.f32 0.0, %v441
    %443 = vmatprep.mubr.f32.mxu0 0.0
    %v444 = vand.u32 %v125, 4294901760
    %v445 = vsub.f32 %v125, %v444
    %v446 = vand.u32 %v445, 4294901760
    %v447 = vsub.f32 %v445, %v446
    %v448 = vand.u32 %v447, 4294901760
    %449 = vmatmul.mubr.f32.gmra.mrb[0].mxu0 %v448
    %v450 = vpop.f32.mrb[0].mxu0
    %v451 = vadd.f32 0.0, %v450
    %v452 = vpop.f32.mrb[0].mxu0
    %v453 = vadd.f32 0.0, %v452
    %454 = vmatprep.mubr.f32.mxu0 0.0
    %v455 = vand.u32 %v126, 4294901760
    %v456 = vsub.f32 %v126, %v455
    %v457 = vand.u32 %v456, 4294901760
    %v458 = vsub.f32 %v456, %v457
    %v459 = vand.u32 %v458, 4294901760
    %460 = vmatmul.mubr.f32.gmra.mrb[0].mxu0 %v459
    %v461 = vpop.f32.mrb[0].mxu0
    %v462 = vadd.f32 0.0, %v461
    %v463 = vpop.f32.mrb[0].mxu0
    %v464 = vadd.f32 0.0, %v463
    %465 = vmatprep.mubr.f32.mxu0 0.0
    %v466 = vand.u32 %v127, 4294901760
    %v467 = vsub.f32 %v127, %v466
    %v468 = vand.u32 %v467, 4294901760
    %v469 = vsub.f32 %v467, %v468
    %v470 = vand.u32 %v469, 4294901760
    %471 = vmatmul.mubr.f32.gmra.mrb[0].mxu0 %v470
    %v472 = vpop.f32.mrb[0].mxu0
    %v473 = vadd.f32 0.0, %v472
    %v474 = vpop.f32.mrb[0].mxu0
    %v475 = vadd.f32 0.0, %v474
    %476 = vmatprep.mubr.f32.mxu0 0.0
    %v477 = vand.u32 %v128, 4294901760
    %v478 = vsub.f32 %v128, %v477
    %v479 = vand.u32 %v478, 4294901760
    %v480 = vsub.f32 %v478, %v479
    %v481 = vand.u32 %v480, 4294901760
    %482 = vmatmul.mubr.f32.gmra.mrb[0].mxu0 %v481
    %v483 = vpop.f32.mrb[0].mxu0
    %v484 = vadd.f32 0.0, %v483
    %v485 = vpop.f32.mrb[0].mxu0
    %v486 = vadd.f32 0.0, %v485
    %487 = vmatprep.mubr.f32.mxu0 0.0
    %v488 = vand.u32 %v129, 4294901760
    %v489 = vsub.f32 %v129, %v488
    %v490 = vand.u32 %v489, 4294901760
    %v491 = vsub.f32 %v489, %v490
    %v492 = vand.u32 %v491, 4294901760
    %493 = vmatmul.mubr.f32.gmra.mrb[0].mxu0 %v492
    %v494 = vpop.f32.mrb[0].mxu0
    %v495 = vadd.f32 0.0, %v494
    %v496 = vpop.f32.mrb[0].mxu0
    %v497 = vadd.f32 0.0, %v496
    %498 = vmatprep.mubr.f32.mxu0 0.0
    %v499 = vand.u32 %v130, 4294901760
    %v500 = vsub.f32 %v130, %v499
    %v501 = vand.u32 %v500, 4294901760
    %v502 = vsub.f32 %v500, %v501
    %v503 = vand.u32 %v502, 4294901760
    %504 = vmatmul.mubr.f32.gmra.mrb[0].mxu0 %v503
    %v505 = vpop.f32.mrb[0].mxu0
    %v506 = vadd.f32 0.0, %v505
    %v507 = vpop.f32.mrb[0].mxu0
    %v508 = vadd.f32 0.0, %v507
    %509 = vmatprep.mubr.f32.mxu0 0.0
    %v510 = vand.u32 %v131, 4294901760
    %v511 = vsub.f32 %v131, %v510
    %v512 = vand.u32 %v511, 4294901760
    %v513 = vsub.f32 %v511, %v512
    %v514 = vand.u32 %v513, 4294901760
    %515 = vmatmul.mubr.f32.gmra.mrb[0].mxu0 %v514
    %v516 = vpop.f32.mrb[0].mxu0
    %v517 = vadd.f32 0.0, %v516
    %v518 = vpop.f32.mrb[0].mxu0
    %v519 = vadd.f32 0.0, %v518
    %520 = vmatprep.mubr.f32.mxu0 0.0
    %v521 = vand.u32 %v132, 4294901760
    %v522 = vsub.f32 %v132, %v521
    %v523 = vand.u32 %v522, 4294901760
    %v524 = vsub.f32 %v522, %v523
    %v525 = vand.u32 %v524, 4294901760
    %526 = vmatmul.mubr.f32.gmra.mrb[0].mxu0 %v525
    %v527 = vpop.f32.mrb[0].mxu0
    %v528 = vadd.f32 0.0, %v527
    %v529 = vpop.f32.mrb[0].mxu0
    %v530 = vadd.f32 0.0, %v529
    %531 = vmatprep.mubr.f32.mxu0 0.0
    %v532 = vand.u32 %v133, 4294901760
    %v533 = vsub.f32 %v133, %v532
    %v534 = vand.u32 %v533, 4294901760
    %v535 = vsub.f32 %v533, %v534
    %v536 = vand.u32 %v535, 4294901760
    %537 = vmatmul.mubr.f32.gmra.mrb[0].mxu0 %v536
    %v538 = vpop.f32.mrb[0].mxu0
    %v539 = vadd.f32 0.0, %v538
    %v540 = vpop.f32.mrb[0].mxu0
    %v541 = vadd.f32 0.0, %v540
    %542 = vmatprep.mubr.f32.mxu0 0.0
    %v543 = vand.u32 %v134, 4294901760
    %v544 = vsub.f32 %v134, %v543
    %v545 = vand.u32 %v544, 4294901760
    %v546 = vsub.f32 %v544, %v545
    %v547 = vand.u32 %v546, 4294901760
    %548 = vmatmul.mubr.f32.gmra.mrb[0].mxu0 %v547
    %v549 = vpop.f32.mrb[0].mxu0
    %v550 = vadd.f32 0.0, %v549
    %v551 = vpop.f32.mrb[0].mxu0
    %v552 = vadd.f32 0.0, %v551
    %553 = vmatprep.mubr.f32.mxu0 0.0
    %v554 = vand.u32 %v135, 4294901760
    %v555 = vsub.f32 %v135, %v554
    %v556 = vand.u32 %v555, 4294901760
    %v557 = vsub.f32 %v555, %v556
    %v558 = vand.u32 %v557, 4294901760
    %559 = vmatmul.mubr.f32.gmra.mrb[0].mxu0 %v558
    %v560 = vpop.f32.mrb[0].mxu0
    %v561 = vadd.f32 0.0, %v560
    %v562 = vpop.f32.mrb[0].mxu0
    %v563 = vadd.f32 0.0, %v562
    %564 = vmatprep.mubr.f32.mxu0 0.0
    %v565 = vand.u32 %v136, 4294901760
    %v566 = vsub.f32 %v136, %v565
    %v567 = vand.u32 %v566, 4294901760
    %v568 = vsub.f32 %v566, %v567
    %v569 = vand.u32 %v568, 4294901760
    %570 = vmatmul.mubr.f32.gmra.mrb[0].mxu0 %v569
    %v571 = vpop.f32.mrb[0].mxu0
    %v572 = vadd.f32 0.0, %v571
    %v573 = vpop.f32.mrb[0].mxu0
    %v574 = vadd.f32 0.0, %v573
    %575 = vmatprep.mubr.f32.mxu0 0.0
    %v576 = vand.u32 %v137, 4294901760
    %v577 = vsub.f32 %v137, %v576
    %v578 = vand.u32 %v577, 4294901760
    %v579 = vsub.f32 %v577, %v578
    %v580 = vand.u32 %v579, 4294901760
    %581 = vmatmul.mubr.f32.gmra.mrb[0].mxu0 %v580
    %v582 = vpop.f32.mrb[0].mxu0
    %v583 = vadd.f32 0.0, %v582
    %v584 = vpop.f32.mrb[0].mxu0
    %v585 = vadd.f32 0.0, %v584
    %586 = vmatprep.mubr.f32.mxu0 0.0
    %v587 = vand.u32 %v138, 4294901760
    %v588 = vsub.f32 %v138, %v587
    %v589 = vand.u32 %v588, 4294901760
    %v590 = vsub.f32 %v588, %v589
    %v591 = vand.u32 %v590, 4294901760
    %592 = vmatmul.mubr.f32.gmra.mrb[0].mxu0 %v591
    %v593 = vpop.f32.mrb[0].mxu0
    %v594 = vadd.f32 0.0, %v593
    %v595 = vpop.f32.mrb[0].mxu0
    %v596 = vadd.f32 0.0, %v595
    %597 = vmatprep.mubr.f32.mxu0 0.0
    %v598 = vand.u32 %v139, 4294901760
    %v599 = vsub.f32 %v139, %v598
    %v600 = vand.u32 %v599, 4294901760
    %v601 = vsub.f32 %v599, %v600
    %v602 = vand.u32 %v601, 4294901760
    %603 = vmatmul.mubr.f32.gmra.mrb[0].mxu0 %v602
    %v604 = vpop.f32.mrb[0].mxu0
    %v605 = vadd.f32 0.0, %v604
    %v606 = vpop.f32.mrb[0].mxu0
    %v607 = vadd.f32 0.0, %v606
    %608 = vmatprep.mubr.f32.mxu0 0.0
    %v609 = vand.u32 %v140, 4294901760
    %v610 = vsub.f32 %v140, %v609
    %v611 = vand.u32 %v610, 4294901760
    %v612 = vsub.f32 %v610, %v611
    %v613 = vand.u32 %v612, 4294901760
    %614 = vmatmul.mubr.f32.gmra.mrb[0].mxu0 %v613
    %v615 = vpop.f32.mrb[0].mxu0
    %v616 = vadd.f32 0.0, %v615
    %v617 = vpop.f32.mrb[0].mxu0
    %v618 = vadd.f32 0.0, %v617
    %619 = vmatprep.mubr.f32.mxu0 0.0
    %v620 = vand.u32 %v141, 4294901760
    %v621 = vsub.f32 %v141, %v620
    %v622 = vand.u32 %v621, 4294901760
    %v623 = vsub.f32 %v621, %v622
    %v624 = vand.u32 %v623, 4294901760
    %625 = vmatmul.mubr.f32.gmra.mrb[0].mxu0 %v624
    %v626 = vpop.f32.mrb[0].mxu0
    %v627 = vadd.f32 0.0, %v626
    %v628 = vpop.f32.mrb[0].mxu0
    %v629 = vadd.f32 0.0, %v628
    %630 = vmatprep.mubr.f32.mxu0 0.0
    %v631 = vand.u32 %v142, 4294901760
    %v632 = vsub.f32 %v142, %v631
    %v633 = vand.u32 %v632, 4294901760
    %v634 = vsub.f32 %v632, %v633
    %v635 = vand.u32 %v634, 4294901760
    %636 = vmatmul.mubr.f32.gmra.mrb[0].mxu0 %v635
    %v637 = vpop.f32.mrb[0].mxu0
    %v638 = vadd.f32 0.0, %v637
    %v639 = vpop.f32.mrb[0].mxu0
    %v640 = vadd.f32 0.0, %v639
    %641 = vmatprep.mubr.f32.mxu0 0.0
    %v642 = vand.u32 %v143, 4294901760
    %v643 = vsub.f32 %v143, %v642
    %v644 = vand.u32 %v643, 4294901760
    %v645 = vsub.f32 %v643, %v644
    %v646 = vand.u32 %v645, 4294901760
    %647 = vmatmul.mubr.f32.gmra.mrb[0].mxu0 %v646
    %v648 = vpop.f32.mrb[0].mxu0
    %v649 = vadd.f32 0.0, %v648
    %v650 = vpop.f32.mrb[0].mxu0
    %v651 = vadd.f32 0.0, %v650
    %652 = vmatprep.mubr.f32.mxu0 0.0
    %v653 = vand.u32 %v144, 4294901760
    %v654 = vsub.f32 %v144, %v653
    %v655 = vand.u32 %v654, 4294901760
    %v656 = vsub.f32 %v654, %v655
    %v657 = vand.u32 %v656, 4294901760
    %658 = vmatmul.mubr.f32.gmra.mrb[0].mxu0 %v657
    %v659 = vpop.f32.mrb[0].mxu0
    %v660 = vadd.f32 0.0, %v659
    %v661 = vpop.f32.mrb[0].mxu0
    %v662 = vadd.f32 0.0, %v661
    %663 = vmatprep.mubr.f32.mxu0 0.0
    %v664 = vand.u32 %v145, 4294901760
    %v665 = vsub.f32 %v145, %v664
    %v666 = vand.u32 %v665, 4294901760
    %v667 = vsub.f32 %v665, %v666
    %v668 = vand.u32 %v667, 4294901760
    %669 = vmatmul.mubr.f32.gmra.mrb[0].mxu0 %v668
    %v670 = vpop.f32.mrb[0].mxu0
    %v671 = vadd.f32 0.0, %v670
    %v672 = vpop.f32.mrb[0].mxu0
    %v673 = vadd.f32 0.0, %v672
    %674 = vmatprep.mubr.f32.mxu0 0.0
    %v675 = vand.u32 %v146, 4294901760
    %v676 = vsub.f32 %v146, %v675
    %v677 = vand.u32 %v676, 4294901760
    %v678 = vsub.f32 %v676, %v677
    %v679 = vand.u32 %v678, 4294901760
    %680 = vmatmul.mubr.f32.gmra.mrb[0].mxu0 %v679
    %v681 = vpop.f32.mrb[0].mxu0
    %v682 = vadd.f32 0.0, %v681
    %v683 = vpop.f32.mrb[0].mxu0
    %v684 = vadd.f32 0.0, %v683
    %685 = vmatprep.mubr.f32.mxu0 0.0
    %v686 = vand.u32 %v147, 4294901760
    %v687 = vsub.f32 %v147, %v686
    %v688 = vand.u32 %v687, 4294901760
    %v689 = vsub.f32 %v687, %v688
    %v690 = vand.u32 %v689, 4294901760
    %691 = vmatmul.mubr.f32.gmra.mrb[0].mxu0 %v690
    %v692 = vpop.f32.mrb[0].mxu0
    %v693 = vadd.f32 0.0, %v692
    %v694 = vpop.f32.mrb[0].mxu0
    %v695 = vadd.f32 0.0, %v694
    %696 = vdwg.mxu0
    %697 = vmatprep.subr.mxu0 0.0
    %v698 = vand.u32 %v148, 4294901760
    %v699 = vsub.f32 %v148, %v698
    %v700 = vand.u32 %v699, 4294901760
    %v701 = vsub.f32 %v699, %v700
    %v702 = vand.u32 %v701, 4294901760
    %703 = vmatpush1.xpose.msra.mxu0 %v702
    %704 = vmatprep.subr.mxu0 0.0
    %v705 = vand.u32 %v149, 4294901760
    %v706 = vsub.f32 %v149, %v705
    %v707 = vand.u32 %v706, 4294901760
    %v708 = vsub.f32 %v706, %v707
    %v709 = vand.u32 %v708, 4294901760
    %710 = vmatpush1.xpose.msra.mxu0 %v709
    %711 = vmatprep.subr.mxu0 0.0
    %v712 = vand.u32 %v150, 4294901760
    %v713 = vsub.f32 %v150, %v712
    %v714 = vand.u32 %v713, 4294901760
    %v715 = vsub.f32 %v713, %v714
    %v716 = vand.u32 %v715, 4294901760
    %717 = vmatpush1.xpose.msra.mxu0 %v716
    %718 = vmatprep.subr.mxu0 0.0
    %v719 = vand.u32 %v151, 4294901760
    %v720 = vsub.f32 %v151, %v719
    %v721 = vand.u32 %v720, 4294901760
    %v722 = vsub.f32 %v720, %v721
    %v723 = vand.u32 %v722, 4294901760
    %724 = vmatpush1.xpose.msra.mxu0 %v723
    %725 = vmatprep.subr.mxu0 0.0
    %v726 = vand.u32 %v152, 4294901760
    %v727 = vsub.f32 %v152, %v726
    %v728 = vand.u32 %v727, 4294901760
    %v729 = vsub.f32 %v727, %v728
    %v730 = vand.u32 %v729, 4294901760
    %731 = vmatpush1.xpose.msra.mxu0 %v730
    %732 = vmatprep.subr.mxu0 0.0
    %v733 = vand.u32 %v153, 4294901760
    %v734 = vsub.f32 %v153, %v733
    %v735 = vand.u32 %v734, 4294901760
    %v736 = vsub.f32 %v734, %v735
    %v737 = vand.u32 %v736, 4294901760
    %738 = vmatpush1.xpose.msra.mxu0 %v737
    %739 = vmatprep.subr.mxu0 0.0
    %v740 = vand.u32 %v154, 4294901760
    %v741 = vsub.f32 %v154, %v740
    %v742 = vand.u32 %v741, 4294901760
    %v743 = vsub.f32 %v741, %v742
    %v744 = vand.u32 %v743, 4294901760
    %745 = vmatpush1.xpose.msra.mxu0 %v744
    %746 = vmatprep.subr.mxu0 0.0
    %v747 = vand.u32 %v155, 4294901760
    %v748 = vsub.f32 %v155, %v747
    %v749 = vand.u32 %v748, 4294901760
    %v750 = vsub.f32 %v748, %v749
    %v751 = vand.u32 %v750, 4294901760
    %752 = vmatpush1.xpose.msra.mxu0 %v751
    %753 = vmatprep.subr.mxu0 0.0
    %v754 = vand.u32 %v156, 4294901760
    %v755 = vsub.f32 %v156, %v754
    %v756 = vand.u32 %v755, 4294901760
    %v757 = vsub.f32 %v755, %v756
    %v758 = vand.u32 %v757, 4294901760
    %759 = vmatpush1.xpose.msra.mxu0 %v758
    %760 = vmatprep.subr.mxu0 0.0
    %v761 = vand.u32 %v157, 4294901760
    %v762 = vsub.f32 %v157, %v761
    %v763 = vand.u32 %v762, 4294901760
    %v764 = vsub.f32 %v762, %v763
    %v765 = vand.u32 %v764, 4294901760
    %766 = vmatpush1.xpose.msra.mxu0 %v765
    %767 = vmatprep.subr.mxu0 0.0
    %v768 = vand.u32 %v158, 4294901760
    %v769 = vsub.f32 %v158, %v768
    %v770 = vand.u32 %v769, 4294901760
    %v771 = vsub.f32 %v769, %v770
    %v772 = vand.u32 %v771, 4294901760
    %773 = vmatpush1.xpose.msra.mxu0 %v772
    %774 = vmatprep.subr.mxu0 0.0
    %v775 = vand.u32 %v159, 4294901760
    %v776 = vsub.f32 %v159, %v775
    %v777 = vand.u32 %v776, 4294901760
    %v778 = vsub.f32 %v776, %v777
    %v779 = vand.u32 %v778, 4294901760
    %780 = vmatpush1.xpose.msra.mxu0 %v779
    %781 = vmatprep.subr.mxu0 0.0
    %v782 = vand.u32 %v160, 4294901760
    %v783 = vsub.f32 %v160, %v782
    %v784 = vand.u32 %v783, 4294901760
    %v785 = vsub.f32 %v783, %v784
    %v786 = vand.u32 %v785, 4294901760
    %787 = vmatpush1.xpose.msra.mxu0 %v786
    %788 = vmatprep.subr.mxu0 0.0
    %v789 = vand.u32 %v161, 4294901760
    %v790 = vsub.f32 %v161, %v789
    %v791 = vand.u32 %v790, 4294901760
    %v792 = vsub.f32 %v790, %v791
    %v793 = vand.u32 %v792, 4294901760
    %794 = vmatpush1.xpose.msra.mxu0 %v793
    %795 = vmatprep.subr.mxu0 0.0
    %v796 = vand.u32 %v162, 4294901760
    %v797 = vsub.f32 %v162, %v796
    %v798 = vand.u32 %v797, 4294901760
    %v799 = vsub.f32 %v797, %v798
    %v800 = vand.u32 %v799, 4294901760
    %801 = vmatpush1.xpose.msra.mxu0 %v800
    %802 = vmatprep.subr.mxu0 0.0
    %v803 = vand.u32 %v163, 4294901760
    %v804 = vsub.f32 %v163, %v803
    %v805 = vand.u32 %v804, 4294901760
    %v806 = vsub.f32 %v804, %v805
    %v807 = vand.u32 %v806, 4294901760
    %808 = vmatpush1.xpose.msra.mxu0 %v807
    %809 = vmatprep.subr.mxu0 0.0
    %v810 = vand.u32 %v164, 4294901760
    %v811 = vsub.f32 %v164, %v810
    %v812 = vand.u32 %v811, 4294901760
    %v813 = vsub.f32 %v811, %v812
    %v814 = vand.u32 %v813, 4294901760
    %815 = vmatpush1.xpose.msra.mxu0 %v814
    %816 = vmatprep.subr.mxu0 0.0
    %v817 = vand.u32 %v165, 4294901760
    %v818 = vsub.f32 %v165, %v817
    %v819 = vand.u32 %v818, 4294901760
    %v820 = vsub.f32 %v818, %v819
    %v821 = vand.u32 %v820, 4294901760
    %822 = vmatpush1.xpose.msra.mxu0 %v821
    %823 = vmatprep.subr.mxu0 0.0
    %v824 = vand.u32 %v166, 4294901760
    %v825 = vsub.f32 %v166, %v824
    %v826 = vand.u32 %v825, 4294901760
    %v827 = vsub.f32 %v825, %v826
    %v828 = vand.u32 %v827, 4294901760
    %829 = vmatpush1.xpose.msra.mxu0 %v828
    %830 = vmatprep.subr.mxu0 0.0
    %v831 = vand.u32 %v167, 4294901760
    %v832 = vsub.f32 %v167, %v831
    %v833 = vand.u32 %v832, 4294901760
    %v834 = vsub.f32 %v832, %v833
    %v835 = vand.u32 %v834, 4294901760
    %836 = vmatpush1.xpose.msra.mxu0 %v835
    %837 = vmatprep.subr.mxu0 0.0
    %v838 = vand.u32 %v168, 4294901760
    %v839 = vsub.f32 %v168, %v838
    %v840 = vand.u32 %v839, 4294901760
    %v841 = vsub.f32 %v839, %v840
    %v842 = vand.u32 %v841, 4294901760
    %843 = vmatpush1.xpose.msra.mxu0 %v842
    %844 = vmatprep.subr.mxu0 0.0
    %v845 = vand.u32 %v169, 4294901760
    %v846 = vsub.f32 %v169, %v845
    %v847 = vand.u32 %v846, 4294901760
    %v848 = vsub.f32 %v846, %v847
    %v849 = vand.u32 %v848, 4294901760
    %850 = vmatpush1.xpose.msra.mxu0 %v849
    %851 = vmatprep.subr.mxu0 0.0
    %v852 = vand.u32 %v170, 4294901760
    %v853 = vsub.f32 %v170, %v852
    %v854 = vand.u32 %v853, 4294901760
    %v855 = vsub.f32 %v853, %v854
    %v856 = vand.u32 %v855, 4294901760
    %857 = vmatpush1.xpose.msra.mxu0 %v856
    %858 = vmatprep.subr.mxu0 0.0
    %v859 = vand.u32 %v171, 4294901760
    %v860 = vsub.f32 %v171, %v859
    %v861 = vand.u32 %v860, 4294901760
    %v862 = vsub.f32 %v860, %v861
    %v863 = vand.u32 %v862, 4294901760
    %864 = vmatpush1.xpose.msra.mxu0 %v863
    %865 = vmatprep.subr.mxu0 0.0
    %v866 = vand.u32 %v172, 4294901760
    %v867 = vsub.f32 %v172, %v866
    %v868 = vand.u32 %v867, 4294901760
    %v869 = vsub.f32 %v867, %v868
    %v870 = vand.u32 %v869, 4294901760
    %871 = vmatpush1.xpose.msra.mxu0 %v870
    %872 = vmatprep.subr.mxu0 0.0
    %v873 = vand.u32 %v173, 4294901760
    %v874 = vsub.f32 %v173, %v873
    %v875 = vand.u32 %v874, 4294901760
    %v876 = vsub.f32 %v874, %v875
    %v877 = vand.u32 %v876, 4294901760
    %878 = vmatpush1.xpose.msra.mxu0 %v877
    %879 = vmatprep.subr.mxu0 0.0
    %v880 = vand.u32 %v174, 4294901760
    %v881 = vsub.f32 %v174, %v880
    %v882 = vand.u32 %v881, 4294901760
    %v883 = vsub.f32 %v881, %v882
    %v884 = vand.u32 %v883, 4294901760
    %885 = vmatpush1.xpose.msra.mxu0 %v884
    %886 = vmatprep.subr.mxu0 0.0
    %v887 = vand.u32 %v175, 4294901760
    %v888 = vsub.f32 %v175, %v887
    %v889 = vand.u32 %v888, 4294901760
    %v890 = vsub.f32 %v888, %v889
    %v891 = vand.u32 %v890, 4294901760
    %892 = vmatpush1.xpose.msra.mxu0 %v891
    %893 = vmatprep.subr.mxu0 0.0
    %v894 = vand.u32 %v176, 4294901760
    %v895 = vsub.f32 %v176, %v894
    %v896 = vand.u32 %v895, 4294901760
    %v897 = vsub.f32 %v895, %v896
    %v898 = vand.u32 %v897, 4294901760
    %899 = vmatpush1.xpose.msra.mxu0 %v898
    %900 = vmatprep.subr.mxu0 0.0
    %v901 = vand.u32 %v177, 4294901760
    %v902 = vsub.f32 %v177, %v901
    %v903 = vand.u32 %v902, 4294901760
    %v904 = vsub.f32 %v902, %v903
    %v905 = vand.u32 %v904, 4294901760
    %906 = vmatpush1.xpose.msra.mxu0 %v905
    %907 = vmatprep.subr.mxu0 0.0
    %v908 = vand.u32 %v178, 4294901760
    %v909 = vsub.f32 %v178, %v908
    %v910 = vand.u32 %v909, 4294901760
    %v911 = vsub.f32 %v909, %v910
    %v912 = vand.u32 %v911, 4294901760
    %913 = vmatpush1.xpose.msra.mxu0 %v912
    %914 = vmatprep.subr.mxu0 0.0
    %v915 = vand.u32 %v179, 4294901760
    %v916 = vsub.f32 %v179, %v915
    %v917 = vand.u32 %v916, 4294901760
    %v918 = vsub.f32 %v916, %v917
    %v919 = vand.u32 %v918, 4294901760
    %920 = vmatpush1.xpose.msra.mxu0 %v919
    %921 = vmatprep.mubr.f32.mxu0 0.0
    %v922 = vand.u32 %v116, 4294901760
    %923 = vmatmul.mubr.f32.gmra.mrb[0].mxu0 %v922
    %v924 = vpop.f32.mrb[0].mxu0
    %v925 = vadd.f32 %v352, %v924
    %v926 = vpop.f32.mrb[0].mxu0
    %v927 = vadd.f32 %v354, %v926
    %928 = vmatprep.mubr.f32.mxu0 0.0
    %v929 = vand.u32 %v117, 4294901760
    %930 = vmatmul.mubr.f32.gmra.mrb[0].mxu0 %v929
    %v931 = vpop.f32.mrb[0].mxu0
    %v932 = vadd.f32 %v363, %v931
    %v933 = vpop.f32.mrb[0].mxu0
    %v934 = vadd.f32 %v365, %v933
    %935 = vmatprep.mubr.f32.mxu0 0.0
    %v936 = vand.u32 %v118, 4294901760
    %937 = vmatmul.mubr.f32.gmra.mrb[0].mxu0 %v936
    %v938 = vpop.f32.mrb[0].mxu0
    %v939 = vadd.f32 %v374, %v938
    %v940 = vpop.f32.mrb[0].mxu0
    %v941 = vadd.f32 %v376, %v940
    %942 = vmatprep.mubr.f32.mxu0 0.0
    %v943 = vand.u32 %v119, 4294901760
    %944 = vmatmul.mubr.f32.gmra.mrb[0].mxu0 %v943
    %v945 = vpop.f32.mrb[0].mxu0
    %v946 = vadd.f32 %v385, %v945
    %v947 = vpop.f32.mrb[0].mxu0
    %v948 = vadd.f32 %v387, %v947
    %949 = vmatprep.mubr.f32.mxu0 0.0
    %v950 = vand.u32 %v120, 4294901760
    %951 = vmatmul.mubr.f32.gmra.mrb[0].mxu0 %v950
    %v952 = vpop.f32.mrb[0].mxu0
    %v953 = vadd.f32 %v396, %v952
    %v954 = vpop.f32.mrb[0].mxu0
    %v955 = vadd.f32 %v398, %v954
    %956 = vmatprep.mubr.f32.mxu0 0.0
    %v957 = vand.u32 %v121, 4294901760
    %958 = vmatmul.mubr.f32.gmra.mrb[0].mxu0 %v957
    %v959 = vpop.f32.mrb[0].mxu0
    %v960 = vadd.f32 %v407, %v959
    %v961 = vpop.f32.mrb[0].mxu0
    %v962 = vadd.f32 %v409, %v961
    %963 = vmatprep.mubr.f32.mxu0 0.0
    %v964 = vand.u32 %v122, 4294901760
    %965 = vmatmul.mubr.f32.gmra.mrb[0].mxu0 %v964
    %v966 = vpop.f32.mrb[0].mxu0
    %v967 = vadd.f32 %v418, %v966
    %v968 = vpop.f32.mrb[0].mxu0
    %v969 = vadd.f32 %v420, %v968
    %970 = vmatprep.mubr.f32.mxu0 0.0
    %v971 = vand.u32 %v123, 4294901760
    %972 = vmatmul.mubr.f32.gmra.mrb[0].mxu0 %v971
    %v973 = vpop.f32.mrb[0].mxu0
    %v974 = vadd.f32 %v429, %v973
    %v975 = vpop.f32.mrb[0].mxu0
    %v976 = vadd.f32 %v431, %v975
    %977 = vmatprep.mubr.f32.mxu0 0.0
    %v978 = vand.u32 %v124, 4294901760
    %979 = vmatmul.mubr.f32.gmra.mrb[0].mxu0 %v978
    %v980 = vpop.f32.mrb[0].mxu0
    %v981 = vadd.f32 %v440, %v980
    %v982 = vpop.f32.mrb[0].mxu0
    %v983 = vadd.f32 %v442, %v982
    %984 = vmatprep.mubr.f32.mxu0 0.0
    %v985 = vand.u32 %v125, 4294901760
    %986 = vmatmul.mubr.f32.gmra.mrb[0].mxu0 %v985
    %v987 = vpop.f32.mrb[0].mxu0
    %v988 = vadd.f32 %v451, %v987
    %v989 = vpop.f32.mrb[0].mxu0
    %v990 = vadd.f32 %v453, %v989
    %991 = vmatprep.mubr.f32.mxu0 0.0
    %v992 = vand.u32 %v126, 4294901760
    %993 = vmatmul.mubr.f32.gmra.mrb[0].mxu0 %v992
    %v994 = vpop.f32.mrb[0].mxu0
    %v995 = vadd.f32 %v462, %v994
    %v996 = vpop.f32.mrb[0].mxu0
    %v997 = vadd.f32 %v464, %v996
    %998 = vmatprep.mubr.f32.mxu0 0.0
    %v999 = vand.u32 %v127, 4294901760
    %1000 = vmatmul.mubr.f32.gmra.mrb[0].mxu0 %v999
    %v1001 = vpop.f32.mrb[0].mxu0
    %v1002 = vadd.f32 %v473, %v1001
    %v1003 = vpop.f32.mrb[0].mxu0
    %v1004 = vadd.f32 %v475, %v1003
    %1005 = vmatprep.mubr.f32.mxu0 0.0
    %v1006 = vand.u32 %v128, 4294901760
    %1007 = vmatmul.mubr.f32.gmra.mrb[0].mxu0 %v1006
    %v1008 = vpop.f32.mrb[0].mxu0
    %v1009 = vadd.f32 %v484, %v1008
    %v1010 = vpop.f32.mrb[0].mxu0
    %v1011 = vadd.f32 %v486, %v1010
    %1012 = vmatprep.mubr.f32.mxu0 0.0
    %v1013 = vand.u32 %v129, 4294901760
    %1014 = vmatmul.mubr.f32.gmra.mrb[0].mxu0 %v1013
    %v1015 = vpop.f32.mrb[0].mxu0
    %v1016 = vadd.f32 %v495, %v1015
    %v1017 = vpop.f32.mrb[0].mxu0
    %v1018 = vadd.f32 %v497, %v1017
    %1019 = vmatprep.mubr.f32.mxu0 0.0
    %v1020 = vand.u32 %v130, 4294901760
    %1021 = vmatmul.mubr.f32.gmra.mrb[0].mxu0 %v1020
    %v1022 = vpop.f32.mrb[0].mxu0
    %v1023 = vadd.f32 %v506, %v1022
    %v1024 = vpop.f32.mrb[0].mxu0
    %v1025 = vadd.f32 %v508, %v1024
    %1026 = vmatprep.mubr.f32.mxu0 0.0
    %v1027 = vand.u32 %v131, 4294901760
    %1028 = vmatmul.mubr.f32.gmra.mrb[0].mxu0 %v1027
    %v1029 = vpop.f32.mrb[0].mxu0
    %v1030 = vadd.f32 %v517, %v1029
    %v1031 = vpop.f32.mrb[0].mxu0
    %v1032 = vadd.f32 %v519, %v1031
    %1033 = vmatprep.mubr.f32.mxu0 0.0
    %v1034 = vand.u32 %v132, 4294901760
    %1035 = vmatmul.mubr.f32.gmra.mrb[0].mxu0 %v1034
    %v1036 = vpop.f32.mrb[0].mxu0
    %v1037 = vadd.f32 %v528, %v1036
    %v1038 = vpop.f32.mrb[0].mxu0
    %v1039 = vadd.f32 %v530, %v1038
    %1040 = vmatprep.mubr.f32.mxu0 0.0
    %v1041 = vand.u32 %v133, 4294901760
    %1042 = vmatmul.mubr.f32.gmra.mrb[0].mxu0 %v1041
    %v1043 = vpop.f32.mrb[0].mxu0
    %v1044 = vadd.f32 %v539, %v1043
    %v1045 = vpop.f32.mrb[0].mxu0
    %v1046 = vadd.f32 %v541, %v1045
    %1047 = vmatprep.mubr.f32.mxu0 0.0
    %v1048 = vand.u32 %v134, 4294901760
    %1049 = vmatmul.mubr.f32.gmra.mrb[0].mxu0 %v1048
    %v1050 = vpop.f32.mrb[0].mxu0
    %v1051 = vadd.f32 %v550, %v1050
    %v1052 = vpop.f32.mrb[0].mxu0
    %v1053 = vadd.f32 %v552, %v1052
    %1054 = vmatprep.mubr.f32.mxu0 0.0
    %v1055 = vand.u32 %v135, 4294901760
    %1056 = vmatmul.mubr.f32.gmra.mrb[0].mxu0 %v1055
    %v1057 = vpop.f32.mrb[0].mxu0
    %v1058 = vadd.f32 %v561, %v1057
    %v1059 = vpop.f32.mrb[0].mxu0
    %v1060 = vadd.f32 %v563, %v1059
    %1061 = vmatprep.mubr.f32.mxu0 0.0
    %v1062 = vand.u32 %v136, 4294901760
    %1063 = vmatmul.mubr.f32.gmra.mrb[0].mxu0 %v1062
    %v1064 = vpop.f32.mrb[0].mxu0
    %v1065 = vadd.f32 %v572, %v1064
    %v1066 = vpop.f32.mrb[0].mxu0
    %v1067 = vadd.f32 %v574, %v1066
    %1068 = vmatprep.mubr.f32.mxu0 0.0
    %v1069 = vand.u32 %v137, 4294901760
    %1070 = vmatmul.mubr.f32.gmra.mrb[0].mxu0 %v1069
    %v1071 = vpop.f32.mrb[0].mxu0
    %v1072 = vadd.f32 %v583, %v1071
    %v1073 = vpop.f32.mrb[0].mxu0
    %v1074 = vadd.f32 %v585, %v1073
    %1075 = vmatprep.mubr.f32.mxu0 0.0
    %v1076 = vand.u32 %v138, 4294901760
    %1077 = vmatmul.mubr.f32.gmra.mrb[0].mxu0 %v1076
    %v1078 = vpop.f32.mrb[0].mxu0
    %v1079 = vadd.f32 %v594, %v1078
    %v1080 = vpop.f32.mrb[0].mxu0
    %v1081 = vadd.f32 %v596, %v1080
    %1082 = vmatprep.mubr.f32.mxu0 0.0
    %v1083 = vand.u32 %v139, 4294901760
    %1084 = vmatmul.mubr.f32.gmra.mrb[0].mxu0 %v1083
    %v1085 = vpop.f32.mrb[0].mxu0
    %v1086 = vadd.f32 %v605, %v1085
    %v1087 = vpop.f32.mrb[0].mxu0
    %v1088 = vadd.f32 %v607, %v1087
    %1089 = vmatprep.mubr.f32.mxu0 0.0
    %v1090 = vand.u32 %v140, 4294901760
    %1091 = vmatmul.mubr.f32.gmra.mrb[0].mxu0 %v1090
    %v1092 = vpop.f32.mrb[0].mxu0
    %v1093 = vadd.f32 %v616, %v1092
    %v1094 = vpop.f32.mrb[0].mxu0
    %v1095 = vadd.f32 %v618, %v1094
    %1096 = vmatprep.mubr.f32.mxu0 0.0
    %v1097 = vand.u32 %v141, 4294901760
    %1098 = vmatmul.mubr.f32.gmra.mrb[0].mxu0 %v1097
    %v1099 = vpop.f32.mrb[0].mxu0
    %v1100 = vadd.f32 %v627, %v1099
    %v1101 = vpop.f32.mrb[0].mxu0
    %v1102 = vadd.f32 %v629, %v1101
    %1103 = vmatprep.mubr.f32.mxu0 0.0
    %v1104 = vand.u32 %v142, 4294901760
    %1105 = vmatmul.mubr.f32.gmra.mrb[0].mxu0 %v1104
    %v1106 = vpop.f32.mrb[0].mxu0
    %v1107 = vadd.f32 %v638, %v1106
    %v1108 = vpop.f32.mrb[0].mxu0
    %v1109 = vadd.f32 %v640, %v1108
    %1110 = vmatprep.mubr.f32.mxu0 0.0
    %v1111 = vand.u32 %v143, 4294901760
    %1112 = vmatmul.mubr.f32.gmra.mrb[0].mxu0 %v1111
    %v1113 = vpop.f32.mrb[0].mxu0
    %v1114 = vadd.f32 %v649, %v1113
    %v1115 = vpop.f32.mrb[0].mxu0
    %v1116 = vadd.f32 %v651, %v1115
    %1117 = vmatprep.mubr.f32.mxu0 0.0
    %v1118 = vand.u32 %v144, 4294901760
    %1119 = vmatmul.mubr.f32.gmra.mrb[0].mxu0 %v1118
    %v1120 = vpop.f32.mrb[0].mxu0
    %v1121 = vadd.f32 %v660, %v1120
    %v1122 = vpop.f32.mrb[0].mxu0
    %v1123 = vadd.f32 %v662, %v1122
    %1124 = vmatprep.mubr.f32.mxu0 0.0
    %v1125 = vand.u32 %v145, 4294901760
    %1126 = vmatmul.mubr.f32.gmra.mrb[0].mxu0 %v1125
    %v1127 = vpop.f32.mrb[0].mxu0
    %v1128 = vadd.f32 %v671, %v1127
    %v1129 = vpop.f32.mrb[0].mxu0
    %v1130 = vadd.f32 %v673, %v1129
    %1131 = vmatprep.mubr.f32.mxu0 0.0
    %v1132 = vand.u32 %v146, 4294901760
    %1133 = vmatmul.mubr.f32.gmra.mrb[0].mxu0 %v1132
    %v1134 = vpop.f32.mrb[0].mxu0
    %v1135 = vadd.f32 %v682, %v1134
    %v1136 = vpop.f32.mrb[0].mxu0
    %v1137 = vadd.f32 %v684, %v1136
    %1138 = vmatprep.mubr.f32.mxu0 0.0
    %v1139 = vand.u32 %v147, 4294901760
    %1140 = vmatmul.mubr.f32.gmra.mrb[0].mxu0 %v1139
    %v1141 = vpop.f32.mrb[0].mxu0
    %v1142 = vadd.f32 %v693, %v1141
    %v1143 = vpop.f32.mrb[0].mxu0
    %v1144 = vadd.f32 %v695, %v1143
    %1145 = vdwg.mxu0
    %1146 = vmatprep.subr.mxu0 0.0
    %v1147 = vand.u32 %v148, 4294901760
    %v1148 = vsub.f32 %v148, %v1147
    %1149 = vmatpush1.xpose.msra.mxu0 %v1148
    %1150 = vmatprep.subr.mxu0 0.0
    %v1151 = vand.u32 %v149, 4294901760
    %v1152 = vsub.f32 %v149, %v1151
    %1153 = vmatpush1.xpose.msra.mxu0 %v1152
    %1154 = vmatprep.subr.mxu0 0.0
    %v1155 = vand.u32 %v150, 4294901760
    %v1156 = vsub.f32 %v150, %v1155
    %1157 = vmatpush1.xpose.msra.mxu0 %v1156
    %1158 = vmatprep.subr.mxu0 0.0
    %v1159 = vand.u32 %v151, 4294901760
    %v1160 = vsub.f32 %v151, %v1159
    %1161 = vmatpush1.xpose.msra.mxu0 %v1160
    %1162 = vmatprep.subr.mxu0 0.0
    %v1163 = vand.u32 %v152, 4294901760
    %v1164 = vsub.f32 %v152, %v1163
    %1165 = vmatpush1.xpose.msra.mxu0 %v1164
    %1166 = vmatprep.subr.mxu0 0.0
    %v1167 = vand.u32 %v153, 4294901760
    %v1168 = vsub.f32 %v153, %v1167
    %1169 = vmatpush1.xpose.msra.mxu0 %v1168
    %1170 = vmatprep.subr.mxu0 0.0
    %v1171 = vand.u32 %v154, 4294901760
    %v1172 = vsub.f32 %v154, %v1171
    %1173 = vmatpush1.xpose.msra.mxu0 %v1172
    %1174 = vmatprep.subr.mxu0 0.0
    %v1175 = vand.u32 %v155, 4294901760
    %v1176 = vsub.f32 %v155, %v1175
    %1177 = vmatpush1.xpose.msra.mxu0 %v1176
    %1178 = vmatprep.subr.mxu0 0.0
    %v1179 = vand.u32 %v156, 4294901760
    %v1180 = vsub.f32 %v156, %v1179
    %1181 = vmatpush1.xpose.msra.mxu0 %v1180
    %1182 = vmatprep.subr.mxu0 0.0
    %v1183 = vand.u32 %v157, 4294901760
    %v1184 = vsub.f32 %v157, %v1183
    %1185 = vmatpush1.xpose.msra.mxu0 %v1184
    %1186 = vmatprep.subr.mxu0 0.0
    %v1187 = vand.u32 %v158, 4294901760
    %v1188 = vsub.f32 %v158, %v1187
    %1189 = vmatpush1.xpose.msra.mxu0 %v1188
    %1190 = vmatprep.subr.mxu0 0.0
    %v1191 = vand.u32 %v159, 4294901760
    %v1192 = vsub.f32 %v159, %v1191
    %1193 = vmatpush1.xpose.msra.mxu0 %v1192
    %1194 = vmatprep.subr.mxu0 0.0
    %v1195 = vand.u32 %v160, 4294901760
    %v1196 = vsub.f32 %v160, %v1195
    %1197 = vmatpush1.xpose.msra.mxu0 %v1196
    %1198 = vmatprep.subr.mxu0 0.0
    %v1199 = vand.u32 %v161, 4294901760
    %v1200 = vsub.f32 %v161, %v1199
    %1201 = vmatpush1.xpose.msra.mxu0 %v1200
    %1202 = vmatprep.subr.mxu0 0.0
    %v1203 = vand.u32 %v162, 4294901760
    %v1204 = vsub.f32 %v162, %v1203
    %1205 = vmatpush1.xpose.msra.mxu0 %v1204
    %1206 = vmatprep.subr.mxu0 0.0
    %v1207 = vand.u32 %v163, 4294901760
    %v1208 = vsub.f32 %v163, %v1207
    %1209 = vmatpush1.xpose.msra.mxu0 %v1208
    %1210 = vmatprep.subr.mxu0 0.0
    %v1211 = vand.u32 %v164, 4294901760
    %v1212 = vsub.f32 %v164, %v1211
    %1213 = vmatpush1.xpose.msra.mxu0 %v1212
    %1214 = vmatprep.subr.mxu0 0.0
    %v1215 = vand.u32 %v165, 4294901760
    %v1216 = vsub.f32 %v165, %v1215
    %1217 = vmatpush1.xpose.msra.mxu0 %v1216
    %1218 = vmatprep.subr.mxu0 0.0
    %v1219 = vand.u32 %v166, 4294901760
    %v1220 = vsub.f32 %v166, %v1219
    %1221 = vmatpush1.xpose.msra.mxu0 %v1220
    %1222 = vmatprep.subr.mxu0 0.0
    %v1223 = vand.u32 %v167, 4294901760
    %v1224 = vsub.f32 %v167, %v1223
    %1225 = vmatpush1.xpose.msra.mxu0 %v1224
    %1226 = vmatprep.subr.mxu0 0.0
    %v1227 = vand.u32 %v168, 4294901760
    %v1228 = vsub.f32 %v168, %v1227
    %1229 = vmatpush1.xpose.msra.mxu0 %v1228
    %1230 = vmatprep.subr.mxu0 0.0
    %v1231 = vand.u32 %v169, 4294901760
    %v1232 = vsub.f32 %v169, %v1231
    %1233 = vmatpush1.xpose.msra.mxu0 %v1232
    %1234 = vmatprep.subr.mxu0 0.0
    %v1235 = vand.u32 %v170, 4294901760
    %v1236 = vsub.f32 %v170, %v1235
    %1237 = vmatpush1.xpose.msra.mxu0 %v1236
    %1238 = vmatprep.subr.mxu0 0.0
    %v1239 = vand.u32 %v171, 4294901760
    %v1240 = vsub.f32 %v171, %v1239
    %1241 = vmatpush1.xpose.msra.mxu0 %v1240
    %1242 = vmatprep.subr.mxu0 0.0
    %v1243 = vand.u32 %v172, 4294901760
    %v1244 = vsub.f32 %v172, %v1243
    %1245 = vmatpush1.xpose.msra.mxu0 %v1244
    %1246 = vmatprep.subr.mxu0 0.0
    %v1247 = vand.u32 %v173, 4294901760
    %v1248 = vsub.f32 %v173, %v1247
    %1249 = vmatpush1.xpose.msra.mxu0 %v1248
    %1250 = vmatprep.subr.mxu0 0.0
    %v1251 = vand.u32 %v174, 4294901760
    %v1252 = vsub.f32 %v174, %v1251
    %1253 = vmatpush1.xpose.msra.mxu0 %v1252
    %1254 = vmatprep.subr.mxu0 0.0
    %v1255 = vand.u32 %v175, 4294901760
    %v1256 = vsub.f32 %v175, %v1255
    %1257 = vmatpush1.xpose.msra.mxu0 %v1256
    %1258 = vmatprep.subr.mxu0 0.0
    %v1259 = vand.u32 %v176, 4294901760
    %v1260 = vsub.f32 %v176, %v1259
    %1261 = vmatpush1.xpose.msra.mxu0 %v1260
    %1262 = vmatprep.subr.mxu0 0.0
    %v1263 = vand.u32 %v177, 4294901760
    %v1264 = vsub.f32 %v177, %v1263
    %1265 = vmatpush1.xpose.msra.mxu0 %v1264
    %1266 = vmatprep.subr.mxu0 0.0
    %v1267 = vand.u32 %v178, 4294901760
    %v1268 = vsub.f32 %v178, %v1267
    %1269 = vmatpush1.xpose.msra.mxu0 %v1268
    %1270 = vmatprep.subr.mxu0 0.0
    %v1271 = vand.u32 %v179, 4294901760
    %v1272 = vsub.f32 %v179, %v1271
    %1273 = vmatpush1.xpose.msra.mxu0 %v1272
    %1274 = vmatprep.mubr.f32.mxu0 0.0
    %v1275 = vand.u32 %v116, 4294901760
    %v1276 = vsub.f32 %v116, %v1275
    %1277 = vmatmul.mubr.f32.gmra.mrb[0].mxu0 %v1276
    %v1278 = vpop.f32.mrb[0].mxu0
    %v1279 = vadd.f32 %v925, %v1278
    %v1280 = vpop.f32.mrb[0].mxu0
    %v1281 = vadd.f32 %v927, %v1280
    %1282 = vmatprep.mubr.f32.mxu0 0.0
    %v1283 = vand.u32 %v117, 4294901760
    %v1284 = vsub.f32 %v117, %v1283
    %1285 = vmatmul.mubr.f32.gmra.mrb[0].mxu0 %v1284
    %v1286 = vpop.f32.mrb[0].mxu0
    %v1287 = vadd.f32 %v932, %v1286
    %v1288 = vpop.f32.mrb[0].mxu0
    %v1289 = vadd.f32 %v934, %v1288
    %1290 = vmatprep.mubr.f32.mxu0 0.0
    %v1291 = vand.u32 %v118, 4294901760
    %v1292 = vsub.f32 %v118, %v1291
    %1293 = vmatmul.mubr.f32.gmra.mrb[0].mxu0 %v1292
    %v1294 = vpop.f32.mrb[0].mxu0
    %v1295 = vadd.f32 %v939, %v1294
    %v1296 = vpop.f32.mrb[0].mxu0
    %v1297 = vadd.f32 %v941, %v1296
    %1298 = vmatprep.mubr.f32.mxu0 0.0
    %v1299 = vand.u32 %v119, 4294901760
    %v1300 = vsub.f32 %v119, %v1299
    %1301 = vmatmul.mubr.f32.gmra.mrb[0].mxu0 %v1300
    %v1302 = vpop.f32.mrb[0].mxu0
    %v1303 = vadd.f32 %v946, %v1302
    %v1304 = vpop.f32.mrb[0].mxu0
    %v1305 = vadd.f32 %v948, %v1304
    %1306 = vmatprep.mubr.f32.mxu0 0.0
    %v1307 = vand.u32 %v120, 4294901760
    %v1308 = vsub.f32 %v120, %v1307
    %1309 = vmatmul.mubr.f32.gmra.mrb[0].mxu0 %v1308
    %v1310 = vpop.f32.mrb[0].mxu0
    %v1311 = vadd.f32 %v953, %v1310
    %v1312 = vpop.f32.mrb[0].mxu0
    %v1313 = vadd.f32 %v955, %v1312
    %1314 = vmatprep.mubr.f32.mxu0 0.0
    %v1315 = vand.u32 %v121, 4294901760
    %v1316 = vsub.f32 %v121, %v1315
    %1317 = vmatmul.mubr.f32.gmra.mrb[0].mxu0 %v1316
    %v1318 = vpop.f32.mrb[0].mxu0
    %v1319 = vadd.f32 %v960, %v1318
    %v1320 = vpop.f32.mrb[0].mxu0
    %v1321 = vadd.f32 %v962, %v1320
    %1322 = vmatprep.mubr.f32.mxu0 0.0
    %v1323 = vand.u32 %v122, 4294901760
    %v1324 = vsub.f32 %v122, %v1323
    %1325 = vmatmul.mubr.f32.gmra.mrb[0].mxu0 %v1324
    %v1326 = vpop.f32.mrb[0].mxu0
    %v1327 = vadd.f32 %v967, %v1326
    %v1328 = vpop.f32.mrb[0].mxu0
    %v1329 = vadd.f32 %v969, %v1328
    %1330 = vmatprep.mubr.f32.mxu0 0.0
    %v1331 = vand.u32 %v123, 4294901760
    %v1332 = vsub.f32 %v123, %v1331
    %1333 = vmatmul.mubr.f32.gmra.mrb[0].mxu0 %v1332
    %v1334 = vpop.f32.mrb[0].mxu0
    %v1335 = vadd.f32 %v974, %v1334
    %v1336 = vpop.f32.mrb[0].mxu0
    %v1337 = vadd.f32 %v976, %v1336
    %1338 = vmatprep.mubr.f32.mxu0 0.0
    %v1339 = vand.u32 %v124, 4294901760
    %v1340 = vsub.f32 %v124, %v1339
    %1341 = vmatmul.mubr.f32.gmra.mrb[0].mxu0 %v1340
    %v1342 = vpop.f32.mrb[0].mxu0
    %v1343 = vadd.f32 %v981, %v1342
    %v1344 = vpop.f32.mrb[0].mxu0
    %v1345 = vadd.f32 %v983, %v1344
    %1346 = vmatprep.mubr.f32.mxu0 0.0
    %v1347 = vand.u32 %v125, 4294901760
    %v1348 = vsub.f32 %v125, %v1347
    %1349 = vmatmul.mubr.f32.gmra.mrb[0].mxu0 %v1348
    %v1350 = vpop.f32.mrb[0].mxu0
    %v1351 = vadd.f32 %v988, %v1350
    %v1352 = vpop.f32.mrb[0].mxu0
    %v1353 = vadd.f32 %v990, %v1352
    %1354 = vmatprep.mubr.f32.mxu0 0.0
    %v1355 = vand.u32 %v126, 4294901760
    %v1356 = vsub.f32 %v126, %v1355
    %1357 = vmatmul.mubr.f32.gmra.mrb[0].mxu0 %v1356
    %v1358 = vpop.f32.mrb[0].mxu0
    %v1359 = vadd.f32 %v995, %v1358
    %v1360 = vpop.f32.mrb[0].mxu0
    %v1361 = vadd.f32 %v997, %v1360
    %1362 = vmatprep.mubr.f32.mxu0 0.0
    %v1363 = vand.u32 %v127, 4294901760
    %v1364 = vsub.f32 %v127, %v1363
    %1365 = vmatmul.mubr.f32.gmra.mrb[0].mxu0 %v1364
    %v1366 = vpop.f32.mrb[0].mxu0
    %v1367 = vadd.f32 %v1002, %v1366
    %v1368 = vpop.f32.mrb[0].mxu0
    %v1369 = vadd.f32 %v1004, %v1368
    %1370 = vmatprep.mubr.f32.mxu0 0.0
    %v1371 = vand.u32 %v128, 4294901760
    %v1372 = vsub.f32 %v128, %v1371
    %1373 = vmatmul.mubr.f32.gmra.mrb[0].mxu0 %v1372
    %v1374 = vpop.f32.mrb[0].mxu0
    %v1375 = vadd.f32 %v1009, %v1374
    %v1376 = vpop.f32.mrb[0].mxu0
    %v1377 = vadd.f32 %v1011, %v1376
    %1378 = vmatprep.mubr.f32.mxu0 0.0
    %v1379 = vand.u32 %v129, 4294901760
    %v1380 = vsub.f32 %v129, %v1379
    %1381 = vmatmul.mubr.f32.gmra.mrb[0].mxu0 %v1380
    %v1382 = vpop.f32.mrb[0].mxu0
    %v1383 = vadd.f32 %v1016, %v1382
    %v1384 = vpop.f32.mrb[0].mxu0
    %v1385 = vadd.f32 %v1018, %v1384
    %1386 = vmatprep.mubr.f32.mxu0 0.0
    %v1387 = vand.u32 %v130, 4294901760
    %v1388 = vsub.f32 %v130, %v1387
    %1389 = vmatmul.mubr.f32.gmra.mrb[0].mxu0 %v1388
    %v1390 = vpop.f32.mrb[0].mxu0
    %v1391 = vadd.f32 %v1023, %v1390
    %v1392 = vpop.f32.mrb[0].mxu0
    %v1393 = vadd.f32 %v1025, %v1392
    %1394 = vmatprep.mubr.f32.mxu0 0.0
    %v1395 = vand.u32 %v131, 4294901760
    %v1396 = vsub.f32 %v131, %v1395
    %1397 = vmatmul.mubr.f32.gmra.mrb[0].mxu0 %v1396
    %v1398 = vpop.f32.mrb[0].mxu0
    %v1399 = vadd.f32 %v1030, %v1398
    %v1400 = vpop.f32.mrb[0].mxu0
    %v1401 = vadd.f32 %v1032, %v1400
    %1402 = vmatprep.mubr.f32.mxu0 0.0
    %v1403 = vand.u32 %v132, 4294901760
    %v1404 = vsub.f32 %v132, %v1403
    %1405 = vmatmul.mubr.f32.gmra.mrb[0].mxu0 %v1404
    %v1406 = vpop.f32.mrb[0].mxu0
    %v1407 = vadd.f32 %v1037, %v1406
    %v1408 = vpop.f32.mrb[0].mxu0
    %v1409 = vadd.f32 %v1039, %v1408
    %1410 = vmatprep.mubr.f32.mxu0 0.0
    %v1411 = vand.u32 %v133, 4294901760
    %v1412 = vsub.f32 %v133, %v1411
    %1413 = vmatmul.mubr.f32.gmra.mrb[0].mxu0 %v1412
    %v1414 = vpop.f32.mrb[0].mxu0
    %v1415 = vadd.f32 %v1044, %v1414
    %v1416 = vpop.f32.mrb[0].mxu0
    %v1417 = vadd.f32 %v1046, %v1416
    %1418 = vmatprep.mubr.f32.mxu0 0.0
    %v1419 = vand.u32 %v134, 4294901760
    %v1420 = vsub.f32 %v134, %v1419
    %1421 = vmatmul.mubr.f32.gmra.mrb[0].mxu0 %v1420
    %v1422 = vpop.f32.mrb[0].mxu0
    %v1423 = vadd.f32 %v1051, %v1422
    %v1424 = vpop.f32.mrb[0].mxu0
    %v1425 = vadd.f32 %v1053, %v1424
    %1426 = vmatprep.mubr.f32.mxu0 0.0
    %v1427 = vand.u32 %v135, 4294901760
    %v1428 = vsub.f32 %v135, %v1427
    %1429 = vmatmul.mubr.f32.gmra.mrb[0].mxu0 %v1428
    %v1430 = vpop.f32.mrb[0].mxu0
    %v1431 = vadd.f32 %v1058, %v1430
    %v1432 = vpop.f32.mrb[0].mxu0
    %v1433 = vadd.f32 %v1060, %v1432
    %1434 = vmatprep.mubr.f32.mxu0 0.0
    %v1435 = vand.u32 %v136, 4294901760
    %v1436 = vsub.f32 %v136, %v1435
    %1437 = vmatmul.mubr.f32.gmra.mrb[0].mxu0 %v1436
    %v1438 = vpop.f32.mrb[0].mxu0
    %v1439 = vadd.f32 %v1065, %v1438
    %v1440 = vpop.f32.mrb[0].mxu0
    %v1441 = vadd.f32 %v1067, %v1440
    %1442 = vmatprep.mubr.f32.mxu0 0.0
    %v1443 = vand.u32 %v137, 4294901760
    %v1444 = vsub.f32 %v137, %v1443
    %1445 = vmatmul.mubr.f32.gmra.mrb[0].mxu0 %v1444
    %v1446 = vpop.f32.mrb[0].mxu0
    %v1447 = vadd.f32 %v1072, %v1446
    %v1448 = vpop.f32.mrb[0].mxu0
    %v1449 = vadd.f32 %v1074, %v1448
    %1450 = vmatprep.mubr.f32.mxu0 0.0
    %v1451 = vand.u32 %v138, 4294901760
    %v1452 = vsub.f32 %v138, %v1451
    %1453 = vmatmul.mubr.f32.gmra.mrb[0].mxu0 %v1452
    %v1454 = vpop.f32.mrb[0].mxu0
    %v1455 = vadd.f32 %v1079, %v1454
    %v1456 = vpop.f32.mrb[0].mxu0
    %v1457 = vadd.f32 %v1081, %v1456
    %1458 = vmatprep.mubr.f32.mxu0 0.0
    %v1459 = vand.u32 %v139, 4294901760
    %v1460 = vsub.f32 %v139, %v1459
    %1461 = vmatmul.mubr.f32.gmra.mrb[0].mxu0 %v1460
    %v1462 = vpop.f32.mrb[0].mxu0
    %v1463 = vadd.f32 %v1086, %v1462
    %v1464 = vpop.f32.mrb[0].mxu0
    %v1465 = vadd.f32 %v1088, %v1464
    %1466 = vmatprep.mubr.f32.mxu0 0.0
    %v1467 = vand.u32 %v140, 4294901760
    %v1468 = vsub.f32 %v140, %v1467
    %1469 = vmatmul.mubr.f32.gmra.mrb[0].mxu0 %v1468
    %v1470 = vpop.f32.mrb[0].mxu0
    %v1471 = vadd.f32 %v1093, %v1470
    %v1472 = vpop.f32.mrb[0].mxu0
    %v1473 = vadd.f32 %v1095, %v1472
    %1474 = vmatprep.mubr.f32.mxu0 0.0
    %v1475 = vand.u32 %v141, 4294901760
    %v1476 = vsub.f32 %v141, %v1475
    %1477 = vmatmul.mubr.f32.gmra.mrb[0].mxu0 %v1476
    %v1478 = vpop.f32.mrb[0].mxu0
    %v1479 = vadd.f32 %v1100, %v1478
    %v1480 = vpop.f32.mrb[0].mxu0
    %v1481 = vadd.f32 %v1102, %v1480
    %1482 = vmatprep.mubr.f32.mxu0 0.0
    %v1483 = vand.u32 %v142, 4294901760
    %v1484 = vsub.f32 %v142, %v1483
    %1485 = vmatmul.mubr.f32.gmra.mrb[0].mxu0 %v1484
    %v1486 = vpop.f32.mrb[0].mxu0
    %v1487 = vadd.f32 %v1107, %v1486
    %v1488 = vpop.f32.mrb[0].mxu0
    %v1489 = vadd.f32 %v1109, %v1488
    %1490 = vmatprep.mubr.f32.mxu0 0.0
    %v1491 = vand.u32 %v143, 4294901760
    %v1492 = vsub.f32 %v143, %v1491
    %1493 = vmatmul.mubr.f32.gmra.mrb[0].mxu0 %v1492
    %v1494 = vpop.f32.mrb[0].mxu0
    %v1495 = vadd.f32 %v1114, %v1494
    %v1496 = vpop.f32.mrb[0].mxu0
    %v1497 = vadd.f32 %v1116, %v1496
    %1498 = vmatprep.mubr.f32.mxu0 0.0
    %v1499 = vand.u32 %v144, 4294901760
    %v1500 = vsub.f32 %v144, %v1499
    %1501 = vmatmul.mubr.f32.gmra.mrb[0].mxu0 %v1500
    %v1502 = vpop.f32.mrb[0].mxu0
    %v1503 = vadd.f32 %v1121, %v1502
    %v1504 = vpop.f32.mrb[0].mxu0
    %v1505 = vadd.f32 %v1123, %v1504
    %1506 = vmatprep.mubr.f32.mxu0 0.0
    %v1507 = vand.u32 %v145, 4294901760
    %v1508 = vsub.f32 %v145, %v1507
    %1509 = vmatmul.mubr.f32.gmra.mrb[0].mxu0 %v1508
    %v1510 = vpop.f32.mrb[0].mxu0
    %v1511 = vadd.f32 %v1128, %v1510
    %v1512 = vpop.f32.mrb[0].mxu0
    %v1513 = vadd.f32 %v1130, %v1512
    %1514 = vmatprep.mubr.f32.mxu0 0.0
    %v1515 = vand.u32 %v146, 4294901760
    %v1516 = vsub.f32 %v146, %v1515
    %1517 = vmatmul.mubr.f32.gmra.mrb[0].mxu0 %v1516
    %v1518 = vpop.f32.mrb[0].mxu0
    %v1519 = vadd.f32 %v1135, %v1518
    %v1520 = vpop.f32.mrb[0].mxu0
    %v1521 = vadd.f32 %v1137, %v1520
    %1522 = vmatprep.mubr.f32.mxu0 0.0
    %v1523 = vand.u32 %v147, 4294901760
    %v1524 = vsub.f32 %v147, %v1523
    %1525 = vmatmul.mubr.f32.gmra.mrb[0].mxu0 %v1524
    %v1526 = vpop.f32.mrb[0].mxu0
    %v1527 = vadd.f32 %v1142, %v1526
    %v1528 = vpop.f32.mrb[0].mxu0
    %v1529 = vadd.f32 %v1144, %v1528
    %1530 = vdwg.mxu0
    %1531 = vmatprep.subr.mxu0 0.0
    %v1532 = vand.u32 %v148, 4294901760
    %1533 = vmatpush1.xpose.msra.mxu0 %v1532
    %1534 = vmatprep.subr.mxu0 0.0
    %v1535 = vand.u32 %v149, 4294901760
    %1536 = vmatpush1.xpose.msra.mxu0 %v1535
    %1537 = vmatprep.subr.mxu0 0.0
    %v1538 = vand.u32 %v150, 4294901760
    %1539 = vmatpush1.xpose.msra.mxu0 %v1538
    %1540 = vmatprep.subr.mxu0 0.0
    %v1541 = vand.u32 %v151, 4294901760
    %1542 = vmatpush1.xpose.msra.mxu0 %v1541
    %1543 = vmatprep.subr.mxu0 0.0
    %v1544 = vand.u32 %v152, 4294901760
    %1545 = vmatpush1.xpose.msra.mxu0 %v1544
    %1546 = vmatprep.subr.mxu0 0.0
    %v1547 = vand.u32 %v153, 4294901760
    %1548 = vmatpush1.xpose.msra.mxu0 %v1547
    %1549 = vmatprep.subr.mxu0 0.0
    %v1550 = vand.u32 %v154, 4294901760
    %1551 = vmatpush1.xpose.msra.mxu0 %v1550
    %1552 = vmatprep.subr.mxu0 0.0
    %v1553 = vand.u32 %v155, 4294901760
    %1554 = vmatpush1.xpose.msra.mxu0 %v1553
    %1555 = vmatprep.subr.mxu0 0.0
    %v1556 = vand.u32 %v156, 4294901760
    %1557 = vmatpush1.xpose.msra.mxu0 %v1556
    %1558 = vmatprep.subr.mxu0 0.0
    %v1559 = vand.u32 %v157, 4294901760
    %1560 = vmatpush1.xpose.msra.mxu0 %v1559
    %1561 = vmatprep.subr.mxu0 0.0
    %v1562 = vand.u32 %v158, 4294901760
    %1563 = vmatpush1.xpose.msra.mxu0 %v1562
    %1564 = vmatprep.subr.mxu0 0.0
    %v1565 = vand.u32 %v159, 4294901760
    %1566 = vmatpush1.xpose.msra.mxu0 %v1565
    %1567 = vmatprep.subr.mxu0 0.0
    %v1568 = vand.u32 %v160, 4294901760
    %1569 = vmatpush1.xpose.msra.mxu0 %v1568
    %1570 = vmatprep.subr.mxu0 0.0
    %v1571 = vand.u32 %v161, 4294901760
    %1572 = vmatpush1.xpose.msra.mxu0 %v1571
    %1573 = vmatprep.subr.mxu0 0.0
    %v1574 = vand.u32 %v162, 4294901760
    %1575 = vmatpush1.xpose.msra.mxu0 %v1574
    %1576 = vmatprep.subr.mxu0 0.0
    %v1577 = vand.u32 %v163, 4294901760
    %1578 = vmatpush1.xpose.msra.mxu0 %v1577
    %1579 = vmatprep.subr.mxu0 0.0
    %v1580 = vand.u32 %v164, 4294901760
    %1581 = vmatpush1.xpose.msra.mxu0 %v1580
    %1582 = vmatprep.subr.mxu0 0.0
    %v1583 = vand.u32 %v165, 4294901760
    %1584 = vmatpush1.xpose.msra.mxu0 %v1583
    %1585 = vmatprep.subr.mxu0 0.0
    %v1586 = vand.u32 %v166, 4294901760
    %1587 = vmatpush1.xpose.msra.mxu0 %v1586
    %1588 = vmatprep.subr.mxu0 0.0
    %v1589 = vand.u32 %v167, 4294901760
    %1590 = vmatpush1.xpose.msra.mxu0 %v1589
    %1591 = vmatprep.subr.mxu0 0.0
    %v1592 = vand.u32 %v168, 4294901760
    %1593 = vmatpush1.xpose.msra.mxu0 %v1592
    %1594 = vmatprep.subr.mxu0 0.0
    %v1595 = vand.u32 %v169, 4294901760
    %1596 = vmatpush1.xpose.msra.mxu0 %v1595
    %1597 = vmatprep.subr.mxu0 0.0
    %v1598 = vand.u32 %v170, 4294901760
    %1599 = vmatpush1.xpose.msra.mxu0 %v1598
    %1600 = vmatprep.subr.mxu0 0.0
    %v1601 = vand.u32 %v171, 4294901760
    %1602 = vmatpush1.xpose.msra.mxu0 %v1601
    %1603 = vmatprep.subr.mxu0 0.0
    %v1604 = vand.u32 %v172, 4294901760
    %1605 = vmatpush1.xpose.msra.mxu0 %v1604
    %1606 = vmatprep.subr.mxu0 0.0
    %v1607 = vand.u32 %v173, 4294901760
    %1608 = vmatpush1.xpose.msra.mxu0 %v1607
    %1609 = vmatprep.subr.mxu0 0.0
    %v1610 = vand.u32 %v174, 4294901760
    %1611 = vmatpush1.xpose.msra.mxu0 %v1610
    %1612 = vmatprep.subr.mxu0 0.0
    %v1613 = vand.u32 %v175, 4294901760
    %1614 = vmatpush1.xpose.msra.mxu0 %v1613
    %1615 = vmatprep.subr.mxu0 0.0
    %v1616 = vand.u32 %v176, 4294901760
    %1617 = vmatpush1.xpose.msra.mxu0 %v1616
    %1618 = vmatprep.subr.mxu0 0.0
    %v1619 = vand.u32 %v177, 4294901760
    %1620 = vmatpush1.xpose.msra.mxu0 %v1619
    %1621 = vmatprep.subr.mxu0 0.0
    %v1622 = vand.u32 %v178, 4294901760
    %1623 = vmatpush1.xpose.msra.mxu0 %v1622
    %1624 = vmatprep.subr.mxu0 0.0
    %v1625 = vand.u32 %v179, 4294901760
    %1626 = vmatpush1.xpose.msra.mxu0 %v1625
    %1627 = vmatprep.mubr.f32.mxu0 0.0
    %v1628 = vand.u32 %v116, 4294901760
    %v1629 = vsub.f32 %v116, %v1628
    %v1630 = vand.u32 %v1629, 4294901760
    %1631 = vmatmul.mubr.f32.gmra.mrb[0].mxu0 %v1630
    %v1632 = vpop.f32.mrb[0].mxu0
    %v1633 = vadd.f32 %v1279, %v1632
    %v1634 = vpop.f32.mrb[0].mxu0
    %v1635 = vadd.f32 %v1281, %v1634
    %1636 = vmatprep.mubr.f32.mxu0 0.0
    %v1637 = vand.u32 %v117, 4294901760
    %v1638 = vsub.f32 %v117, %v1637
    %v1639 = vand.u32 %v1638, 4294901760
    %1640 = vmatmul.mubr.f32.gmra.mrb[0].mxu0 %v1639
    %v1641 = vpop.f32.mrb[0].mxu0
    %v1642 = vadd.f32 %v1287, %v1641
    %v1643 = vpop.f32.mrb[0].mxu0
    %v1644 = vadd.f32 %v1289, %v1643
    %1645 = vmatprep.mubr.f32.mxu0 0.0
    %v1646 = vand.u32 %v118, 4294901760
    %v1647 = vsub.f32 %v118, %v1646
    %v1648 = vand.u32 %v1647, 4294901760
    %1649 = vmatmul.mubr.f32.gmra.mrb[0].mxu0 %v1648
    %v1650 = vpop.f32.mrb[0].mxu0
    %v1651 = vadd.f32 %v1295, %v1650
    %v1652 = vpop.f32.mrb[0].mxu0
    %v1653 = vadd.f32 %v1297, %v1652
    %1654 = vmatprep.mubr.f32.mxu0 0.0
    %v1655 = vand.u32 %v119, 4294901760
    %v1656 = vsub.f32 %v119, %v1655
    %v1657 = vand.u32 %v1656, 4294901760
    %1658 = vmatmul.mubr.f32.gmra.mrb[0].mxu0 %v1657
    %v1659 = vpop.f32.mrb[0].mxu0
    %v1660 = vadd.f32 %v1303, %v1659
    %v1661 = vpop.f32.mrb[0].mxu0
    %v1662 = vadd.f32 %v1305, %v1661
    %1663 = vmatprep.mubr.f32.mxu0 0.0
    %v1664 = vand.u32 %v120, 4294901760
    %v1665 = vsub.f32 %v120, %v1664
    %v1666 = vand.u32 %v1665, 4294901760
    %1667 = vmatmul.mubr.f32.gmra.mrb[0].mxu0 %v1666
    %v1668 = vpop.f32.mrb[0].mxu0
    %v1669 = vadd.f32 %v1311, %v1668
    %v1670 = vpop.f32.mrb[0].mxu0
    %v1671 = vadd.f32 %v1313, %v1670
    %1672 = vmatprep.mubr.f32.mxu0 0.0
    %v1673 = vand.u32 %v121, 4294901760
    %v1674 = vsub.f32 %v121, %v1673
    %v1675 = vand.u32 %v1674, 4294901760
    %1676 = vmatmul.mubr.f32.gmra.mrb[0].mxu0 %v1675
    %v1677 = vpop.f32.mrb[0].mxu0
    %v1678 = vadd.f32 %v1319, %v1677
    %v1679 = vpop.f32.mrb[0].mxu0
    %v1680 = vadd.f32 %v1321, %v1679
    %1681 = vmatprep.mubr.f32.mxu0 0.0
    %v1682 = vand.u32 %v122, 4294901760
    %v1683 = vsub.f32 %v122, %v1682
    %v1684 = vand.u32 %v1683, 4294901760
    %1685 = vmatmul.mubr.f32.gmra.mrb[0].mxu0 %v1684
    %v1686 = vpop.f32.mrb[0].mxu0
    %v1687 = vadd.f32 %v1327, %v1686
    %v1688 = vpop.f32.mrb[0].mxu0
    %v1689 = vadd.f32 %v1329, %v1688
    %1690 = vmatprep.mubr.f32.mxu0 0.0
    %v1691 = vand.u32 %v123, 4294901760
    %v1692 = vsub.f32 %v123, %v1691
    %v1693 = vand.u32 %v1692, 4294901760
    %1694 = vmatmul.mubr.f32.gmra.mrb[0].mxu0 %v1693
    %v1695 = vpop.f32.mrb[0].mxu0
    %v1696 = vadd.f32 %v1335, %v1695
    %v1697 = vpop.f32.mrb[0].mxu0
    %v1698 = vadd.f32 %v1337, %v1697
    %1699 = vmatprep.mubr.f32.mxu0 0.0
    %v1700 = vand.u32 %v124, 4294901760
    %v1701 = vsub.f32 %v124, %v1700
    %v1702 = vand.u32 %v1701, 4294901760
    %1703 = vmatmul.mubr.f32.gmra.mrb[0].mxu0 %v1702
    %v1704 = vpop.f32.mrb[0].mxu0
    %v1705 = vadd.f32 %v1343, %v1704
    %v1706 = vpop.f32.mrb[0].mxu0
    %v1707 = vadd.f32 %v1345, %v1706
    %1708 = vmatprep.mubr.f32.mxu0 0.0
    %v1709 = vand.u32 %v125, 4294901760
    %v1710 = vsub.f32 %v125, %v1709
    %v1711 = vand.u32 %v1710, 4294901760
    %1712 = vmatmul.mubr.f32.gmra.mrb[0].mxu0 %v1711
    %v1713 = vpop.f32.mrb[0].mxu0
    %v1714 = vadd.f32 %v1351, %v1713
    %v1715 = vpop.f32.mrb[0].mxu0
    %v1716 = vadd.f32 %v1353, %v1715
    %1717 = vmatprep.mubr.f32.mxu0 0.0
    %v1718 = vand.u32 %v126, 4294901760
    %v1719 = vsub.f32 %v126, %v1718
    %v1720 = vand.u32 %v1719, 4294901760
    %1721 = vmatmul.mubr.f32.gmra.mrb[0].mxu0 %v1720
    %v1722 = vpop.f32.mrb[0].mxu0
    %v1723 = vadd.f32 %v1359, %v1722
    %v1724 = vpop.f32.mrb[0].mxu0
    %v1725 = vadd.f32 %v1361, %v1724
    %1726 = vmatprep.mubr.f32.mxu0 0.0
    %v1727 = vand.u32 %v127, 4294901760
    %v1728 = vsub.f32 %v127, %v1727
    %v1729 = vand.u32 %v1728, 4294901760
    %1730 = vmatmul.mubr.f32.gmra.mrb[0].mxu0 %v1729
    %v1731 = vpop.f32.mrb[0].mxu0
    %v1732 = vadd.f32 %v1367, %v1731
    %v1733 = vpop.f32.mrb[0].mxu0
    %v1734 = vadd.f32 %v1369, %v1733
    %1735 = vmatprep.mubr.f32.mxu0 0.0
    %v1736 = vand.u32 %v128, 4294901760
    %v1737 = vsub.f32 %v128, %v1736
    %v1738 = vand.u32 %v1737, 4294901760
    %1739 = vmatmul.mubr.f32.gmra.mrb[0].mxu0 %v1738
    %v1740 = vpop.f32.mrb[0].mxu0
    %v1741 = vadd.f32 %v1375, %v1740
    %v1742 = vpop.f32.mrb[0].mxu0
    %v1743 = vadd.f32 %v1377, %v1742
    %1744 = vmatprep.mubr.f32.mxu0 0.0
    %v1745 = vand.u32 %v129, 4294901760
    %v1746 = vsub.f32 %v129, %v1745
    %v1747 = vand.u32 %v1746, 4294901760
    %1748 = vmatmul.mubr.f32.gmra.mrb[0].mxu0 %v1747
    %v1749 = vpop.f32.mrb[0].mxu0
    %v1750 = vadd.f32 %v1383, %v1749
    %v1751 = vpop.f32.mrb[0].mxu0
    %v1752 = vadd.f32 %v1385, %v1751
    %1753 = vmatprep.mubr.f32.mxu0 0.0
    %v1754 = vand.u32 %v130, 4294901760
    %v1755 = vsub.f32 %v130, %v1754
    %v1756 = vand.u32 %v1755, 4294901760
    %1757 = vmatmul.mubr.f32.gmra.mrb[0].mxu0 %v1756
    %v1758 = vpop.f32.mrb[0].mxu0
    %v1759 = vadd.f32 %v1391, %v1758
    %v1760 = vpop.f32.mrb[0].mxu0
    %v1761 = vadd.f32 %v1393, %v1760
    %1762 = vmatprep.mubr.f32.mxu0 0.0
    %v1763 = vand.u32 %v131, 4294901760
    %v1764 = vsub.f32 %v131, %v1763
    %v1765 = vand.u32 %v1764, 4294901760
    %1766 = vmatmul.mubr.f32.gmra.mrb[0].mxu0 %v1765
    %v1767 = vpop.f32.mrb[0].mxu0
    %v1768 = vadd.f32 %v1399, %v1767
    %v1769 = vpop.f32.mrb[0].mxu0
    %v1770 = vadd.f32 %v1401, %v1769
    %1771 = vmatprep.mubr.f32.mxu0 0.0
    %v1772 = vand.u32 %v132, 4294901760
    %v1773 = vsub.f32 %v132, %v1772
    %v1774 = vand.u32 %v1773, 4294901760
    %1775 = vmatmul.mubr.f32.gmra.mrb[0].mxu0 %v1774
    %v1776 = vpop.f32.mrb[0].mxu0
    %v1777 = vadd.f32 %v1407, %v1776
    %v1778 = vpop.f32.mrb[0].mxu0
    %v1779 = vadd.f32 %v1409, %v1778
    %1780 = vmatprep.mubr.f32.mxu0 0.0
    %v1781 = vand.u32 %v133, 4294901760
    %v1782 = vsub.f32 %v133, %v1781
    %v1783 = vand.u32 %v1782, 4294901760
    %1784 = vmatmul.mubr.f32.gmra.mrb[0].mxu0 %v1783
    %v1785 = vpop.f32.mrb[0].mxu0
    %v1786 = vadd.f32 %v1415, %v1785
    %v1787 = vpop.f32.mrb[0].mxu0
    %v1788 = vadd.f32 %v1417, %v1787
    %1789 = vmatprep.mubr.f32.mxu0 0.0
    %v1790 = vand.u32 %v134, 4294901760
    %v1791 = vsub.f32 %v134, %v1790
    %v1792 = vand.u32 %v1791, 4294901760
    %1793 = vmatmul.mubr.f32.gmra.mrb[0].mxu0 %v1792
    %v1794 = vpop.f32.mrb[0].mxu0
    %v1795 = vadd.f32 %v1423, %v1794
    %v1796 = vpop.f32.mrb[0].mxu0
    %v1797 = vadd.f32 %v1425, %v1796
    %1798 = vmatprep.mubr.f32.mxu0 0.0
    %v1799 = vand.u32 %v135, 4294901760
    %v1800 = vsub.f32 %v135, %v1799
    %v1801 = vand.u32 %v1800, 4294901760
    %1802 = vmatmul.mubr.f32.gmra.mrb[0].mxu0 %v1801
    %v1803 = vpop.f32.mrb[0].mxu0
    %v1804 = vadd.f32 %v1431, %v1803
    %v1805 = vpop.f32.mrb[0].mxu0
    %v1806 = vadd.f32 %v1433, %v1805
    %1807 = vmatprep.mubr.f32.mxu0 0.0
    %v1808 = vand.u32 %v136, 4294901760
    %v1809 = vsub.f32 %v136, %v1808
    %v1810 = vand.u32 %v1809, 4294901760
    %1811 = vmatmul.mubr.f32.gmra.mrb[0].mxu0 %v1810
    %v1812 = vpop.f32.mrb[0].mxu0
    %v1813 = vadd.f32 %v1439, %v1812
    %v1814 = vpop.f32.mrb[0].mxu0
    %v1815 = vadd.f32 %v1441, %v1814
    %1816 = vmatprep.mubr.f32.mxu0 0.0
    %v1817 = vand.u32 %v137, 4294901760
    %v1818 = vsub.f32 %v137, %v1817
    %v1819 = vand.u32 %v1818, 4294901760
    %1820 = vmatmul.mubr.f32.gmra.mrb[0].mxu0 %v1819
    %v1821 = vpop.f32.mrb[0].mxu0
    %v1822 = vadd.f32 %v1447, %v1821
    %v1823 = vpop.f32.mrb[0].mxu0
    %v1824 = vadd.f32 %v1449, %v1823
    %1825 = vmatprep.mubr.f32.mxu0 0.0
    %v1826 = vand.u32 %v138, 4294901760
    %v1827 = vsub.f32 %v138, %v1826
    %v1828 = vand.u32 %v1827, 4294901760
    %1829 = vmatmul.mubr.f32.gmra.mrb[0].mxu0 %v1828
    %v1830 = vpop.f32.mrb[0].mxu0
    %v1831 = vadd.f32 %v1455, %v1830
    %v1832 = vpop.f32.mrb[0].mxu0
    %v1833 = vadd.f32 %v1457, %v1832
    %1834 = vmatprep.mubr.f32.mxu0 0.0
    %v1835 = vand.u32 %v139, 4294901760
    %v1836 = vsub.f32 %v139, %v1835
    %v1837 = vand.u32 %v1836, 4294901760
    %1838 = vmatmul.mubr.f32.gmra.mrb[0].mxu0 %v1837
    %v1839 = vpop.f32.mrb[0].mxu0
    %v1840 = vadd.f32 %v1463, %v1839
    %v1841 = vpop.f32.mrb[0].mxu0
    %v1842 = vadd.f32 %v1465, %v1841
    %1843 = vmatprep.mubr.f32.mxu0 0.0
    %v1844 = vand.u32 %v140, 4294901760
    %v1845 = vsub.f32 %v140, %v1844
    %v1846 = vand.u32 %v1845, 4294901760
    %1847 = vmatmul.mubr.f32.gmra.mrb[0].mxu0 %v1846
    %v1848 = vpop.f32.mrb[0].mxu0
    %v1849 = vadd.f32 %v1471, %v1848
    %v1850 = vpop.f32.mrb[0].mxu0
    %v1851 = vadd.f32 %v1473, %v1850
    %1852 = vmatprep.mubr.f32.mxu0 0.0
    %v1853 = vand.u32 %v141, 4294901760
    %v1854 = vsub.f32 %v141, %v1853
    %v1855 = vand.u32 %v1854, 4294901760
    %1856 = vmatmul.mubr.f32.gmra.mrb[0].mxu0 %v1855
    %v1857 = vpop.f32.mrb[0].mxu0
    %v1858 = vadd.f32 %v1479, %v1857
    %v1859 = vpop.f32.mrb[0].mxu0
    %v1860 = vadd.f32 %v1481, %v1859
    %1861 = vmatprep.mubr.f32.mxu0 0.0
    %v1862 = vand.u32 %v142, 4294901760
    %v1863 = vsub.f32 %v142, %v1862
    %v1864 = vand.u32 %v1863, 4294901760
    %1865 = vmatmul.mubr.f32.gmra.mrb[0].mxu0 %v1864
    %v1866 = vpop.f32.mrb[0].mxu0
    %v1867 = vadd.f32 %v1487, %v1866
    %v1868 = vpop.f32.mrb[0].mxu0
    %v1869 = vadd.f32 %v1489, %v1868
    %1870 = vmatprep.mubr.f32.mxu0 0.0
    %v1871 = vand.u32 %v143, 4294901760
    %v1872 = vsub.f32 %v143, %v1871
    %v1873 = vand.u32 %v1872, 4294901760
    %1874 = vmatmul.mubr.f32.gmra.mrb[0].mxu0 %v1873
    %v1875 = vpop.f32.mrb[0].mxu0
    %v1876 = vadd.f32 %v1495, %v1875
    %v1877 = vpop.f32.mrb[0].mxu0
    %v1878 = vadd.f32 %v1497, %v1877
    %1879 = vmatprep.mubr.f32.mxu0 0.0
    %v1880 = vand.u32 %v144, 4294901760
    %v1881 = vsub.f32 %v144, %v1880
    %v1882 = vand.u32 %v1881, 4294901760
    %1883 = vmatmul.mubr.f32.gmra.mrb[0].mxu0 %v1882
    %v1884 = vpop.f32.mrb[0].mxu0
    %v1885 = vadd.f32 %v1503, %v1884
    %v1886 = vpop.f32.mrb[0].mxu0
    %v1887 = vadd.f32 %v1505, %v1886
    %1888 = vmatprep.mubr.f32.mxu0 0.0
    %v1889 = vand.u32 %v145, 4294901760
    %v1890 = vsub.f32 %v145, %v1889
    %v1891 = vand.u32 %v1890, 4294901760
    %1892 = vmatmul.mubr.f32.gmra.mrb[0].mxu0 %v1891
    %v1893 = vpop.f32.mrb[0].mxu0
    %v1894 = vadd.f32 %v1511, %v1893
    %v1895 = vpop.f32.mrb[0].mxu0
    %v1896 = vadd.f32 %v1513, %v1895
    %1897 = vmatprep.mubr.f32.mxu0 0.0
    %v1898 = vand.u32 %v146, 4294901760
    %v1899 = vsub.f32 %v146, %v1898
    %v1900 = vand.u32 %v1899, 4294901760
    %1901 = vmatmul.mubr.f32.gmra.mrb[0].mxu0 %v1900
    %v1902 = vpop.f32.mrb[0].mxu0
    %v1903 = vadd.f32 %v1519, %v1902
    %v1904 = vpop.f32.mrb[0].mxu0
    %v1905 = vadd.f32 %v1521, %v1904
    %1906 = vmatprep.mubr.f32.mxu0 0.0
    %v1907 = vand.u32 %v147, 4294901760
    %v1908 = vsub.f32 %v147, %v1907
    %v1909 = vand.u32 %v1908, 4294901760
    %1910 = vmatmul.mubr.f32.gmra.mrb[0].mxu0 %v1909
    %v1911 = vpop.f32.mrb[0].mxu0
    %v1912 = vadd.f32 %v1527, %v1911
    %v1913 = vpop.f32.mrb[0].mxu0
    %v1914 = vadd.f32 %v1529, %v1913
    %1915 = vdwg.mxu0
    %1916 = vmatprep.subr.mxu0 0.0
    %v1917 = vand.u32 %v148, 4294901760
    %v1918 = vsub.f32 %v148, %v1917
    %v1919 = vand.u32 %v1918, 4294901760
    %1920 = vmatpush1.xpose.msra.mxu0 %v1919
    %1921 = vmatprep.subr.mxu0 0.0
    %v1922 = vand.u32 %v149, 4294901760
    %v1923 = vsub.f32 %v149, %v1922
    %v1924 = vand.u32 %v1923, 4294901760
    %1925 = vmatpush1.xpose.msra.mxu0 %v1924
    %1926 = vmatprep.subr.mxu0 0.0
    %v1927 = vand.u32 %v150, 4294901760
    %v1928 = vsub.f32 %v150, %v1927
    %v1929 = vand.u32 %v1928, 4294901760
    %1930 = vmatpush1.xpose.msra.mxu0 %v1929
    %1931 = vmatprep.subr.mxu0 0.0
    %v1932 = vand.u32 %v151, 4294901760
    %v1933 = vsub.f32 %v151, %v1932
    %v1934 = vand.u32 %v1933, 4294901760
    %1935 = vmatpush1.xpose.msra.mxu0 %v1934
    %1936 = vmatprep.subr.mxu0 0.0
    %v1937 = vand.u32 %v152, 4294901760
    %v1938 = vsub.f32 %v152, %v1937
    %v1939 = vand.u32 %v1938, 4294901760
    %1940 = vmatpush1.xpose.msra.mxu0 %v1939
    %1941 = vmatprep.subr.mxu0 0.0
    %v1942 = vand.u32 %v153, 4294901760
    %v1943 = vsub.f32 %v153, %v1942
    %v1944 = vand.u32 %v1943, 4294901760
    %1945 = vmatpush1.xpose.msra.mxu0 %v1944
    %1946 = vmatprep.subr.mxu0 0.0
    %v1947 = vand.u32 %v154, 4294901760
    %v1948 = vsub.f32 %v154, %v1947
    %v1949 = vand.u32 %v1948, 4294901760
    %1950 = vmatpush1.xpose.msra.mxu0 %v1949
    %1951 = vmatprep.subr.mxu0 0.0
    %v1952 = vand.u32 %v155, 4294901760
    %v1953 = vsub.f32 %v155, %v1952
    %v1954 = vand.u32 %v1953, 4294901760
    %1955 = vmatpush1.xpose.msra.mxu0 %v1954
    %1956 = vmatprep.subr.mxu0 0.0
    %v1957 = vand.u32 %v156, 4294901760
    %v1958 = vsub.f32 %v156, %v1957
    %v1959 = vand.u32 %v1958, 4294901760
    %1960 = vmatpush1.xpose.msra.mxu0 %v1959
    %1961 = vmatprep.subr.mxu0 0.0
    %v1962 = vand.u32 %v157, 4294901760
    %v1963 = vsub.f32 %v157, %v1962
    %v1964 = vand.u32 %v1963, 4294901760
    %1965 = vmatpush1.xpose.msra.mxu0 %v1964
    %1966 = vmatprep.subr.mxu0 0.0
    %v1967 = vand.u32 %v158, 4294901760
    %v1968 = vsub.f32 %v158, %v1967
    %v1969 = vand.u32 %v1968, 4294901760
    %1970 = vmatpush1.xpose.msra.mxu0 %v1969
    %1971 = vmatprep.subr.mxu0 0.0
    %v1972 = vand.u32 %v159, 4294901760
    %v1973 = vsub.f32 %v159, %v1972
    %v1974 = vand.u32 %v1973, 4294901760
    %1975 = vmatpush1.xpose.msra.mxu0 %v1974
    %1976 = vmatprep.subr.mxu0 0.0
    %v1977 = vand.u32 %v160, 4294901760
    %v1978 = vsub.f32 %v160, %v1977
    %v1979 = vand.u32 %v1978, 4294901760
    %1980 = vmatpush1.xpose.msra.mxu0 %v1979
    %1981 = vmatprep.subr.mxu0 0.0
    %v1982 = vand.u32 %v161, 4294901760
    %v1983 = vsub.f32 %v161, %v1982
    %v1984 = vand.u32 %v1983, 4294901760
    %1985 = vmatpush1.xpose.msra.mxu0 %v1984
    %1986 = vmatprep.subr.mxu0 0.0
    %v1987 = vand.u32 %v162, 4294901760
    %v1988 = vsub.f32 %v162, %v1987
    %v1989 = vand.u32 %v1988, 4294901760
    %1990 = vmatpush1.xpose.msra.mxu0 %v1989
    %1991 = vmatprep.subr.mxu0 0.0
    %v1992 = vand.u32 %v163, 4294901760
    %v1993 = vsub.f32 %v163, %v1992
    %v1994 = vand.u32 %v1993, 4294901760
    %1995 = vmatpush1.xpose.msra.mxu0 %v1994
    %1996 = vmatprep.subr.mxu0 0.0
    %v1997 = vand.u32 %v164, 4294901760
    %v1998 = vsub.f32 %v164, %v1997
    %v1999 = vand.u32 %v1998, 4294901760
    %2000 = vmatpush1.xpose.msra.mxu0 %v1999
    %2001 = vmatprep.subr.mxu0 0.0
    %v2002 = vand.u32 %v165, 4294901760
    %v2003 = vsub.f32 %v165, %v2002
    %v2004 = vand.u32 %v2003, 4294901760
    %2005 = vmatpush1.xpose.msra.mxu0 %v2004
    %2006 = vmatprep.subr.mxu0 0.0
    %v2007 = vand.u32 %v166, 4294901760
    %v2008 = vsub.f32 %v166, %v2007
    %v2009 = vand.u32 %v2008, 4294901760
    %2010 = vmatpush1.xpose.msra.mxu0 %v2009
    %2011 = vmatprep.subr.mxu0 0.0
    %v2012 = vand.u32 %v167, 4294901760
    %v2013 = vsub.f32 %v167, %v2012
    %v2014 = vand.u32 %v2013, 4294901760
    %2015 = vmatpush1.xpose.msra.mxu0 %v2014
    %2016 = vmatprep.subr.mxu0 0.0
    %v2017 = vand.u32 %v168, 4294901760
    %v2018 = vsub.f32 %v168, %v2017
    %v2019 = vand.u32 %v2018, 4294901760
    %2020 = vmatpush1.xpose.msra.mxu0 %v2019
    %2021 = vmatprep.subr.mxu0 0.0
    %v2022 = vand.u32 %v169, 4294901760
    %v2023 = vsub.f32 %v169, %v2022
    %v2024 = vand.u32 %v2023, 4294901760
    %2025 = vmatpush1.xpose.msra.mxu0 %v2024
    %2026 = vmatprep.subr.mxu0 0.0
    %v2027 = vand.u32 %v170, 4294901760
    %v2028 = vsub.f32 %v170, %v2027
    %v2029 = vand.u32 %v2028, 4294901760
    %2030 = vmatpush1.xpose.msra.mxu0 %v2029
    %2031 = vmatprep.subr.mxu0 0.0
    %v2032 = vand.u32 %v171, 4294901760
    %v2033 = vsub.f32 %v171, %v2032
    %v2034 = vand.u32 %v2033, 4294901760
    %2035 = vmatpush1.xpose.msra.mxu0 %v2034
    %2036 = vmatprep.subr.mxu0 0.0
    %v2037 = vand.u32 %v172, 4294901760
    %v2038 = vsub.f32 %v172, %v2037
    %v2039 = vand.u32 %v2038, 4294901760
    %2040 = vmatpush1.xpose.msra.mxu0 %v2039
    %2041 = vmatprep.subr.mxu0 0.0
    %v2042 = vand.u32 %v173, 4294901760
    %v2043 = vsub.f32 %v173, %v2042
    %v2044 = vand.u32 %v2043, 4294901760
    %2045 = vmatpush1.xpose.msra.mxu0 %v2044
    %2046 = vmatprep.subr.mxu0 0.0
    %v2047 = vand.u32 %v174, 4294901760
    %v2048 = vsub.f32 %v174, %v2047
    %v2049 = vand.u32 %v2048, 4294901760
    %2050 = vmatpush1.xpose.msra.mxu0 %v2049
    %2051 = vmatprep.subr.mxu0 0.0
    %v2052 = vand.u32 %v175, 4294901760
    %v2053 = vsub.f32 %v175, %v2052
    %v2054 = vand.u32 %v2053, 4294901760
    %2055 = vmatpush1.xpose.msra.mxu0 %v2054
    %2056 = vmatprep.subr.mxu0 0.0
    %v2057 = vand.u32 %v176, 4294901760
    %v2058 = vsub.f32 %v176, %v2057
    %v2059 = vand.u32 %v2058, 4294901760
    %2060 = vmatpush1.xpose.msra.mxu0 %v2059
    %2061 = vmatprep.subr.mxu0 0.0
    %v2062 = vand.u32 %v177, 4294901760
    %v2063 = vsub.f32 %v177, %v2062
    %v2064 = vand.u32 %v2063, 4294901760
    %2065 = vmatpush1.xpose.msra.mxu0 %v2064
    %2066 = vmatprep.subr.mxu0 0.0
    %v2067 = vand.u32 %v178, 4294901760
    %v2068 = vsub.f32 %v178, %v2067
    %v2069 = vand.u32 %v2068, 4294901760
    %2070 = vmatpush1.xpose.msra.mxu0 %v2069
    %2071 = vmatprep.subr.mxu0 0.0
    %v2072 = vand.u32 %v179, 4294901760
    %v2073 = vsub.f32 %v179, %v2072
    %v2074 = vand.u32 %v2073, 4294901760
    %2075 = vmatpush1.xpose.msra.mxu0 %v2074
    %2076 = vmatprep.mubr.f32.mxu0 0.0
    %v2077 = vand.u32 %v116, 4294901760
    %2078 = vmatmul.mubr.f32.gmra.mrb[0].mxu0 %v2077
    %v2079 = vpop.f32.mrb[0].mxu0
    %v2080 = vadd.f32 %v1633, %v2079
    %v2081 = vpop.f32.mrb[0].mxu0
    %v2082 = vadd.f32 %v1635, %v2081
    %2083 = vmatprep.mubr.f32.mxu0 0.0
    %v2084 = vand.u32 %v117, 4294901760
    %2085 = vmatmul.mubr.f32.gmra.mrb[0].mxu0 %v2084
    %v2086 = vpop.f32.mrb[0].mxu0
    %v2087 = vadd.f32 %v1642, %v2086
    %v2088 = vpop.f32.mrb[0].mxu0
    %v2089 = vadd.f32 %v1644, %v2088
    %2090 = vmatprep.mubr.f32.mxu0 0.0
    %v2091 = vand.u32 %v118, 4294901760
    %2092 = vmatmul.mubr.f32.gmra.mrb[0].mxu0 %v2091
    %v2093 = vpop.f32.mrb[0].mxu0
    %v2094 = vadd.f32 %v1651, %v2093
    %v2095 = vpop.f32.mrb[0].mxu0
    %v2096 = vadd.f32 %v1653, %v2095
    %2097 = vmatprep.mubr.f32.mxu0 0.0
    %v2098 = vand.u32 %v119, 4294901760
    %2099 = vmatmul.mubr.f32.gmra.mrb[0].mxu0 %v2098
    %v2100 = vpop.f32.mrb[0].mxu0
    %v2101 = vadd.f32 %v1660, %v2100
    %v2102 = vpop.f32.mrb[0].mxu0
    %v2103 = vadd.f32 %v1662, %v2102
    %2104 = vmatprep.mubr.f32.mxu0 0.0
    %v2105 = vand.u32 %v120, 4294901760
    %2106 = vmatmul.mubr.f32.gmra.mrb[0].mxu0 %v2105
    %v2107 = vpop.f32.mrb[0].mxu0
    %v2108 = vadd.f32 %v1669, %v2107
    %v2109 = vpop.f32.mrb[0].mxu0
    %v2110 = vadd.f32 %v1671, %v2109
    %2111 = vmatprep.mubr.f32.mxu0 0.0
    %v2112 = vand.u32 %v121, 4294901760
    %2113 = vmatmul.mubr.f32.gmra.mrb[0].mxu0 %v2112
    %v2114 = vpop.f32.mrb[0].mxu0
    %v2115 = vadd.f32 %v1678, %v2114
    %v2116 = vpop.f32.mrb[0].mxu0
    %v2117 = vadd.f32 %v1680, %v2116
    %2118 = vmatprep.mubr.f32.mxu0 0.0
    %v2119 = vand.u32 %v122, 4294901760
    %2120 = vmatmul.mubr.f32.gmra.mrb[0].mxu0 %v2119
    %v2121 = vpop.f32.mrb[0].mxu0
    %v2122 = vadd.f32 %v1687, %v2121
    %v2123 = vpop.f32.mrb[0].mxu0
    %v2124 = vadd.f32 %v1689, %v2123
    %2125 = vmatprep.mubr.f32.mxu0 0.0
    %v2126 = vand.u32 %v123, 4294901760
    %2127 = vmatmul.mubr.f32.gmra.mrb[0].mxu0 %v2126
    %v2128 = vpop.f32.mrb[0].mxu0
    %v2129 = vadd.f32 %v1696, %v2128
    %v2130 = vpop.f32.mrb[0].mxu0
    %v2131 = vadd.f32 %v1698, %v2130
    %2132 = vmatprep.mubr.f32.mxu0 0.0
    %v2133 = vand.u32 %v124, 4294901760
    %2134 = vmatmul.mubr.f32.gmra.mrb[0].mxu0 %v2133
    %v2135 = vpop.f32.mrb[0].mxu0
    %v2136 = vadd.f32 %v1705, %v2135
    %v2137 = vpop.f32.mrb[0].mxu0
    %v2138 = vadd.f32 %v1707, %v2137
    %2139 = vmatprep.mubr.f32.mxu0 0.0
    %v2140 = vand.u32 %v125, 4294901760
    %2141 = vmatmul.mubr.f32.gmra.mrb[0].mxu0 %v2140
    %v2142 = vpop.f32.mrb[0].mxu0
    %v2143 = vadd.f32 %v1714, %v2142
    %v2144 = vpop.f32.mrb[0].mxu0
    %v2145 = vadd.f32 %v1716, %v2144
    %2146 = vmatprep.mubr.f32.mxu0 0.0
    %v2147 = vand.u32 %v126, 4294901760
    %2148 = vmatmul.mubr.f32.gmra.mrb[0].mxu0 %v2147
    %v2149 = vpop.f32.mrb[0].mxu0
    %v2150 = vadd.f32 %v1723, %v2149
    %v2151 = vpop.f32.mrb[0].mxu0
    %v2152 = vadd.f32 %v1725, %v2151
    %2153 = vmatprep.mubr.f32.mxu0 0.0
    %v2154 = vand.u32 %v127, 4294901760
    %2155 = vmatmul.mubr.f32.gmra.mrb[0].mxu0 %v2154
    %v2156 = vpop.f32.mrb[0].mxu0
    %v2157 = vadd.f32 %v1732, %v2156
    %v2158 = vpop.f32.mrb[0].mxu0
    %v2159 = vadd.f32 %v1734, %v2158
    %2160 = vmatprep.mubr.f32.mxu0 0.0
    %v2161 = vand.u32 %v128, 4294901760
    %2162 = vmatmul.mubr.f32.gmra.mrb[0].mxu0 %v2161
    %v2163 = vpop.f32.mrb[0].mxu0
    %v2164 = vadd.f32 %v1741, %v2163
    %v2165 = vpop.f32.mrb[0].mxu0
    %v2166 = vadd.f32 %v1743, %v2165
    %2167 = vmatprep.mubr.f32.mxu0 0.0
    %v2168 = vand.u32 %v129, 4294901760
    %2169 = vmatmul.mubr.f32.gmra.mrb[0].mxu0 %v2168
    %v2170 = vpop.f32.mrb[0].mxu0
    %v2171 = vadd.f32 %v1750, %v2170
    %v2172 = vpop.f32.mrb[0].mxu0
    %v2173 = vadd.f32 %v1752, %v2172
    %2174 = vmatprep.mubr.f32.mxu0 0.0
    %v2175 = vand.u32 %v130, 4294901760
    %2176 = vmatmul.mubr.f32.gmra.mrb[0].mxu0 %v2175
    %v2177 = vpop.f32.mrb[0].mxu0
    %v2178 = vadd.f32 %v1759, %v2177
    %v2179 = vpop.f32.mrb[0].mxu0
    %v2180 = vadd.f32 %v1761, %v2179
    %2181 = vmatprep.mubr.f32.mxu0 0.0
    %v2182 = vand.u32 %v131, 4294901760
    %2183 = vmatmul.mubr.f32.gmra.mrb[0].mxu0 %v2182
    %v2184 = vpop.f32.mrb[0].mxu0
    %v2185 = vadd.f32 %v1768, %v2184
    %v2186 = vpop.f32.mrb[0].mxu0
    %v2187 = vadd.f32 %v1770, %v2186
    %2188 = vmatprep.mubr.f32.mxu0 0.0
    %v2189 = vand.u32 %v132, 4294901760
    %2190 = vmatmul.mubr.f32.gmra.mrb[0].mxu0 %v2189
    %v2191 = vpop.f32.mrb[0].mxu0
    %v2192 = vadd.f32 %v1777, %v2191
    %v2193 = vpop.f32.mrb[0].mxu0
    %v2194 = vadd.f32 %v1779, %v2193
    %2195 = vmatprep.mubr.f32.mxu0 0.0
    %v2196 = vand.u32 %v133, 4294901760
    %2197 = vmatmul.mubr.f32.gmra.mrb[0].mxu0 %v2196
    %v2198 = vpop.f32.mrb[0].mxu0
    %v2199 = vadd.f32 %v1786, %v2198
    %v2200 = vpop.f32.mrb[0].mxu0
    %v2201 = vadd.f32 %v1788, %v2200
    %2202 = vmatprep.mubr.f32.mxu0 0.0
    %v2203 = vand.u32 %v134, 4294901760
    %2204 = vmatmul.mubr.f32.gmra.mrb[0].mxu0 %v2203
    %v2205 = vpop.f32.mrb[0].mxu0
    %v2206 = vadd.f32 %v1795, %v2205
    %v2207 = vpop.f32.mrb[0].mxu0
    %v2208 = vadd.f32 %v1797, %v2207
    %2209 = vmatprep.mubr.f32.mxu0 0.0
    %v2210 = vand.u32 %v135, 4294901760
    %2211 = vmatmul.mubr.f32.gmra.mrb[0].mxu0 %v2210
    %v2212 = vpop.f32.mrb[0].mxu0
    %v2213 = vadd.f32 %v1804, %v2212
    %v2214 = vpop.f32.mrb[0].mxu0
    %v2215 = vadd.f32 %v1806, %v2214
    %2216 = vmatprep.mubr.f32.mxu0 0.0
    %v2217 = vand.u32 %v136, 4294901760
    %2218 = vmatmul.mubr.f32.gmra.mrb[0].mxu0 %v2217
    %v2219 = vpop.f32.mrb[0].mxu0
    %v2220 = vadd.f32 %v1813, %v2219
    %v2221 = vpop.f32.mrb[0].mxu0
    %v2222 = vadd.f32 %v1815, %v2221
    %2223 = vmatprep.mubr.f32.mxu0 0.0
    %v2224 = vand.u32 %v137, 4294901760
    %2225 = vmatmul.mubr.f32.gmra.mrb[0].mxu0 %v2224
    %v2226 = vpop.f32.mrb[0].mxu0
    %v2227 = vadd.f32 %v1822, %v2226
    %v2228 = vpop.f32.mrb[0].mxu0
    %v2229 = vadd.f32 %v1824, %v2228
    %2230 = vmatprep.mubr.f32.mxu0 0.0
    %v2231 = vand.u32 %v138, 4294901760
    %2232 = vmatmul.mubr.f32.gmra.mrb[0].mxu0 %v2231
    %v2233 = vpop.f32.mrb[0].mxu0
    %v2234 = vadd.f32 %v1831, %v2233
    %v2235 = vpop.f32.mrb[0].mxu0
    %v2236 = vadd.f32 %v1833, %v2235
    %2237 = vmatprep.mubr.f32.mxu0 0.0
    %v2238 = vand.u32 %v139, 4294901760
    %2239 = vmatmul.mubr.f32.gmra.mrb[0].mxu0 %v2238
    %v2240 = vpop.f32.mrb[0].mxu0
    %v2241 = vadd.f32 %v1840, %v2240
    %v2242 = vpop.f32.mrb[0].mxu0
    %v2243 = vadd.f32 %v1842, %v2242
    %2244 = vmatprep.mubr.f32.mxu0 0.0
    %v2245 = vand.u32 %v140, 4294901760
    %2246 = vmatmul.mubr.f32.gmra.mrb[0].mxu0 %v2245
    %v2247 = vpop.f32.mrb[0].mxu0
    %v2248 = vadd.f32 %v1849, %v2247
    %v2249 = vpop.f32.mrb[0].mxu0
    %v2250 = vadd.f32 %v1851, %v2249
    %2251 = vmatprep.mubr.f32.mxu0 0.0
    %v2252 = vand.u32 %v141, 4294901760
    %2253 = vmatmul.mubr.f32.gmra.mrb[0].mxu0 %v2252
    %v2254 = vpop.f32.mrb[0].mxu0
    %v2255 = vadd.f32 %v1858, %v2254
    %v2256 = vpop.f32.mrb[0].mxu0
    %v2257 = vadd.f32 %v1860, %v2256
    %2258 = vmatprep.mubr.f32.mxu0 0.0
    %v2259 = vand.u32 %v142, 4294901760
    %2260 = vmatmul.mubr.f32.gmra.mrb[0].mxu0 %v2259
    %v2261 = vpop.f32.mrb[0].mxu0
    %v2262 = vadd.f32 %v1867, %v2261
    %v2263 = vpop.f32.mrb[0].mxu0
    %v2264 = vadd.f32 %v1869, %v2263
    %2265 = vmatprep.mubr.f32.mxu0 0.0
    %v2266 = vand.u32 %v143, 4294901760
    %2267 = vmatmul.mubr.f32.gmra.mrb[0].mxu0 %v2266
    %v2268 = vpop.f32.mrb[0].mxu0
    %v2269 = vadd.f32 %v1876, %v2268
    %v2270 = vpop.f32.mrb[0].mxu0
    %v2271 = vadd.f32 %v1878, %v2270
    %2272 = vmatprep.mubr.f32.mxu0 0.0
    %v2273 = vand.u32 %v144, 4294901760
    %2274 = vmatmul.mubr.f32.gmra.mrb[0].mxu0 %v2273
    %v2275 = vpop.f32.mrb[0].mxu0
    %v2276 = vadd.f32 %v1885, %v2275
    %v2277 = vpop.f32.mrb[0].mxu0
    %v2278 = vadd.f32 %v1887, %v2277
    %2279 = vmatprep.mubr.f32.mxu0 0.0
    %v2280 = vand.u32 %v145, 4294901760
    %2281 = vmatmul.mubr.f32.gmra.mrb[0].mxu0 %v2280
    %v2282 = vpop.f32.mrb[0].mxu0
    %v2283 = vadd.f32 %v1894, %v2282
    %v2284 = vpop.f32.mrb[0].mxu0
    %v2285 = vadd.f32 %v1896, %v2284
    %2286 = vmatprep.mubr.f32.mxu0 0.0
    %v2287 = vand.u32 %v146, 4294901760
    %2288 = vmatmul.mubr.f32.gmra.mrb[0].mxu0 %v2287
    %v2289 = vpop.f32.mrb[0].mxu0
    %v2290 = vadd.f32 %v1903, %v2289
    %v2291 = vpop.f32.mrb[0].mxu0
    %v2292 = vadd.f32 %v1905, %v2291
    %2293 = vmatprep.mubr.f32.mxu0 0.0
    %v2294 = vand.u32 %v147, 4294901760
    %2295 = vmatmul.mubr.f32.gmra.mrb[0].mxu0 %v2294
    %v2296 = vpop.f32.mrb[0].mxu0
    %v2297 = vadd.f32 %v1912, %v2296
    %v2298 = vpop.f32.mrb[0].mxu0
    %v2299 = vadd.f32 %v1914, %v2298
    %2300 = vdwg.mxu0
    %2301 = vmatprep.subr.mxu0 0.0
    %v2302 = vand.u32 %v148, 4294901760
    %2303 = vmatpush1.xpose.msra.mxu0 %v2302
    %2304 = vmatprep.subr.mxu0 0.0
    %v2305 = vand.u32 %v149, 4294901760
    %2306 = vmatpush1.xpose.msra.mxu0 %v2305
    %2307 = vmatprep.subr.mxu0 0.0
    %v2308 = vand.u32 %v150, 4294901760
    %2309 = vmatpush1.xpose.msra.mxu0 %v2308
    %2310 = vmatprep.subr.mxu0 0.0
    %v2311 = vand.u32 %v151, 4294901760
    %2312 = vmatpush1.xpose.msra.mxu0 %v2311
    %2313 = vmatprep.subr.mxu0 0.0
    %v2314 = vand.u32 %v152, 4294901760
    %2315 = vmatpush1.xpose.msra.mxu0 %v2314
    %2316 = vmatprep.subr.mxu0 0.0
    %v2317 = vand.u32 %v153, 4294901760
    %2318 = vmatpush1.xpose.msra.mxu0 %v2317
    %2319 = vmatprep.subr.mxu0 0.0
    %v2320 = vand.u32 %v154, 4294901760
    %2321 = vmatpush1.xpose.msra.mxu0 %v2320
    %2322 = vmatprep.subr.mxu0 0.0
    %v2323 = vand.u32 %v155, 4294901760
    %2324 = vmatpush1.xpose.msra.mxu0 %v2323
    %2325 = vmatprep.subr.mxu0 0.0
    %v2326 = vand.u32 %v156, 4294901760
    %2327 = vmatpush1.xpose.msra.mxu0 %v2326
    %2328 = vmatprep.subr.mxu0 0.0
    %v2329 = vand.u32 %v157, 4294901760
    %2330 = vmatpush1.xpose.msra.mxu0 %v2329
    %2331 = vmatprep.subr.mxu0 0.0
    %v2332 = vand.u32 %v158, 4294901760
    %2333 = vmatpush1.xpose.msra.mxu0 %v2332
    %2334 = vmatprep.subr.mxu0 0.0
    %v2335 = vand.u32 %v159, 4294901760
    %2336 = vmatpush1.xpose.msra.mxu0 %v2335
    %2337 = vmatprep.subr.mxu0 0.0
    %v2338 = vand.u32 %v160, 4294901760
    %2339 = vmatpush1.xpose.msra.mxu0 %v2338
    %2340 = vmatprep.subr.mxu0 0.0
    %v2341 = vand.u32 %v161, 4294901760
    %2342 = vmatpush1.xpose.msra.mxu0 %v2341
    %2343 = vmatprep.subr.mxu0 0.0
    %v2344 = vand.u32 %v162, 4294901760
    %2345 = vmatpush1.xpose.msra.mxu0 %v2344
    %2346 = vmatprep.subr.mxu0 0.0
    %v2347 = vand.u32 %v163, 4294901760
    %2348 = vmatpush1.xpose.msra.mxu0 %v2347
    %2349 = vmatprep.subr.mxu0 0.0
    %v2350 = vand.u32 %v164, 4294901760
    %2351 = vmatpush1.xpose.msra.mxu0 %v2350
    %2352 = vmatprep.subr.mxu0 0.0
    %v2353 = vand.u32 %v165, 4294901760
    %2354 = vmatpush1.xpose.msra.mxu0 %v2353
    %2355 = vmatprep.subr.mxu0 0.0
    %v2356 = vand.u32 %v166, 4294901760
    %2357 = vmatpush1.xpose.msra.mxu0 %v2356
    %2358 = vmatprep.subr.mxu0 0.0
    %v2359 = vand.u32 %v167, 4294901760
    %2360 = vmatpush1.xpose.msra.mxu0 %v2359
    %2361 = vmatprep.subr.mxu0 0.0
    %v2362 = vand.u32 %v168, 4294901760
    %2363 = vmatpush1.xpose.msra.mxu0 %v2362
    %2364 = vmatprep.subr.mxu0 0.0
    %v2365 = vand.u32 %v169, 4294901760
    %2366 = vmatpush1.xpose.msra.mxu0 %v2365
    %2367 = vmatprep.subr.mxu0 0.0
    %v2368 = vand.u32 %v170, 4294901760
    %2369 = vmatpush1.xpose.msra.mxu0 %v2368
    %2370 = vmatprep.subr.mxu0 0.0
    %v2371 = vand.u32 %v171, 4294901760
    %2372 = vmatpush1.xpose.msra.mxu0 %v2371
    %2373 = vmatprep.subr.mxu0 0.0
    %v2374 = vand.u32 %v172, 4294901760
    %2375 = vmatpush1.xpose.msra.mxu0 %v2374
    %2376 = vmatprep.subr.mxu0 0.0
    %v2377 = vand.u32 %v173, 4294901760
    %2378 = vmatpush1.xpose.msra.mxu0 %v2377
    %2379 = vmatprep.subr.mxu0 0.0
    %v2380 = vand.u32 %v174, 4294901760
    %2381 = vmatpush1.xpose.msra.mxu0 %v2380
    %2382 = vmatprep.subr.mxu0 0.0
    %v2383 = vand.u32 %v175, 4294901760
    %2384 = vmatpush1.xpose.msra.mxu0 %v2383
    %2385 = vmatprep.subr.mxu0 0.0
    %v2386 = vand.u32 %v176, 4294901760
    %2387 = vmatpush1.xpose.msra.mxu0 %v2386
    %2388 = vmatprep.subr.mxu0 0.0
    %v2389 = vand.u32 %v177, 4294901760
    %2390 = vmatpush1.xpose.msra.mxu0 %v2389
    %2391 = vmatprep.subr.mxu0 0.0
    %v2392 = vand.u32 %v178, 4294901760
    %2393 = vmatpush1.xpose.msra.mxu0 %v2392
    %2394 = vmatprep.subr.mxu0 0.0
    %v2395 = vand.u32 %v179, 4294901760
    %2396 = vmatpush1.xpose.msra.mxu0 %v2395
    %2397 = vmatprep.mubr.f32.mxu0 0.0
    %v2398 = vand.u32 %v116, 4294901760
    %2399 = vmatmul.mubr.f32.gmra.mrb[0].mxu0 %v2398
    %v2400 = vpop.f32.mrb[0].mxu0
    %v2401 = vadd.f32 %v2080, %v2400
    %v2402 = vpop.f32.mrb[0].mxu0
    %v2403 = vadd.f32 %v2082, %v2402
    %2404 = vmatprep.mubr.f32.mxu0 0.0
    %v2405 = vand.u32 %v117, 4294901760
    %2406 = vmatmul.mubr.f32.gmra.mrb[0].mxu0 %v2405
    %v2407 = vpop.f32.mrb[0].mxu0
    %v2408 = vadd.f32 %v2087, %v2407
    %v2409 = vpop.f32.mrb[0].mxu0
    %v2410 = vadd.f32 %v2089, %v2409
    %2411 = vmatprep.mubr.f32.mxu0 0.0
    %v2412 = vand.u32 %v118, 4294901760
    %2413 = vmatmul.mubr.f32.gmra.mrb[0].mxu0 %v2412
    %v2414 = vpop.f32.mrb[0].mxu0
    %v2415 = vadd.f32 %v2094, %v2414
    %v2416 = vpop.f32.mrb[0].mxu0
    %v2417 = vadd.f32 %v2096, %v2416
    %2418 = vmatprep.mubr.f32.mxu0 0.0
    %v2419 = vand.u32 %v119, 4294901760
    %2420 = vmatmul.mubr.f32.gmra.mrb[0].mxu0 %v2419
    %v2421 = vpop.f32.mrb[0].mxu0
    %v2422 = vadd.f32 %v2101, %v2421
    %v2423 = vpop.f32.mrb[0].mxu0
    %v2424 = vadd.f32 %v2103, %v2423
    %2425 = vmatprep.mubr.f32.mxu0 0.0
    %v2426 = vand.u32 %v120, 4294901760
    %2427 = vmatmul.mubr.f32.gmra.mrb[0].mxu0 %v2426
    %v2428 = vpop.f32.mrb[0].mxu0
    %v2429 = vadd.f32 %v2108, %v2428
    %v2430 = vpop.f32.mrb[0].mxu0
    %v2431 = vadd.f32 %v2110, %v2430
    %2432 = vmatprep.mubr.f32.mxu0 0.0
    %v2433 = vand.u32 %v121, 4294901760
    %2434 = vmatmul.mubr.f32.gmra.mrb[0].mxu0 %v2433
    %v2435 = vpop.f32.mrb[0].mxu0
    %v2436 = vadd.f32 %v2115, %v2435
    %v2437 = vpop.f32.mrb[0].mxu0
    %v2438 = vadd.f32 %v2117, %v2437
    %2439 = vmatprep.mubr.f32.mxu0 0.0
    %v2440 = vand.u32 %v122, 4294901760
    %2441 = vmatmul.mubr.f32.gmra.mrb[0].mxu0 %v2440
    %v2442 = vpop.f32.mrb[0].mxu0
    %v2443 = vadd.f32 %v2122, %v2442
    %v2444 = vpop.f32.mrb[0].mxu0
    %v2445 = vadd.f32 %v2124, %v2444
    %2446 = vmatprep.mubr.f32.mxu0 0.0
    %v2447 = vand.u32 %v123, 4294901760
    %2448 = vmatmul.mubr.f32.gmra.mrb[0].mxu0 %v2447
    %v2449 = vpop.f32.mrb[0].mxu0
    %v2450 = vadd.f32 %v2129, %v2449
    %v2451 = vpop.f32.mrb[0].mxu0
    %v2452 = vadd.f32 %v2131, %v2451
    %2453 = vmatprep.mubr.f32.mxu0 0.0
    %v2454 = vand.u32 %v124, 4294901760
    %2455 = vmatmul.mubr.f32.gmra.mrb[0].mxu0 %v2454
    %v2456 = vpop.f32.mrb[0].mxu0
    %v2457 = vadd.f32 %v2136, %v2456
    %v2458 = vpop.f32.mrb[0].mxu0
    %v2459 = vadd.f32 %v2138, %v2458
    %2460 = vmatprep.mubr.f32.mxu0 0.0
    %v2461 = vand.u32 %v125, 4294901760
    %2462 = vmatmul.mubr.f32.gmra.mrb[0].mxu0 %v2461
    %v2463 = vpop.f32.mrb[0].mxu0
    %v2464 = vadd.f32 %v2143, %v2463
    %v2465 = vpop.f32.mrb[0].mxu0
    %v2466 = vadd.f32 %v2145, %v2465
    %2467 = vmatprep.mubr.f32.mxu0 0.0
    %v2468 = vand.u32 %v126, 4294901760
    %2469 = vmatmul.mubr.f32.gmra.mrb[0].mxu0 %v2468
    %v2470 = vpop.f32.mrb[0].mxu0
    %v2471 = vadd.f32 %v2150, %v2470
    %v2472 = vpop.f32.mrb[0].mxu0
    %v2473 = vadd.f32 %v2152, %v2472
    %2474 = vmatprep.mubr.f32.mxu0 0.0
    %v2475 = vand.u32 %v127, 4294901760
    %2476 = vmatmul.mubr.f32.gmra.mrb[0].mxu0 %v2475
    %v2477 = vpop.f32.mrb[0].mxu0
    %v2478 = vadd.f32 %v2157, %v2477
    %v2479 = vpop.f32.mrb[0].mxu0
    %v2480 = vadd.f32 %v2159, %v2479
    %2481 = vmatprep.mubr.f32.mxu0 0.0
    %v2482 = vand.u32 %v128, 4294901760
    %2483 = vmatmul.mubr.f32.gmra.mrb[0].mxu0 %v2482
    %v2484 = vpop.f32.mrb[0].mxu0
    %v2485 = vadd.f32 %v2164, %v2484
    %v2486 = vpop.f32.mrb[0].mxu0
    %v2487 = vadd.f32 %v2166, %v2486
    %2488 = vmatprep.mubr.f32.mxu0 0.0
    %v2489 = vand.u32 %v129, 4294901760
    %2490 = vmatmul.mubr.f32.gmra.mrb[0].mxu0 %v2489
    %v2491 = vpop.f32.mrb[0].mxu0
    %v2492 = vadd.f32 %v2171, %v2491
    %v2493 = vpop.f32.mrb[0].mxu0
    %v2494 = vadd.f32 %v2173, %v2493
    %2495 = vmatprep.mubr.f32.mxu0 0.0
    %v2496 = vand.u32 %v130, 4294901760
    %2497 = vmatmul.mubr.f32.gmra.mrb[0].mxu0 %v2496
    %v2498 = vpop.f32.mrb[0].mxu0
    %v2499 = vadd.f32 %v2178, %v2498
    %v2500 = vpop.f32.mrb[0].mxu0
    %v2501 = vadd.f32 %v2180, %v2500
    %2502 = vmatprep.mubr.f32.mxu0 0.0
    %v2503 = vand.u32 %v131, 4294901760
    %2504 = vmatmul.mubr.f32.gmra.mrb[0].mxu0 %v2503
    %v2505 = vpop.f32.mrb[0].mxu0
    %v2506 = vadd.f32 %v2185, %v2505
    %v2507 = vpop.f32.mrb[0].mxu0
    %v2508 = vadd.f32 %v2187, %v2507
    %2509 = vmatprep.mubr.f32.mxu0 0.0
    %v2510 = vand.u32 %v132, 4294901760
    %2511 = vmatmul.mubr.f32.gmra.mrb[0].mxu0 %v2510
    %v2512 = vpop.f32.mrb[0].mxu0
    %v2513 = vadd.f32 %v2192, %v2512
    %v2514 = vpop.f32.mrb[0].mxu0
    %v2515 = vadd.f32 %v2194, %v2514
    %2516 = vmatprep.mubr.f32.mxu0 0.0
    %v2517 = vand.u32 %v133, 4294901760
    %2518 = vmatmul.mubr.f32.gmra.mrb[0].mxu0 %v2517
    %v2519 = vpop.f32.mrb[0].mxu0
    %v2520 = vadd.f32 %v2199, %v2519
    %v2521 = vpop.f32.mrb[0].mxu0
    %v2522 = vadd.f32 %v2201, %v2521
    %2523 = vmatprep.mubr.f32.mxu0 0.0
    %v2524 = vand.u32 %v134, 4294901760
    %2525 = vmatmul.mubr.f32.gmra.mrb[0].mxu0 %v2524
    %v2526 = vpop.f32.mrb[0].mxu0
    %v2527 = vadd.f32 %v2206, %v2526
    %v2528 = vpop.f32.mrb[0].mxu0
    %v2529 = vadd.f32 %v2208, %v2528
    %2530 = vmatprep.mubr.f32.mxu0 0.0
    %v2531 = vand.u32 %v135, 4294901760
    %2532 = vmatmul.mubr.f32.gmra.mrb[0].mxu0 %v2531
    %v2533 = vpop.f32.mrb[0].mxu0
    %v2534 = vadd.f32 %v2213, %v2533
    %v2535 = vpop.f32.mrb[0].mxu0
    %v2536 = vadd.f32 %v2215, %v2535
    %2537 = vmatprep.mubr.f32.mxu0 0.0
    %v2538 = vand.u32 %v136, 4294901760
    %2539 = vmatmul.mubr.f32.gmra.mrb[0].mxu0 %v2538
    %v2540 = vpop.f32.mrb[0].mxu0
    %v2541 = vadd.f32 %v2220, %v2540
    %v2542 = vpop.f32.mrb[0].mxu0
    %v2543 = vadd.f32 %v2222, %v2542
    %2544 = vmatprep.mubr.f32.mxu0 0.0
    %v2545 = vand.u32 %v137, 4294901760
    %2546 = vmatmul.mubr.f32.gmra.mrb[0].mxu0 %v2545
    %v2547 = vpop.f32.mrb[0].mxu0
    %v2548 = vadd.f32 %v2227, %v2547
    %v2549 = vpop.f32.mrb[0].mxu0
    %v2550 = vadd.f32 %v2229, %v2549
    %2551 = vmatprep.mubr.f32.mxu0 0.0
    %v2552 = vand.u32 %v138, 4294901760
    %2553 = vmatmul.mubr.f32.gmra.mrb[0].mxu0 %v2552
    %v2554 = vpop.f32.mrb[0].mxu0
    %v2555 = vadd.f32 %v2234, %v2554
    %v2556 = vpop.f32.mrb[0].mxu0
    %v2557 = vadd.f32 %v2236, %v2556
    %2558 = vmatprep.mubr.f32.mxu0 0.0
    %v2559 = vand.u32 %v139, 4294901760
    %2560 = vmatmul.mubr.f32.gmra.mrb[0].mxu0 %v2559
    %v2561 = vpop.f32.mrb[0].mxu0
    %v2562 = vadd.f32 %v2241, %v2561
    %v2563 = vpop.f32.mrb[0].mxu0
    %v2564 = vadd.f32 %v2243, %v2563
    %2565 = vmatprep.mubr.f32.mxu0 0.0
    %v2566 = vand.u32 %v140, 4294901760
    %2567 = vmatmul.mubr.f32.gmra.mrb[0].mxu0 %v2566
    %v2568 = vpop.f32.mrb[0].mxu0
    %v2569 = vadd.f32 %v2248, %v2568
    %v2570 = vpop.f32.mrb[0].mxu0
    %v2571 = vadd.f32 %v2250, %v2570
    %2572 = vmatprep.mubr.f32.mxu0 0.0
    %v2573 = vand.u32 %v141, 4294901760
    %2574 = vmatmul.mubr.f32.gmra.mrb[0].mxu0 %v2573
    %v2575 = vpop.f32.mrb[0].mxu0
    %v2576 = vadd.f32 %v2255, %v2575
    %v2577 = vpop.f32.mrb[0].mxu0
    %v2578 = vadd.f32 %v2257, %v2577
    %2579 = vmatprep.mubr.f32.mxu0 0.0
    %v2580 = vand.u32 %v142, 4294901760
    %2581 = vmatmul.mubr.f32.gmra.mrb[0].mxu0 %v2580
    %v2582 = vpop.f32.mrb[0].mxu0
    %v2583 = vadd.f32 %v2262, %v2582
    %v2584 = vpop.f32.mrb[0].mxu0
    %v2585 = vadd.f32 %v2264, %v2584
    %2586 = vmatprep.mubr.f32.mxu0 0.0
    %v2587 = vand.u32 %v143, 4294901760
    %2588 = vmatmul.mubr.f32.gmra.mrb[0].mxu0 %v2587
    %v2589 = vpop.f32.mrb[0].mxu0
    %v2590 = vadd.f32 %v2269, %v2589
    %v2591 = vpop.f32.mrb[0].mxu0
    %v2592 = vadd.f32 %v2271, %v2591
    %2593 = vmatprep.mubr.f32.mxu0 0.0
    %v2594 = vand.u32 %v144, 4294901760
    %2595 = vmatmul.mubr.f32.gmra.mrb[0].mxu0 %v2594
    %v2596 = vpop.f32.mrb[0].mxu0
    %v2597 = vadd.f32 %v2276, %v2596
    %v2598 = vpop.f32.mrb[0].mxu0
    %v2599 = vadd.f32 %v2278, %v2598
    %2600 = vmatprep.mubr.f32.mxu0 0.0
    %v2601 = vand.u32 %v145, 4294901760
    %2602 = vmatmul.mubr.f32.gmra.mrb[0].mxu0 %v2601
    %v2603 = vpop.f32.mrb[0].mxu0
    %v2604 = vadd.f32 %v2283, %v2603
    %v2605 = vpop.f32.mrb[0].mxu0
    %v2606 = vadd.f32 %v2285, %v2605
    %2607 = vmatprep.mubr.f32.mxu0 0.0
    %v2608 = vand.u32 %v146, 4294901760
    %2609 = vmatmul.mubr.f32.gmra.mrb[0].mxu0 %v2608
    %v2610 = vpop.f32.mrb[0].mxu0
    %v2611 = vadd.f32 %v2290, %v2610
    %v2612 = vpop.f32.mrb[0].mxu0
    %v2613 = vadd.f32 %v2292, %v2612
    %2614 = vmatprep.mubr.f32.mxu0 0.0
    %v2615 = vand.u32 %v147, 4294901760
    %2616 = vmatmul.mubr.f32.gmra.mrb[0].mxu0 %v2615
    %v2617 = vpop.f32.mrb[0].mxu0
    %v2618 = vadd.f32 %v2297, %v2617
    %v2619 = vpop.f32.mrb[0].mxu0
    %v2620 = vadd.f32 %v2299, %v2619
    %2621 = vdwg.mxu0
    %2623 = vset.pattern.permute.xlu0 0
    %2624 = vperm.xlu0 %2623, %v180
    %v2625 = vpop.permute.xlu0 %2624
    %2628 = vset.pattern.permute.xlu0 0
    %2629 = vperm.xlu0 %2628, %v181
    %v2630 = vpop.permute.xlu0 %2629
    %2633 = vset.pattern.permute.xlu0 0
    %2634 = vperm.xlu0 %2633, %v182
    %v2635 = vpop.permute.xlu0 %2634
    %2638 = vset.pattern.permute.xlu0 0
    %2639 = vperm.xlu0 %2638, %v183
    %v2640 = vpop.permute.xlu0 %2639
    %2643 = vset.pattern.permute.xlu0 0
    %2644 = vperm.xlu0 %2643, %v184
    %v2645 = vpop.permute.xlu0 %2644
    %2648 = vset.pattern.permute.xlu0 0
    %2649 = vperm.xlu0 %2648, %v185
    %v2650 = vpop.permute.xlu0 %2649
    %2653 = vset.pattern.permute.xlu0 0
    %2654 = vperm.xlu0 %2653, %v186
    %v2655 = vpop.permute.xlu0 %2654
    %2658 = vset.pattern.permute.xlu0 0
    %2659 = vperm.xlu0 %2658, %v187
    %v2660 = vpop.permute.xlu0 %2659
    %2663 = vset.pattern.permute.xlu0 0
    %2664 = vperm.xlu0 %2663, %v188
    %v2665 = vpop.permute.xlu0 %2664
    %2668 = vset.pattern.permute.xlu0 0
    %2669 = vperm.xlu0 %2668, %v189
    %v2670 = vpop.permute.xlu0 %2669
    %2673 = vset.pattern.permute.xlu0 0
    %2674 = vperm.xlu0 %2673, %v190
    %v2675 = vpop.permute.xlu0 %2674
    %2678 = vset.pattern.permute.xlu0 0
    %2679 = vperm.xlu0 %2678, %v191
    %v2680 = vpop.permute.xlu0 %2679
    %2683 = vset.pattern.permute.xlu0 0
    %2684 = vperm.xlu0 %2683, %v192
    %v2685 = vpop.permute.xlu0 %2684
    %2688 = vset.pattern.permute.xlu0 0
    %2689 = vperm.xlu0 %2688, %v193
    %v2690 = vpop.permute.xlu0 %2689
    %2693 = vset.pattern.permute.xlu0 0
    %2694 = vperm.xlu0 %2693, %v194
    %v2695 = vpop.permute.xlu0 %2694
    %2698 = vset.pattern.permute.xlu0 0
    %2699 = vperm.xlu0 %2698, %v195
    %v2700 = vpop.permute.xlu0 %2699
    %2703 = vset.pattern.permute.xlu0 0
    %2704 = vperm.xlu0 %2703, %v196
    %v2705 = vpop.permute.xlu0 %2704
    %2708 = vset.pattern.permute.xlu0 0
    %2709 = vperm.xlu0 %2708, %v197
    %v2710 = vpop.permute.xlu0 %2709
    %2713 = vset.pattern.permute.xlu0 0
    %2714 = vperm.xlu0 %2713, %v198
    %v2715 = vpop.permute.xlu0 %2714
    %2718 = vset.pattern.permute.xlu0 0
    %2719 = vperm.xlu0 %2718, %v199
    %v2720 = vpop.permute.xlu0 %2719
    %2723 = vset.pattern.permute.xlu0 0
    %2724 = vperm.xlu0 %2723, %v200
    %v2725 = vpop.permute.xlu0 %2724
    %2728 = vset.pattern.permute.xlu0 0
    %2729 = vperm.xlu0 %2728, %v201
    %v2730 = vpop.permute.xlu0 %2729
    %2733 = vset.pattern.permute.xlu0 0
    %2734 = vperm.xlu0 %2733, %v202
    %v2735 = vpop.permute.xlu0 %2734
    %2738 = vset.pattern.permute.xlu0 0
    %2739 = vperm.xlu0 %2738, %v203
    %v2740 = vpop.permute.xlu0 %2739
    %2743 = vset.pattern.permute.xlu0 0
    %2744 = vperm.xlu0 %2743, %v204
    %v2745 = vpop.permute.xlu0 %2744
    %2748 = vset.pattern.permute.xlu0 0
    %2749 = vperm.xlu0 %2748, %v205
    %v2750 = vpop.permute.xlu0 %2749
    %2753 = vset.pattern.permute.xlu0 0
    %2754 = vperm.xlu0 %2753, %v206
    %v2755 = vpop.permute.xlu0 %2754
    %2758 = vset.pattern.permute.xlu0 0
    %2759 = vperm.xlu0 %2758, %v207
    %v2760 = vpop.permute.xlu0 %2759
    %2763 = vset.pattern.permute.xlu0 0
    %2764 = vperm.xlu0 %2763, %v208
    %v2765 = vpop.permute.xlu0 %2764
    %2768 = vset.pattern.permute.xlu0 0
    %2769 = vperm.xlu0 %2768, %v209
    %v2770 = vpop.permute.xlu0 %2769
    %2773 = vset.pattern.permute.xlu0 0
    %2774 = vperm.xlu0 %2773, %v210
    %v2775 = vpop.permute.xlu0 %2774
    %2778 = vset.pattern.permute.xlu0 0
    %2779 = vperm.xlu0 %2778, %v211
    %v2780 = vpop.permute.xlu0 %2779
    %v2783 = vlaneseq
    %v2784 = vshrl.u32 %v2783, 7
    %v2785 = vsub.s32 0, %v2784
    %v2786 = vrot.slane %v212, %v2785
    %v2787 = vlaneseq
    %v2788 = vshrl.u32 %v2787, 7
    %v2789 = vsub.s32 1, %v2788
    %v2790 = vrot.slane %v212, %v2789
    %v2793 = vadd.f32 %v2625, %v2786
    %v2794 = vadd.f32 %v2625, %v2790
    %v2795 = vadd.f32 %v2630, %v2786
    %v2796 = vadd.f32 %v2630, %v2790
    %v2797 = vadd.f32 %v2635, %v2786
    %v2798 = vadd.f32 %v2635, %v2790
    %v2799 = vadd.f32 %v2640, %v2786
    %v2800 = vadd.f32 %v2640, %v2790
    %v2801 = vadd.f32 %v2645, %v2786
    %v2802 = vadd.f32 %v2645, %v2790
    %v2803 = vadd.f32 %v2650, %v2786
    %v2804 = vadd.f32 %v2650, %v2790
    %v2805 = vadd.f32 %v2655, %v2786
    %v2806 = vadd.f32 %v2655, %v2790
    %v2807 = vadd.f32 %v2660, %v2786
    %v2808 = vadd.f32 %v2660, %v2790
    %v2809 = vadd.f32 %v2665, %v2786
    %v2810 = vadd.f32 %v2665, %v2790
    %v2811 = vadd.f32 %v2670, %v2786
    %v2812 = vadd.f32 %v2670, %v2790
    %v2813 = vadd.f32 %v2675, %v2786
    %v2814 = vadd.f32 %v2675, %v2790
    %v2815 = vadd.f32 %v2680, %v2786
    %v2816 = vadd.f32 %v2680, %v2790
    %v2817 = vadd.f32 %v2685, %v2786
    %v2818 = vadd.f32 %v2685, %v2790
    %v2819 = vadd.f32 %v2690, %v2786
    %v2820 = vadd.f32 %v2690, %v2790
    %v2821 = vadd.f32 %v2695, %v2786
    %v2822 = vadd.f32 %v2695, %v2790
    %v2823 = vadd.f32 %v2700, %v2786
    %v2824 = vadd.f32 %v2700, %v2790
    %v2825 = vadd.f32 %v2705, %v2786
    %v2826 = vadd.f32 %v2705, %v2790
    %v2827 = vadd.f32 %v2710, %v2786
    %v2828 = vadd.f32 %v2710, %v2790
    %v2829 = vadd.f32 %v2715, %v2786
    %v2830 = vadd.f32 %v2715, %v2790
    %v2831 = vadd.f32 %v2720, %v2786
    %v2832 = vadd.f32 %v2720, %v2790
    %v2833 = vadd.f32 %v2725, %v2786
    %v2834 = vadd.f32 %v2725, %v2790
    %v2835 = vadd.f32 %v2730, %v2786
    %v2836 = vadd.f32 %v2730, %v2790
    %v2837 = vadd.f32 %v2735, %v2786
    %v2838 = vadd.f32 %v2735, %v2790
    %v2839 = vadd.f32 %v2740, %v2786
    %v2840 = vadd.f32 %v2740, %v2790
    %v2841 = vadd.f32 %v2745, %v2786
    %v2842 = vadd.f32 %v2745, %v2790
    %v2843 = vadd.f32 %v2750, %v2786
    %v2844 = vadd.f32 %v2750, %v2790
    %v2845 = vadd.f32 %v2755, %v2786
    %v2846 = vadd.f32 %v2755, %v2790
    %v2847 = vadd.f32 %v2760, %v2786
    %v2848 = vadd.f32 %v2760, %v2790
    %v2849 = vadd.f32 %v2765, %v2786
    %v2850 = vadd.f32 %v2765, %v2790
    %v2851 = vadd.f32 %v2770, %v2786
    %v2852 = vadd.f32 %v2770, %v2790
    %v2853 = vadd.f32 %v2775, %v2786
    %v2854 = vadd.f32 %v2775, %v2790
    %v2855 = vadd.f32 %v2780, %v2786
    %v2856 = vadd.f32 %v2780, %v2790
    %v2857 = vmul.f32 %v2401, 2.0
    %v2858 = vmul.f32 %v2403, 2.0
    %v2859 = vmul.f32 %v2408, 2.0
    %v2860 = vmul.f32 %v2410, 2.0
    %v2861 = vmul.f32 %v2415, 2.0
    %v2862 = vmul.f32 %v2417, 2.0
    %v2863 = vmul.f32 %v2422, 2.0
    %v2864 = vmul.f32 %v2424, 2.0
    %v2865 = vmul.f32 %v2429, 2.0
    %v2866 = vmul.f32 %v2431, 2.0
    %v2867 = vmul.f32 %v2436, 2.0
    %v2868 = vmul.f32 %v2438, 2.0
    %v2869 = vmul.f32 %v2443, 2.0
    %v2870 = vmul.f32 %v2445, 2.0
    %v2871 = vmul.f32 %v2450, 2.0
    %v2872 = vmul.f32 %v2452, 2.0
    %v2873 = vmul.f32 %v2457, 2.0
    %v2874 = vmul.f32 %v2459, 2.0
    %v2875 = vmul.f32 %v2464, 2.0
    %v2876 = vmul.f32 %v2466, 2.0
    %v2877 = vmul.f32 %v2471, 2.0
    %v2878 = vmul.f32 %v2473, 2.0
    %v2879 = vmul.f32 %v2478, 2.0
    %v2880 = vmul.f32 %v2480, 2.0
    %v2881 = vmul.f32 %v2485, 2.0
    %v2882 = vmul.f32 %v2487, 2.0
    %v2883 = vmul.f32 %v2492, 2.0
    %v2884 = vmul.f32 %v2494, 2.0
    %v2885 = vmul.f32 %v2499, 2.0
    %v2886 = vmul.f32 %v2501, 2.0
    %v2887 = vmul.f32 %v2506, 2.0
    %v2888 = vmul.f32 %v2508, 2.0
    %v2889 = vmul.f32 %v2513, 2.0
    %v2890 = vmul.f32 %v2515, 2.0
    %v2891 = vmul.f32 %v2520, 2.0
    %v2892 = vmul.f32 %v2522, 2.0
    %v2893 = vmul.f32 %v2527, 2.0
    %v2894 = vmul.f32 %v2529, 2.0
    %v2895 = vmul.f32 %v2534, 2.0
    %v2896 = vmul.f32 %v2536, 2.0
    %v2897 = vmul.f32 %v2541, 2.0
    %v2898 = vmul.f32 %v2543, 2.0
    %v2899 = vmul.f32 %v2548, 2.0
    %v2900 = vmul.f32 %v2550, 2.0
    %v2901 = vmul.f32 %v2555, 2.0
    %v2902 = vmul.f32 %v2557, 2.0
    %v2903 = vmul.f32 %v2562, 2.0
    %v2904 = vmul.f32 %v2564, 2.0
    %v2905 = vmul.f32 %v2569, 2.0
    %v2906 = vmul.f32 %v2571, 2.0
    %v2907 = vmul.f32 %v2576, 2.0
    %v2908 = vmul.f32 %v2578, 2.0
    %v2909 = vmul.f32 %v2583, 2.0
    %v2910 = vmul.f32 %v2585, 2.0
    %v2911 = vmul.f32 %v2590, 2.0
    %v2912 = vmul.f32 %v2592, 2.0
    %v2913 = vmul.f32 %v2597, 2.0
    %v2914 = vmul.f32 %v2599, 2.0
    %v2915 = vmul.f32 %v2604, 2.0
    %v2916 = vmul.f32 %v2606, 2.0
    %v2917 = vmul.f32 %v2611, 2.0
    %v2918 = vmul.f32 %v2613, 2.0
    %v2919 = vmul.f32 %v2618, 2.0
    %v2920 = vmul.f32 %v2620, 2.0
    %v2921 = vsub.f32 %v2793, %v2857
    %v2922 = vsub.f32 %v2794, %v2858
    %v2923 = vsub.f32 %v2795, %v2859
    %v2924 = vsub.f32 %v2796, %v2860
    %v2925 = vsub.f32 %v2797, %v2861
    %v2926 = vsub.f32 %v2798, %v2862
    %v2927 = vsub.f32 %v2799, %v2863
    %v2928 = vsub.f32 %v2800, %v2864
    %v2929 = vsub.f32 %v2801, %v2865
    %v2930 = vsub.f32 %v2802, %v2866
    %v2931 = vsub.f32 %v2803, %v2867
    %v2932 = vsub.f32 %v2804, %v2868
    %v2933 = vsub.f32 %v2805, %v2869
    %v2934 = vsub.f32 %v2806, %v2870
    %v2935 = vsub.f32 %v2807, %v2871
    %v2936 = vsub.f32 %v2808, %v2872
    %v2937 = vsub.f32 %v2809, %v2873
    %v2938 = vsub.f32 %v2810, %v2874
    %v2939 = vsub.f32 %v2811, %v2875
    %v2940 = vsub.f32 %v2812, %v2876
    %v2941 = vsub.f32 %v2813, %v2877
    %v2942 = vsub.f32 %v2814, %v2878
    %v2943 = vsub.f32 %v2815, %v2879
    %v2944 = vsub.f32 %v2816, %v2880
    %v2945 = vsub.f32 %v2817, %v2881
    %v2946 = vsub.f32 %v2818, %v2882
    %v2947 = vsub.f32 %v2819, %v2883
    %v2948 = vsub.f32 %v2820, %v2884
    %v2949 = vsub.f32 %v2821, %v2885
    %v2950 = vsub.f32 %v2822, %v2886
    %v2951 = vsub.f32 %v2823, %v2887
    %v2952 = vsub.f32 %v2824, %v2888
    %v2953 = vsub.f32 %v2825, %v2889
    %v2954 = vsub.f32 %v2826, %v2890
    %v2955 = vsub.f32 %v2827, %v2891
    %v2956 = vsub.f32 %v2828, %v2892
    %v2957 = vsub.f32 %v2829, %v2893
    %v2958 = vsub.f32 %v2830, %v2894
    %v2959 = vsub.f32 %v2831, %v2895
    %v2960 = vsub.f32 %v2832, %v2896
    %v2961 = vsub.f32 %v2833, %v2897
    %v2962 = vsub.f32 %v2834, %v2898
    %v2963 = vsub.f32 %v2835, %v2899
    %v2964 = vsub.f32 %v2836, %v2900
    %v2965 = vsub.f32 %v2837, %v2901
    %v2966 = vsub.f32 %v2838, %v2902
    %v2967 = vsub.f32 %v2839, %v2903
    %v2968 = vsub.f32 %v2840, %v2904
    %v2969 = vsub.f32 %v2841, %v2905
    %v2970 = vsub.f32 %v2842, %v2906
    %v2971 = vsub.f32 %v2843, %v2907
    %v2972 = vsub.f32 %v2844, %v2908
    %v2973 = vsub.f32 %v2845, %v2909
    %v2974 = vsub.f32 %v2846, %v2910
    %v2975 = vsub.f32 %v2847, %v2911
    %v2976 = vsub.f32 %v2848, %v2912
    %v2977 = vsub.f32 %v2849, %v2913
    %v2978 = vsub.f32 %v2850, %v2914
    %v2979 = vsub.f32 %v2851, %v2915
    %v2980 = vsub.f32 %v2852, %v2916
    %v2981 = vsub.f32 %v2853, %v2917
    %v2982 = vsub.f32 %v2854, %v2918
    %v2983 = vsub.f32 %v2855, %v2919
    %v2984 = vsub.f32 %v2856, %v2920
    %v2985 = vmax.f32 %v2921, 0.0
    %v2986 = vmax.f32 %v2922, 0.0
    %v2987 = vmax.f32 %v2923, 0.0
    %v2988 = vmax.f32 %v2924, 0.0
    %v2989 = vmax.f32 %v2925, 0.0
    %v2990 = vmax.f32 %v2926, 0.0
    %v2991 = vmax.f32 %v2927, 0.0
    %v2992 = vmax.f32 %v2928, 0.0
    %v2993 = vmax.f32 %v2929, 0.0
    %v2994 = vmax.f32 %v2930, 0.0
    %v2995 = vmax.f32 %v2931, 0.0
    %v2996 = vmax.f32 %v2932, 0.0
    %v2997 = vmax.f32 %v2933, 0.0
    %v2998 = vmax.f32 %v2934, 0.0
    %v2999 = vmax.f32 %v2935, 0.0
    %v3000 = vmax.f32 %v2936, 0.0
    %v3001 = vmax.f32 %v2937, 0.0
    %v3002 = vmax.f32 %v2938, 0.0
    %v3003 = vmax.f32 %v2939, 0.0
    %v3004 = vmax.f32 %v2940, 0.0
    %v3005 = vmax.f32 %v2941, 0.0
    %v3006 = vmax.f32 %v2942, 0.0
    %v3007 = vmax.f32 %v2943, 0.0
    %v3008 = vmax.f32 %v2944, 0.0
    %v3009 = vmax.f32 %v2945, 0.0
    %v3010 = vmax.f32 %v2946, 0.0
    %v3011 = vmax.f32 %v2947, 0.0
    %v3012 = vmax.f32 %v2948, 0.0
    %v3013 = vmax.f32 %v2949, 0.0
    %v3014 = vmax.f32 %v2950, 0.0
    %v3015 = vmax.f32 %v2951, 0.0
    %v3016 = vmax.f32 %v2952, 0.0
    %v3017 = vmax.f32 %v2953, 0.0
    %v3018 = vmax.f32 %v2954, 0.0
    %v3019 = vmax.f32 %v2955, 0.0
    %v3020 = vmax.f32 %v2956, 0.0
    %v3021 = vmax.f32 %v2957, 0.0
    %v3022 = vmax.f32 %v2958, 0.0
    %v3023 = vmax.f32 %v2959, 0.0
    %v3024 = vmax.f32 %v2960, 0.0
    %v3025 = vmax.f32 %v2961, 0.0
    %v3026 = vmax.f32 %v2962, 0.0
    %v3027 = vmax.f32 %v2963, 0.0
    %v3028 = vmax.f32 %v2964, 0.0
    %v3029 = vmax.f32 %v2965, 0.0
    %v3030 = vmax.f32 %v2966, 0.0
    %v3031 = vmax.f32 %v2967, 0.0
    %v3032 = vmax.f32 %v2968, 0.0
    %v3033 = vmax.f32 %v2969, 0.0
    %v3034 = vmax.f32 %v2970, 0.0
    %v3035 = vmax.f32 %v2971, 0.0
    %v3036 = vmax.f32 %v2972, 0.0
    %v3037 = vmax.f32 %v2973, 0.0
    %v3038 = vmax.f32 %v2974, 0.0
    %v3039 = vmax.f32 %v2975, 0.0
    %v3040 = vmax.f32 %v2976, 0.0
    %v3041 = vmax.f32 %v2977, 0.0
    %v3042 = vmax.f32 %v2978, 0.0
    %v3043 = vmax.f32 %v2979, 0.0
    %v3044 = vmax.f32 %v2980, 0.0
    %v3045 = vmax.f32 %v2981, 0.0
    %v3046 = vmax.f32 %v2982, 0.0
    %v3047 = vmax.f32 %v2983, 0.0
    %v3048 = vmax.f32 %v2984, 0.0
    %v3049 = vrsqrt.pop %v2985
    %v3050 = vmul.f32 %v2985, %v3049
    %vm3051 = vcmp.eq.f32.partialorder %v2985, inf
    %v3052 = vsel %vm3051, %v2985, %v3050
    %vm3053 = vcmp.eq.f32.partialorder %v2985, 0.0
    %v3054 = vand.u32 %v2985, 2147483648
    %v3055 = vsel %vm3053, %v3054, %v3052
    %v3056 = vrsqrt.pop %v2986
    %v3057 = vmul.f32 %v2986, %v3056
    %vm3058 = vcmp.eq.f32.partialorder %v2986, inf
    %v3059 = vsel %vm3058, %v2986, %v3057
    %vm3060 = vcmp.eq.f32.partialorder %v2986, 0.0
    %v3061 = vand.u32 %v2986, 2147483648
    %v3062 = vsel %vm3060, %v3061, %v3059
    %v3063 = vrsqrt.pop %v2987
    %v3064 = vmul.f32 %v2987, %v3063
    %vm3065 = vcmp.eq.f32.partialorder %v2987, inf
    %v3066 = vsel %vm3065, %v2987, %v3064
    %vm3067 = vcmp.eq.f32.partialorder %v2987, 0.0
    %v3068 = vand.u32 %v2987, 2147483648
    %v3069 = vsel %vm3067, %v3068, %v3066
    %v3070 = vrsqrt.pop %v2988
    %v3071 = vmul.f32 %v2988, %v3070
    %vm3072 = vcmp.eq.f32.partialorder %v2988, inf
    %v3073 = vsel %vm3072, %v2988, %v3071
    %vm3074 = vcmp.eq.f32.partialorder %v2988, 0.0
    %v3075 = vand.u32 %v2988, 2147483648
    %v3076 = vsel %vm3074, %v3075, %v3073
    %v3077 = vrsqrt.pop %v2989
    %v3078 = vmul.f32 %v2989, %v3077
    %vm3079 = vcmp.eq.f32.partialorder %v2989, inf
    %v3080 = vsel %vm3079, %v2989, %v3078
    %vm3081 = vcmp.eq.f32.partialorder %v2989, 0.0
    %v3082 = vand.u32 %v2989, 2147483648
    %v3083 = vsel %vm3081, %v3082, %v3080
    %v3084 = vrsqrt.pop %v2990
    %v3085 = vmul.f32 %v2990, %v3084
    %vm3086 = vcmp.eq.f32.partialorder %v2990, inf
    %v3087 = vsel %vm3086, %v2990, %v3085
    %vm3088 = vcmp.eq.f32.partialorder %v2990, 0.0
    %v3089 = vand.u32 %v2990, 2147483648
    %v3090 = vsel %vm3088, %v3089, %v3087
    %v3091 = vrsqrt.pop %v2991
    %v3092 = vmul.f32 %v2991, %v3091
    %vm3093 = vcmp.eq.f32.partialorder %v2991, inf
    %v3094 = vsel %vm3093, %v2991, %v3092
    %vm3095 = vcmp.eq.f32.partialorder %v2991, 0.0
    %v3096 = vand.u32 %v2991, 2147483648
    %v3097 = vsel %vm3095, %v3096, %v3094
    %v3098 = vrsqrt.pop %v2992
    %v3099 = vmul.f32 %v2992, %v3098
    %vm3100 = vcmp.eq.f32.partialorder %v2992, inf
    %v3101 = vsel %vm3100, %v2992, %v3099
    %vm3102 = vcmp.eq.f32.partialorder %v2992, 0.0
    %v3103 = vand.u32 %v2992, 2147483648
    %v3104 = vsel %vm3102, %v3103, %v3101
    %v3105 = vrsqrt.pop %v2993
    %v3106 = vmul.f32 %v2993, %v3105
    %vm3107 = vcmp.eq.f32.partialorder %v2993, inf
    %v3108 = vsel %vm3107, %v2993, %v3106
    %vm3109 = vcmp.eq.f32.partialorder %v2993, 0.0
    %v3110 = vand.u32 %v2993, 2147483648
    %v3111 = vsel %vm3109, %v3110, %v3108
    %v3112 = vrsqrt.pop %v2994
    %v3113 = vmul.f32 %v2994, %v3112
    %vm3114 = vcmp.eq.f32.partialorder %v2994, inf
    %v3115 = vsel %vm3114, %v2994, %v3113
    %vm3116 = vcmp.eq.f32.partialorder %v2994, 0.0
    %v3117 = vand.u32 %v2994, 2147483648
    %v3118 = vsel %vm3116, %v3117, %v3115
    %v3119 = vrsqrt.pop %v2995
    %v3120 = vmul.f32 %v2995, %v3119
    %vm3121 = vcmp.eq.f32.partialorder %v2995, inf
    %v3122 = vsel %vm3121, %v2995, %v3120
    %vm3123 = vcmp.eq.f32.partialorder %v2995, 0.0
    %v3124 = vand.u32 %v2995, 2147483648
    %v3125 = vsel %vm3123, %v3124, %v3122
    %v3126 = vrsqrt.pop %v2996
    %v3127 = vmul.f32 %v2996, %v3126
    %vm3128 = vcmp.eq.f32.partialorder %v2996, inf
    %v3129 = vsel %vm3128, %v2996, %v3127
    %vm3130 = vcmp.eq.f32.partialorder %v2996, 0.0
    %v3131 = vand.u32 %v2996, 2147483648
    %v3132 = vsel %vm3130, %v3131, %v3129
    %v3133 = vrsqrt.pop %v2997
    %v3134 = vmul.f32 %v2997, %v3133
    %vm3135 = vcmp.eq.f32.partialorder %v2997, inf
    %v3136 = vsel %vm3135, %v2997, %v3134
    %vm3137 = vcmp.eq.f32.partialorder %v2997, 0.0
    %v3138 = vand.u32 %v2997, 2147483648
    %v3139 = vsel %vm3137, %v3138, %v3136
    %v3140 = vrsqrt.pop %v2998
    %v3141 = vmul.f32 %v2998, %v3140
    %vm3142 = vcmp.eq.f32.partialorder %v2998, inf
    %v3143 = vsel %vm3142, %v2998, %v3141
    %vm3144 = vcmp.eq.f32.partialorder %v2998, 0.0
    %v3145 = vand.u32 %v2998, 2147483648
    %v3146 = vsel %vm3144, %v3145, %v3143
    %v3147 = vrsqrt.pop %v2999
    %v3148 = vmul.f32 %v2999, %v3147
    %vm3149 = vcmp.eq.f32.partialorder %v2999, inf
    %v3150 = vsel %vm3149, %v2999, %v3148
    %vm3151 = vcmp.eq.f32.partialorder %v2999, 0.0
    %v3152 = vand.u32 %v2999, 2147483648
    %v3153 = vsel %vm3151, %v3152, %v3150
    %v3154 = vrsqrt.pop %v3000
    %v3155 = vmul.f32 %v3000, %v3154
    %vm3156 = vcmp.eq.f32.partialorder %v3000, inf
    %v3157 = vsel %vm3156, %v3000, %v3155
    %vm3158 = vcmp.eq.f32.partialorder %v3000, 0.0
    %v3159 = vand.u32 %v3000, 2147483648
    %v3160 = vsel %vm3158, %v3159, %v3157
    %v3161 = vrsqrt.pop %v3001
    %v3162 = vmul.f32 %v3001, %v3161
    %vm3163 = vcmp.eq.f32.partialorder %v3001, inf
    %v3164 = vsel %vm3163, %v3001, %v3162
    %vm3165 = vcmp.eq.f32.partialorder %v3001, 0.0
    %v3166 = vand.u32 %v3001, 2147483648
    %v3167 = vsel %vm3165, %v3166, %v3164
    %v3168 = vrsqrt.pop %v3002
    %v3169 = vmul.f32 %v3002, %v3168
    %vm3170 = vcmp.eq.f32.partialorder %v3002, inf
    %v3171 = vsel %vm3170, %v3002, %v3169
    %vm3172 = vcmp.eq.f32.partialorder %v3002, 0.0
    %v3173 = vand.u32 %v3002, 2147483648
    %v3174 = vsel %vm3172, %v3173, %v3171
    %v3175 = vrsqrt.pop %v3003
    %v3176 = vmul.f32 %v3003, %v3175
    %vm3177 = vcmp.eq.f32.partialorder %v3003, inf
    %v3178 = vsel %vm3177, %v3003, %v3176
    %vm3179 = vcmp.eq.f32.partialorder %v3003, 0.0
    %v3180 = vand.u32 %v3003, 2147483648
    %v3181 = vsel %vm3179, %v3180, %v3178
    %v3182 = vrsqrt.pop %v3004
    %v3183 = vmul.f32 %v3004, %v3182
    %vm3184 = vcmp.eq.f32.partialorder %v3004, inf
    %v3185 = vsel %vm3184, %v3004, %v3183
    %vm3186 = vcmp.eq.f32.partialorder %v3004, 0.0
    %v3187 = vand.u32 %v3004, 2147483648
    %v3188 = vsel %vm3186, %v3187, %v3185
    %v3189 = vrsqrt.pop %v3005
    %v3190 = vmul.f32 %v3005, %v3189
    %vm3191 = vcmp.eq.f32.partialorder %v3005, inf
    %v3192 = vsel %vm3191, %v3005, %v3190
    %vm3193 = vcmp.eq.f32.partialorder %v3005, 0.0
    %v3194 = vand.u32 %v3005, 2147483648
    %v3195 = vsel %vm3193, %v3194, %v3192
    %v3196 = vrsqrt.pop %v3006
    %v3197 = vmul.f32 %v3006, %v3196
    %vm3198 = vcmp.eq.f32.partialorder %v3006, inf
    %v3199 = vsel %vm3198, %v3006, %v3197
    %vm3200 = vcmp.eq.f32.partialorder %v3006, 0.0
    %v3201 = vand.u32 %v3006, 2147483648
    %v3202 = vsel %vm3200, %v3201, %v3199
    %v3203 = vrsqrt.pop %v3007
    %v3204 = vmul.f32 %v3007, %v3203
    %vm3205 = vcmp.eq.f32.partialorder %v3007, inf
    %v3206 = vsel %vm3205, %v3007, %v3204
    %vm3207 = vcmp.eq.f32.partialorder %v3007, 0.0
    %v3208 = vand.u32 %v3007, 2147483648
    %v3209 = vsel %vm3207, %v3208, %v3206
    %v3210 = vrsqrt.pop %v3008
    %v3211 = vmul.f32 %v3008, %v3210
    %vm3212 = vcmp.eq.f32.partialorder %v3008, inf
    %v3213 = vsel %vm3212, %v3008, %v3211
    %vm3214 = vcmp.eq.f32.partialorder %v3008, 0.0
    %v3215 = vand.u32 %v3008, 2147483648
    %v3216 = vsel %vm3214, %v3215, %v3213
    %v3217 = vrsqrt.pop %v3009
    %v3218 = vmul.f32 %v3009, %v3217
    %vm3219 = vcmp.eq.f32.partialorder %v3009, inf
    %v3220 = vsel %vm3219, %v3009, %v3218
    %vm3221 = vcmp.eq.f32.partialorder %v3009, 0.0
    %v3222 = vand.u32 %v3009, 2147483648
    %v3223 = vsel %vm3221, %v3222, %v3220
    %v3224 = vrsqrt.pop %v3010
    %v3225 = vmul.f32 %v3010, %v3224
    %vm3226 = vcmp.eq.f32.partialorder %v3010, inf
    %v3227 = vsel %vm3226, %v3010, %v3225
    %vm3228 = vcmp.eq.f32.partialorder %v3010, 0.0
    %v3229 = vand.u32 %v3010, 2147483648
    %v3230 = vsel %vm3228, %v3229, %v3227
    %v3231 = vrsqrt.pop %v3011
    %v3232 = vmul.f32 %v3011, %v3231
    %vm3233 = vcmp.eq.f32.partialorder %v3011, inf
    %v3234 = vsel %vm3233, %v3011, %v3232
    %vm3235 = vcmp.eq.f32.partialorder %v3011, 0.0
    %v3236 = vand.u32 %v3011, 2147483648
    %v3237 = vsel %vm3235, %v3236, %v3234
    %v3238 = vrsqrt.pop %v3012
    %v3239 = vmul.f32 %v3012, %v3238
    %vm3240 = vcmp.eq.f32.partialorder %v3012, inf
    %v3241 = vsel %vm3240, %v3012, %v3239
    %vm3242 = vcmp.eq.f32.partialorder %v3012, 0.0
    %v3243 = vand.u32 %v3012, 2147483648
    %v3244 = vsel %vm3242, %v3243, %v3241
    %v3245 = vrsqrt.pop %v3013
    %v3246 = vmul.f32 %v3013, %v3245
    %vm3247 = vcmp.eq.f32.partialorder %v3013, inf
    %v3248 = vsel %vm3247, %v3013, %v3246
    %vm3249 = vcmp.eq.f32.partialorder %v3013, 0.0
    %v3250 = vand.u32 %v3013, 2147483648
    %v3251 = vsel %vm3249, %v3250, %v3248
    %v3252 = vrsqrt.pop %v3014
    %v3253 = vmul.f32 %v3014, %v3252
    %vm3254 = vcmp.eq.f32.partialorder %v3014, inf
    %v3255 = vsel %vm3254, %v3014, %v3253
    %vm3256 = vcmp.eq.f32.partialorder %v3014, 0.0
    %v3257 = vand.u32 %v3014, 2147483648
    %v3258 = vsel %vm3256, %v3257, %v3255
    %v3259 = vrsqrt.pop %v3015
    %v3260 = vmul.f32 %v3015, %v3259
    %vm3261 = vcmp.eq.f32.partialorder %v3015, inf
    %v3262 = vsel %vm3261, %v3015, %v3260
    %vm3263 = vcmp.eq.f32.partialorder %v3015, 0.0
    %v3264 = vand.u32 %v3015, 2147483648
    %v3265 = vsel %vm3263, %v3264, %v3262
    %v3266 = vrsqrt.pop %v3016
    %v3267 = vmul.f32 %v3016, %v3266
    %vm3268 = vcmp.eq.f32.partialorder %v3016, inf
    %v3269 = vsel %vm3268, %v3016, %v3267
    %vm3270 = vcmp.eq.f32.partialorder %v3016, 0.0
    %v3271 = vand.u32 %v3016, 2147483648
    %v3272 = vsel %vm3270, %v3271, %v3269
    %v3273 = vrsqrt.pop %v3017
    %v3274 = vmul.f32 %v3017, %v3273
    %vm3275 = vcmp.eq.f32.partialorder %v3017, inf
    %v3276 = vsel %vm3275, %v3017, %v3274
    %vm3277 = vcmp.eq.f32.partialorder %v3017, 0.0
    %v3278 = vand.u32 %v3017, 2147483648
    %v3279 = vsel %vm3277, %v3278, %v3276
    %v3280 = vrsqrt.pop %v3018
    %v3281 = vmul.f32 %v3018, %v3280
    %vm3282 = vcmp.eq.f32.partialorder %v3018, inf
    %v3283 = vsel %vm3282, %v3018, %v3281
    %vm3284 = vcmp.eq.f32.partialorder %v3018, 0.0
    %v3285 = vand.u32 %v3018, 2147483648
    %v3286 = vsel %vm3284, %v3285, %v3283
    %v3287 = vrsqrt.pop %v3019
    %v3288 = vmul.f32 %v3019, %v3287
    %vm3289 = vcmp.eq.f32.partialorder %v3019, inf
    %v3290 = vsel %vm3289, %v3019, %v3288
    %vm3291 = vcmp.eq.f32.partialorder %v3019, 0.0
    %v3292 = vand.u32 %v3019, 2147483648
    %v3293 = vsel %vm3291, %v3292, %v3290
    %v3294 = vrsqrt.pop %v3020
    %v3295 = vmul.f32 %v3020, %v3294
    %vm3296 = vcmp.eq.f32.partialorder %v3020, inf
    %v3297 = vsel %vm3296, %v3020, %v3295
    %vm3298 = vcmp.eq.f32.partialorder %v3020, 0.0
    %v3299 = vand.u32 %v3020, 2147483648
    %v3300 = vsel %vm3298, %v3299, %v3297
    %v3301 = vrsqrt.pop %v3021
    %v3302 = vmul.f32 %v3021, %v3301
    %vm3303 = vcmp.eq.f32.partialorder %v3021, inf
    %v3304 = vsel %vm3303, %v3021, %v3302
    %vm3305 = vcmp.eq.f32.partialorder %v3021, 0.0
    %v3306 = vand.u32 %v3021, 2147483648
    %v3307 = vsel %vm3305, %v3306, %v3304
    %v3308 = vrsqrt.pop %v3022
    %v3309 = vmul.f32 %v3022, %v3308
    %vm3310 = vcmp.eq.f32.partialorder %v3022, inf
    %v3311 = vsel %vm3310, %v3022, %v3309
    %vm3312 = vcmp.eq.f32.partialorder %v3022, 0.0
    %v3313 = vand.u32 %v3022, 2147483648
    %v3314 = vsel %vm3312, %v3313, %v3311
    %v3315 = vrsqrt.pop %v3023
    %v3316 = vmul.f32 %v3023, %v3315
    %vm3317 = vcmp.eq.f32.partialorder %v3023, inf
    %v3318 = vsel %vm3317, %v3023, %v3316
    %vm3319 = vcmp.eq.f32.partialorder %v3023, 0.0
    %v3320 = vand.u32 %v3023, 2147483648
    %v3321 = vsel %vm3319, %v3320, %v3318
    %v3322 = vrsqrt.pop %v3024
    %v3323 = vmul.f32 %v3024, %v3322
    %vm3324 = vcmp.eq.f32.partialorder %v3024, inf
    %v3325 = vsel %vm3324, %v3024, %v3323
    %vm3326 = vcmp.eq.f32.partialorder %v3024, 0.0
    %v3327 = vand.u32 %v3024, 2147483648
    %v3328 = vsel %vm3326, %v3327, %v3325
    %v3329 = vrsqrt.pop %v3025
    %v3330 = vmul.f32 %v3025, %v3329
    %vm3331 = vcmp.eq.f32.partialorder %v3025, inf
    %v3332 = vsel %vm3331, %v3025, %v3330
    %vm3333 = vcmp.eq.f32.partialorder %v3025, 0.0
    %v3334 = vand.u32 %v3025, 2147483648
    %v3335 = vsel %vm3333, %v3334, %v3332
    %v3336 = vrsqrt.pop %v3026
    %v3337 = vmul.f32 %v3026, %v3336
    %vm3338 = vcmp.eq.f32.partialorder %v3026, inf
    %v3339 = vsel %vm3338, %v3026, %v3337
    %vm3340 = vcmp.eq.f32.partialorder %v3026, 0.0
    %v3341 = vand.u32 %v3026, 2147483648
    %v3342 = vsel %vm3340, %v3341, %v3339
    %v3343 = vrsqrt.pop %v3027
    %v3344 = vmul.f32 %v3027, %v3343
    %vm3345 = vcmp.eq.f32.partialorder %v3027, inf
    %v3346 = vsel %vm3345, %v3027, %v3344
    %vm3347 = vcmp.eq.f32.partialorder %v3027, 0.0
    %v3348 = vand.u32 %v3027, 2147483648
    %v3349 = vsel %vm3347, %v3348, %v3346
    %v3350 = vrsqrt.pop %v3028
    %v3351 = vmul.f32 %v3028, %v3350
    %vm3352 = vcmp.eq.f32.partialorder %v3028, inf
    %v3353 = vsel %vm3352, %v3028, %v3351
    %vm3354 = vcmp.eq.f32.partialorder %v3028, 0.0
    %v3355 = vand.u32 %v3028, 2147483648
    %v3356 = vsel %vm3354, %v3355, %v3353
    %v3357 = vrsqrt.pop %v3029
    %v3358 = vmul.f32 %v3029, %v3357
    %vm3359 = vcmp.eq.f32.partialorder %v3029, inf
    %v3360 = vsel %vm3359, %v3029, %v3358
    %vm3361 = vcmp.eq.f32.partialorder %v3029, 0.0
    %v3362 = vand.u32 %v3029, 2147483648
    %v3363 = vsel %vm3361, %v3362, %v3360
    %v3364 = vrsqrt.pop %v3030
    %v3365 = vmul.f32 %v3030, %v3364
    %vm3366 = vcmp.eq.f32.partialorder %v3030, inf
    %v3367 = vsel %vm3366, %v3030, %v3365
    %vm3368 = vcmp.eq.f32.partialorder %v3030, 0.0
    %v3369 = vand.u32 %v3030, 2147483648
    %v3370 = vsel %vm3368, %v3369, %v3367
    %v3371 = vrsqrt.pop %v3031
    %v3372 = vmul.f32 %v3031, %v3371
    %vm3373 = vcmp.eq.f32.partialorder %v3031, inf
    %v3374 = vsel %vm3373, %v3031, %v3372
    %vm3375 = vcmp.eq.f32.partialorder %v3031, 0.0
    %v3376 = vand.u32 %v3031, 2147483648
    %v3377 = vsel %vm3375, %v3376, %v3374
    %v3378 = vrsqrt.pop %v3032
    %v3379 = vmul.f32 %v3032, %v3378
    %vm3380 = vcmp.eq.f32.partialorder %v3032, inf
    %v3381 = vsel %vm3380, %v3032, %v3379
    %vm3382 = vcmp.eq.f32.partialorder %v3032, 0.0
    %v3383 = vand.u32 %v3032, 2147483648
    %v3384 = vsel %vm3382, %v3383, %v3381
    %v3385 = vrsqrt.pop %v3033
    %v3386 = vmul.f32 %v3033, %v3385
    %vm3387 = vcmp.eq.f32.partialorder %v3033, inf
    %v3388 = vsel %vm3387, %v3033, %v3386
    %vm3389 = vcmp.eq.f32.partialorder %v3033, 0.0
    %v3390 = vand.u32 %v3033, 2147483648
    %v3391 = vsel %vm3389, %v3390, %v3388
    %v3392 = vrsqrt.pop %v3034
    %v3393 = vmul.f32 %v3034, %v3392
    %vm3394 = vcmp.eq.f32.partialorder %v3034, inf
    %v3395 = vsel %vm3394, %v3034, %v3393
    %vm3396 = vcmp.eq.f32.partialorder %v3034, 0.0
    %v3397 = vand.u32 %v3034, 2147483648
    %v3398 = vsel %vm3396, %v3397, %v3395
    %v3399 = vrsqrt.pop %v3035
    %v3400 = vmul.f32 %v3035, %v3399
    %vm3401 = vcmp.eq.f32.partialorder %v3035, inf
    %v3402 = vsel %vm3401, %v3035, %v3400
    %vm3403 = vcmp.eq.f32.partialorder %v3035, 0.0
    %v3404 = vand.u32 %v3035, 2147483648
    %v3405 = vsel %vm3403, %v3404, %v3402
    %v3406 = vrsqrt.pop %v3036
    %v3407 = vmul.f32 %v3036, %v3406
    %vm3408 = vcmp.eq.f32.partialorder %v3036, inf
    %v3409 = vsel %vm3408, %v3036, %v3407
    %vm3410 = vcmp.eq.f32.partialorder %v3036, 0.0
    %v3411 = vand.u32 %v3036, 2147483648
    %v3412 = vsel %vm3410, %v3411, %v3409
    %v3413 = vrsqrt.pop %v3037
    %v3414 = vmul.f32 %v3037, %v3413
    %vm3415 = vcmp.eq.f32.partialorder %v3037, inf
    %v3416 = vsel %vm3415, %v3037, %v3414
    %vm3417 = vcmp.eq.f32.partialorder %v3037, 0.0
    %v3418 = vand.u32 %v3037, 2147483648
    %v3419 = vsel %vm3417, %v3418, %v3416
    %v3420 = vrsqrt.pop %v3038
    %v3421 = vmul.f32 %v3038, %v3420
    %vm3422 = vcmp.eq.f32.partialorder %v3038, inf
    %v3423 = vsel %vm3422, %v3038, %v3421
    %vm3424 = vcmp.eq.f32.partialorder %v3038, 0.0
    %v3425 = vand.u32 %v3038, 2147483648
    %v3426 = vsel %vm3424, %v3425, %v3423
    %v3427 = vrsqrt.pop %v3039
    %v3428 = vmul.f32 %v3039, %v3427
    %vm3429 = vcmp.eq.f32.partialorder %v3039, inf
    %v3430 = vsel %vm3429, %v3039, %v3428
    %vm3431 = vcmp.eq.f32.partialorder %v3039, 0.0
    %v3432 = vand.u32 %v3039, 2147483648
    %v3433 = vsel %vm3431, %v3432, %v3430
    %v3434 = vrsqrt.pop %v3040
    %v3435 = vmul.f32 %v3040, %v3434
    %vm3436 = vcmp.eq.f32.partialorder %v3040, inf
    %v3437 = vsel %vm3436, %v3040, %v3435
    %vm3438 = vcmp.eq.f32.partialorder %v3040, 0.0
    %v3439 = vand.u32 %v3040, 2147483648
    %v3440 = vsel %vm3438, %v3439, %v3437
    %v3441 = vrsqrt.pop %v3041
    %v3442 = vmul.f32 %v3041, %v3441
    %vm3443 = vcmp.eq.f32.partialorder %v3041, inf
    %v3444 = vsel %vm3443, %v3041, %v3442
    %vm3445 = vcmp.eq.f32.partialorder %v3041, 0.0
    %v3446 = vand.u32 %v3041, 2147483648
    %v3447 = vsel %vm3445, %v3446, %v3444
    %v3448 = vrsqrt.pop %v3042
    %v3449 = vmul.f32 %v3042, %v3448
    %vm3450 = vcmp.eq.f32.partialorder %v3042, inf
    %v3451 = vsel %vm3450, %v3042, %v3449
    %vm3452 = vcmp.eq.f32.partialorder %v3042, 0.0
    %v3453 = vand.u32 %v3042, 2147483648
    %v3454 = vsel %vm3452, %v3453, %v3451
    %v3455 = vrsqrt.pop %v3043
    %v3456 = vmul.f32 %v3043, %v3455
    %vm3457 = vcmp.eq.f32.partialorder %v3043, inf
    %v3458 = vsel %vm3457, %v3043, %v3456
    %vm3459 = vcmp.eq.f32.partialorder %v3043, 0.0
    %v3460 = vand.u32 %v3043, 2147483648
    %v3461 = vsel %vm3459, %v3460, %v3458
    %v3462 = vrsqrt.pop %v3044
    %v3463 = vmul.f32 %v3044, %v3462
    %vm3464 = vcmp.eq.f32.partialorder %v3044, inf
    %v3465 = vsel %vm3464, %v3044, %v3463
    %vm3466 = vcmp.eq.f32.partialorder %v3044, 0.0
    %v3467 = vand.u32 %v3044, 2147483648
    %v3468 = vsel %vm3466, %v3467, %v3465
    %v3469 = vrsqrt.pop %v3045
    %v3470 = vmul.f32 %v3045, %v3469
    %vm3471 = vcmp.eq.f32.partialorder %v3045, inf
    %v3472 = vsel %vm3471, %v3045, %v3470
    %vm3473 = vcmp.eq.f32.partialorder %v3045, 0.0
    %v3474 = vand.u32 %v3045, 2147483648
    %v3475 = vsel %vm3473, %v3474, %v3472
    %v3476 = vrsqrt.pop %v3046
    %v3477 = vmul.f32 %v3046, %v3476
    %vm3478 = vcmp.eq.f32.partialorder %v3046, inf
    %v3479 = vsel %vm3478, %v3046, %v3477
    %vm3480 = vcmp.eq.f32.partialorder %v3046, 0.0
    %v3481 = vand.u32 %v3046, 2147483648
    %v3482 = vsel %vm3480, %v3481, %v3479
    %v3483 = vrsqrt.pop %v3047
    %v3484 = vmul.f32 %v3047, %v3483
    %vm3485 = vcmp.eq.f32.partialorder %v3047, inf
    %v3486 = vsel %vm3485, %v3047, %v3484
    %vm3487 = vcmp.eq.f32.partialorder %v3047, 0.0
    %v3488 = vand.u32 %v3047, 2147483648
    %v3489 = vsel %vm3487, %v3488, %v3486
    %v3490 = vrsqrt.pop %v3048
    %v3491 = vmul.f32 %v3048, %v3490
    %vm3492 = vcmp.eq.f32.partialorder %v3048, inf
    %v3493 = vsel %vm3492, %v3048, %v3491
    %vm3494 = vcmp.eq.f32.partialorder %v3048, 0.0
    %v3495 = vand.u32 %v3048, 2147483648
    %v3496 = vsel %vm3494, %v3495, %v3493
    %3497 = vset.pattern.permute.xlu0 0
    %3498 = vperm.xlu0 %3497, %v215
    %v3499 = vpop.permute.xlu0 %3498
    %3500 = vset.pattern.permute.xlu0 0
    %3501 = vperm.xlu0 %3500, %v216
    %v3502 = vpop.permute.xlu0 %3501
    %3503 = vset.pattern.permute.xlu0 0
    %3504 = vperm.xlu0 %3503, %v217
    %v3505 = vpop.permute.xlu0 %3504
    %3506 = vset.pattern.permute.xlu0 0
    %3507 = vperm.xlu0 %3506, %v218
    %v3508 = vpop.permute.xlu0 %3507
    %3509 = vset.pattern.permute.xlu0 0
    %3510 = vperm.xlu0 %3509, %v219
    %v3511 = vpop.permute.xlu0 %3510
    %3512 = vset.pattern.permute.xlu0 0
    %3513 = vperm.xlu0 %3512, %v220
    %v3514 = vpop.permute.xlu0 %3513
    %3515 = vset.pattern.permute.xlu0 0
    %3516 = vperm.xlu0 %3515, %v221
    %v3517 = vpop.permute.xlu0 %3516
    %3518 = vset.pattern.permute.xlu0 0
    %3519 = vperm.xlu0 %3518, %v222
    %v3520 = vpop.permute.xlu0 %3519
    %3521 = vset.pattern.permute.xlu0 0
    %3522 = vperm.xlu0 %3521, %v223
    %v3523 = vpop.permute.xlu0 %3522
    %3524 = vset.pattern.permute.xlu0 0
    %3525 = vperm.xlu0 %3524, %v224
    %v3526 = vpop.permute.xlu0 %3525
    %3527 = vset.pattern.permute.xlu0 0
    %3528 = vperm.xlu0 %3527, %v225
    %v3529 = vpop.permute.xlu0 %3528
    %3530 = vset.pattern.permute.xlu0 0
    %3531 = vperm.xlu0 %3530, %v226
    %v3532 = vpop.permute.xlu0 %3531
    %3533 = vset.pattern.permute.xlu0 0
    %3534 = vperm.xlu0 %3533, %v227
    %v3535 = vpop.permute.xlu0 %3534
    %3536 = vset.pattern.permute.xlu0 0
    %3537 = vperm.xlu0 %3536, %v228
    %v3538 = vpop.permute.xlu0 %3537
    %3539 = vset.pattern.permute.xlu0 0
    %3540 = vperm.xlu0 %3539, %v229
    %v3541 = vpop.permute.xlu0 %3540
    %3542 = vset.pattern.permute.xlu0 0
    %3543 = vperm.xlu0 %3542, %v230
    %v3544 = vpop.permute.xlu0 %3543
    %3545 = vset.pattern.permute.xlu0 0
    %3546 = vperm.xlu0 %3545, %v231
    %v3547 = vpop.permute.xlu0 %3546
    %3548 = vset.pattern.permute.xlu0 0
    %3549 = vperm.xlu0 %3548, %v232
    %v3550 = vpop.permute.xlu0 %3549
    %3551 = vset.pattern.permute.xlu0 0
    %3552 = vperm.xlu0 %3551, %v233
    %v3553 = vpop.permute.xlu0 %3552
    %3554 = vset.pattern.permute.xlu0 0
    %3555 = vperm.xlu0 %3554, %v234
    %v3556 = vpop.permute.xlu0 %3555
    %3557 = vset.pattern.permute.xlu0 0
    %3558 = vperm.xlu0 %3557, %v235
    %v3559 = vpop.permute.xlu0 %3558
    %3560 = vset.pattern.permute.xlu0 0
    %3561 = vperm.xlu0 %3560, %v236
    %v3562 = vpop.permute.xlu0 %3561
    %3563 = vset.pattern.permute.xlu0 0
    %3564 = vperm.xlu0 %3563, %v237
    %v3565 = vpop.permute.xlu0 %3564
    %3566 = vset.pattern.permute.xlu0 0
    %3567 = vperm.xlu0 %3566, %v238
    %v3568 = vpop.permute.xlu0 %3567
    %3569 = vset.pattern.permute.xlu0 0
    %3570 = vperm.xlu0 %3569, %v239
    %v3571 = vpop.permute.xlu0 %3570
    %3572 = vset.pattern.permute.xlu0 0
    %3573 = vperm.xlu0 %3572, %v240
    %v3574 = vpop.permute.xlu0 %3573
    %3575 = vset.pattern.permute.xlu0 0
    %3576 = vperm.xlu0 %3575, %v241
    %v3577 = vpop.permute.xlu0 %3576
    %3578 = vset.pattern.permute.xlu0 0
    %3579 = vperm.xlu0 %3578, %v242
    %v3580 = vpop.permute.xlu0 %3579
    %3581 = vset.pattern.permute.xlu0 0
    %3582 = vperm.xlu0 %3581, %v243
    %v3583 = vpop.permute.xlu0 %3582
    %3584 = vset.pattern.permute.xlu0 0
    %3585 = vperm.xlu0 %3584, %v244
    %v3586 = vpop.permute.xlu0 %3585
    %3587 = vset.pattern.permute.xlu0 0
    %3588 = vperm.xlu0 %3587, %v245
    %v3589 = vpop.permute.xlu0 %3588
    %3590 = vset.pattern.permute.xlu0 0
    %3591 = vperm.xlu0 %3590, %v246
    %v3592 = vpop.permute.xlu0 %3591
    %v3593 = vlaneseq
    %v3594 = vshrl.u32 %v3593, 7
    %v3595 = vsub.s32 0, %v3594
    %v3596 = vrot.slane %v247, %v3595
    %v3597 = vlaneseq
    %v3598 = vshrl.u32 %v3597, 7
    %v3599 = vsub.s32 1, %v3598
    %v3600 = vrot.slane %v247, %v3599
    %vm3601 = vcmp.eq.s32.totalorder %v3499, %v3596
    %vm3602 = vcmp.eq.s32.totalorder %v3499, %v3600
    %vm3603 = vcmp.eq.s32.totalorder %v3502, %v3596
    %vm3604 = vcmp.eq.s32.totalorder %v3502, %v3600
    %vm3605 = vcmp.eq.s32.totalorder %v3505, %v3596
    %vm3606 = vcmp.eq.s32.totalorder %v3505, %v3600
    %vm3607 = vcmp.eq.s32.totalorder %v3508, %v3596
    %vm3608 = vcmp.eq.s32.totalorder %v3508, %v3600
    %vm3609 = vcmp.eq.s32.totalorder %v3511, %v3596
    %vm3610 = vcmp.eq.s32.totalorder %v3511, %v3600
    %vm3611 = vcmp.eq.s32.totalorder %v3514, %v3596
    %vm3612 = vcmp.eq.s32.totalorder %v3514, %v3600
    %vm3613 = vcmp.eq.s32.totalorder %v3517, %v3596
    %vm3614 = vcmp.eq.s32.totalorder %v3517, %v3600
    %vm3615 = vcmp.eq.s32.totalorder %v3520, %v3596
    %vm3616 = vcmp.eq.s32.totalorder %v3520, %v3600
    %vm3617 = vcmp.eq.s32.totalorder %v3523, %v3596
    %vm3618 = vcmp.eq.s32.totalorder %v3523, %v3600
    %vm3619 = vcmp.eq.s32.totalorder %v3526, %v3596
    %vm3620 = vcmp.eq.s32.totalorder %v3526, %v3600
    %vm3621 = vcmp.eq.s32.totalorder %v3529, %v3596
    %vm3622 = vcmp.eq.s32.totalorder %v3529, %v3600
    %vm3623 = vcmp.eq.s32.totalorder %v3532, %v3596
    %vm3624 = vcmp.eq.s32.totalorder %v3532, %v3600
    %vm3625 = vcmp.eq.s32.totalorder %v3535, %v3596
    %vm3626 = vcmp.eq.s32.totalorder %v3535, %v3600
    %vm3627 = vcmp.eq.s32.totalorder %v3538, %v3596
    %vm3628 = vcmp.eq.s32.totalorder %v3538, %v3600
    %vm3629 = vcmp.eq.s32.totalorder %v3541, %v3596
    %vm3630 = vcmp.eq.s32.totalorder %v3541, %v3600
    %vm3631 = vcmp.eq.s32.totalorder %v3544, %v3596
    %vm3632 = vcmp.eq.s32.totalorder %v3544, %v3600
    %vm3633 = vcmp.eq.s32.totalorder %v3547, %v3596
    %vm3634 = vcmp.eq.s32.totalorder %v3547, %v3600
    %vm3635 = vcmp.eq.s32.totalorder %v3550, %v3596
    %vm3636 = vcmp.eq.s32.totalorder %v3550, %v3600
    %vm3637 = vcmp.eq.s32.totalorder %v3553, %v3596
    %vm3638 = vcmp.eq.s32.totalorder %v3553, %v3600
    %vm3639 = vcmp.eq.s32.totalorder %v3556, %v3596
    %vm3640 = vcmp.eq.s32.totalorder %v3556, %v3600
    %vm3641 = vcmp.eq.s32.totalorder %v3559, %v3596
    %vm3642 = vcmp.eq.s32.totalorder %v3559, %v3600
    %vm3643 = vcmp.eq.s32.totalorder %v3562, %v3596
    %vm3644 = vcmp.eq.s32.totalorder %v3562, %v3600
    %vm3645 = vcmp.eq.s32.totalorder %v3565, %v3596
    %vm3646 = vcmp.eq.s32.totalorder %v3565, %v3600
    %vm3647 = vcmp.eq.s32.totalorder %v3568, %v3596
    %vm3648 = vcmp.eq.s32.totalorder %v3568, %v3600
    %vm3649 = vcmp.eq.s32.totalorder %v3571, %v3596
    %vm3650 = vcmp.eq.s32.totalorder %v3571, %v3600
    %vm3651 = vcmp.eq.s32.totalorder %v3574, %v3596
    %vm3652 = vcmp.eq.s32.totalorder %v3574, %v3600
    %vm3653 = vcmp.eq.s32.totalorder %v3577, %v3596
    %vm3654 = vcmp.eq.s32.totalorder %v3577, %v3600
    %vm3655 = vcmp.eq.s32.totalorder %v3580, %v3596
    %vm3656 = vcmp.eq.s32.totalorder %v3580, %v3600
    %vm3657 = vcmp.eq.s32.totalorder %v3583, %v3596
    %vm3658 = vcmp.eq.s32.totalorder %v3583, %v3600
    %vm3659 = vcmp.eq.s32.totalorder %v3586, %v3596
    %vm3660 = vcmp.eq.s32.totalorder %v3586, %v3600
    %vm3661 = vcmp.eq.s32.totalorder %v3589, %v3596
    %vm3662 = vcmp.eq.s32.totalorder %v3589, %v3600
    %vm3663 = vcmp.eq.s32.totalorder %v3592, %v3596
    %vm3664 = vcmp.eq.s32.totalorder %v3592, %v3600
    %v3665 = vsel %vm214, 1, 0
    %v3666 = vlaneseq
    %v3667 = vshrl.u32 %v3666, 7
    %v3668 = vsub.s32 0, %v3667
    %v3669 = vrot.slane %v3665, %v3668
    %v3670 = vlaneseq
    %v3671 = vshrl.u32 %v3670, 7
    %v3672 = vsub.s32 1, %v3671
    %v3673 = vrot.slane %v3665, %v3672
    %vm3674 = vcmp.eq.s32.totalorder %v3669, 1
    %vm3675 = vcmp.eq.s32.totalorder %v3673, 1
    %vm3676 = vmand %vm3601, %vm3674
    %vm3677 = vmand %vm3602, %vm3675
    %vm3678 = vmand %vm3603, %vm3674
    %vm3679 = vmand %vm3604, %vm3675
    %vm3680 = vmand %vm3605, %vm3674
    %vm3681 = vmand %vm3606, %vm3675
    %vm3682 = vmand %vm3607, %vm3674
    %vm3683 = vmand %vm3608, %vm3675
    %vm3684 = vmand %vm3609, %vm3674
    %vm3685 = vmand %vm3610, %vm3675
    %vm3686 = vmand %vm3611, %vm3674
    %vm3687 = vmand %vm3612, %vm3675
    %vm3688 = vmand %vm3613, %vm3674
    %vm3689 = vmand %vm3614, %vm3675
    %vm3690 = vmand %vm3615, %vm3674
    %vm3691 = vmand %vm3616, %vm3675
    %vm3692 = vmand %vm3617, %vm3674
    %vm3693 = vmand %vm3618, %vm3675
    %vm3694 = vmand %vm3619, %vm3674
    %vm3695 = vmand %vm3620, %vm3675
    %vm3696 = vmand %vm3621, %vm3674
    %vm3697 = vmand %vm3622, %vm3675
    %vm3698 = vmand %vm3623, %vm3674
    %vm3699 = vmand %vm3624, %vm3675
    %vm3700 = vmand %vm3625, %vm3674
    %vm3701 = vmand %vm3626, %vm3675
    %vm3702 = vmand %vm3627, %vm3674
    %vm3703 = vmand %vm3628, %vm3675
    %vm3704 = vmand %vm3629, %vm3674
    %vm3705 = vmand %vm3630, %vm3675
    %vm3706 = vmand %vm3631, %vm3674
    %vm3707 = vmand %vm3632, %vm3675
    %vm3708 = vmand %vm3633, %vm3674
    %vm3709 = vmand %vm3634, %vm3675
    %vm3710 = vmand %vm3635, %vm3674
    %vm3711 = vmand %vm3636, %vm3675
    %vm3712 = vmand %vm3637, %vm3674
    %vm3713 = vmand %vm3638, %vm3675
    %vm3714 = vmand %vm3639, %vm3674
    %vm3715 = vmand %vm3640, %vm3675
    %vm3716 = vmand %vm3641, %vm3674
    %vm3717 = vmand %vm3642, %vm3675
    %vm3718 = vmand %vm3643, %vm3674
    %vm3719 = vmand %vm3644, %vm3675
    %vm3720 = vmand %vm3645, %vm3674
    %vm3721 = vmand %vm3646, %vm3675
    %vm3722 = vmand %vm3647, %vm3674
    %vm3723 = vmand %vm3648, %vm3675
    %vm3724 = vmand %vm3649, %vm3674
    %vm3725 = vmand %vm3650, %vm3675
    %vm3726 = vmand %vm3651, %vm3674
    %vm3727 = vmand %vm3652, %vm3675
    %vm3728 = vmand %vm3653, %vm3674
    %vm3729 = vmand %vm3654, %vm3675
    %vm3730 = vmand %vm3655, %vm3674
    %vm3731 = vmand %vm3656, %vm3675
    %vm3732 = vmand %vm3657, %vm3674
    %vm3733 = vmand %vm3658, %vm3675
    %vm3734 = vmand %vm3659, %vm3674
    %vm3735 = vmand %vm3660, %vm3675
    %vm3736 = vmand %vm3661, %vm3674
    %vm3737 = vmand %vm3662, %vm3675
    %vm3738 = vmand %vm3663, %vm3674
    %vm3739 = vmand %vm3664, %vm3675
    %vm3740 = vmxor %vm3601, 1
    %vm3741 = vmxor %vm3602, 1
    %vm3742 = vmxor %vm3603, 1
    %vm3743 = vmxor %vm3604, 1
    %vm3744 = vmxor %vm3605, 1
    %vm3745 = vmxor %vm3606, 1
    %vm3746 = vmxor %vm3607, 1
    %vm3747 = vmxor %vm3608, 1
    %vm3748 = vmxor %vm3609, 1
    %vm3749 = vmxor %vm3610, 1
    %vm3750 = vmxor %vm3611, 1
    %vm3751 = vmxor %vm3612, 1
    %vm3752 = vmxor %vm3613, 1
    %vm3753 = vmxor %vm3614, 1
    %vm3754 = vmxor %vm3615, 1
    %vm3755 = vmxor %vm3616, 1
    %vm3756 = vmxor %vm3617, 1
    %vm3757 = vmxor %vm3618, 1
    %vm3758 = vmxor %vm3619, 1
    %vm3759 = vmxor %vm3620, 1
    %vm3760 = vmxor %vm3621, 1
    %vm3761 = vmxor %vm3622, 1
    %vm3762 = vmxor %vm3623, 1
    %vm3763 = vmxor %vm3624, 1
    %vm3764 = vmxor %vm3625, 1
    %vm3765 = vmxor %vm3626, 1
    %vm3766 = vmxor %vm3627, 1
    %vm3767 = vmxor %vm3628, 1
    %vm3768 = vmxor %vm3629, 1
    %vm3769 = vmxor %vm3630, 1
    %vm3770 = vmxor %vm3631, 1
    %vm3771 = vmxor %vm3632, 1
    %vm3772 = vmxor %vm3633, 1
    %vm3773 = vmxor %vm3634, 1
    %vm3774 = vmxor %vm3635, 1
    %vm3775 = vmxor %vm3636, 1
    %vm3776 = vmxor %vm3637, 1
    %vm3777 = vmxor %vm3638, 1
    %vm3778 = vmxor %vm3639, 1
    %vm3779 = vmxor %vm3640, 1
    %vm3780 = vmxor %vm3641, 1
    %vm3781 = vmxor %vm3642, 1
    %vm3782 = vmxor %vm3643, 1
    %vm3783 = vmxor %vm3644, 1
    %vm3784 = vmxor %vm3645, 1
    %vm3785 = vmxor %vm3646, 1
    %vm3786 = vmxor %vm3647, 1
    %vm3787 = vmxor %vm3648, 1
    %vm3788 = vmxor %vm3649, 1
    %vm3789 = vmxor %vm3650, 1
    %vm3790 = vmxor %vm3651, 1
    %vm3791 = vmxor %vm3652, 1
    %vm3792 = vmxor %vm3653, 1
    %vm3793 = vmxor %vm3654, 1
    %vm3794 = vmxor %vm3655, 1
    %vm3795 = vmxor %vm3656, 1
    %vm3796 = vmxor %vm3657, 1
    %vm3797 = vmxor %vm3658, 1
    %vm3798 = vmxor %vm3659, 1
    %vm3799 = vmxor %vm3660, 1
    %vm3800 = vmxor %vm3661, 1
    %vm3801 = vmxor %vm3662, 1
    %vm3802 = vmxor %vm3663, 1
    %vm3803 = vmxor %vm3664, 1
    %vm3804 = vmand %vm3740, %vm3674
    %vm3805 = vmand %vm3741, %vm3675
    %vm3806 = vmand %vm3742, %vm3674
    %vm3807 = vmand %vm3743, %vm3675
    %vm3808 = vmand %vm3744, %vm3674
    %vm3809 = vmand %vm3745, %vm3675
    %vm3810 = vmand %vm3746, %vm3674
    %vm3811 = vmand %vm3747, %vm3675
    %vm3812 = vmand %vm3748, %vm3674
    %vm3813 = vmand %vm3749, %vm3675
    %vm3814 = vmand %vm3750, %vm3674
    %vm3815 = vmand %vm3751, %vm3675
    %vm3816 = vmand %vm3752, %vm3674
    %vm3817 = vmand %vm3753, %vm3675
    %vm3818 = vmand %vm3754, %vm3674
    %vm3819 = vmand %vm3755, %vm3675
    %vm3820 = vmand %vm3756, %vm3674
    %vm3821 = vmand %vm3757, %vm3675
    %vm3822 = vmand %vm3758, %vm3674
    %vm3823 = vmand %vm3759, %vm3675
    %vm3824 = vmand %vm3760, %vm3674
    %vm3825 = vmand %vm3761, %vm3675
    %vm3826 = vmand %vm3762, %vm3674
    %vm3827 = vmand %vm3763, %vm3675
    %vm3828 = vmand %vm3764, %vm3674
    %vm3829 = vmand %vm3765, %vm3675
    %vm3830 = vmand %vm3766, %vm3674
    %vm3831 = vmand %vm3767, %vm3675
    %vm3832 = vmand %vm3768, %vm3674
    %vm3833 = vmand %vm3769, %vm3675
    %vm3834 = vmand %vm3770, %vm3674
    %vm3835 = vmand %vm3771, %vm3675
    %vm3836 = vmand %vm3772, %vm3674
    %vm3837 = vmand %vm3773, %vm3675
    %vm3838 = vmand %vm3774, %vm3674
    %vm3839 = vmand %vm3775, %vm3675
    %vm3840 = vmand %vm3776, %vm3674
    %vm3841 = vmand %vm3777, %vm3675
    %vm3842 = vmand %vm3778, %vm3674
    %vm3843 = vmand %vm3779, %vm3675
    %vm3844 = vmand %vm3780, %vm3674
    %vm3845 = vmand %vm3781, %vm3675
    %vm3846 = vmand %vm3782, %vm3674
    %vm3847 = vmand %vm3783, %vm3675
    %vm3848 = vmand %vm3784, %vm3674
    %vm3849 = vmand %vm3785, %vm3675
    %vm3850 = vmand %vm3786, %vm3674
    %vm3851 = vmand %vm3787, %vm3675
    %vm3852 = vmand %vm3788, %vm3674
    %vm3853 = vmand %vm3789, %vm3675
    %vm3854 = vmand %vm3790, %vm3674
    %vm3855 = vmand %vm3791, %vm3675
    %vm3856 = vmand %vm3792, %vm3674
    %vm3857 = vmand %vm3793, %vm3675
    %vm3858 = vmand %vm3794, %vm3674
    %vm3859 = vmand %vm3795, %vm3675
    %vm3860 = vmand %vm3796, %vm3674
    %vm3861 = vmand %vm3797, %vm3675
    %vm3862 = vmand %vm3798, %vm3674
    %vm3863 = vmand %vm3799, %vm3675
    %vm3864 = vmand %vm3800, %vm3674
    %vm3865 = vmand %vm3801, %vm3675
    %vm3866 = vmand %vm3802, %vm3674
    %vm3867 = vmand %vm3803, %vm3675
    %v3868 = vsel %vm3676, 1, 0
    %v3869 = vsel %vm3677, 1, 0
    %v3870 = vsel %vm3678, 1, 0
    %v3871 = vsel %vm3679, 1, 0
    %v3872 = vsel %vm3680, 1, 0
    %v3873 = vsel %vm3681, 1, 0
    %v3874 = vsel %vm3682, 1, 0
    %v3875 = vsel %vm3683, 1, 0
    %v3876 = vsel %vm3684, 1, 0
    %v3877 = vsel %vm3685, 1, 0
    %v3878 = vsel %vm3686, 1, 0
    %v3879 = vsel %vm3687, 1, 0
    %v3880 = vsel %vm3688, 1, 0
    %v3881 = vsel %vm3689, 1, 0
    %v3882 = vsel %vm3690, 1, 0
    %v3883 = vsel %vm3691, 1, 0
    %v3884 = vsel %vm3692, 1, 0
    %v3885 = vsel %vm3693, 1, 0
    %v3886 = vsel %vm3694, 1, 0
    %v3887 = vsel %vm3695, 1, 0
    %v3888 = vsel %vm3696, 1, 0
    %v3889 = vsel %vm3697, 1, 0
    %v3890 = vsel %vm3698, 1, 0
    %v3891 = vsel %vm3699, 1, 0
    %v3892 = vsel %vm3700, 1, 0
    %v3893 = vsel %vm3701, 1, 0
    %v3894 = vsel %vm3702, 1, 0
    %v3895 = vsel %vm3703, 1, 0
    %v3896 = vsel %vm3704, 1, 0
    %v3897 = vsel %vm3705, 1, 0
    %v3898 = vsel %vm3706, 1, 0
    %v3899 = vsel %vm3707, 1, 0
    %v3900 = vsel %vm3708, 1, 0
    %v3901 = vsel %vm3709, 1, 0
    %v3902 = vsel %vm3710, 1, 0
    %v3903 = vsel %vm3711, 1, 0
    %v3904 = vsel %vm3712, 1, 0
    %v3905 = vsel %vm3713, 1, 0
    %v3906 = vsel %vm3714, 1, 0
    %v3907 = vsel %vm3715, 1, 0
    %v3908 = vsel %vm3716, 1, 0
    %v3909 = vsel %vm3717, 1, 0
    %v3910 = vsel %vm3718, 1, 0
    %v3911 = vsel %vm3719, 1, 0
    %v3912 = vsel %vm3720, 1, 0
    %v3913 = vsel %vm3721, 1, 0
    %v3914 = vsel %vm3722, 1, 0
    %v3915 = vsel %vm3723, 1, 0
    %v3916 = vsel %vm3724, 1, 0
    %v3917 = vsel %vm3725, 1, 0
    %v3918 = vsel %vm3726, 1, 0
    %v3919 = vsel %vm3727, 1, 0
    %v3920 = vsel %vm3728, 1, 0
    %v3921 = vsel %vm3729, 1, 0
    %v3922 = vsel %vm3730, 1, 0
    %v3923 = vsel %vm3731, 1, 0
    %v3924 = vsel %vm3732, 1, 0
    %v3925 = vsel %vm3733, 1, 0
    %v3926 = vsel %vm3734, 1, 0
    %v3927 = vsel %vm3735, 1, 0
    %v3928 = vsel %vm3736, 1, 0
    %v3929 = vsel %vm3737, 1, 0
    %v3930 = vsel %vm3738, 1, 0
    %v3931 = vsel %vm3739, 1, 0
    %v3932 = vcvt.s32.f32 %v3868
    %v3933 = vcvt.s32.f32 %v3869
    %v3934 = vcvt.s32.f32 %v3870
    %v3935 = vcvt.s32.f32 %v3871
    %v3936 = vcvt.s32.f32 %v3872
    %v3937 = vcvt.s32.f32 %v3873
    %v3938 = vcvt.s32.f32 %v3874
    %v3939 = vcvt.s32.f32 %v3875
    %v3940 = vcvt.s32.f32 %v3876
    %v3941 = vcvt.s32.f32 %v3877
    %v3942 = vcvt.s32.f32 %v3878
    %v3943 = vcvt.s32.f32 %v3879
    %v3944 = vcvt.s32.f32 %v3880
    %v3945 = vcvt.s32.f32 %v3881
    %v3946 = vcvt.s32.f32 %v3882
    %v3947 = vcvt.s32.f32 %v3883
    %v3948 = vcvt.s32.f32 %v3884
    %v3949 = vcvt.s32.f32 %v3885
    %v3950 = vcvt.s32.f32 %v3886
    %v3951 = vcvt.s32.f32 %v3887
    %v3952 = vcvt.s32.f32 %v3888
    %v3953 = vcvt.s32.f32 %v3889
    %v3954 = vcvt.s32.f32 %v3890
    %v3955 = vcvt.s32.f32 %v3891
    %v3956 = vcvt.s32.f32 %v3892
    %v3957 = vcvt.s32.f32 %v3893
    %v3958 = vcvt.s32.f32 %v3894
    %v3959 = vcvt.s32.f32 %v3895
    %v3960 = vcvt.s32.f32 %v3896
    %v3961 = vcvt.s32.f32 %v3897
    %v3962 = vcvt.s32.f32 %v3898
    %v3963 = vcvt.s32.f32 %v3899
    %v3964 = vcvt.s32.f32 %v3900
    %v3965 = vcvt.s32.f32 %v3901
    %v3966 = vcvt.s32.f32 %v3902
    %v3967 = vcvt.s32.f32 %v3903
    %v3968 = vcvt.s32.f32 %v3904
    %v3969 = vcvt.s32.f32 %v3905
    %v3970 = vcvt.s32.f32 %v3906
    %v3971 = vcvt.s32.f32 %v3907
    %v3972 = vcvt.s32.f32 %v3908
    %v3973 = vcvt.s32.f32 %v3909
    %v3974 = vcvt.s32.f32 %v3910
    %v3975 = vcvt.s32.f32 %v3911
    %v3976 = vcvt.s32.f32 %v3912
    %v3977 = vcvt.s32.f32 %v3913
    %v3978 = vcvt.s32.f32 %v3914
    %v3979 = vcvt.s32.f32 %v3915
    %v3980 = vcvt.s32.f32 %v3916
    %v3981 = vcvt.s32.f32 %v3917
    %v3982 = vcvt.s32.f32 %v3918
    %v3983 = vcvt.s32.f32 %v3919
    %v3984 = vcvt.s32.f32 %v3920
    %v3985 = vcvt.s32.f32 %v3921
    %v3986 = vcvt.s32.f32 %v3922
    %v3987 = vcvt.s32.f32 %v3923
    %v3988 = vcvt.s32.f32 %v3924
    %v3989 = vcvt.s32.f32 %v3925
    %v3990 = vcvt.s32.f32 %v3926
    %v3991 = vcvt.s32.f32 %v3927
    %v3992 = vcvt.s32.f32 %v3928
    %v3993 = vcvt.s32.f32 %v3929
    %v3994 = vcvt.s32.f32 %v3930
    %v3995 = vcvt.s32.f32 %v3931
    %v3996 = vadd.f32 %v3932, %v3933
    %3997 = vadd.xlane.f32.xlu0 %v3996
    %v3998 = vpop.xlane.xlu0 %3997
    %v3999 = vadd.f32 %v3934, %v3935
    %4000 = vadd.xlane.f32.xlu0 %v3999
    %v4001 = vpop.xlane.xlu0 %4000
    %v4002 = vadd.f32 %v3936, %v3937
    %4003 = vadd.xlane.f32.xlu0 %v4002
    %v4004 = vpop.xlane.xlu0 %4003
    %v4005 = vadd.f32 %v3938, %v3939
    %4006 = vadd.xlane.f32.xlu0 %v4005
    %v4007 = vpop.xlane.xlu0 %4006
    %v4008 = vadd.f32 %v3940, %v3941
    %4009 = vadd.xlane.f32.xlu0 %v4008
    %v4010 = vpop.xlane.xlu0 %4009
    %v4011 = vadd.f32 %v3942, %v3943
    %4012 = vadd.xlane.f32.xlu0 %v4011
    %v4013 = vpop.xlane.xlu0 %4012
    %v4014 = vadd.f32 %v3944, %v3945
    %4015 = vadd.xlane.f32.xlu0 %v4014
    %v4016 = vpop.xlane.xlu0 %4015
    %v4017 = vadd.f32 %v3946, %v3947
    %4018 = vadd.xlane.f32.xlu0 %v4017
    %v4019 = vpop.xlane.xlu0 %4018
    %v4020 = vadd.f32 %v3948, %v3949
    %4021 = vadd.xlane.f32.xlu0 %v4020
    %v4022 = vpop.xlane.xlu0 %4021
    %v4023 = vadd.f32 %v3950, %v3951
    %4024 = vadd.xlane.f32.xlu0 %v4023
    %v4025 = vpop.xlane.xlu0 %4024
    %v4026 = vadd.f32 %v3952, %v3953
    %4027 = vadd.xlane.f32.xlu0 %v4026
    %v4028 = vpop.xlane.xlu0 %4027
    %v4029 = vadd.f32 %v3954, %v3955
    %4030 = vadd.xlane.f32.xlu0 %v4029
    %v4031 = vpop.xlane.xlu0 %4030
    %v4032 = vadd.f32 %v3956, %v3957
    %4033 = vadd.xlane.f32.xlu0 %v4032
    %v4034 = vpop.xlane.xlu0 %4033
    %v4035 = vadd.f32 %v3958, %v3959
    %4036 = vadd.xlane.f32.xlu0 %v4035
    %v4037 = vpop.xlane.xlu0 %4036
    %v4038 = vadd.f32 %v3960, %v3961
    %4039 = vadd.xlane.f32.xlu0 %v4038
    %v4040 = vpop.xlane.xlu0 %4039
    %v4041 = vadd.f32 %v3962, %v3963
    %4042 = vadd.xlane.f32.xlu0 %v4041
    %v4043 = vpop.xlane.xlu0 %4042
    %v4044 = vadd.f32 %v3964, %v3965
    %4045 = vadd.xlane.f32.xlu0 %v4044
    %v4046 = vpop.xlane.xlu0 %4045
    %v4047 = vadd.f32 %v3966, %v3967
    %4048 = vadd.xlane.f32.xlu0 %v4047
    %v4049 = vpop.xlane.xlu0 %4048
    %v4050 = vadd.f32 %v3968, %v3969
    %4051 = vadd.xlane.f32.xlu0 %v4050
    %v4052 = vpop.xlane.xlu0 %4051
    %v4053 = vadd.f32 %v3970, %v3971
    %4054 = vadd.xlane.f32.xlu0 %v4053
    %v4055 = vpop.xlane.xlu0 %4054
    %v4056 = vadd.f32 %v3972, %v3973
    %4057 = vadd.xlane.f32.xlu0 %v4056
    %v4058 = vpop.xlane.xlu0 %4057
    %v4059 = vadd.f32 %v3974, %v3975
    %4060 = vadd.xlane.f32.xlu0 %v4059
    %v4061 = vpop.xlane.xlu0 %4060
    %v4062 = vadd.f32 %v3976, %v3977
    %4063 = vadd.xlane.f32.xlu0 %v4062
    %v4064 = vpop.xlane.xlu0 %4063
    %v4065 = vadd.f32 %v3978, %v3979
    %4066 = vadd.xlane.f32.xlu0 %v4065
    %v4067 = vpop.xlane.xlu0 %4066
    %v4068 = vadd.f32 %v3980, %v3981
    %4069 = vadd.xlane.f32.xlu0 %v4068
    %v4070 = vpop.xlane.xlu0 %4069
    %v4071 = vadd.f32 %v3982, %v3983
    %4072 = vadd.xlane.f32.xlu0 %v4071
    %v4073 = vpop.xlane.xlu0 %4072
    %v4074 = vadd.f32 %v3984, %v3985
    %4075 = vadd.xlane.f32.xlu0 %v4074
    %v4076 = vpop.xlane.xlu0 %4075
    %v4077 = vadd.f32 %v3986, %v3987
    %4078 = vadd.xlane.f32.xlu0 %v4077
    %v4079 = vpop.xlane.xlu0 %4078
    %v4080 = vadd.f32 %v3988, %v3989
    %4081 = vadd.xlane.f32.xlu0 %v4080
    %v4082 = vpop.xlane.xlu0 %4081
    %v4083 = vadd.f32 %v3990, %v3991
    %4084 = vadd.xlane.f32.xlu0 %v4083
    %v4085 = vpop.xlane.xlu0 %4084
    %v4086 = vadd.f32 %v3992, %v3993
    %4087 = vadd.xlane.f32.xlu0 %v4086
    %v4088 = vpop.xlane.xlu0 %4087
    %v4089 = vadd.f32 %v3994, %v3995
    %4090 = vadd.xlane.f32.xlu0 %v4089
    %v4091 = vpop.xlane.xlu0 %4090
    %v4092 = vmul.f32 %v3055, %v3932
    %v4093 = vmul.f32 %v3062, %v3933
    %v4094 = vmul.f32 %v3069, %v3934
    %v4095 = vmul.f32 %v3076, %v3935
    %v4096 = vmul.f32 %v3083, %v3936
    %v4097 = vmul.f32 %v3090, %v3937
    %v4098 = vmul.f32 %v3097, %v3938
    %v4099 = vmul.f32 %v3104, %v3939
    %v4100 = vmul.f32 %v3111, %v3940
    %v4101 = vmul.f32 %v3118, %v3941
    %v4102 = vmul.f32 %v3125, %v3942
    %v4103 = vmul.f32 %v3132, %v3943
    %v4104 = vmul.f32 %v3139, %v3944
    %v4105 = vmul.f32 %v3146, %v3945
    %v4106 = vmul.f32 %v3153, %v3946
    %v4107 = vmul.f32 %v3160, %v3947
    %v4108 = vmul.f32 %v3167, %v3948
    %v4109 = vmul.f32 %v3174, %v3949
    %v4110 = vmul.f32 %v3181, %v3950
    %v4111 = vmul.f32 %v3188, %v3951
    %v4112 = vmul.f32 %v3195, %v3952
    %v4113 = vmul.f32 %v3202, %v3953
    %v4114 = vmul.f32 %v3209, %v3954
    %v4115 = vmul.f32 %v3216, %v3955
    %v4116 = vmul.f32 %v3223, %v3956
    %v4117 = vmul.f32 %v3230, %v3957
    %v4118 = vmul.f32 %v3237, %v3958
    %v4119 = vmul.f32 %v3244, %v3959
    %v4120 = vmul.f32 %v3251, %v3960
    %v4121 = vmul.f32 %v3258, %v3961
    %v4122 = vmul.f32 %v3265, %v3962
    %v4123 = vmul.f32 %v3272, %v3963
    %v4124 = vmul.f32 %v3279, %v3964
    %v4125 = vmul.f32 %v3286, %v3965
    %v4126 = vmul.f32 %v3293, %v3966
    %v4127 = vmul.f32 %v3300, %v3967
    %v4128 = vmul.f32 %v3307, %v3968
    %v4129 = vmul.f32 %v3314, %v3969
    %v4130 = vmul.f32 %v3321, %v3970
    %v4131 = vmul.f32 %v3328, %v3971
    %v4132 = vmul.f32 %v3335, %v3972
    %v4133 = vmul.f32 %v3342, %v3973
    %v4134 = vmul.f32 %v3349, %v3974
    %v4135 = vmul.f32 %v3356, %v3975
    %v4136 = vmul.f32 %v3363, %v3976
    %v4137 = vmul.f32 %v3370, %v3977
    %v4138 = vmul.f32 %v3377, %v3978
    %v4139 = vmul.f32 %v3384, %v3979
    %v4140 = vmul.f32 %v3391, %v3980
    %v4141 = vmul.f32 %v3398, %v3981
    %v4142 = vmul.f32 %v3405, %v3982
    %v4143 = vmul.f32 %v3412, %v3983
    %v4144 = vmul.f32 %v3419, %v3984
    %v4145 = vmul.f32 %v3426, %v3985
    %v4146 = vmul.f32 %v3433, %v3986
    %v4147 = vmul.f32 %v3440, %v3987
    %v4148 = vmul.f32 %v3447, %v3988
    %v4149 = vmul.f32 %v3454, %v3989
    %v4150 = vmul.f32 %v3461, %v3990
    %v4151 = vmul.f32 %v3468, %v3991
    %v4152 = vmul.f32 %v3475, %v3992
    %v4153 = vmul.f32 %v3482, %v3993
    %v4154 = vmul.f32 %v3489, %v3994
    %v4155 = vmul.f32 %v3496, %v3995
    %v4156 = vadd.f32 %v4092, %v4093
    %4157 = vadd.xlane.f32.xlu0 %v4156
    %v4158 = vpop.xlane.xlu0 %4157
    %v4159 = vadd.f32 %v4094, %v4095
    %4160 = vadd.xlane.f32.xlu0 %v4159
    %v4161 = vpop.xlane.xlu0 %4160
    %v4162 = vadd.f32 %v4096, %v4097
    %4163 = vadd.xlane.f32.xlu0 %v4162
    %v4164 = vpop.xlane.xlu0 %4163
    %v4165 = vadd.f32 %v4098, %v4099
    %4166 = vadd.xlane.f32.xlu0 %v4165
    %v4167 = vpop.xlane.xlu0 %4166
    %v4168 = vadd.f32 %v4100, %v4101
    %4169 = vadd.xlane.f32.xlu0 %v4168
    %v4170 = vpop.xlane.xlu0 %4169
    %v4171 = vadd.f32 %v4102, %v4103
    %4172 = vadd.xlane.f32.xlu0 %v4171
    %v4173 = vpop.xlane.xlu0 %4172
    %v4174 = vadd.f32 %v4104, %v4105
    %4175 = vadd.xlane.f32.xlu0 %v4174
    %v4176 = vpop.xlane.xlu0 %4175
    %v4177 = vadd.f32 %v4106, %v4107
    %4178 = vadd.xlane.f32.xlu0 %v4177
    %v4179 = vpop.xlane.xlu0 %4178
    %v4180 = vadd.f32 %v4108, %v4109
    %4181 = vadd.xlane.f32.xlu0 %v4180
    %v4182 = vpop.xlane.xlu0 %4181
    %v4183 = vadd.f32 %v4110, %v4111
    %4184 = vadd.xlane.f32.xlu0 %v4183
    %v4185 = vpop.xlane.xlu0 %4184
    %v4186 = vadd.f32 %v4112, %v4113
    %4187 = vadd.xlane.f32.xlu0 %v4186
    %v4188 = vpop.xlane.xlu0 %4187
    %v4189 = vadd.f32 %v4114, %v4115
    %4190 = vadd.xlane.f32.xlu0 %v4189
    %v4191 = vpop.xlane.xlu0 %4190
    %v4192 = vadd.f32 %v4116, %v4117
    %4193 = vadd.xlane.f32.xlu0 %v4192
    %v4194 = vpop.xlane.xlu0 %4193
    %v4195 = vadd.f32 %v4118, %v4119
    %4196 = vadd.xlane.f32.xlu0 %v4195
    %v4197 = vpop.xlane.xlu0 %4196
    %v4198 = vadd.f32 %v4120, %v4121
    %4199 = vadd.xlane.f32.xlu0 %v4198
    %v4200 = vpop.xlane.xlu0 %4199
    %v4201 = vadd.f32 %v4122, %v4123
    %4202 = vadd.xlane.f32.xlu0 %v4201
    %v4203 = vpop.xlane.xlu0 %4202
    %v4204 = vadd.f32 %v4124, %v4125
    %4205 = vadd.xlane.f32.xlu0 %v4204
    %v4206 = vpop.xlane.xlu0 %4205
    %v4207 = vadd.f32 %v4126, %v4127
    %4208 = vadd.xlane.f32.xlu0 %v4207
    %v4209 = vpop.xlane.xlu0 %4208
    %v4210 = vadd.f32 %v4128, %v4129
    %4211 = vadd.xlane.f32.xlu0 %v4210
    %v4212 = vpop.xlane.xlu0 %4211
    %v4213 = vadd.f32 %v4130, %v4131
    %4214 = vadd.xlane.f32.xlu0 %v4213
    %v4215 = vpop.xlane.xlu0 %4214
    %v4216 = vadd.f32 %v4132, %v4133
    %4217 = vadd.xlane.f32.xlu0 %v4216
    %v4218 = vpop.xlane.xlu0 %4217
    %v4219 = vadd.f32 %v4134, %v4135
    %4220 = vadd.xlane.f32.xlu0 %v4219
    %v4221 = vpop.xlane.xlu0 %4220
    %v4222 = vadd.f32 %v4136, %v4137
    %4223 = vadd.xlane.f32.xlu0 %v4222
    %v4224 = vpop.xlane.xlu0 %4223
    %v4225 = vadd.f32 %v4138, %v4139
    %4226 = vadd.xlane.f32.xlu0 %v4225
    %v4227 = vpop.xlane.xlu0 %4226
    %v4228 = vadd.f32 %v4140, %v4141
    %4229 = vadd.xlane.f32.xlu0 %v4228
    %v4230 = vpop.xlane.xlu0 %4229
    %v4231 = vadd.f32 %v4142, %v4143
    %4232 = vadd.xlane.f32.xlu0 %v4231
    %v4233 = vpop.xlane.xlu0 %4232
    %v4234 = vadd.f32 %v4144, %v4145
    %4235 = vadd.xlane.f32.xlu0 %v4234
    %v4236 = vpop.xlane.xlu0 %4235
    %v4237 = vadd.f32 %v4146, %v4147
    %4238 = vadd.xlane.f32.xlu0 %v4237
    %v4239 = vpop.xlane.xlu0 %4238
    %v4240 = vadd.f32 %v4148, %v4149
    %4241 = vadd.xlane.f32.xlu0 %v4240
    %v4242 = vpop.xlane.xlu0 %4241
    %v4243 = vadd.f32 %v4150, %v4151
    %4244 = vadd.xlane.f32.xlu0 %v4243
    %v4245 = vpop.xlane.xlu0 %4244
    %v4246 = vadd.f32 %v4152, %v4153
    %4247 = vadd.xlane.f32.xlu0 %v4246
    %v4248 = vpop.xlane.xlu0 %4247
    %v4249 = vadd.f32 %v4154, %v4155
    %4250 = vadd.xlane.f32.xlu0 %v4249
    %v4251 = vpop.xlane.xlu0 %4250
    %v4252 = vmax.f32 %v3998, 1.0
    %v4253 = vmax.f32 %v4001, 1.0
    %v4254 = vmax.f32 %v4004, 1.0
    %v4255 = vmax.f32 %v4007, 1.0
    %v4256 = vmax.f32 %v4010, 1.0
    %v4257 = vmax.f32 %v4013, 1.0
    %v4258 = vmax.f32 %v4016, 1.0
    %v4259 = vmax.f32 %v4019, 1.0
    %v4260 = vmax.f32 %v4022, 1.0
    %v4261 = vmax.f32 %v4025, 1.0
    %v4262 = vmax.f32 %v4028, 1.0
    %v4263 = vmax.f32 %v4031, 1.0
    %v4264 = vmax.f32 %v4034, 1.0
    %v4265 = vmax.f32 %v4037, 1.0
    %v4266 = vmax.f32 %v4040, 1.0
    %v4267 = vmax.f32 %v4043, 1.0
    %v4268 = vmax.f32 %v4046, 1.0
    %v4269 = vmax.f32 %v4049, 1.0
    %v4270 = vmax.f32 %v4052, 1.0
    %v4271 = vmax.f32 %v4055, 1.0
    %v4272 = vmax.f32 %v4058, 1.0
    %v4273 = vmax.f32 %v4061, 1.0
    %v4274 = vmax.f32 %v4064, 1.0
    %v4275 = vmax.f32 %v4067, 1.0
    %v4276 = vmax.f32 %v4070, 1.0
    %v4277 = vmax.f32 %v4073, 1.0
    %v4278 = vmax.f32 %v4076, 1.0
    %v4279 = vmax.f32 %v4079, 1.0
    %v4280 = vmax.f32 %v4082, 1.0
    %v4281 = vmax.f32 %v4085, 1.0
    %v4282 = vmax.f32 %v4088, 1.0
    %v4283 = vmax.f32 %v4091, 1.0
    %v4284 = vrcp.pop %v4252
    %v4285 = vmul.f32 %v4158, %v4284
    %v4286 = vrcp.pop %v4253
    %v4287 = vmul.f32 %v4161, %v4286
    %v4288 = vrcp.pop %v4254
    %v4289 = vmul.f32 %v4164, %v4288
    %v4290 = vrcp.pop %v4255
    %v4291 = vmul.f32 %v4167, %v4290
    %v4292 = vrcp.pop %v4256
    %v4293 = vmul.f32 %v4170, %v4292
    %v4294 = vrcp.pop %v4257
    %v4295 = vmul.f32 %v4173, %v4294
    %v4296 = vrcp.pop %v4258
    %v4297 = vmul.f32 %v4176, %v4296
    %v4298 = vrcp.pop %v4259
    %v4299 = vmul.f32 %v4179, %v4298
    %v4300 = vrcp.pop %v4260
    %v4301 = vmul.f32 %v4182, %v4300
    %v4302 = vrcp.pop %v4261
    %v4303 = vmul.f32 %v4185, %v4302
    %v4304 = vrcp.pop %v4262
    %v4305 = vmul.f32 %v4188, %v4304
    %v4306 = vrcp.pop %v4263
    %v4307 = vmul.f32 %v4191, %v4306
    %v4308 = vrcp.pop %v4264
    %v4309 = vmul.f32 %v4194, %v4308
    %v4310 = vrcp.pop %v4265
    %v4311 = vmul.f32 %v4197, %v4310
    %v4312 = vrcp.pop %v4266
    %v4313 = vmul.f32 %v4200, %v4312
    %v4314 = vrcp.pop %v4267
    %v4315 = vmul.f32 %v4203, %v4314
    %v4316 = vrcp.pop %v4268
    %v4317 = vmul.f32 %v4206, %v4316
    %v4318 = vrcp.pop %v4269
    %v4319 = vmul.f32 %v4209, %v4318
    %v4320 = vrcp.pop %v4270
    %v4321 = vmul.f32 %v4212, %v4320
    %v4322 = vrcp.pop %v4271
    %v4323 = vmul.f32 %v4215, %v4322
    %v4324 = vrcp.pop %v4272
    %v4325 = vmul.f32 %v4218, %v4324
    %v4326 = vrcp.pop %v4273
    %v4327 = vmul.f32 %v4221, %v4326
    %v4328 = vrcp.pop %v4274
    %v4329 = vmul.f32 %v4224, %v4328
    %v4330 = vrcp.pop %v4275
    %v4331 = vmul.f32 %v4227, %v4330
    %v4332 = vrcp.pop %v4276
    %v4333 = vmul.f32 %v4230, %v4332
    %v4334 = vrcp.pop %v4277
    %v4335 = vmul.f32 %v4233, %v4334
    %v4336 = vrcp.pop %v4278
    %v4337 = vmul.f32 %v4236, %v4336
    %v4338 = vrcp.pop %v4279
    %v4339 = vmul.f32 %v4239, %v4338
    %v4340 = vrcp.pop %v4280
    %v4341 = vmul.f32 %v4242, %v4340
    %v4342 = vrcp.pop %v4281
    %v4343 = vmul.f32 %v4245, %v4342
    %v4344 = vrcp.pop %v4282
    %v4345 = vmul.f32 %v4248, %v4344
    %v4346 = vrcp.pop %v4283
    %v4347 = vmul.f32 %v4251, %v4346
    %v4348 = vsel %vm3804, %v3055, 1e+30
    %v4349 = vsel %vm3805, %v3062, 1e+30
    %v4350 = vsel %vm3806, %v3069, 1e+30
    %v4351 = vsel %vm3807, %v3076, 1e+30
    %v4352 = vsel %vm3808, %v3083, 1e+30
    %v4353 = vsel %vm3809, %v3090, 1e+30
    %v4354 = vsel %vm3810, %v3097, 1e+30
    %v4355 = vsel %vm3811, %v3104, 1e+30
    %v4356 = vsel %vm3812, %v3111, 1e+30
    %v4357 = vsel %vm3813, %v3118, 1e+30
    %v4358 = vsel %vm3814, %v3125, 1e+30
    %v4359 = vsel %vm3815, %v3132, 1e+30
    %v4360 = vsel %vm3816, %v3139, 1e+30
    %v4361 = vsel %vm3817, %v3146, 1e+30
    %v4362 = vsel %vm3818, %v3153, 1e+30
    %v4363 = vsel %vm3819, %v3160, 1e+30
    %v4364 = vsel %vm3820, %v3167, 1e+30
    %v4365 = vsel %vm3821, %v3174, 1e+30
    %v4366 = vsel %vm3822, %v3181, 1e+30
    %v4367 = vsel %vm3823, %v3188, 1e+30
    %v4368 = vsel %vm3824, %v3195, 1e+30
    %v4369 = vsel %vm3825, %v3202, 1e+30
    %v4370 = vsel %vm3826, %v3209, 1e+30
    %v4371 = vsel %vm3827, %v3216, 1e+30
    %v4372 = vsel %vm3828, %v3223, 1e+30
    %v4373 = vsel %vm3829, %v3230, 1e+30
    %v4374 = vsel %vm3830, %v3237, 1e+30
    %v4375 = vsel %vm3831, %v3244, 1e+30
    %v4376 = vsel %vm3832, %v3251, 1e+30
    %v4377 = vsel %vm3833, %v3258, 1e+30
    %v4378 = vsel %vm3834, %v3265, 1e+30
    %v4379 = vsel %vm3835, %v3272, 1e+30
    %v4380 = vsel %vm3836, %v3279, 1e+30
    %v4381 = vsel %vm3837, %v3286, 1e+30
    %v4382 = vsel %vm3838, %v3293, 1e+30
    %v4383 = vsel %vm3839, %v3300, 1e+30
    %v4384 = vsel %vm3840, %v3307, 1e+30
    %v4385 = vsel %vm3841, %v3314, 1e+30
    %v4386 = vsel %vm3842, %v3321, 1e+30
    %v4387 = vsel %vm3843, %v3328, 1e+30
    %v4388 = vsel %vm3844, %v3335, 1e+30
    %v4389 = vsel %vm3845, %v3342, 1e+30
    %v4390 = vsel %vm3846, %v3349, 1e+30
    %v4391 = vsel %vm3847, %v3356, 1e+30
    %v4392 = vsel %vm3848, %v3363, 1e+30
    %v4393 = vsel %vm3849, %v3370, 1e+30
    %v4394 = vsel %vm3850, %v3377, 1e+30
    %v4395 = vsel %vm3851, %v3384, 1e+30
    %v4396 = vsel %vm3852, %v3391, 1e+30
    %v4397 = vsel %vm3853, %v3398, 1e+30
    %v4398 = vsel %vm3854, %v3405, 1e+30
    %v4399 = vsel %vm3855, %v3412, 1e+30
    %v4400 = vsel %vm3856, %v3419, 1e+30
    %v4401 = vsel %vm3857, %v3426, 1e+30
    %v4402 = vsel %vm3858, %v3433, 1e+30
    %v4403 = vsel %vm3859, %v3440, 1e+30
    %v4404 = vsel %vm3860, %v3447, 1e+30
    %v4405 = vsel %vm3861, %v3454, 1e+30
    %v4406 = vsel %vm3862, %v3461, 1e+30
    %v4407 = vsel %vm3863, %v3468, 1e+30
    %v4408 = vsel %vm3864, %v3475, 1e+30
    %v4409 = vsel %vm3865, %v3482, 1e+30
    %v4410 = vsel %vm3866, %v3489, 1e+30
    %v4411 = vsel %vm3867, %v3496, 1e+30
    %v4412 = vmin.f32 %v4348, %v4349
    %4413 = vmin.xlane.f32.xlu0 %v4412
    %v4414 = vpop.xlane.xlu0 %4413
    %v4415 = vmin.f32 %v4350, %v4351
    %4416 = vmin.xlane.f32.xlu0 %v4415
    %v4417 = vpop.xlane.xlu0 %4416
    %v4418 = vmin.f32 %v4352, %v4353
    %4419 = vmin.xlane.f32.xlu0 %v4418
    %v4420 = vpop.xlane.xlu0 %4419
    %v4421 = vmin.f32 %v4354, %v4355
    %4422 = vmin.xlane.f32.xlu0 %v4421
    %v4423 = vpop.xlane.xlu0 %4422
    %v4424 = vmin.f32 %v4356, %v4357
    %4425 = vmin.xlane.f32.xlu0 %v4424
    %v4426 = vpop.xlane.xlu0 %4425
    %v4427 = vmin.f32 %v4358, %v4359
    %4428 = vmin.xlane.f32.xlu0 %v4427
    %v4429 = vpop.xlane.xlu0 %4428
    %v4430 = vmin.f32 %v4360, %v4361
    %4431 = vmin.xlane.f32.xlu0 %v4430
    %v4432 = vpop.xlane.xlu0 %4431
    %v4433 = vmin.f32 %v4362, %v4363
    %4434 = vmin.xlane.f32.xlu0 %v4433
    %v4435 = vpop.xlane.xlu0 %4434
    %v4436 = vmin.f32 %v4364, %v4365
    %4437 = vmin.xlane.f32.xlu0 %v4436
    %v4438 = vpop.xlane.xlu0 %4437
    %v4439 = vmin.f32 %v4366, %v4367
    %4440 = vmin.xlane.f32.xlu0 %v4439
    %v4441 = vpop.xlane.xlu0 %4440
    %v4442 = vmin.f32 %v4368, %v4369
    %4443 = vmin.xlane.f32.xlu0 %v4442
    %v4444 = vpop.xlane.xlu0 %4443
    %v4445 = vmin.f32 %v4370, %v4371
    %4446 = vmin.xlane.f32.xlu0 %v4445
    %v4447 = vpop.xlane.xlu0 %4446
    %v4448 = vmin.f32 %v4372, %v4373
    %4449 = vmin.xlane.f32.xlu0 %v4448
    %v4450 = vpop.xlane.xlu0 %4449
    %v4451 = vmin.f32 %v4374, %v4375
    %4452 = vmin.xlane.f32.xlu0 %v4451
    %v4453 = vpop.xlane.xlu0 %4452
    %v4454 = vmin.f32 %v4376, %v4377
    %4455 = vmin.xlane.f32.xlu0 %v4454
    %v4456 = vpop.xlane.xlu0 %4455
    %v4457 = vmin.f32 %v4378, %v4379
    %4458 = vmin.xlane.f32.xlu0 %v4457
    %v4459 = vpop.xlane.xlu0 %4458
    %v4460 = vmin.f32 %v4380, %v4381
    %4461 = vmin.xlane.f32.xlu0 %v4460
    %v4462 = vpop.xlane.xlu0 %4461
    %v4463 = vmin.f32 %v4382, %v4383
    %4464 = vmin.xlane.f32.xlu0 %v4463
    %v4465 = vpop.xlane.xlu0 %4464
    %v4466 = vmin.f32 %v4384, %v4385
    %4467 = vmin.xlane.f32.xlu0 %v4466
    %v4468 = vpop.xlane.xlu0 %4467
    %v4469 = vmin.f32 %v4386, %v4387
    %4470 = vmin.xlane.f32.xlu0 %v4469
    %v4471 = vpop.xlane.xlu0 %4470
    %v4472 = vmin.f32 %v4388, %v4389
    %4473 = vmin.xlane.f32.xlu0 %v4472
    %v4474 = vpop.xlane.xlu0 %4473
    %v4475 = vmin.f32 %v4390, %v4391
    %4476 = vmin.xlane.f32.xlu0 %v4475
    %v4477 = vpop.xlane.xlu0 %4476
    %v4478 = vmin.f32 %v4392, %v4393
    %4479 = vmin.xlane.f32.xlu0 %v4478
    %v4480 = vpop.xlane.xlu0 %4479
    %v4481 = vmin.f32 %v4394, %v4395
    %4482 = vmin.xlane.f32.xlu0 %v4481
    %v4483 = vpop.xlane.xlu0 %4482
    %v4484 = vmin.f32 %v4396, %v4397
    %4485 = vmin.xlane.f32.xlu0 %v4484
    %v4486 = vpop.xlane.xlu0 %4485
    %v4487 = vmin.f32 %v4398, %v4399
    %4488 = vmin.xlane.f32.xlu0 %v4487
    %v4489 = vpop.xlane.xlu0 %4488
    %v4490 = vmin.f32 %v4400, %v4401
    %4491 = vmin.xlane.f32.xlu0 %v4490
    %v4492 = vpop.xlane.xlu0 %4491
    %v4493 = vmin.f32 %v4402, %v4403
    %4494 = vmin.xlane.f32.xlu0 %v4493
    %v4495 = vpop.xlane.xlu0 %4494
    %v4496 = vmin.f32 %v4404, %v4405
    %4497 = vmin.xlane.f32.xlu0 %v4496
    %v4498 = vpop.xlane.xlu0 %4497
    %v4499 = vmin.f32 %v4406, %v4407
    %4500 = vmin.xlane.f32.xlu0 %v4499
    %v4501 = vpop.xlane.xlu0 %4500
    %v4502 = vmin.f32 %v4408, %v4409
    %4503 = vmin.xlane.f32.xlu0 %v4502
    %v4504 = vpop.xlane.xlu0 %4503
    %v4505 = vmin.f32 %v4410, %v4411
    %4506 = vmin.xlane.f32.xlu0 %v4505
    %v4507 = vpop.xlane.xlu0 %4506
    %v4508 = vsub.f32 %v4285, %v4414
    %v4509 = vsub.f32 %v4287, %v4417
    %v4510 = vsub.f32 %v4289, %v4420
    %v4511 = vsub.f32 %v4291, %v4423
    %v4512 = vsub.f32 %v4293, %v4426
    %v4513 = vsub.f32 %v4295, %v4429
    %v4514 = vsub.f32 %v4297, %v4432
    %v4515 = vsub.f32 %v4299, %v4435
    %v4516 = vsub.f32 %v4301, %v4438
    %v4517 = vsub.f32 %v4303, %v4441
    %v4518 = vsub.f32 %v4305, %v4444
    %v4519 = vsub.f32 %v4307, %v4447
    %v4520 = vsub.f32 %v4309, %v4450
    %v4521 = vsub.f32 %v4311, %v4453
    %v4522 = vsub.f32 %v4313, %v4456
    %v4523 = vsub.f32 %v4315, %v4459
    %v4524 = vsub.f32 %v4317, %v4462
    %v4525 = vsub.f32 %v4319, %v4465
    %v4526 = vsub.f32 %v4321, %v4468
    %v4527 = vsub.f32 %v4323, %v4471
    %v4528 = vsub.f32 %v4325, %v4474
    %v4529 = vsub.f32 %v4327, %v4477
    %v4530 = vsub.f32 %v4329, %v4480
    %v4531 = vsub.f32 %v4331, %v4483
    %v4532 = vsub.f32 %v4333, %v4486
    %v4533 = vsub.f32 %v4335, %v4489
    %v4534 = vsub.f32 %v4337, %v4492
    %v4535 = vsub.f32 %v4339, %v4495
    %v4536 = vsub.f32 %v4341, %v4498
    %v4537 = vsub.f32 %v4343, %v4501
    %v4538 = vsub.f32 %v4345, %v4504
    %v4539 = vsub.f32 %v4347, %v4507
    %v4540 = vadd.f32 %v4508, 1.0
    %v4541 = vadd.f32 %v4509, 1.0
    %v4542 = vadd.f32 %v4510, 1.0
    %v4543 = vadd.f32 %v4511, 1.0
    %v4544 = vadd.f32 %v4512, 1.0
    %v4545 = vadd.f32 %v4513, 1.0
    %v4546 = vadd.f32 %v4514, 1.0
    %v4547 = vadd.f32 %v4515, 1.0
    %v4548 = vadd.f32 %v4516, 1.0
    %v4549 = vadd.f32 %v4517, 1.0
    %v4550 = vadd.f32 %v4518, 1.0
    %v4551 = vadd.f32 %v4519, 1.0
    %v4552 = vadd.f32 %v4520, 1.0
    %v4553 = vadd.f32 %v4521, 1.0
    %v4554 = vadd.f32 %v4522, 1.0
    %v4555 = vadd.f32 %v4523, 1.0
    %v4556 = vadd.f32 %v4524, 1.0
    %v4557 = vadd.f32 %v4525, 1.0
    %v4558 = vadd.f32 %v4526, 1.0
    %v4559 = vadd.f32 %v4527, 1.0
    %v4560 = vadd.f32 %v4528, 1.0
    %v4561 = vadd.f32 %v4529, 1.0
    %v4562 = vadd.f32 %v4530, 1.0
    %v4563 = vadd.f32 %v4531, 1.0
    %v4564 = vadd.f32 %v4532, 1.0
    %v4565 = vadd.f32 %v4533, 1.0
    %v4566 = vadd.f32 %v4534, 1.0
    %v4567 = vadd.f32 %v4535, 1.0
    %v4568 = vadd.f32 %v4536, 1.0
    %v4569 = vadd.f32 %v4537, 1.0
    %v4570 = vadd.f32 %v4538, 1.0
    %v4571 = vadd.f32 %v4539, 1.0
    %v4572 = vmax.f32 %v4540, 0.0
    %v4573 = vmax.f32 %v4541, 0.0
    %v4574 = vmax.f32 %v4542, 0.0
    %v4575 = vmax.f32 %v4543, 0.0
    %v4576 = vmax.f32 %v4544, 0.0
    %v4577 = vmax.f32 %v4545, 0.0
    %v4578 = vmax.f32 %v4546, 0.0
    %v4579 = vmax.f32 %v4547, 0.0
    %v4580 = vmax.f32 %v4548, 0.0
    %v4581 = vmax.f32 %v4549, 0.0
    %v4582 = vmax.f32 %v4550, 0.0
    %v4583 = vmax.f32 %v4551, 0.0
    %v4584 = vmax.f32 %v4552, 0.0
    %v4585 = vmax.f32 %v4553, 0.0
    %v4586 = vmax.f32 %v4554, 0.0
    %v4587 = vmax.f32 %v4555, 0.0
    %v4588 = vmax.f32 %v4556, 0.0
    %v4589 = vmax.f32 %v4557, 0.0
    %v4590 = vmax.f32 %v4558, 0.0
    %v4591 = vmax.f32 %v4559, 0.0
    %v4592 = vmax.f32 %v4560, 0.0
    %v4593 = vmax.f32 %v4561, 0.0
    %v4594 = vmax.f32 %v4562, 0.0
    %v4595 = vmax.f32 %v4563, 0.0
    %v4596 = vmax.f32 %v4564, 0.0
    %v4597 = vmax.f32 %v4565, 0.0
    %v4598 = vmax.f32 %v4566, 0.0
    %v4599 = vmax.f32 %v4567, 0.0
    %v4600 = vmax.f32 %v4568, 0.0
    %v4601 = vmax.f32 %v4569, 0.0
    %v4602 = vmax.f32 %v4570, 0.0
    %v4603 = vmax.f32 %v4571, 0.0
    %s4604 = smul.u32 0, 256
    %v4605 = vlaneseq
    %v4606 = vshrl.u32 %v4605, 7
    %v4607 = vadd.s32 %v4606, 8
    %v4608 = vadd.s32 %v4606, 16
    %v4609 = vadd.s32 %v4606, 24
    %v4610 = vadd.s32 %v4606, 32
    %v4611 = vadd.s32 %v4606, 40
    %v4612 = vadd.s32 %v4606, 48
    %v4613 = vadd.s32 %v4606, 56
    %v4614 = vadd.s32 %v4606, 64
    %v4615 = vadd.s32 %v4606, 72
    %v4616 = vadd.s32 %v4606, 80
    %v4617 = vadd.s32 %v4606, 88
    %v4618 = vadd.s32 %v4606, 96
    %v4619 = vadd.s32 %v4606, 104
    %v4620 = vadd.s32 %v4606, 112
    %v4621 = vadd.s32 %v4606, 120
    %v4622 = vadd.s32 %v4606, 128
    %v4623 = vadd.s32 %v4606, 136
    %v4624 = vadd.s32 %v4606, 144
    %v4625 = vadd.s32 %v4606, 152
    %v4626 = vadd.s32 %v4606, 160
    %v4627 = vadd.s32 %v4606, 168
    %v4628 = vadd.s32 %v4606, 176
    %v4629 = vadd.s32 %v4606, 184
    %v4630 = vadd.s32 %v4606, 192
    %v4631 = vadd.s32 %v4606, 200
    %v4632 = vadd.s32 %v4606, 208
    %v4633 = vadd.s32 %v4606, 216
    %v4634 = vadd.s32 %v4606, 224
    %v4635 = vadd.s32 %v4606, 232
    %v4636 = vadd.s32 %v4606, 240
    %v4637 = vadd.s32 %v4606, 248
    %v4638 = vstv %s4604
    %v4639 = vadd.s32 %v4638, %v4606
    %v4640 = vadd.s32 %v4638, %v4607
    %v4641 = vadd.s32 %v4638, %v4608
    %v4642 = vadd.s32 %v4638, %v4609
    %v4643 = vadd.s32 %v4638, %v4610
    %v4644 = vadd.s32 %v4638, %v4611
    %v4645 = vadd.s32 %v4638, %v4612
    %v4646 = vadd.s32 %v4638, %v4613
    %v4647 = vadd.s32 %v4638, %v4614
    %v4648 = vadd.s32 %v4638, %v4615
    %v4649 = vadd.s32 %v4638, %v4616
    %v4650 = vadd.s32 %v4638, %v4617
    %v4651 = vadd.s32 %v4638, %v4618
    %v4652 = vadd.s32 %v4638, %v4619
    %v4653 = vadd.s32 %v4638, %v4620
    %v4654 = vadd.s32 %v4638, %v4621
    %v4655 = vadd.s32 %v4638, %v4622
    %v4656 = vadd.s32 %v4638, %v4623
    %v4657 = vadd.s32 %v4638, %v4624
    %v4658 = vadd.s32 %v4638, %v4625
    %v4659 = vadd.s32 %v4638, %v4626
    %v4660 = vadd.s32 %v4638, %v4627
    %v4661 = vadd.s32 %v4638, %v4628
    %v4662 = vadd.s32 %v4638, %v4629
    %v4663 = vadd.s32 %v4638, %v4630
    %v4664 = vadd.s32 %v4638, %v4631
    %v4665 = vadd.s32 %v4638, %v4632
    %v4666 = vadd.s32 %v4638, %v4633
    %v4667 = vadd.s32 %v4638, %v4634
    %v4668 = vadd.s32 %v4638, %v4635
    %v4669 = vadd.s32 %v4638, %v4636
    %v4670 = vadd.s32 %v4638, %v4637
    %vm4671 = vcmp.lt.s32.totalorder %v4639, 8
    %vm4672 = vcmp.lt.s32.totalorder %v4640, 8
    %vm4673 = vcmp.lt.s32.totalorder %v4641, 8
    %vm4674 = vcmp.lt.s32.totalorder %v4642, 8
    %vm4675 = vcmp.lt.s32.totalorder %v4643, 8
    %vm4676 = vcmp.lt.s32.totalorder %v4644, 8
    %vm4677 = vcmp.lt.s32.totalorder %v4645, 8
    %vm4678 = vcmp.lt.s32.totalorder %v4646, 8
    %vm4679 = vcmp.lt.s32.totalorder %v4647, 8
    %vm4680 = vcmp.lt.s32.totalorder %v4648, 8
    %vm4681 = vcmp.lt.s32.totalorder %v4649, 8
    %vm4682 = vcmp.lt.s32.totalorder %v4650, 8
    %vm4683 = vcmp.lt.s32.totalorder %v4651, 8
    %vm4684 = vcmp.lt.s32.totalorder %v4652, 8
    %vm4685 = vcmp.lt.s32.totalorder %v4653, 8
    %vm4686 = vcmp.lt.s32.totalorder %v4654, 8
    %vm4687 = vcmp.lt.s32.totalorder %v4655, 8
    %vm4688 = vcmp.lt.s32.totalorder %v4656, 8
    %vm4689 = vcmp.lt.s32.totalorder %v4657, 8
    %vm4690 = vcmp.lt.s32.totalorder %v4658, 8
    %vm4691 = vcmp.lt.s32.totalorder %v4659, 8
    %vm4692 = vcmp.lt.s32.totalorder %v4660, 8
    %vm4693 = vcmp.lt.s32.totalorder %v4661, 8
    %vm4694 = vcmp.lt.s32.totalorder %v4662, 8
    %vm4695 = vcmp.lt.s32.totalorder %v4663, 8
    %vm4696 = vcmp.lt.s32.totalorder %v4664, 8
    %vm4697 = vcmp.lt.s32.totalorder %v4665, 8
    %vm4698 = vcmp.lt.s32.totalorder %v4666, 8
    %vm4699 = vcmp.lt.s32.totalorder %v4667, 8
    %vm4700 = vcmp.lt.s32.totalorder %v4668, 8
    %vm4701 = vcmp.lt.s32.totalorder %v4669, 8
    %vm4702 = vcmp.lt.s32.totalorder %v4670, 8
    %v4703 = vsel %vm4671, 1, 0
    %v4704 = vsel %vm4672, 1, 0
    %v4705 = vsel %vm4673, 1, 0
    %v4706 = vsel %vm4674, 1, 0
    %v4707 = vsel %vm4675, 1, 0
    %v4708 = vsel %vm4676, 1, 0
    %v4709 = vsel %vm4677, 1, 0
    %v4710 = vsel %vm4678, 1, 0
    %v4711 = vsel %vm4679, 1, 0
    %v4712 = vsel %vm4680, 1, 0
    %v4713 = vsel %vm4681, 1, 0
    %v4714 = vsel %vm4682, 1, 0
    %v4715 = vsel %vm4683, 1, 0
    %v4716 = vsel %vm4684, 1, 0
    %v4717 = vsel %vm4685, 1, 0
    %v4718 = vsel %vm4686, 1, 0
    %v4719 = vsel %vm4687, 1, 0
    %v4720 = vsel %vm4688, 1, 0
    %v4721 = vsel %vm4689, 1, 0
    %v4722 = vsel %vm4690, 1, 0
    %v4723 = vsel %vm4691, 1, 0
    %v4724 = vsel %vm4692, 1, 0
    %v4725 = vsel %vm4693, 1, 0
    %v4726 = vsel %vm4694, 1, 0
    %v4727 = vsel %vm4695, 1, 0
    %v4728 = vsel %vm4696, 1, 0
    %v4729 = vsel %vm4697, 1, 0
    %v4730 = vsel %vm4698, 1, 0
    %v4731 = vsel %vm4699, 1, 0
    %v4732 = vsel %vm4700, 1, 0
    %v4733 = vsel %vm4701, 1, 0
    %v4734 = vsel %vm4702, 1, 0
    %v4735 = vcvt.s32.f32 %v4703
    %v4736 = vcvt.s32.f32 %v4704
    %v4737 = vcvt.s32.f32 %v4705
    %v4738 = vcvt.s32.f32 %v4706
    %v4739 = vcvt.s32.f32 %v4707
    %v4740 = vcvt.s32.f32 %v4708
    %v4741 = vcvt.s32.f32 %v4709
    %v4742 = vcvt.s32.f32 %v4710
    %v4743 = vcvt.s32.f32 %v4711
    %v4744 = vcvt.s32.f32 %v4712
    %v4745 = vcvt.s32.f32 %v4713
    %v4746 = vcvt.s32.f32 %v4714
    %v4747 = vcvt.s32.f32 %v4715
    %v4748 = vcvt.s32.f32 %v4716
    %v4749 = vcvt.s32.f32 %v4717
    %v4750 = vcvt.s32.f32 %v4718
    %v4751 = vcvt.s32.f32 %v4719
    %v4752 = vcvt.s32.f32 %v4720
    %v4753 = vcvt.s32.f32 %v4721
    %v4754 = vcvt.s32.f32 %v4722
    %v4755 = vcvt.s32.f32 %v4723
    %v4756 = vcvt.s32.f32 %v4724
    %v4757 = vcvt.s32.f32 %v4725
    %v4758 = vcvt.s32.f32 %v4726
    %v4759 = vcvt.s32.f32 %v4727
    %v4760 = vcvt.s32.f32 %v4728
    %v4761 = vcvt.s32.f32 %v4729
    %v4762 = vcvt.s32.f32 %v4730
    %v4763 = vcvt.s32.f32 %v4731
    %v4764 = vcvt.s32.f32 %v4732
    %v4765 = vcvt.s32.f32 %v4733
    %v4766 = vcvt.s32.f32 %v4734
    %v4767 = vmul.f32 %v4572, %v4735
    %v4768 = vmul.f32 %v4573, %v4736
    %v4769 = vmul.f32 %v4574, %v4737
    %v4770 = vmul.f32 %v4575, %v4738
    %v4771 = vmul.f32 %v4576, %v4739
    %v4772 = vmul.f32 %v4577, %v4740
    %v4773 = vmul.f32 %v4578, %v4741
    %v4774 = vmul.f32 %v4579, %v4742
    %v4775 = vmul.f32 %v4580, %v4743
    %v4776 = vmul.f32 %v4581, %v4744
    %v4777 = vmul.f32 %v4582, %v4745
    %v4778 = vmul.f32 %v4583, %v4746
    %v4779 = vmul.f32 %v4584, %v4747
    %v4780 = vmul.f32 %v4585, %v4748
    %v4781 = vmul.f32 %v4586, %v4749
    %v4782 = vmul.f32 %v4587, %v4750
    %v4783 = vmul.f32 %v4588, %v4751
    %v4784 = vmul.f32 %v4589, %v4752
    %v4785 = vmul.f32 %v4590, %v4753
    %v4786 = vmul.f32 %v4591, %v4754
    %v4787 = vmul.f32 %v4592, %v4755
    %v4788 = vmul.f32 %v4593, %v4756
    %v4789 = vmul.f32 %v4594, %v4757
    %v4790 = vmul.f32 %v4595, %v4758
    %v4791 = vmul.f32 %v4596, %v4759
    %v4792 = vmul.f32 %v4597, %v4760
    %v4793 = vmul.f32 %v4598, %v4761
    %v4794 = vmul.f32 %v4599, %v4762
    %v4795 = vmul.f32 %v4600, %v4763
    %v4796 = vmul.f32 %v4601, %v4764
    %v4797 = vmul.f32 %v4602, %v4765
    %v4798 = vmul.f32 %v4603, %v4766
    %vm4799 = vcmask 7168
    %4800 = vst.msk [vmem:[#allocation14] sm:$0xff] %vm4799, %v4767
    %4801 = vst.msk [vmem:[#allocation14 + $0x8] sm:$0xff] %vm4799, %v4768
    %4802 = vst.msk [vmem:[#allocation14 + $0x10] sm:$0xff] %vm4799, %v4769
    %4803 = vst.msk [vmem:[#allocation14 + $0x18] sm:$0xff] %vm4799, %v4770
    %4804 = vst.msk [vmem:[#allocation14 + $0x20] sm:$0xff] %vm4799, %v4771
    %4805 = vst.msk [vmem:[#allocation14 + $0x28] sm:$0xff] %vm4799, %v4772
    %4806 = vst.msk [vmem:[#allocation14 + $0x30] sm:$0xff] %vm4799, %v4773
    %4807 = vst.msk [vmem:[#allocation14 + $0x38] sm:$0xff] %vm4799, %v4774
    %4808 = vst.msk [vmem:[#allocation14 + $0x40] sm:$0xff] %vm4799, %v4775
    %4809 = vst.msk [vmem:[#allocation14 + $0x48] sm:$0xff] %vm4799, %v4776
    %4810 = vst.msk [vmem:[#allocation14 + $0x50] sm:$0xff] %vm4799, %v4777
    %4811 = vst.msk [vmem:[#allocation14 + $0x58] sm:$0xff] %vm4799, %v4778
    %4812 = vst.msk [vmem:[#allocation14 + $0x60] sm:$0xff] %vm4799, %v4779
    %4813 = vst.msk [vmem:[#allocation14 + $0x68] sm:$0xff] %vm4799, %v4780
    %4814 = vst.msk [vmem:[#allocation14 + $0x70] sm:$0xff] %vm4799, %v4781
    %4815 = vst.msk [vmem:[#allocation14 + $0x78] sm:$0xff] %vm4799, %v4782
    %4816 = vst.msk [vmem:[#allocation14 + $0x80] sm:$0xff] %vm4799, %v4783
    %4817 = vst.msk [vmem:[#allocation14 + $0x88] sm:$0xff] %vm4799, %v4784
    %4818 = vst.msk [vmem:[#allocation14 + $0x90] sm:$0xff] %vm4799, %v4785
    %4819 = vst.msk [vmem:[#allocation14 + $0x98] sm:$0xff] %vm4799, %v4786
    %4820 = vst.msk [vmem:[#allocation14 + $0xa0] sm:$0xff] %vm4799, %v4787
    %4821 = vst.msk [vmem:[#allocation14 + $0xa8] sm:$0xff] %vm4799, %v4788
    %4822 = vst.msk [vmem:[#allocation14 + $0xb0] sm:$0xff] %vm4799, %v4789
    %4823 = vst.msk [vmem:[#allocation14 + $0xb8] sm:$0xff] %vm4799, %v4790
    %4824 = vst.msk [vmem:[#allocation14 + $0xc0] sm:$0xff] %vm4799, %v4791
    %4825 = vst.msk [vmem:[#allocation14 + $0xc8] sm:$0xff] %vm4799, %v4792
    %4826 = vst.msk [vmem:[#allocation14 + $0xd0] sm:$0xff] %vm4799, %v4793
    %4827 = vst.msk [vmem:[#allocation14 + $0xd8] sm:$0xff] %vm4799, %v4794
    %4828 = vst.msk [vmem:[#allocation14 + $0xe0] sm:$0xff] %vm4799, %v4795
    %4829 = vst.msk [vmem:[#allocation14 + $0xe8] sm:$0xff] %vm4799, %v4796
    %4830 = vst.msk [vmem:[#allocation14 + $0xf0] sm:$0xff] %vm4799, %v4797
    %4831 = vst.msk [vmem:[#allocation14 + $0xf8] sm:$0xff] %vm4799, %v4798
    // Predicated region
    $region58: #{tpu_custom_call.1} parent=1 // pred_check
      _
    $region59: #{tpu_custom_call.1} parent=1 // pred_check_branch
      %4833 = sbr.rel (0) target = $region61
    $region60: #{tpu_custom_call.1} parent=1 // pred_region
      %s4835 = ssub.s32 4096, 4096
      %4836 = vsyncadd [#allocation4], %s4835
      %s4837 = sshll.u32 [#allocation14], 4
      %s4838 = int_to_ptr.vmem [resolvable:$true] %s4837
      %4843 = dma.vmem_to_hbm [thread:$0]  %s4838, 4096, %s7, [#allocation4], 128, 128, 8
    $region61: #{tpu_custom_call.1} parent=1 // pred_fallthru
      _
    // Predicated region
    $region62: #{tpu_custom_call.1} parent=1 // pred_check
      _
    $region63: #{tpu_custom_call.1} parent=1 // pred_check_branch
      %4845 = sbr.rel (0) target = $region65
    $region64: #{tpu_custom_call.1} parent=1 // pred_region
      %4846 = dma.done [#allocation4], 4096
    $region65: #{tpu_custom_call.1} parent=1 // pred_fallthru
      _
    %4847 = vsyncpa [#allocation3], 1
    %4848 = vsyncpa [#allocation6], 1
    %4849 = vsyncpa [#allocation9], 1
    %4850 = vsyncpa [#allocation12], 1
    %4851 = vsyncpa [#allocation4], 1

// kernel: tpu_custom_call.1
$region0: #{tpu_custom_call.1}
  #allocation0 [shape = 'u32[]', space=smem, size = 0x4, offset = 0x4, fixed_abs, tag = 'smem constant byte address 0x4 - core index']
  #allocation1 [shape = 'u32[144,128]{1,0:T(1,128)}', space=vmem, size = 0x12000, scoped, tag = 'internal scratch']
  %s0 = inlined_call_operand.hbm [shape: f32[256,128], index: 0, kind: input, shape index: {}]
  %s1 = inlined_call_operand.hbm [shape: f32[256,128], index: 1, kind: input, shape index: {}]
  %s2 = inlined_call_operand.hbm [shape: f32[256,1], index: 2, kind: input, shape index: {}]
  %s3 = inlined_call_operand.hbm [shape: f32[1,256], index: 3, kind: input, shape index: {}]
  %s4 = inlined_call_operand.hbm [shape: f32[1,256], index: 4, kind: input, shape index: {}]
  %s5 = inlined_call_operand.hbm [shape: s32[256,1], index: 5, kind: input, shape index: {}]
  %s6 = inlined_call_operand.hbm [shape: s32[1,256], index: 6, kind: input, shape index: {}]
  %s7 = inlined_call_operand.hbm [shape: f32[256,1], index: 7, kind: output, shape index: {}]
  %s8 = sld [smem:[#allocation0]]
  $region66: #{tpu_custom_call.1} parent=0
    _
  %s10 = ssub.s32 1, %s8
  %s11 = scalar_select 0, %s10, %s8
  $region1: #{tpu_custom_call.1} parent=0
    #allocation2 [shape = 'u8[131072]{0}', space=vmem, size = 0x20000, scoped, tag = 'input window, operand 0, single buffered']
    #allocation3 [shape = 's32[1]{0}', space=sflag, size = 0x4, scoped, tag = 'scoped memory for tpu_custom_call.1']
    #allocation4 [shape = 's32[1]{0}', space=sflag, size = 0x4, scoped, tag = 'scoped memory for tpu_custom_call.1']
    #allocation5 [shape = 'u8[131072]{0}', space=vmem, size = 0x20000, scoped, tag = 'input window, operand 1, single buffered']
    #allocation6 [shape = 's32[1]{0}', space=sflag, size = 0x4, scoped, tag = 'scoped memory for tpu_custom_call.1']
    #allocation7 [shape = 'u8[131072]{0}', space=vmem, size = 0x20000, scoped, tag = 'input window, operand 2, single buffered']
    #allocation8 [shape = 'u8[1024]{0}', space=vmem, size = 0x400, scoped, tag = 'input window, operand 3, single buffered']
    #allocation9 [shape = 's32[1]{0}', space=sflag, size = 0x4, scoped, tag = 'scoped memory for tpu_custom_call.1']
    #allocation10 [shape = 'u8[1024]{0}', space=vmem, size = 0x400, scoped, tag = 'input window, operand 4, single buffered']
    #allocation11 [shape = 'u8[131072]{0}', space=vmem, size = 0x20000, scoped, tag = 'input window, operand 5, single buffered']
    #allocation12 [shape = 's32[1]{0}', space=sflag, size = 0x4, scoped, tag = 'scoped memory for tpu_custom_call.1']
    #allocation13 [shape = 'u8[1024]{0}', space=vmem, size = 0x400, scoped, tag = 'input window, operand 6, single buffered']
    #allocation14 [shape = 'u8[131072]{0}', space=vmem, size = 0x20000, scoped, tag = 'output window, operand 0, single buffered']
    %12 = vsyncpa [#allocation3], 0
    %13 = vsyncpa [#allocation6], 0
    %14 = vsyncpa [#allocation9], 0
    %15 = vsyncpa [#allocation12], 0
    %16 = vsyncpa [#allocation4], 0
    // Predicated region
    $region2: #{tpu_custom_call.1} parent=1 // pred_check
      _
    $region3: #{tpu_custom_call.1} parent=1 // pred_check_branch
      %18 = sbr.rel (0) target = $region5
    $region4: #{tpu_custom_call.1} parent=1 // pred_region
      %s20 = ssub.s32 4096, 4096
      %21 = vsyncadd [#allocation3], %s20
      %s22 = sshll.u32 [#allocation2], 4
      %s23 = int_to_ptr.vmem [resolvable:$true] %s22
      %28 = dma.hbm_to_vmem [thread:$0]  %s0, 4096, %s23, [#allocation3], 128, 128, 8
    $region5: #{tpu_custom_call.1} parent=1 // pred_fallthru
      _
    // Predicated region
    $region6: #{tpu_custom_call.1} parent=1 // pred_check
      _
    $region7: #{tpu_custom_call.1} parent=1 // pred_check_branch
      %30 = sbr.rel (0) target = $region9
    $region8: #{tpu_custom_call.1} parent=1 // pred_region
      %s32 = ssub.s32 4096, 4096
      %33 = vsyncadd [#allocation6], %s32
      %s34 = sshll.u32 [#allocation5], 4
      %s35 = int_to_ptr.vmem [resolvable:$true] %s34
      %40 = dma.hbm_to_vmem [thread:$0]  %s1, 4096, %s35, [#allocation6], 128, 128, 8
    $region9: #{tpu_custom_call.1} parent=1 // pred_fallthru
      _
    // Predicated region
    $region10: #{tpu_custom_call.1} parent=1 // pred_check
      _
    $region11: #{tpu_custom_call.1} parent=1 // pred_check_branch
      %42 = sbr.rel (0) target = $region13
    $region12: #{tpu_custom_call.1} parent=1 // pred_region
      %s44 = ssub.s32 4096, 4096
      %45 = vsyncadd [#allocation6], %s44
      %s46 = sshll.u32 [#allocation7], 4
      %s47 = int_to_ptr.vmem [resolvable:$true] %s46
      %52 = dma.hbm_to_vmem [thread:$0]  %s2, 4096, %s47, [#allocation6], 128, 128, 8
    $region13: #{tpu_custom_call.1} parent=1 // pred_fallthru
      _
    // Predicated region
    $region14: #{tpu_custom_call.1} parent=1 // pred_check
      _
    $region15: #{tpu_custom_call.1} parent=1 // pred_check_branch
      %54 = sbr.rel (0) target = $region17
    $region16: #{tpu_custom_call.1} parent=1 // pred_region
      %s56 = ssub.s32 32, 32
      %57 = vsyncadd [#allocation9], %s56
      %s59 = sshll.u32 [#allocation8], 4
      %s60 = int_to_ptr.vmem [resolvable:$true] %s59
      %62 = dma.hbm_to_vmem [thread:$0]  %s3, 32, %s60, [#allocation9]
    $region17: #{tpu_custom_call.1} parent=1 // pred_fallthru
      _
    // Predicated region
    $region18: #{tpu_custom_call.1} parent=1 // pred_check
      _
    $region19: #{tpu_custom_call.1} parent=1 // pred_check_branch
      %64 = sbr.rel (0) target = $region21
    $region20: #{tpu_custom_call.1} parent=1 // pred_region
      %s66 = ssub.s32 32, 32
      %67 = vsyncadd [#allocation9], %s66
      %s69 = sshll.u32 [#allocation10], 4
      %s70 = int_to_ptr.vmem [resolvable:$true] %s69
      %72 = dma.hbm_to_vmem [thread:$0]  %s4, 32, %s70, [#allocation9]
    $region21: #{tpu_custom_call.1} parent=1 // pred_fallthru
      _
    // Predicated region
    $region22: #{tpu_custom_call.1} parent=1 // pred_check
      _
    $region23: #{tpu_custom_call.1} parent=1 // pred_check_branch
      %74 = sbr.rel (0) target = $region25
    $region24: #{tpu_custom_call.1} parent=1 // pred_region
      %s76 = ssub.s32 4096, 4096
      %77 = vsyncadd [#allocation12], %s76
      %s78 = sshll.u32 [#allocation11], 4
      %s79 = int_to_ptr.vmem [resolvable:$true] %s78
      %84 = dma.hbm_to_vmem [thread:$0]  %s5, 4096, %s79, [#allocation12], 128, 128, 8
    $region25: #{tpu_custom_call.1} parent=1 // pred_fallthru
      _
    // Predicated region
    $region26: #{tpu_custom_call.1} parent=1 // pred_check
      _
    $region27: #{tpu_custom_call.1} parent=1 // pred_check_branch
      %86 = sbr.rel (0) target = $region29
    $region28: #{tpu_custom_call.1} parent=1 // pred_region
      %s88 = ssub.s32 32, 32
      %89 = vsyncadd [#allocation12], %s88
      %s91 = sshll.u32 [#allocation13], 4
      %s92 = int_to_ptr.vmem [resolvable:$true] %s91
      %94 = dma.hbm_to_vmem [thread:$0]  %s6, 32, %s92, [#allocation12]
    $region29: #{tpu_custom_call.1} parent=1 // pred_fallthru
      _
    // Predicated region
    $region30: #{tpu_custom_call.1} parent=1 // pred_check
      _
    $region31: #{tpu_custom_call.1} parent=1 // pred_check_branch
      %96 = sbr.rel (0) target = $region33
    $region32: #{tpu_custom_call.1} parent=1 // pred_region
      %97 = dma.done [#allocation3], 4096
    $region33: #{tpu_custom_call.1} parent=1 // pred_fallthru
      _
    // Predicated region
    $region34: #{tpu_custom_call.1} parent=1 // pred_check
      _
    $region35: #{tpu_custom_call.1} parent=1 // pred_check_branch
      %99 = sbr.rel (0) target = $region37
    $region36: #{tpu_custom_call.1} parent=1 // pred_region
      %100 = dma.done [#allocation6], 4096
    $region37: #{tpu_custom_call.1} parent=1 // pred_fallthru
      _
    // Predicated region
    $region38: #{tpu_custom_call.1} parent=1 // pred_check
      _
    $region39: #{tpu_custom_call.1} parent=1 // pred_check_branch
      %102 = sbr.rel (0) target = $region41
    $region40: #{tpu_custom_call.1} parent=1 // pred_region
      %103 = dma.done [#allocation6], 4096
    $region41: #{tpu_custom_call.1} parent=1 // pred_fallthru
      _
    // Predicated region
    $region42: #{tpu_custom_call.1} parent=1 // pred_check
      _
    $region43: #{tpu_custom_call.1} parent=1 // pred_check_branch
      %105 = sbr.rel (0) target = $region45
    $region44: #{tpu_custom_call.1} parent=1 // pred_region
      %106 = dma.done [#allocation9], 32
    $region45: #{tpu_custom_call.1} parent=1 // pred_fallthru
      _
    // Predicated region
    $region46: #{tpu_custom_call.1} parent=1 // pred_check
      _
    $region47: #{tpu_custom_call.1} parent=1 // pred_check_branch
      %108 = sbr.rel (0) target = $region49
    $region48: #{tpu_custom_call.1} parent=1 // pred_region
      %109 = dma.done [#allocation9], 32
    $region49: #{tpu_custom_call.1} parent=1 // pred_fallthru
      _
    // Predicated region
    $region50: #{tpu_custom_call.1} parent=1 // pred_check
      _
    $region51: #{tpu_custom_call.1} parent=1 // pred_check_branch
      %111 = sbr.rel (0) target = $region53
    $region52: #{tpu_custom_call.1} parent=1 // pred_region
      %112 = dma.done [#allocation12], 4096
    $region53: #{tpu_custom_call.1} parent=1 // pred_fallthru
      _
    // Predicated region
    $region54: #{tpu_custom_call.1} parent=1 // pred_check
      _
    $region55: #{tpu_custom_call.1} parent=1 // pred_check_branch
      %114 = sbr.rel (0) target = $region57
    $region56: #{tpu_custom_call.1} parent=1 // pred_region
      %115 = dma.done [#allocation12], 32
    $region57: #{tpu_custom_call.1} parent=1 // pred_fallthru
      _
    %v116 = vld [vmem:[#allocation2] sm:$0xff]
    %v117 = vld [vmem:[#allocation2 + $0x8] sm:$0xff]
    %v118 = vld [vmem:[#allocation2 + $0x10] sm:$0xff]
    %v119 = vld [vmem:[#allocation2 + $0x18] sm:$0xff]
    %v120 = vld [vmem:[#allocation2 + $0x20] sm:$0xff]
    %v121 = vld [vmem:[#allocation2 + $0x28] sm:$0xff]
    %v122 = vld [vmem:[#allocation2 + $0x30] sm:$0xff]
    %v123 = vld [vmem:[#allocation2 + $0x38] sm:$0xff]
    %v124 = vld [vmem:[#allocation2 + $0x40] sm:$0xff]
    %v125 = vld [vmem:[#allocation2 + $0x48] sm:$0xff]
    %v126 = vld [vmem:[#allocation2 + $0x50] sm:$0xff]
    %v127 = vld [vmem:[#allocation2 + $0x58] sm:$0xff]
    %v128 = vld [vmem:[#allocation2 + $0x60] sm:$0xff]
    %v129 = vld [vmem:[#allocation2 + $0x68] sm:$0xff]
    %v130 = vld [vmem:[#allocation2 + $0x70] sm:$0xff]
    %v131 = vld [vmem:[#allocation2 + $0x78] sm:$0xff]
    %v132 = vld [vmem:[#allocation2 + $0x80] sm:$0xff]
    %v133 = vld [vmem:[#allocation2 + $0x88] sm:$0xff]
    %v134 = vld [vmem:[#allocation2 + $0x90] sm:$0xff]
    %v135 = vld [vmem:[#allocation2 + $0x98] sm:$0xff]
    %v136 = vld [vmem:[#allocation2 + $0xa0] sm:$0xff]
    %v137 = vld [vmem:[#allocation2 + $0xa8] sm:$0xff]
    %v138 = vld [vmem:[#allocation2 + $0xb0] sm:$0xff]
    %v139 = vld [vmem:[#allocation2 + $0xb8] sm:$0xff]
    %v140 = vld [vmem:[#allocation2 + $0xc0] sm:$0xff]
    %v141 = vld [vmem:[#allocation2 + $0xc8] sm:$0xff]
    %v142 = vld [vmem:[#allocation2 + $0xd0] sm:$0xff]
    %v143 = vld [vmem:[#allocation2 + $0xd8] sm:$0xff]
    %v144 = vld [vmem:[#allocation2 + $0xe0] sm:$0xff]
    %v145 = vld [vmem:[#allocation2 + $0xe8] sm:$0xff]
    %v146 = vld [vmem:[#allocation2 + $0xf0] sm:$0xff]
    %v147 = vld [vmem:[#allocation2 + $0xf8] sm:$0xff]
    %v148 = vld [vmem:[#allocation5] sm:$0xff]
    %v149 = vld [vmem:[#allocation5 + $0x8] sm:$0xff]
    %v150 = vld [vmem:[#allocation5 + $0x10] sm:$0xff]
    %v151 = vld [vmem:[#allocation5 + $0x18] sm:$0xff]
    %v152 = vld [vmem:[#allocation5 + $0x20] sm:$0xff]
    %v153 = vld [vmem:[#allocation5 + $0x28] sm:$0xff]
    %v154 = vld [vmem:[#allocation5 + $0x30] sm:$0xff]
    %v155 = vld [vmem:[#allocation5 + $0x38] sm:$0xff]
    %v156 = vld [vmem:[#allocation5 + $0x40] sm:$0xff]
    %v157 = vld [vmem:[#allocation5 + $0x48] sm:$0xff]
    %v158 = vld [vmem:[#allocation5 + $0x50] sm:$0xff]
    %v159 = vld [vmem:[#allocation5 + $0x58] sm:$0xff]
    %v160 = vld [vmem:[#allocation5 + $0x60] sm:$0xff]
    %v161 = vld [vmem:[#allocation5 + $0x68] sm:$0xff]
    %v162 = vld [vmem:[#allocation5 + $0x70] sm:$0xff]
    %v163 = vld [vmem:[#allocation5 + $0x78] sm:$0xff]
    %v164 = vld [vmem:[#allocation5 + $0x80] sm:$0xff]
    %v165 = vld [vmem:[#allocation5 + $0x88] sm:$0xff]
    %v166 = vld [vmem:[#allocation5 + $0x90] sm:$0xff]
    %v167 = vld [vmem:[#allocation5 + $0x98] sm:$0xff]
    %v168 = vld [vmem:[#allocation5 + $0xa0] sm:$0xff]
    %v169 = vld [vmem:[#allocation5 + $0xa8] sm:$0xff]
    %v170 = vld [vmem:[#allocation5 + $0xb0] sm:$0xff]
    %v171 = vld [vmem:[#allocation5 + $0xb8] sm:$0xff]
    %v172 = vld [vmem:[#allocation5 + $0xc0] sm:$0xff]
    %v173 = vld [vmem:[#allocation5 + $0xc8] sm:$0xff]
    %v174 = vld [vmem:[#allocation5 + $0xd0] sm:$0xff]
    %v175 = vld [vmem:[#allocation5 + $0xd8] sm:$0xff]
    %v176 = vld [vmem:[#allocation5 + $0xe0] sm:$0xff]
    %v177 = vld [vmem:[#allocation5 + $0xe8] sm:$0xff]
    %v178 = vld [vmem:[#allocation5 + $0xf0] sm:$0xff]
    %v179 = vld [vmem:[#allocation5 + $0xf8] sm:$0xff]
    %v180 = vld [vmem:[#allocation7] sm:$0xff]
    %v181 = vld [vmem:[#allocation7 + $0x8] sm:$0xff]
    %v182 = vld [vmem:[#allocation7 + $0x10] sm:$0xff]
    %v183 = vld [vmem:[#allocation7 + $0x18] sm:$0xff]
    %v184 = vld [vmem:[#allocation7 + $0x20] sm:$0xff]
    %v185 = vld [vmem:[#allocation7 + $0x28] sm:$0xff]
    %v186 = vld [vmem:[#allocation7 + $0x30] sm:$0xff]
    %v187 = vld [vmem:[#allocation7 + $0x38] sm:$0xff]
    %v188 = vld [vmem:[#allocation7 + $0x40] sm:$0xff]
    %v189 = vld [vmem:[#allocation7 + $0x48] sm:$0xff]
    %v190 = vld [vmem:[#allocation7 + $0x50] sm:$0xff]
    %v191 = vld [vmem:[#allocation7 + $0x58] sm:$0xff]
    %v192 = vld [vmem:[#allocation7 + $0x60] sm:$0xff]
    %v193 = vld [vmem:[#allocation7 + $0x68] sm:$0xff]
    %v194 = vld [vmem:[#allocation7 + $0x70] sm:$0xff]
    %v195 = vld [vmem:[#allocation7 + $0x78] sm:$0xff]
    %v196 = vld [vmem:[#allocation7 + $0x80] sm:$0xff]
    %v197 = vld [vmem:[#allocation7 + $0x88] sm:$0xff]
    %v198 = vld [vmem:[#allocation7 + $0x90] sm:$0xff]
    %v199 = vld [vmem:[#allocation7 + $0x98] sm:$0xff]
    %v200 = vld [vmem:[#allocation7 + $0xa0] sm:$0xff]
    %v201 = vld [vmem:[#allocation7 + $0xa8] sm:$0xff]
    %v202 = vld [vmem:[#allocation7 + $0xb0] sm:$0xff]
    %v203 = vld [vmem:[#allocation7 + $0xb8] sm:$0xff]
    %v204 = vld [vmem:[#allocation7 + $0xc0] sm:$0xff]
    %v205 = vld [vmem:[#allocation7 + $0xc8] sm:$0xff]
    %v206 = vld [vmem:[#allocation7 + $0xd0] sm:$0xff]
    %v207 = vld [vmem:[#allocation7 + $0xd8] sm:$0xff]
    %v208 = vld [vmem:[#allocation7 + $0xe0] sm:$0xff]
    %v209 = vld [vmem:[#allocation7 + $0xe8] sm:$0xff]
    %v210 = vld [vmem:[#allocation7 + $0xf0] sm:$0xff]
    %v211 = vld [vmem:[#allocation7 + $0xf8] sm:$0xff]
    %v212 = vld [vmem:[#allocation8] sm:$0x3]
    %v213 = vld [vmem:[#allocation10] sm:$0x3]
    %vm214 = vcmp.gt.f32.partialorder %v213, 0.5
    %v215 = vld [vmem:[#allocation11] sm:$0xff]
    %v216 = vld [vmem:[#allocation11 + $0x8] sm:$0xff]
    %v217 = vld [vmem:[#allocation11 + $0x10] sm:$0xff]
    %v218 = vld [vmem:[#allocation11 + $0x18] sm:$0xff]
    %v219 = vld [vmem:[#allocation11 + $0x20] sm:$0xff]
    %v220 = vld [vmem:[#allocation11 + $0x28] sm:$0xff]
    %v221 = vld [vmem:[#allocation11 + $0x30] sm:$0xff]
    %v222 = vld [vmem:[#allocation11 + $0x38] sm:$0xff]
    %v223 = vld [vmem:[#allocation11 + $0x40] sm:$0xff]
    %v224 = vld [vmem:[#allocation11 + $0x48] sm:$0xff]
    %v225 = vld [vmem:[#allocation11 + $0x50] sm:$0xff]
    %v226 = vld [vmem:[#allocation11 + $0x58] sm:$0xff]
    %v227 = vld [vmem:[#allocation11 + $0x60] sm:$0xff]
    %v228 = vld [vmem:[#allocation11 + $0x68] sm:$0xff]
    %v229 = vld [vmem:[#allocation11 + $0x70] sm:$0xff]
    %v230 = vld [vmem:[#allocation11 + $0x78] sm:$0xff]
    %v231 = vld [vmem:[#allocation11 + $0x80] sm:$0xff]
    %v232 = vld [vmem:[#allocation11 + $0x88] sm:$0xff]
    %v233 = vld [vmem:[#allocation11 + $0x90] sm:$0xff]
    %v234 = vld [vmem:[#allocation11 + $0x98] sm:$0xff]
    %v235 = vld [vmem:[#allocation11 + $0xa0] sm:$0xff]
    %v236 = vld [vmem:[#allocation11 + $0xa8] sm:$0xff]
    %v237 = vld [vmem:[#allocation11 + $0xb0] sm:$0xff]
    %v238 = vld [vmem:[#allocation11 + $0xb8] sm:$0xff]
    %v239 = vld [vmem:[#allocation11 + $0xc0] sm:$0xff]
    %v240 = vld [vmem:[#allocation11 + $0xc8] sm:$0xff]
    %v241 = vld [vmem:[#allocation11 + $0xd0] sm:$0xff]
    %v242 = vld [vmem:[#allocation11 + $0xd8] sm:$0xff]
    %v243 = vld [vmem:[#allocation11 + $0xe0] sm:$0xff]
    %v244 = vld [vmem:[#allocation11 + $0xe8] sm:$0xff]
    %v245 = vld [vmem:[#allocation11 + $0xf0] sm:$0xff]
    %v246 = vld [vmem:[#allocation11 + $0xf8] sm:$0xff]
    %v247 = vld [vmem:[#allocation13] sm:$0x3]
    %248 = vmatprep.subr.mxu0 0.0
    %v249 = vand.u32 %v148, 4294901760
    %250 = vmatpush1.xpose.msra.mxu0 %v249
    %251 = vmatprep.subr.mxu0 0.0
    %v252 = vand.u32 %v149, 4294901760
    %253 = vmatpush1.xpose.msra.mxu0 %v252
    %254 = vmatprep.subr.mxu0 0.0
    %v255 = vand.u32 %v150, 4294901760
    %256 = vmatpush1.xpose.msra.mxu0 %v255
    %257 = vmatprep.subr.mxu0 0.0
    %v258 = vand.u32 %v151, 4294901760
    %259 = vmatpush1.xpose.msra.mxu0 %v258
    %260 = vmatprep.subr.mxu0 0.0
    %v261 = vand.u32 %v152, 4294901760
    %262 = vmatpush1.xpose.msra.mxu0 %v261
    %263 = vmatprep.subr.mxu0 0.0
    %v264 = vand.u32 %v153, 4294901760
    %265 = vmatpush1.xpose.msra.mxu0 %v264
    %266 = vmatprep.subr.mxu0 0.0
    %v267 = vand.u32 %v154, 4294901760
    %268 = vmatpush1.xpose.msra.mxu0 %v267
    %269 = vmatprep.subr.mxu0 0.0
    %v270 = vand.u32 %v155, 4294901760
    %271 = vmatpush1.xpose.msra.mxu0 %v270
    %272 = vmatprep.subr.mxu0 0.0
    %v273 = vand.u32 %v156, 4294901760
    %274 = vmatpush1.xpose.msra.mxu0 %v273
    %275 = vmatprep.subr.mxu0 0.0
    %v276 = vand.u32 %v157, 4294901760
    %277 = vmatpush1.xpose.msra.mxu0 %v276
    %278 = vmatprep.subr.mxu0 0.0
    %v279 = vand.u32 %v158, 4294901760
    %280 = vmatpush1.xpose.msra.mxu0 %v279
    %281 = vmatprep.subr.mxu0 0.0
    %v282 = vand.u32 %v159, 4294901760
    %283 = vmatpush1.xpose.msra.mxu0 %v282
    %284 = vmatprep.subr.mxu0 0.0
    %v285 = vand.u32 %v160, 4294901760
    %286 = vmatpush1.xpose.msra.mxu0 %v285
    %287 = vmatprep.subr.mxu0 0.0
    %v288 = vand.u32 %v161, 4294901760
    %289 = vmatpush1.xpose.msra.mxu0 %v288
    %290 = vmatprep.subr.mxu0 0.0
    %v291 = vand.u32 %v162, 4294901760
    %292 = vmatpush1.xpose.msra.mxu0 %v291
    %293 = vmatprep.subr.mxu0 0.0
    %v294 = vand.u32 %v163, 4294901760
    %295 = vmatpush1.xpose.msra.mxu0 %v294
    %296 = vmatprep.subr.mxu0 0.0
    %v297 = vand.u32 %v164, 4294901760
    %298 = vmatpush1.xpose.msra.mxu0 %v297
    %299 = vmatprep.subr.mxu0 0.0
    %v300 = vand.u32 %v165, 4294901760
    %301 = vmatpush1.xpose.msra.mxu0 %v300
    %302 = vmatprep.subr.mxu0 0.0
    %v303 = vand.u32 %v166, 4294901760
    %304 = vmatpush1.xpose.msra.mxu0 %v303
    %305 = vmatprep.subr.mxu0 0.0
    %v306 = vand.u32 %v167, 4294901760
    %307 = vmatpush1.xpose.msra.mxu0 %v306
    %308 = vmatprep.subr.mxu0 0.0
    %v309 = vand.u32 %v168, 4294901760
    %310 = vmatpush1.xpose.msra.mxu0 %v309
    %311 = vmatprep.subr.mxu0 0.0
    %v312 = vand.u32 %v169, 4294901760
    %313 = vmatpush1.xpose.msra.mxu0 %v312
    %314 = vmatprep.subr.mxu0 0.0
    %v315 = vand.u32 %v170, 4294901760
    %316 = vmatpush1.xpose.msra.mxu0 %v315
    %317 = vmatprep.subr.mxu0 0.0
    %v318 = vand.u32 %v171, 4294901760
    %319 = vmatpush1.xpose.msra.mxu0 %v318
    %320 = vmatprep.subr.mxu0 0.0
    %v321 = vand.u32 %v172, 4294901760
    %322 = vmatpush1.xpose.msra.mxu0 %v321
    %323 = vmatprep.subr.mxu0 0.0
    %v324 = vand.u32 %v173, 4294901760
    %325 = vmatpush1.xpose.msra.mxu0 %v324
    %326 = vmatprep.subr.mxu0 0.0
    %v327 = vand.u32 %v174, 4294901760
    %328 = vmatpush1.xpose.msra.mxu0 %v327
    %329 = vmatprep.subr.mxu0 0.0
    %v330 = vand.u32 %v175, 4294901760
    %331 = vmatpush1.xpose.msra.mxu0 %v330
    %332 = vmatprep.subr.mxu0 0.0
    %v333 = vand.u32 %v176, 4294901760
    %334 = vmatpush1.xpose.msra.mxu0 %v333
    %335 = vmatprep.subr.mxu0 0.0
    %v336 = vand.u32 %v177, 4294901760
    %337 = vmatpush1.xpose.msra.mxu0 %v336
    %338 = vmatprep.subr.mxu0 0.0
    %v339 = vand.u32 %v178, 4294901760
    %340 = vmatpush1.xpose.msra.mxu0 %v339
    %341 = vmatprep.subr.mxu0 0.0
    %v342 = vand.u32 %v179, 4294901760
    %343 = vmatpush1.xpose.msra.mxu0 %v342
    %344 = vmatprep.mubr.f32.mxu0 0.0
    %v345 = vand.u32 %v116, 4294901760
    %v346 = vsub.f32 %v116, %v345
    %v347 = vand.u32 %v346, 4294901760
    %v348 = vsub.f32 %v346, %v347
    %v349 = vand.u32 %v348, 4294901760
    %350 = vmatmul.mubr.f32.gmra.mrb[0].mxu0 %v349
    %v351 = vpop.f32.mrb[0].mxu0
    %v352 = vadd.f32 0.0, %v351
    %v353 = vpop.f32.mrb[0].mxu0
    %v354 = vadd.f32 0.0, %v353
    %355 = vmatprep.mubr.f32.mxu0 0.0
    %v356 = vand.u32 %v117, 4294901760
    %v357 = vsub.f32 %v117, %v356
    %v358 = vand.u32 %v357, 4294901760
    %v359 = vsub.f32 %v357, %v358
    %v360 = vand.u32 %v359, 4294901760
    %361 = vmatmul.mubr.f32.gmra.mrb[0].mxu0 %v360
    %v362 = vpop.f32.mrb[0].mxu0
    %v363 = vadd.f32 0.0, %v362
    %v364 = vpop.f32.mrb[0].mxu0
    %v365 = vadd.f32 0.0, %v364
    %366 = vmatprep.mubr.f32.mxu0 0.0
    %v367 = vand.u32 %v118, 4294901760
    %v368 = vsub.f32 %v118, %v367
    %v369 = vand.u32 %v368, 4294901760
    %v370 = vsub.f32 %v368, %v369
    %v371 = vand.u32 %v370, 4294901760
    %372 = vmatmul.mubr.f32.gmra.mrb[0].mxu0 %v371
    %v373 = vpop.f32.mrb[0].mxu0
    %v374 = vadd.f32 0.0, %v373
    %v375 = vpop.f32.mrb[0].mxu0
    %v376 = vadd.f32 0.0, %v375
    %377 = vmatprep.mubr.f32.mxu0 0.0
    %v378 = vand.u32 %v119, 4294901760
    %v379 = vsub.f32 %v119, %v378
    %v380 = vand.u32 %v379, 4294901760
    %v381 = vsub.f32 %v379, %v380
    %v382 = vand.u32 %v381, 4294901760
    %383 = vmatmul.mubr.f32.gmra.mrb[0].mxu0 %v382
    %v384 = vpop.f32.mrb[0].mxu0
    %v385 = vadd.f32 0.0, %v384
    %v386 = vpop.f32.mrb[0].mxu0
    %v387 = vadd.f32 0.0, %v386
    %388 = vmatprep.mubr.f32.mxu0 0.0
    %v389 = vand.u32 %v120, 4294901760
    %v390 = vsub.f32 %v120, %v389
    %v391 = vand.u32 %v390, 4294901760
    %v392 = vsub.f32 %v390, %v391
    %v393 = vand.u32 %v392, 4294901760
    %394 = vmatmul.mubr.f32.gmra.mrb[0].mxu0 %v393
    %v395 = vpop.f32.mrb[0].mxu0
    %v396 = vadd.f32 0.0, %v395
    %v397 = vpop.f32.mrb[0].mxu0
    %v398 = vadd.f32 0.0, %v397
    %399 = vmatprep.mubr.f32.mxu0 0.0
    %v400 = vand.u32 %v121, 4294901760
    %v401 = vsub.f32 %v121, %v400
    %v402 = vand.u32 %v401, 4294901760
    %v403 = vsub.f32 %v401, %v402
    %v404 = vand.u32 %v403, 4294901760
    %405 = vmatmul.mubr.f32.gmra.mrb[0].mxu0 %v404
    %v406 = vpop.f32.mrb[0].mxu0
    %v407 = vadd.f32 0.0, %v406
    %v408 = vpop.f32.mrb[0].mxu0
    %v409 = vadd.f32 0.0, %v408
    %410 = vmatprep.mubr.f32.mxu0 0.0
    %v411 = vand.u32 %v122, 4294901760
    %v412 = vsub.f32 %v122, %v411
    %v413 = vand.u32 %v412, 4294901760
    %v414 = vsub.f32 %v412, %v413
    %v415 = vand.u32 %v414, 4294901760
    %416 = vmatmul.mubr.f32.gmra.mrb[0].mxu0 %v415
    %v417 = vpop.f32.mrb[0].mxu0
    %v418 = vadd.f32 0.0, %v417
    %v419 = vpop.f32.mrb[0].mxu0
    %v420 = vadd.f32 0.0, %v419
    %421 = vmatprep.mubr.f32.mxu0 0.0
    %v422 = vand.u32 %v123, 4294901760
    %v423 = vsub.f32 %v123, %v422
    %v424 = vand.u32 %v423, 4294901760
    %v425 = vsub.f32 %v423, %v424
    %v426 = vand.u32 %v425, 4294901760
    %427 = vmatmul.mubr.f32.gmra.mrb[0].mxu0 %v426
    %v428 = vpop.f32.mrb[0].mxu0
    %v429 = vadd.f32 0.0, %v428
    %v430 = vpop.f32.mrb[0].mxu0
    %v431 = vadd.f32 0.0, %v430
    %432 = vmatprep.mubr.f32.mxu0 0.0
    %v433 = vand.u32 %v124, 4294901760
    %v434 = vsub.f32 %v124, %v433
    %v435 = vand.u32 %v434, 4294901760
    %v436 = vsub.f32 %v434, %v435
    %v437 = vand.u32 %v436, 4294901760
    %438 = vmatmul.mubr.f32.gmra.mrb[0].mxu0 %v437
    %v439 = vpop.f32.mrb[0].mxu0
    %v440 = vadd.f32 0.0, %v439
    %v441 = vpop.f32.mrb[0].mxu0
    %v442 = vadd.f32 0.0, %v441
    %443 = vmatprep.mubr.f32.mxu0 0.0
    %v444 = vand.u32 %v125, 4294901760
    %v445 = vsub.f32 %v125, %v444
    %v446 = vand.u32 %v445, 4294901760
    %v447 = vsub.f32 %v445, %v446
    %v448 = vand.u32 %v447, 4294901760
    %449 = vmatmul.mubr.f32.gmra.mrb[0].mxu0 %v448
    %v450 = vpop.f32.mrb[0].mxu0
    %v451 = vadd.f32 0.0, %v450
    %v452 = vpop.f32.mrb[0].mxu0
    %v453 = vadd.f32 0.0, %v452
    %454 = vmatprep.mubr.f32.mxu0 0.0
    %v455 = vand.u32 %v126, 4294901760
    %v456 = vsub.f32 %v126, %v455
    %v457 = vand.u32 %v456, 4294901760
    %v458 = vsub.f32 %v456, %v457
    %v459 = vand.u32 %v458, 4294901760
    %460 = vmatmul.mubr.f32.gmra.mrb[0].mxu0 %v459
    %v461 = vpop.f32.mrb[0].mxu0
    %v462 = vadd.f32 0.0, %v461
    %v463 = vpop.f32.mrb[0].mxu0
    %v464 = vadd.f32 0.0, %v463
    %465 = vmatprep.mubr.f32.mxu0 0.0
    %v466 = vand.u32 %v127, 4294901760
    %v467 = vsub.f32 %v127, %v466
    %v468 = vand.u32 %v467, 4294901760
    %v469 = vsub.f32 %v467, %v468
    %v470 = vand.u32 %v469, 4294901760
    %471 = vmatmul.mubr.f32.gmra.mrb[0].mxu0 %v470
    %v472 = vpop.f32.mrb[0].mxu0
    %v473 = vadd.f32 0.0, %v472
    %v474 = vpop.f32.mrb[0].mxu0
    %v475 = vadd.f32 0.0, %v474
    %476 = vmatprep.mubr.f32.mxu0 0.0
    %v477 = vand.u32 %v128, 4294901760
    %v478 = vsub.f32 %v128, %v477
    %v479 = vand.u32 %v478, 4294901760
    %v480 = vsub.f32 %v478, %v479
    %v481 = vand.u32 %v480, 4294901760
    %482 = vmatmul.mubr.f32.gmra.mrb[0].mxu0 %v481
    %v483 = vpop.f32.mrb[0].mxu0
    %v484 = vadd.f32 0.0, %v483
    %v485 = vpop.f32.mrb[0].mxu0
    %v486 = vadd.f32 0.0, %v485
    %487 = vmatprep.mubr.f32.mxu0 0.0
    %v488 = vand.u32 %v129, 4294901760
    %v489 = vsub.f32 %v129, %v488
    %v490 = vand.u32 %v489, 4294901760
    %v491 = vsub.f32 %v489, %v490
    %v492 = vand.u32 %v491, 4294901760
    %493 = vmatmul.mubr.f32.gmra.mrb[0].mxu0 %v492
    %v494 = vpop.f32.mrb[0].mxu0
    %v495 = vadd.f32 0.0, %v494
    %v496 = vpop.f32.mrb[0].mxu0
    %v497 = vadd.f32 0.0, %v496
    %498 = vmatprep.mubr.f32.mxu0 0.0
    %v499 = vand.u32 %v130, 4294901760
    %v500 = vsub.f32 %v130, %v499
    %v501 = vand.u32 %v500, 4294901760
    %v502 = vsub.f32 %v500, %v501
    %v503 = vand.u32 %v502, 4294901760
    %504 = vmatmul.mubr.f32.gmra.mrb[0].mxu0 %v503
    %v505 = vpop.f32.mrb[0].mxu0
    %v506 = vadd.f32 0.0, %v505
    %v507 = vpop.f32.mrb[0].mxu0
    %v508 = vadd.f32 0.0, %v507
    %509 = vmatprep.mubr.f32.mxu0 0.0
    %v510 = vand.u32 %v131, 4294901760
    %v511 = vsub.f32 %v131, %v510
    %v512 = vand.u32 %v511, 4294901760
    %v513 = vsub.f32 %v511, %v512
    %v514 = vand.u32 %v513, 4294901760
    %515 = vmatmul.mubr.f32.gmra.mrb[0].mxu0 %v514
    %v516 = vpop.f32.mrb[0].mxu0
    %v517 = vadd.f32 0.0, %v516
    %v518 = vpop.f32.mrb[0].mxu0
    %v519 = vadd.f32 0.0, %v518
    %520 = vmatprep.mubr.f32.mxu0 0.0
    %v521 = vand.u32 %v132, 4294901760
    %v522 = vsub.f32 %v132, %v521
    %v523 = vand.u32 %v522, 4294901760
    %v524 = vsub.f32 %v522, %v523
    %v525 = vand.u32 %v524, 4294901760
    %526 = vmatmul.mubr.f32.gmra.mrb[0].mxu0 %v525
    %v527 = vpop.f32.mrb[0].mxu0
    %v528 = vadd.f32 0.0, %v527
    %v529 = vpop.f32.mrb[0].mxu0
    %v530 = vadd.f32 0.0, %v529
    %531 = vmatprep.mubr.f32.mxu0 0.0
    %v532 = vand.u32 %v133, 4294901760
    %v533 = vsub.f32 %v133, %v532
    %v534 = vand.u32 %v533, 4294901760
    %v535 = vsub.f32 %v533, %v534
    %v536 = vand.u32 %v535, 4294901760
    %537 = vmatmul.mubr.f32.gmra.mrb[0].mxu0 %v536
    %v538 = vpop.f32.mrb[0].mxu0
    %v539 = vadd.f32 0.0, %v538
    %v540 = vpop.f32.mrb[0].mxu0
    %v541 = vadd.f32 0.0, %v540
    %542 = vmatprep.mubr.f32.mxu0 0.0
    %v543 = vand.u32 %v134, 4294901760
    %v544 = vsub.f32 %v134, %v543
    %v545 = vand.u32 %v544, 4294901760
    %v546 = vsub.f32 %v544, %v545
    %v547 = vand.u32 %v546, 4294901760
    %548 = vmatmul.mubr.f32.gmra.mrb[0].mxu0 %v547
    %v549 = vpop.f32.mrb[0].mxu0
    %v550 = vadd.f32 0.0, %v549
    %v551 = vpop.f32.mrb[0].mxu0
    %v552 = vadd.f32 0.0, %v551
    %553 = vmatprep.mubr.f32.mxu0 0.0
    %v554 = vand.u32 %v135, 4294901760
    %v555 = vsub.f32 %v135, %v554
    %v556 = vand.u32 %v555, 4294901760
    %v557 = vsub.f32 %v555, %v556
    %v558 = vand.u32 %v557, 4294901760
    %559 = vmatmul.mubr.f32.gmra.mrb[0].mxu0 %v558
    %v560 = vpop.f32.mrb[0].mxu0
    %v561 = vadd.f32 0.0, %v560
    %v562 = vpop.f32.mrb[0].mxu0
    %v563 = vadd.f32 0.0, %v562
    %564 = vmatprep.mubr.f32.mxu0 0.0
    %v565 = vand.u32 %v136, 4294901760
    %v566 = vsub.f32 %v136, %v565
    %v567 = vand.u32 %v566, 4294901760
    %v568 = vsub.f32 %v566, %v567
    %v569 = vand.u32 %v568, 4294901760
    %570 = vmatmul.mubr.f32.gmra.mrb[0].mxu0 %v569
    %v571 = vpop.f32.mrb[0].mxu0
    %v572 = vadd.f32 0.0, %v571
    %v573 = vpop.f32.mrb[0].mxu0
    %v574 = vadd.f32 0.0, %v573
    %575 = vmatprep.mubr.f32.mxu0 0.0
    %v576 = vand.u32 %v137, 4294901760
    %v577 = vsub.f32 %v137, %v576
    %v578 = vand.u32 %v577, 4294901760
    %v579 = vsub.f32 %v577, %v578
    %v580 = vand.u32 %v579, 4294901760
    %581 = vmatmul.mubr.f32.gmra.mrb[0].mxu0 %v580
    %v582 = vpop.f32.mrb[0].mxu0
    %v583 = vadd.f32 0.0, %v582
    %v584 = vpop.f32.mrb[0].mxu0
    %v585 = vadd.f32 0.0, %v584
    %586 = vmatprep.mubr.f32.mxu0 0.0
    %v587 = vand.u32 %v138, 4294901760
    %v588 = vsub.f32 %v138, %v587
    %v589 = vand.u32 %v588, 4294901760
    %v590 = vsub.f32 %v588, %v589
    %v591 = vand.u32 %v590, 4294901760
    %592 = vmatmul.mubr.f32.gmra.mrb[0].mxu0 %v591
    %v593 = vpop.f32.mrb[0].mxu0
    %v594 = vadd.f32 0.0, %v593
    %v595 = vpop.f32.mrb[0].mxu0
    %v596 = vadd.f32 0.0, %v595
    %597 = vmatprep.mubr.f32.mxu0 0.0
    %v598 = vand.u32 %v139, 4294901760
    %v599 = vsub.f32 %v139, %v598
    %v600 = vand.u32 %v599, 4294901760
    %v601 = vsub.f32 %v599, %v600
    %v602 = vand.u32 %v601, 4294901760
    %603 = vmatmul.mubr.f32.gmra.mrb[0].mxu0 %v602
    %v604 = vpop.f32.mrb[0].mxu0
    %v605 = vadd.f32 0.0, %v604
    %v606 = vpop.f32.mrb[0].mxu0
    %v607 = vadd.f32 0.0, %v606
    %608 = vmatprep.mubr.f32.mxu0 0.0
    %v609 = vand.u32 %v140, 4294901760
    %v610 = vsub.f32 %v140, %v609
    %v611 = vand.u32 %v610, 4294901760
    %v612 = vsub.f32 %v610, %v611
    %v613 = vand.u32 %v612, 4294901760
    %614 = vmatmul.mubr.f32.gmra.mrb[0].mxu0 %v613
    %v615 = vpop.f32.mrb[0].mxu0
    %v616 = vadd.f32 0.0, %v615
    %v617 = vpop.f32.mrb[0].mxu0
    %v618 = vadd.f32 0.0, %v617
    %619 = vmatprep.mubr.f32.mxu0 0.0
    %v620 = vand.u32 %v141, 4294901760
    %v621 = vsub.f32 %v141, %v620
    %v622 = vand.u32 %v621, 4294901760
    %v623 = vsub.f32 %v621, %v622
    %v624 = vand.u32 %v623, 4294901760
    %625 = vmatmul.mubr.f32.gmra.mrb[0].mxu0 %v624
    %v626 = vpop.f32.mrb[0].mxu0
    %v627 = vadd.f32 0.0, %v626
    %v628 = vpop.f32.mrb[0].mxu0
    %v629 = vadd.f32 0.0, %v628
    %630 = vmatprep.mubr.f32.mxu0 0.0
    %v631 = vand.u32 %v142, 4294901760
    %v632 = vsub.f32 %v142, %v631
    %v633 = vand.u32 %v632, 4294901760
    %v634 = vsub.f32 %v632, %v633
    %v635 = vand.u32 %v634, 4294901760
    %636 = vmatmul.mubr.f32.gmra.mrb[0].mxu0 %v635
    %v637 = vpop.f32.mrb[0].mxu0
    %v638 = vadd.f32 0.0, %v637
    %v639 = vpop.f32.mrb[0].mxu0
    %v640 = vadd.f32 0.0, %v639
    %641 = vmatprep.mubr.f32.mxu0 0.0
    %v642 = vand.u32 %v143, 4294901760
    %v643 = vsub.f32 %v143, %v642
    %v644 = vand.u32 %v643, 4294901760
    %v645 = vsub.f32 %v643, %v644
    %v646 = vand.u32 %v645, 4294901760
    %647 = vmatmul.mubr.f32.gmra.mrb[0].mxu0 %v646
    %v648 = vpop.f32.mrb[0].mxu0
    %v649 = vadd.f32 0.0, %v648
    %v650 = vpop.f32.mrb[0].mxu0
    %v651 = vadd.f32 0.0, %v650
    %652 = vmatprep.mubr.f32.mxu0 0.0
    %v653 = vand.u32 %v144, 4294901760
    %v654 = vsub.f32 %v144, %v653
    %v655 = vand.u32 %v654, 4294901760
    %v656 = vsub.f32 %v654, %v655
    %v657 = vand.u32 %v656, 4294901760
    %658 = vmatmul.mubr.f32.gmra.mrb[0].mxu0 %v657
    %v659 = vpop.f32.mrb[0].mxu0
    %v660 = vadd.f32 0.0, %v659
    %v661 = vpop.f32.mrb[0].mxu0
    %v662 = vadd.f32 0.0, %v661
    %663 = vmatprep.mubr.f32.mxu0 0.0
    %v664 = vand.u32 %v145, 4294901760
    %v665 = vsub.f32 %v145, %v664
    %v666 = vand.u32 %v665, 4294901760
    %v667 = vsub.f32 %v665, %v666
    %v668 = vand.u32 %v667, 4294901760
    %669 = vmatmul.mubr.f32.gmra.mrb[0].mxu0 %v668
    %v670 = vpop.f32.mrb[0].mxu0
    %v671 = vadd.f32 0.0, %v670
    %v672 = vpop.f32.mrb[0].mxu0
    %v673 = vadd.f32 0.0, %v672
    %674 = vmatprep.mubr.f32.mxu0 0.0
    %v675 = vand.u32 %v146, 4294901760
    %v676 = vsub.f32 %v146, %v675
    %v677 = vand.u32 %v676, 4294901760
    %v678 = vsub.f32 %v676, %v677
    %v679 = vand.u32 %v678, 4294901760
    %680 = vmatmul.mubr.f32.gmra.mrb[0].mxu0 %v679
    %v681 = vpop.f32.mrb[0].mxu0
    %v682 = vadd.f32 0.0, %v681
    %v683 = vpop.f32.mrb[0].mxu0
    %v684 = vadd.f32 0.0, %v683
    %685 = vmatprep.mubr.f32.mxu0 0.0
    %v686 = vand.u32 %v147, 4294901760
    %v687 = vsub.f32 %v147, %v686
    %v688 = vand.u32 %v687, 4294901760
    %v689 = vsub.f32 %v687, %v688
    %v690 = vand.u32 %v689, 4294901760
    %691 = vmatmul.mubr.f32.gmra.mrb[0].mxu0 %v690
    %v692 = vpop.f32.mrb[0].mxu0
    %v693 = vadd.f32 0.0, %v692
    %v694 = vpop.f32.mrb[0].mxu0
    %v695 = vadd.f32 0.0, %v694
    %696 = vdwg.mxu0
    %697 = vmatprep.subr.mxu0 0.0
    %v698 = vand.u32 %v148, 4294901760
    %v699 = vsub.f32 %v148, %v698
    %v700 = vand.u32 %v699, 4294901760
    %v701 = vsub.f32 %v699, %v700
    %v702 = vand.u32 %v701, 4294901760
    %703 = vmatpush1.xpose.msra.mxu0 %v702
    %704 = vmatprep.subr.mxu0 0.0
    %v705 = vand.u32 %v149, 4294901760
    %v706 = vsub.f32 %v149, %v705
    %v707 = vand.u32 %v706, 4294901760
    %v708 = vsub.f32 %v706, %v707
    %v709 = vand.u32 %v708, 4294901760
    %710 = vmatpush1.xpose.msra.mxu0 %v709
    %711 = vmatprep.subr.mxu0 0.0
    %v712 = vand.u32 %v150, 4294901760
    %v713 = vsub.f32 %v150, %v712
    %v714 = vand.u32 %v713, 4294901760
    %v715 = vsub.f32 %v713, %v714
    %v716 = vand.u32 %v715, 4294901760
    %717 = vmatpush1.xpose.msra.mxu0 %v716
    %718 = vmatprep.subr.mxu0 0.0
    %v719 = vand.u32 %v151, 4294901760
    %v720 = vsub.f32 %v151, %v719
    %v721 = vand.u32 %v720, 4294901760
    %v722 = vsub.f32 %v720, %v721
    %v723 = vand.u32 %v722, 4294901760
    %724 = vmatpush1.xpose.msra.mxu0 %v723
    %725 = vmatprep.subr.mxu0 0.0
    %v726 = vand.u32 %v152, 4294901760
    %v727 = vsub.f32 %v152, %v726
    %v728 = vand.u32 %v727, 4294901760
    %v729 = vsub.f32 %v727, %v728
    %v730 = vand.u32 %v729, 4294901760
    %731 = vmatpush1.xpose.msra.mxu0 %v730
    %732 = vmatprep.subr.mxu0 0.0
    %v733 = vand.u32 %v153, 4294901760
    %v734 = vsub.f32 %v153, %v733
    %v735 = vand.u32 %v734, 4294901760
    %v736 = vsub.f32 %v734, %v735
    %v737 = vand.u32 %v736, 4294901760
    %738 = vmatpush1.xpose.msra.mxu0 %v737
    %739 = vmatprep.subr.mxu0 0.0
    %v740 = vand.u32 %v154, 4294901760
    %v741 = vsub.f32 %v154, %v740
    %v742 = vand.u32 %v741, 4294901760
    %v743 = vsub.f32 %v741, %v742
    %v744 = vand.u32 %v743, 4294901760
    %745 = vmatpush1.xpose.msra.mxu0 %v744
    %746 = vmatprep.subr.mxu0 0.0
    %v747 = vand.u32 %v155, 4294901760
    %v748 = vsub.f32 %v155, %v747
    %v749 = vand.u32 %v748, 4294901760
    %v750 = vsub.f32 %v748, %v749
    %v751 = vand.u32 %v750, 4294901760
    %752 = vmatpush1.xpose.msra.mxu0 %v751
    %753 = vmatprep.subr.mxu0 0.0
    %v754 = vand.u32 %v156, 4294901760
    %v755 = vsub.f32 %v156, %v754
    %v756 = vand.u32 %v755, 4294901760
    %v757 = vsub.f32 %v755, %v756
    %v758 = vand.u32 %v757, 4294901760
    %759 = vmatpush1.xpose.msra.mxu0 %v758
    %760 = vmatprep.subr.mxu0 0.0
    %v761 = vand.u32 %v157, 4294901760
    %v762 = vsub.f32 %v157, %v761
    %v763 = vand.u32 %v762, 4294901760
    %v764 = vsub.f32 %v762, %v763
    %v765 = vand.u32 %v764, 4294901760
    %766 = vmatpush1.xpose.msra.mxu0 %v765
    %767 = vmatprep.subr.mxu0 0.0
    %v768 = vand.u32 %v158, 4294901760
    %v769 = vsub.f32 %v158, %v768
    %v770 = vand.u32 %v769, 4294901760
    %v771 = vsub.f32 %v769, %v770
    %v772 = vand.u32 %v771, 4294901760
    %773 = vmatpush1.xpose.msra.mxu0 %v772
    %774 = vmatprep.subr.mxu0 0.0
    %v775 = vand.u32 %v159, 4294901760
    %v776 = vsub.f32 %v159, %v775
    %v777 = vand.u32 %v776, 4294901760
    %v778 = vsub.f32 %v776, %v777
    %v779 = vand.u32 %v778, 4294901760
    %780 = vmatpush1.xpose.msra.mxu0 %v779
    %781 = vmatprep.subr.mxu0 0.0
    %v782 = vand.u32 %v160, 4294901760
    %v783 = vsub.f32 %v160, %v782
    %v784 = vand.u32 %v783, 4294901760
    %v785 = vsub.f32 %v783, %v784
    %v786 = vand.u32 %v785, 4294901760
    %787 = vmatpush1.xpose.msra.mxu0 %v786
    %788 = vmatprep.subr.mxu0 0.0
    %v789 = vand.u32 %v161, 4294901760
    %v790 = vsub.f32 %v161, %v789
    %v791 = vand.u32 %v790, 4294901760
    %v792 = vsub.f32 %v790, %v791
    %v793 = vand.u32 %v792, 4294901760
    %794 = vmatpush1.xpose.msra.mxu0 %v793
    %795 = vmatprep.subr.mxu0 0.0
    %v796 = vand.u32 %v162, 4294901760
    %v797 = vsub.f32 %v162, %v796
    %v798 = vand.u32 %v797, 4294901760
    %v799 = vsub.f32 %v797, %v798
    %v800 = vand.u32 %v799, 4294901760
    %801 = vmatpush1.xpose.msra.mxu0 %v800
    %802 = vmatprep.subr.mxu0 0.0
    %v803 = vand.u32 %v163, 4294901760
    %v804 = vsub.f32 %v163, %v803
    %v805 = vand.u32 %v804, 4294901760
    %v806 = vsub.f32 %v804, %v805
    %v807 = vand.u32 %v806, 4294901760
    %808 = vmatpush1.xpose.msra.mxu0 %v807
    %809 = vmatprep.subr.mxu0 0.0
    %v810 = vand.u32 %v164, 4294901760
    %v811 = vsub.f32 %v164, %v810
    %v812 = vand.u32 %v811, 4294901760
    %v813 = vsub.f32 %v811, %v812
    %v814 = vand.u32 %v813, 4294901760
    %815 = vmatpush1.xpose.msra.mxu0 %v814
    %816 = vmatprep.subr.mxu0 0.0
    %v817 = vand.u32 %v165, 4294901760
    %v818 = vsub.f32 %v165, %v817
    %v819 = vand.u32 %v818, 4294901760
    %v820 = vsub.f32 %v818, %v819
    %v821 = vand.u32 %v820, 4294901760
    %822 = vmatpush1.xpose.msra.mxu0 %v821
    %823 = vmatprep.subr.mxu0 0.0
    %v824 = vand.u32 %v166, 4294901760
    %v825 = vsub.f32 %v166, %v824
    %v826 = vand.u32 %v825, 4294901760
    %v827 = vsub.f32 %v825, %v826
    %v828 = vand.u32 %v827, 4294901760
    %829 = vmatpush1.xpose.msra.mxu0 %v828
    %830 = vmatprep.subr.mxu0 0.0
    %v831 = vand.u32 %v167, 4294901760
    %v832 = vsub.f32 %v167, %v831
    %v833 = vand.u32 %v832, 4294901760
    %v834 = vsub.f32 %v832, %v833
    %v835 = vand.u32 %v834, 4294901760
    %836 = vmatpush1.xpose.msra.mxu0 %v835
    %837 = vmatprep.subr.mxu0 0.0
    %v838 = vand.u32 %v168, 4294901760
    %v839 = vsub.f32 %v168, %v838
    %v840 = vand.u32 %v839, 4294901760
    %v841 = vsub.f32 %v839, %v840
    %v842 = vand.u32 %v841, 4294901760
    %843 = vmatpush1.xpose.msra.mxu0 %v842
    %844 = vmatprep.subr.mxu0 0.0
    %v845 = vand.u32 %v169, 4294901760
    %v846 = vsub.f32 %v169, %v845
    %v847 = vand.u32 %v846, 4294901760
    %v848 = vsub.f32 %v846, %v847
    %v849 = vand.u32 %v848, 4294901760
    %850 = vmatpush1.xpose.msra.mxu0 %v849
    %851 = vmatprep.subr.mxu0 0.0
    %v852 = vand.u32 %v170, 4294901760
    %v853 = vsub.f32 %v170, %v852
    %v854 = vand.u32 %v853, 4294901760
    %v855 = vsub.f32 %v853, %v854
    %v856 = vand.u32 %v855, 4294901760
    %857 = vmatpush1.xpose.msra.mxu0 %v856
    %858 = vmatprep.subr.mxu0 0.0
    %v859 = vand.u32 %v171, 4294901760
    %v860 = vsub.f32 %v171, %v859
    %v861 = vand.u32 %v860, 4294901760
    %v862 = vsub.f32 %v860, %v861
    %v863 = vand.u32 %v862, 4294901760
    %864 = vmatpush1.xpose.msra.mxu0 %v863
    %865 = vmatprep.subr.mxu0 0.0
    %v866 = vand.u32 %v172, 4294901760
    %v867 = vsub.f32 %v172, %v866
    %v868 = vand.u32 %v867, 4294901760
    %v869 = vsub.f32 %v867, %v868
    %v870 = vand.u32 %v869, 4294901760
    %871 = vmatpush1.xpose.msra.mxu0 %v870
    %872 = vmatprep.subr.mxu0 0.0
    %v873 = vand.u32 %v173, 4294901760
    %v874 = vsub.f32 %v173, %v873
    %v875 = vand.u32 %v874, 4294901760
    %v876 = vsub.f32 %v874, %v875
    %v877 = vand.u32 %v876, 4294901760
    %878 = vmatpush1.xpose.msra.mxu0 %v877
    %879 = vmatprep.subr.mxu0 0.0
    %v880 = vand.u32 %v174, 4294901760
    %v881 = vsub.f32 %v174, %v880
    %v882 = vand.u32 %v881, 4294901760
    %v883 = vsub.f32 %v881, %v882
    %v884 = vand.u32 %v883, 4294901760
    %885 = vmatpush1.xpose.msra.mxu0 %v884
    %886 = vmatprep.subr.mxu0 0.0
    %v887 = vand.u32 %v175, 4294901760
    %v888 = vsub.f32 %v175, %v887
    %v889 = vand.u32 %v888, 4294901760
    %v890 = vsub.f32 %v888, %v889
    %v891 = vand.u32 %v890, 4294901760
    %892 = vmatpush1.xpose.msra.mxu0 %v891
    %893 = vmatprep.subr.mxu0 0.0
    %v894 = vand.u32 %v176, 4294901760
    %v895 = vsub.f32 %v176, %v894
    %v896 = vand.u32 %v895, 4294901760
    %v897 = vsub.f32 %v895, %v896
    %v898 = vand.u32 %v897, 4294901760
    %899 = vmatpush1.xpose.msra.mxu0 %v898
    %900 = vmatprep.subr.mxu0 0.0
    %v901 = vand.u32 %v177, 4294901760
    %v902 = vsub.f32 %v177, %v901
    %v903 = vand.u32 %v902, 4294901760
    %v904 = vsub.f32 %v902, %v903
    %v905 = vand.u32 %v904, 4294901760
    %906 = vmatpush1.xpose.msra.mxu0 %v905
    %907 = vmatprep.subr.mxu0 0.0
    %v908 = vand.u32 %v178, 4294901760
    %v909 = vsub.f32 %v178, %v908
    %v910 = vand.u32 %v909, 4294901760
    %v911 = vsub.f32 %v909, %v910
    %v912 = vand.u32 %v911, 4294901760
    %913 = vmatpush1.xpose.msra.mxu0 %v912
    %914 = vmatprep.subr.mxu0 0.0
    %v915 = vand.u32 %v179, 4294901760
    %v916 = vsub.f32 %v179, %v915
    %v917 = vand.u32 %v916, 4294901760
    %v918 = vsub.f32 %v916, %v917
    %v919 = vand.u32 %v918, 4294901760
    %920 = vmatpush1.xpose.msra.mxu0 %v919
    %921 = vmatprep.mubr.f32.mxu0 0.0
    %v922 = vand.u32 %v116, 4294901760
    %923 = vmatmul.mubr.f32.gmra.mrb[0].mxu0 %v922
    %v924 = vpop.f32.mrb[0].mxu0
    %v925 = vadd.f32 %v352, %v924
    %v926 = vpop.f32.mrb[0].mxu0
    %v927 = vadd.f32 %v354, %v926
    %928 = vmatprep.mubr.f32.mxu0 0.0
    %v929 = vand.u32 %v117, 4294901760
    %930 = vmatmul.mubr.f32.gmra.mrb[0].mxu0 %v929
    %v931 = vpop.f32.mrb[0].mxu0
    %v932 = vadd.f32 %v363, %v931
    %v933 = vpop.f32.mrb[0].mxu0
    %v934 = vadd.f32 %v365, %v933
    %935 = vmatprep.mubr.f32.mxu0 0.0
    %v936 = vand.u32 %v118, 4294901760
    %937 = vmatmul.mubr.f32.gmra.mrb[0].mxu0 %v936
    %v938 = vpop.f32.mrb[0].mxu0
    %v939 = vadd.f32 %v374, %v938
    %v940 = vpop.f32.mrb[0].mxu0
    %v941 = vadd.f32 %v376, %v940
    %942 = vmatprep.mubr.f32.mxu0 0.0
    %v943 = vand.u32 %v119, 4294901760
    %944 = vmatmul.mubr.f32.gmra.mrb[0].mxu0 %v943
    %v945 = vpop.f32.mrb[0].mxu0
    %v946 = vadd.f32 %v385, %v945
    %v947 = vpop.f32.mrb[0].mxu0
    %v948 = vadd.f32 %v387, %v947
    %949 = vmatprep.mubr.f32.mxu0 0.0
    %v950 = vand.u32 %v120, 4294901760
    %951 = vmatmul.mubr.f32.gmra.mrb[0].mxu0 %v950
    %v952 = vpop.f32.mrb[0].mxu0
    %v953 = vadd.f32 %v396, %v952
    %v954 = vpop.f32.mrb[0].mxu0
    %v955 = vadd.f32 %v398, %v954
    %956 = vmatprep.mubr.f32.mxu0 0.0
    %v957 = vand.u32 %v121, 4294901760
    %958 = vmatmul.mubr.f32.gmra.mrb[0].mxu0 %v957
    %v959 = vpop.f32.mrb[0].mxu0
    %v960 = vadd.f32 %v407, %v959
    %v961 = vpop.f32.mrb[0].mxu0
    %v962 = vadd.f32 %v409, %v961
    %963 = vmatprep.mubr.f32.mxu0 0.0
    %v964 = vand.u32 %v122, 4294901760
    %965 = vmatmul.mubr.f32.gmra.mrb[0].mxu0 %v964
    %v966 = vpop.f32.mrb[0].mxu0
    %v967 = vadd.f32 %v418, %v966
    %v968 = vpop.f32.mrb[0].mxu0
    %v969 = vadd.f32 %v420, %v968
    %970 = vmatprep.mubr.f32.mxu0 0.0
    %v971 = vand.u32 %v123, 4294901760
    %972 = vmatmul.mubr.f32.gmra.mrb[0].mxu0 %v971
    %v973 = vpop.f32.mrb[0].mxu0
    %v974 = vadd.f32 %v429, %v973
    %v975 = vpop.f32.mrb[0].mxu0
    %v976 = vadd.f32 %v431, %v975
    %977 = vmatprep.mubr.f32.mxu0 0.0
    %v978 = vand.u32 %v124, 4294901760
    %979 = vmatmul.mubr.f32.gmra.mrb[0].mxu0 %v978
    %v980 = vpop.f32.mrb[0].mxu0
    %v981 = vadd.f32 %v440, %v980
    %v982 = vpop.f32.mrb[0].mxu0
    %v983 = vadd.f32 %v442, %v982
    %984 = vmatprep.mubr.f32.mxu0 0.0
    %v985 = vand.u32 %v125, 4294901760
    %986 = vmatmul.mubr.f32.gmra.mrb[0].mxu0 %v985
    %v987 = vpop.f32.mrb[0].mxu0
    %v988 = vadd.f32 %v451, %v987
    %v989 = vpop.f32.mrb[0].mxu0
    %v990 = vadd.f32 %v453, %v989
    %991 = vmatprep.mubr.f32.mxu0 0.0
    %v992 = vand.u32 %v126, 4294901760
    %993 = vmatmul.mubr.f32.gmra.mrb[0].mxu0 %v992
    %v994 = vpop.f32.mrb[0].mxu0
    %v995 = vadd.f32 %v462, %v994
    %v996 = vpop.f32.mrb[0].mxu0
    %v997 = vadd.f32 %v464, %v996
    %998 = vmatprep.mubr.f32.mxu0 0.0
    %v999 = vand.u32 %v127, 4294901760
    %1000 = vmatmul.mubr.f32.gmra.mrb[0].mxu0 %v999
    %v1001 = vpop.f32.mrb[0].mxu0
    %v1002 = vadd.f32 %v473, %v1001
    %v1003 = vpop.f32.mrb[0].mxu0
    %v1004 = vadd.f32 %v475, %v1003
    %1005 = vmatprep.mubr.f32.mxu0 0.0
    %v1006 = vand.u32 %v128, 4294901760
    %1007 = vmatmul.mubr.f32.gmra.mrb[0].mxu0 %v1006
    %v1008 = vpop.f32.mrb[0].mxu0
    %v1009 = vadd.f32 %v484, %v1008
    %v1010 = vpop.f32.mrb[0].mxu0
    %v1011 = vadd.f32 %v486, %v1010
    %1012 = vmatprep.mubr.f32.mxu0 0.0
    %v1013 = vand.u32 %v129, 4294901760
    %1014 = vmatmul.mubr.f32.gmra.mrb[0].mxu0 %v1013
    %v1015 = vpop.f32.mrb[0].mxu0
    %v1016 = vadd.f32 %v495, %v1015
    %v1017 = vpop.f32.mrb[0].mxu0
    %v1018 = vadd.f32 %v497, %v1017
    %1019 = vmatprep.mubr.f32.mxu0 0.0
    %v1020 = vand.u32 %v130, 4294901760
    %1021 = vmatmul.mubr.f32.gmra.mrb[0].mxu0 %v1020
    %v1022 = vpop.f32.mrb[0].mxu0
    %v1023 = vadd.f32 %v506, %v1022
    %v1024 = vpop.f32.mrb[0].mxu0
    %v1025 = vadd.f32 %v508, %v1024
    %1026 = vmatprep.mubr.f32.mxu0 0.0
    %v1027 = vand.u32 %v131, 4294901760
    %1028 = vmatmul.mubr.f32.gmra.mrb[0].mxu0 %v1027
    %v1029 = vpop.f32.mrb[0].mxu0
    %v1030 = vadd.f32 %v517, %v1029
    %v1031 = vpop.f32.mrb[0].mxu0
    %v1032 = vadd.f32 %v519, %v1031
    %1033 = vmatprep.mubr.f32.mxu0 0.0
    %v1034 = vand.u32 %v132, 4294901760
    %1035 = vmatmul.mubr.f32.gmra.mrb[0].mxu0 %v1034
    %v1036 = vpop.f32.mrb[0].mxu0
    %v1037 = vadd.f32 %v528, %v1036
    %v1038 = vpop.f32.mrb[0].mxu0
    %v1039 = vadd.f32 %v530, %v1038
    %1040 = vmatprep.mubr.f32.mxu0 0.0
    %v1041 = vand.u32 %v133, 4294901760
    %1042 = vmatmul.mubr.f32.gmra.mrb[0].mxu0 %v1041
    %v1043 = vpop.f32.mrb[0].mxu0
    %v1044 = vadd.f32 %v539, %v1043
    %v1045 = vpop.f32.mrb[0].mxu0
    %v1046 = vadd.f32 %v541, %v1045
    %1047 = vmatprep.mubr.f32.mxu0 0.0
    %v1048 = vand.u32 %v134, 4294901760
    %1049 = vmatmul.mubr.f32.gmra.mrb[0].mxu0 %v1048
    %v1050 = vpop.f32.mrb[0].mxu0
    %v1051 = vadd.f32 %v550, %v1050
    %v1052 = vpop.f32.mrb[0].mxu0
    %v1053 = vadd.f32 %v552, %v1052
    %1054 = vmatprep.mubr.f32.mxu0 0.0
    %v1055 = vand.u32 %v135, 4294901760
    %1056 = vmatmul.mubr.f32.gmra.mrb[0].mxu0 %v1055
    %v1057 = vpop.f32.mrb[0].mxu0
    %v1058 = vadd.f32 %v561, %v1057
    %v1059 = vpop.f32.mrb[0].mxu0
    %v1060 = vadd.f32 %v563, %v1059
    %1061 = vmatprep.mubr.f32.mxu0 0.0
    %v1062 = vand.u32 %v136, 4294901760
    %1063 = vmatmul.mubr.f32.gmra.mrb[0].mxu0 %v1062
    %v1064 = vpop.f32.mrb[0].mxu0
    %v1065 = vadd.f32 %v572, %v1064
    %v1066 = vpop.f32.mrb[0].mxu0
    %v1067 = vadd.f32 %v574, %v1066
    %1068 = vmatprep.mubr.f32.mxu0 0.0
    %v1069 = vand.u32 %v137, 4294901760
    %1070 = vmatmul.mubr.f32.gmra.mrb[0].mxu0 %v1069
    %v1071 = vpop.f32.mrb[0].mxu0
    %v1072 = vadd.f32 %v583, %v1071
    %v1073 = vpop.f32.mrb[0].mxu0
    %v1074 = vadd.f32 %v585, %v1073
    %1075 = vmatprep.mubr.f32.mxu0 0.0
    %v1076 = vand.u32 %v138, 4294901760
    %1077 = vmatmul.mubr.f32.gmra.mrb[0].mxu0 %v1076
    %v1078 = vpop.f32.mrb[0].mxu0
    %v1079 = vadd.f32 %v594, %v1078
    %v1080 = vpop.f32.mrb[0].mxu0
    %v1081 = vadd.f32 %v596, %v1080
    %1082 = vmatprep.mubr.f32.mxu0 0.0
    %v1083 = vand.u32 %v139, 4294901760
    %1084 = vmatmul.mubr.f32.gmra.mrb[0].mxu0 %v1083
    %v1085 = vpop.f32.mrb[0].mxu0
    %v1086 = vadd.f32 %v605, %v1085
    %v1087 = vpop.f32.mrb[0].mxu0
    %v1088 = vadd.f32 %v607, %v1087
    %1089 = vmatprep.mubr.f32.mxu0 0.0
    %v1090 = vand.u32 %v140, 4294901760
    %1091 = vmatmul.mubr.f32.gmra.mrb[0].mxu0 %v1090
    %v1092 = vpop.f32.mrb[0].mxu0
    %v1093 = vadd.f32 %v616, %v1092
    %v1094 = vpop.f32.mrb[0].mxu0
    %v1095 = vadd.f32 %v618, %v1094
    %1096 = vmatprep.mubr.f32.mxu0 0.0
    %v1097 = vand.u32 %v141, 4294901760
    %1098 = vmatmul.mubr.f32.gmra.mrb[0].mxu0 %v1097
    %v1099 = vpop.f32.mrb[0].mxu0
    %v1100 = vadd.f32 %v627, %v1099
    %v1101 = vpop.f32.mrb[0].mxu0
    %v1102 = vadd.f32 %v629, %v1101
    %1103 = vmatprep.mubr.f32.mxu0 0.0
    %v1104 = vand.u32 %v142, 4294901760
    %1105 = vmatmul.mubr.f32.gmra.mrb[0].mxu0 %v1104
    %v1106 = vpop.f32.mrb[0].mxu0
    %v1107 = vadd.f32 %v638, %v1106
    %v1108 = vpop.f32.mrb[0].mxu0
    %v1109 = vadd.f32 %v640, %v1108
    %1110 = vmatprep.mubr.f32.mxu0 0.0
    %v1111 = vand.u32 %v143, 4294901760
    %1112 = vmatmul.mubr.f32.gmra.mrb[0].mxu0 %v1111
    %v1113 = vpop.f32.mrb[0].mxu0
    %v1114 = vadd.f32 %v649, %v1113
    %v1115 = vpop.f32.mrb[0].mxu0
    %v1116 = vadd.f32 %v651, %v1115
    %1117 = vmatprep.mubr.f32.mxu0 0.0
    %v1118 = vand.u32 %v144, 4294901760
    %1119 = vmatmul.mubr.f32.gmra.mrb[0].mxu0 %v1118
    %v1120 = vpop.f32.mrb[0].mxu0
    %v1121 = vadd.f32 %v660, %v1120
    %v1122 = vpop.f32.mrb[0].mxu0
    %v1123 = vadd.f32 %v662, %v1122
    %1124 = vmatprep.mubr.f32.mxu0 0.0
    %v1125 = vand.u32 %v145, 4294901760
    %1126 = vmatmul.mubr.f32.gmra.mrb[0].mxu0 %v1125
    %v1127 = vpop.f32.mrb[0].mxu0
    %v1128 = vadd.f32 %v671, %v1127
    %v1129 = vpop.f32.mrb[0].mxu0
    %v1130 = vadd.f32 %v673, %v1129
    %1131 = vmatprep.mubr.f32.mxu0 0.0
    %v1132 = vand.u32 %v146, 4294901760
    %1133 = vmatmul.mubr.f32.gmra.mrb[0].mxu0 %v1132
    %v1134 = vpop.f32.mrb[0].mxu0
    %v1135 = vadd.f32 %v682, %v1134
    %v1136 = vpop.f32.mrb[0].mxu0
    %v1137 = vadd.f32 %v684, %v1136
    %1138 = vmatprep.mubr.f32.mxu0 0.0
    %v1139 = vand.u32 %v147, 4294901760
    %1140 = vmatmul.mubr.f32.gmra.mrb[0].mxu0 %v1139
    %v1141 = vpop.f32.mrb[0].mxu0
    %v1142 = vadd.f32 %v693, %v1141
    %v1143 = vpop.f32.mrb[0].mxu0
    %v1144 = vadd.f32 %v695, %v1143
    %1145 = vdwg.mxu0
    %1146 = vmatprep.subr.mxu0 0.0
    %v1147 = vand.u32 %v148, 4294901760
    %v1148 = vsub.f32 %v148, %v1147
    %1149 = vmatpush1.xpose.msra.mxu0 %v1148
    %1150 = vmatprep.subr.mxu0 0.0
    %v1151 = vand.u32 %v149, 4294901760
    %v1152 = vsub.f32 %v149, %v1151
    %1153 = vmatpush1.xpose.msra.mxu0 %v1152
    %1154 = vmatprep.subr.mxu0 0.0
    %v1155 = vand.u32 %v150, 4294901760
    %v1156 = vsub.f32 %v150, %v1155
    %1157 = vmatpush1.xpose.msra.mxu0 %v1156
    %1158 = vmatprep.subr.mxu0 0.0
    %v1159 = vand.u32 %v151, 4294901760
    %v1160 = vsub.f32 %v151, %v1159
    %1161 = vmatpush1.xpose.msra.mxu0 %v1160
    %1162 = vmatprep.subr.mxu0 0.0
    %v1163 = vand.u32 %v152, 4294901760
    %v1164 = vsub.f32 %v152, %v1163
    %1165 = vmatpush1.xpose.msra.mxu0 %v1164
    %1166 = vmatprep.subr.mxu0 0.0
    %v1167 = vand.u32 %v153, 4294901760
    %v1168 = vsub.f32 %v153, %v1167
    %1169 = vmatpush1.xpose.msra.mxu0 %v1168
    %1170 = vmatprep.subr.mxu0 0.0
    %v1171 = vand.u32 %v154, 4294901760
    %v1172 = vsub.f32 %v154, %v1171
    %1173 = vmatpush1.xpose.msra.mxu0 %v1172
    %1174 = vmatprep.subr.mxu0 0.0
    %v1175 = vand.u32 %v155, 4294901760
    %v1176 = vsub.f32 %v155, %v1175
    %1177 = vmatpush1.xpose.msra.mxu0 %v1176
    %1178 = vmatprep.subr.mxu0 0.0
    %v1179 = vand.u32 %v156, 4294901760
    %v1180 = vsub.f32 %v156, %v1179
    %1181 = vmatpush1.xpose.msra.mxu0 %v1180
    %1182 = vmatprep.subr.mxu0 0.0
    %v1183 = vand.u32 %v157, 4294901760
    %v1184 = vsub.f32 %v157, %v1183
    %1185 = vmatpush1.xpose.msra.mxu0 %v1184
    %1186 = vmatprep.subr.mxu0 0.0
    %v1187 = vand.u32 %v158, 4294901760
    %v1188 = vsub.f32 %v158, %v1187
    %1189 = vmatpush1.xpose.msra.mxu0 %v1188
    %1190 = vmatprep.subr.mxu0 0.0
    %v1191 = vand.u32 %v159, 4294901760
    %v1192 = vsub.f32 %v159, %v1191
    %1193 = vmatpush1.xpose.msra.mxu0 %v1192
    %1194 = vmatprep.subr.mxu0 0.0
    %v1195 = vand.u32 %v160, 4294901760
    %v1196 = vsub.f32 %v160, %v1195
    %1197 = vmatpush1.xpose.msra.mxu0 %v1196
    %1198 = vmatprep.subr.mxu0 0.0
    %v1199 = vand.u32 %v161, 4294901760
    %v1200 = vsub.f32 %v161, %v1199
    %1201 = vmatpush1.xpose.msra.mxu0 %v1200
    %1202 = vmatprep.subr.mxu0 0.0
    %v1203 = vand.u32 %v162, 4294901760
    %v1204 = vsub.f32 %v162, %v1203
    %1205 = vmatpush1.xpose.msra.mxu0 %v1204
    %1206 = vmatprep.subr.mxu0 0.0
    %v1207 = vand.u32 %v163, 4294901760
    %v1208 = vsub.f32 %v163, %v1207
    %1209 = vmatpush1.xpose.msra.mxu0 %v1208
    %1210 = vmatprep.subr.mxu0 0.0
    %v1211 = vand.u32 %v164, 4294901760
    %v1212 = vsub.f32 %v164, %v1211
    %1213 = vmatpush1.xpose.msra.mxu0 %v1212
    %1214 = vmatprep.subr.mxu0 0.0
    %v1215 = vand.u32 %v165, 4294901760
    %v1216 = vsub.f32 %v165, %v1215
    %1217 = vmatpush1.xpose.msra.mxu0 %v1216
    %1218 = vmatprep.subr.mxu0 0.0
    %v1219 = vand.u32 %v166, 4294901760
    %v1220 = vsub.f32 %v166, %v1219
    %1221 = vmatpush1.xpose.msra.mxu0 %v1220
    %1222 = vmatprep.subr.mxu0 0.0
    %v1223 = vand.u32 %v167, 4294901760
    %v1224 = vsub.f32 %v167, %v1223
    %1225 = vmatpush1.xpose.msra.mxu0 %v1224
    %1226 = vmatprep.subr.mxu0 0.0
    %v1227 = vand.u32 %v168, 4294901760
    %v1228 = vsub.f32 %v168, %v1227
    %1229 = vmatpush1.xpose.msra.mxu0 %v1228
    %1230 = vmatprep.subr.mxu0 0.0
    %v1231 = vand.u32 %v169, 4294901760
    %v1232 = vsub.f32 %v169, %v1231
    %1233 = vmatpush1.xpose.msra.mxu0 %v1232
    %1234 = vmatprep.subr.mxu0 0.0
    %v1235 = vand.u32 %v170, 4294901760
    %v1236 = vsub.f32 %v170, %v1235
    %1237 = vmatpush1.xpose.msra.mxu0 %v1236
    %1238 = vmatprep.subr.mxu0 0.0
    %v1239 = vand.u32 %v171, 4294901760
    %v1240 = vsub.f32 %v171, %v1239
    %1241 = vmatpush1.xpose.msra.mxu0 %v1240
    %1242 = vmatprep.subr.mxu0 0.0
    %v1243 = vand.u32 %v172, 4294901760
    %v1244 = vsub.f32 %v172, %v1243
    %1245 = vmatpush1.xpose.msra.mxu0 %v1244
    %1246 = vmatprep.subr.mxu0 0.0
    %v1247 = vand.u32 %v173, 4294901760
    %v1248 = vsub.f32 %v173, %v1247
    %1249 = vmatpush1.xpose.msra.mxu0 %v1248
    %1250 = vmatprep.subr.mxu0 0.0
    %v1251 = vand.u32 %v174, 4294901760
    %v1252 = vsub.f32 %v174, %v1251
    %1253 = vmatpush1.xpose.msra.mxu0 %v1252
    %1254 = vmatprep.subr.mxu0 0.0
    %v1255 = vand.u32 %v175, 4294901760
    %v1256 = vsub.f32 %v175, %v1255
    %1257 = vmatpush1.xpose.msra.mxu0 %v1256
    %1258 = vmatprep.subr.mxu0 0.0
    %v1259 = vand.u32 %v176, 4294901760
    %v1260 = vsub.f32 %v176, %v1259
    %1261 = vmatpush1.xpose.msra.mxu0 %v1260
    %1262 = vmatprep.subr.mxu0 0.0
    %v1263 = vand.u32 %v177, 4294901760
    %v1264 = vsub.f32 %v177, %v1263
    %1265 = vmatpush1.xpose.msra.mxu0 %v1264
    %1266 = vmatprep.subr.mxu0 0.0
    %v1267 = vand.u32 %v178, 4294901760
    %v1268 = vsub.f32 %v178, %v1267
    %1269 = vmatpush1.xpose.msra.mxu0 %v1268
    %1270 = vmatprep.subr.mxu0 0.0
    %v1271 = vand.u32 %v179, 4294901760
    %v1272 = vsub.f32 %v179, %v1271
    %1273 = vmatpush1.xpose.msra.mxu0 %v1272
    %1274 = vmatprep.mubr.f32.mxu0 0.0
    %v1275 = vand.u32 %v116, 4294901760
    %v1276 = vsub.f32 %v116, %v1275
    %1277 = vmatmul.mubr.f32.gmra.mrb[0].mxu0 %v1276
    %v1278 = vpop.f32.mrb[0].mxu0
    %v1279 = vadd.f32 %v925, %v1278
    %v1280 = vpop.f32.mrb[0].mxu0
    %v1281 = vadd.f32 %v927, %v1280
    %1282 = vmatprep.mubr.f32.mxu0 0.0
    %v1283 = vand.u32 %v117, 4294901760
    %v1284 = vsub.f32 %v117, %v1283
    %1285 = vmatmul.mubr.f32.gmra.mrb[0].mxu0 %v1284
    %v1286 = vpop.f32.mrb[0].mxu0
    %v1287 = vadd.f32 %v932, %v1286
    %v1288 = vpop.f32.mrb[0].mxu0
    %v1289 = vadd.f32 %v934, %v1288
    %1290 = vmatprep.mubr.f32.mxu0 0.0
    %v1291 = vand.u32 %v118, 4294901760
    %v1292 = vsub.f32 %v118, %v1291
    %1293 = vmatmul.mubr.f32.gmra.mrb[0].mxu0 %v1292
    %v1294 = vpop.f32.mrb[0].mxu0
    %v1295 = vadd.f32 %v939, %v1294
    %v1296 = vpop.f32.mrb[0].mxu0
    %v1297 = vadd.f32 %v941, %v1296
    %1298 = vmatprep.mubr.f32.mxu0 0.0
    %v1299 = vand.u32 %v119, 4294901760
    %v1300 = vsub.f32 %v119, %v1299
    %1301 = vmatmul.mubr.f32.gmra.mrb[0].mxu0 %v1300
    %v1302 = vpop.f32.mrb[0].mxu0
    %v1303 = vadd.f32 %v946, %v1302
    %v1304 = vpop.f32.mrb[0].mxu0
    %v1305 = vadd.f32 %v948, %v1304
    %1306 = vmatprep.mubr.f32.mxu0 0.0
    %v1307 = vand.u32 %v120, 4294901760
    %v1308 = vsub.f32 %v120, %v1307
    %1309 = vmatmul.mubr.f32.gmra.mrb[0].mxu0 %v1308
    %v1310 = vpop.f32.mrb[0].mxu0
    %v1311 = vadd.f32 %v953, %v1310
    %v1312 = vpop.f32.mrb[0].mxu0
    %v1313 = vadd.f32 %v955, %v1312
    %1314 = vmatprep.mubr.f32.mxu0 0.0
    %v1315 = vand.u32 %v121, 4294901760
    %v1316 = vsub.f32 %v121, %v1315
    %1317 = vmatmul.mubr.f32.gmra.mrb[0].mxu0 %v1316
    %v1318 = vpop.f32.mrb[0].mxu0
    %v1319 = vadd.f32 %v960, %v1318
    %v1320 = vpop.f32.mrb[0].mxu0
    %v1321 = vadd.f32 %v962, %v1320
    %1322 = vmatprep.mubr.f32.mxu0 0.0
    %v1323 = vand.u32 %v122, 4294901760
    %v1324 = vsub.f32 %v122, %v1323
    %1325 = vmatmul.mubr.f32.gmra.mrb[0].mxu0 %v1324
    %v1326 = vpop.f32.mrb[0].mxu0
    %v1327 = vadd.f32 %v967, %v1326
    %v1328 = vpop.f32.mrb[0].mxu0
    %v1329 = vadd.f32 %v969, %v1328
    %1330 = vmatprep.mubr.f32.mxu0 0.0
    %v1331 = vand.u32 %v123, 4294901760
    %v1332 = vsub.f32 %v123, %v1331
    %1333 = vmatmul.mubr.f32.gmra.mrb[0].mxu0 %v1332
    %v1334 = vpop.f32.mrb[0].mxu0
    %v1335 = vadd.f32 %v974, %v1334
    %v1336 = vpop.f32.mrb[0].mxu0
    %v1337 = vadd.f32 %v976, %v1336
    %1338 = vmatprep.mubr.f32.mxu0 0.0
    %v1339 = vand.u32 %v124, 4294901760
    %v1340 = vsub.f32 %v124, %v1339
    %1341 = vmatmul.mubr.f32.gmra.mrb[0].mxu0 %v1340
    %v1342 = vpop.f32.mrb[0].mxu0
    %v1343 = vadd.f32 %v981, %v1342
    %v1344 = vpop.f32.mrb[0].mxu0
    %v1345 = vadd.f32 %v983, %v1344
    %1346 = vmatprep.mubr.f32.mxu0 0.0
    %v1347 = vand.u32 %v125, 4294901760
    %v1348 = vsub.f32 %v125, %v1347
    %1349 = vmatmul.mubr.f32.gmra.mrb[0].mxu0 %v1348
    %v1350 = vpop.f32.mrb[0].mxu0
    %v1351 = vadd.f32 %v988, %v1350
    %v1352 = vpop.f32.mrb[0].mxu0
    %v1353 = vadd.f32 %v990, %v1352
    %1354 = vmatprep.mubr.f32.mxu0 0.0
    %v1355 = vand.u32 %v126, 4294901760
    %v1356 = vsub.f32 %v126, %v1355
    %1357 = vmatmul.mubr.f32.gmra.mrb[0].mxu0 %v1356
    %v1358 = vpop.f32.mrb[0].mxu0
    %v1359 = vadd.f32 %v995, %v1358
    %v1360 = vpop.f32.mrb[0].mxu0
    %v1361 = vadd.f32 %v997, %v1360
    %1362 = vmatprep.mubr.f32.mxu0 0.0
    %v1363 = vand.u32 %v127, 4294901760
    %v1364 = vsub.f32 %v127, %v1363
    %1365 = vmatmul.mubr.f32.gmra.mrb[0].mxu0 %v1364
    %v1366 = vpop.f32.mrb[0].mxu0
    %v1367 = vadd.f32 %v1002, %v1366
    %v1368 = vpop.f32.mrb[0].mxu0
    %v1369 = vadd.f32 %v1004, %v1368
    %1370 = vmatprep.mubr.f32.mxu0 0.0
    %v1371 = vand.u32 %v128, 4294901760
    %v1372 = vsub.f32 %v128, %v1371
    %1373 = vmatmul.mubr.f32.gmra.mrb[0].mxu0 %v1372
    %v1374 = vpop.f32.mrb[0].mxu0
    %v1375 = vadd.f32 %v1009, %v1374
    %v1376 = vpop.f32.mrb[0].mxu0
    %v1377 = vadd.f32 %v1011, %v1376
    %1378 = vmatprep.mubr.f32.mxu0 0.0
    %v1379 = vand.u32 %v129, 4294901760
    %v1380 = vsub.f32 %v129, %v1379
    %1381 = vmatmul.mubr.f32.gmra.mrb[0].mxu0 %v1380
    %v1382 = vpop.f32.mrb[0].mxu0
    %v1383 = vadd.f32 %v1016, %v1382
    %v1384 = vpop.f32.mrb[0].mxu0
    %v1385 = vadd.f32 %v1018, %v1384
    %1386 = vmatprep.mubr.f32.mxu0 0.0
    %v1387 = vand.u32 %v130, 4294901760
    %v1388 = vsub.f32 %v130, %v1387
    %1389 = vmatmul.mubr.f32.gmra.mrb[0].mxu0 %v1388
    %v1390 = vpop.f32.mrb[0].mxu0
    %v1391 = vadd.f32 %v1023, %v1390
    %v1392 = vpop.f32.mrb[0].mxu0
    %v1393 = vadd.f32 %v1025, %v1392
    %1394 = vmatprep.mubr.f32.mxu0 0.0
    %v1395 = vand.u32 %v131, 4294901760
    %v1396 = vsub.f32 %v131, %v1395
    %1397 = vmatmul.mubr.f32.gmra.mrb[0].mxu0 %v1396
    %v1398 = vpop.f32.mrb[0].mxu0
    %v1399 = vadd.f32 %v1030, %v1398
    %v1400 = vpop.f32.mrb[0].mxu0
    %v1401 = vadd.f32 %v1032, %v1400
    %1402 = vmatprep.mubr.f32.mxu0 0.0
    %v1403 = vand.u32 %v132, 4294901760
    %v1404 = vsub.f32 %v132, %v1403
    %1405 = vmatmul.mubr.f32.gmra.mrb[0].mxu0 %v1404
    %v1406 = vpop.f32.mrb[0].mxu0
    %v1407 = vadd.f32 %v1037, %v1406
    %v1408 = vpop.f32.mrb[0].mxu0
    %v1409 = vadd.f32 %v1039, %v1408
    %1410 = vmatprep.mubr.f32.mxu0 0.0
    %v1411 = vand.u32 %v133, 4294901760
    %v1412 = vsub.f32 %v133, %v1411
    %1413 = vmatmul.mubr.f32.gmra.mrb[0].mxu0 %v1412
    %v1414 = vpop.f32.mrb[0].mxu0
    %v1415 = vadd.f32 %v1044, %v1414
    %v1416 = vpop.f32.mrb[0].mxu0
    %v1417 = vadd.f32 %v1046, %v1416
    %1418 = vmatprep.mubr.f32.mxu0 0.0
    %v1419 = vand.u32 %v134, 4294901760
    %v1420 = vsub.f32 %v134, %v1419
    %1421 = vmatmul.mubr.f32.gmra.mrb[0].mxu0 %v1420
    %v1422 = vpop.f32.mrb[0].mxu0
    %v1423 = vadd.f32 %v1051, %v1422
    %v1424 = vpop.f32.mrb[0].mxu0
    %v1425 = vadd.f32 %v1053, %v1424
    %1426 = vmatprep.mubr.f32.mxu0 0.0
    %v1427 = vand.u32 %v135, 4294901760
    %v1428 = vsub.f32 %v135, %v1427
    %1429 = vmatmul.mubr.f32.gmra.mrb[0].mxu0 %v1428
    %v1430 = vpop.f32.mrb[0].mxu0
    %v1431 = vadd.f32 %v1058, %v1430
    %v1432 = vpop.f32.mrb[0].mxu0
    %v1433 = vadd.f32 %v1060, %v1432
    %1434 = vmatprep.mubr.f32.mxu0 0.0
    %v1435 = vand.u32 %v136, 4294901760
    %v1436 = vsub.f32 %v136, %v1435
    %1437 = vmatmul.mubr.f32.gmra.mrb[0].mxu0 %v1436
    %v1438 = vpop.f32.mrb[0].mxu0
    %v1439 = vadd.f32 %v1065, %v1438
    %v1440 = vpop.f32.mrb[0].mxu0
    %v1441 = vadd.f32 %v1067, %v1440
    %1442 = vmatprep.mubr.f32.mxu0 0.0
    %v1443 = vand.u32 %v137, 4294901760
    %v1444 = vsub.f32 %v137, %v1443
    %1445 = vmatmul.mubr.f32.gmra.mrb[0].mxu0 %v1444
    %v1446 = vpop.f32.mrb[0].mxu0
    %v1447 = vadd.f32 %v1072, %v1446
    %v1448 = vpop.f32.mrb[0].mxu0
    %v1449 = vadd.f32 %v1074, %v1448
    %1450 = vmatprep.mubr.f32.mxu0 0.0
    %v1451 = vand.u32 %v138, 4294901760
    %v1452 = vsub.f32 %v138, %v1451
    %1453 = vmatmul.mubr.f32.gmra.mrb[0].mxu0 %v1452
    %v1454 = vpop.f32.mrb[0].mxu0
    %v1455 = vadd.f32 %v1079, %v1454
    %v1456 = vpop.f32.mrb[0].mxu0
    %v1457 = vadd.f32 %v1081, %v1456
    %1458 = vmatprep.mubr.f32.mxu0 0.0
    %v1459 = vand.u32 %v139, 4294901760
    %v1460 = vsub.f32 %v139, %v1459
    %1461 = vmatmul.mubr.f32.gmra.mrb[0].mxu0 %v1460
    %v1462 = vpop.f32.mrb[0].mxu0
    %v1463 = vadd.f32 %v1086, %v1462
    %v1464 = vpop.f32.mrb[0].mxu0
    %v1465 = vadd.f32 %v1088, %v1464
    %1466 = vmatprep.mubr.f32.mxu0 0.0
    %v1467 = vand.u32 %v140, 4294901760
    %v1468 = vsub.f32 %v140, %v1467
    %1469 = vmatmul.mubr.f32.gmra.mrb[0].mxu0 %v1468
    %v1470 = vpop.f32.mrb[0].mxu0
    %v1471 = vadd.f32 %v1093, %v1470
    %v1472 = vpop.f32.mrb[0].mxu0
    %v1473 = vadd.f32 %v1095, %v1472
    %1474 = vmatprep.mubr.f32.mxu0 0.0
    %v1475 = vand.u32 %v141, 4294901760
    %v1476 = vsub.f32 %v141, %v1475
    %1477 = vmatmul.mubr.f32.gmra.mrb[0].mxu0 %v1476
    %v1478 = vpop.f32.mrb[0].mxu0
    %v1479 = vadd.f32 %v1100, %v1478
    %v1480 = vpop.f32.mrb[0].mxu0
    %v1481 = vadd.f32 %v1102, %v1480
    %1482 = vmatprep.mubr.f32.mxu0 0.0
    %v1483 = vand.u32 %v142, 4294901760
    %v1484 = vsub.f32 %v142, %v1483
    %1485 = vmatmul.mubr.f32.gmra.mrb[0].mxu0 %v1484
    %v1486 = vpop.f32.mrb[0].mxu0
    %v1487 = vadd.f32 %v1107, %v1486
    %v1488 = vpop.f32.mrb[0].mxu0
    %v1489 = vadd.f32 %v1109, %v1488
    %1490 = vmatprep.mubr.f32.mxu0 0.0
    %v1491 = vand.u32 %v143, 4294901760
    %v1492 = vsub.f32 %v143, %v1491
    %1493 = vmatmul.mubr.f32.gmra.mrb[0].mxu0 %v1492
    %v1494 = vpop.f32.mrb[0].mxu0
    %v1495 = vadd.f32 %v1114, %v1494
    %v1496 = vpop.f32.mrb[0].mxu0
    %v1497 = vadd.f32 %v1116, %v1496
    %1498 = vmatprep.mubr.f32.mxu0 0.0
    %v1499 = vand.u32 %v144, 4294901760
    %v1500 = vsub.f32 %v144, %v1499
    %1501 = vmatmul.mubr.f32.gmra.mrb[0].mxu0 %v1500
    %v1502 = vpop.f32.mrb[0].mxu0
    %v1503 = vadd.f32 %v1121, %v1502
    %v1504 = vpop.f32.mrb[0].mxu0
    %v1505 = vadd.f32 %v1123, %v1504
    %1506 = vmatprep.mubr.f32.mxu0 0.0
    %v1507 = vand.u32 %v145, 4294901760
    %v1508 = vsub.f32 %v145, %v1507
    %1509 = vmatmul.mubr.f32.gmra.mrb[0].mxu0 %v1508
    %v1510 = vpop.f32.mrb[0].mxu0
    %v1511 = vadd.f32 %v1128, %v1510
    %v1512 = vpop.f32.mrb[0].mxu0
    %v1513 = vadd.f32 %v1130, %v1512
    %1514 = vmatprep.mubr.f32.mxu0 0.0
    %v1515 = vand.u32 %v146, 4294901760
    %v1516 = vsub.f32 %v146, %v1515
    %1517 = vmatmul.mubr.f32.gmra.mrb[0].mxu0 %v1516
    %v1518 = vpop.f32.mrb[0].mxu0
    %v1519 = vadd.f32 %v1135, %v1518
    %v1520 = vpop.f32.mrb[0].mxu0
    %v1521 = vadd.f32 %v1137, %v1520
    %1522 = vmatprep.mubr.f32.mxu0 0.0
    %v1523 = vand.u32 %v147, 4294901760
    %v1524 = vsub.f32 %v147, %v1523
    %1525 = vmatmul.mubr.f32.gmra.mrb[0].mxu0 %v1524
    %v1526 = vpop.f32.mrb[0].mxu0
    %v1527 = vadd.f32 %v1142, %v1526
    %v1528 = vpop.f32.mrb[0].mxu0
    %v1529 = vadd.f32 %v1144, %v1528
    %1530 = vdwg.mxu0
    %1531 = vmatprep.subr.mxu0 0.0
    %v1532 = vand.u32 %v148, 4294901760
    %1533 = vmatpush1.xpose.msra.mxu0 %v1532
    %1534 = vmatprep.subr.mxu0 0.0
    %v1535 = vand.u32 %v149, 4294901760
    %1536 = vmatpush1.xpose.msra.mxu0 %v1535
    %1537 = vmatprep.subr.mxu0 0.0
    %v1538 = vand.u32 %v150, 4294901760
    %1539 = vmatpush1.xpose.msra.mxu0 %v1538
    %1540 = vmatprep.subr.mxu0 0.0
    %v1541 = vand.u32 %v151, 4294901760
    %1542 = vmatpush1.xpose.msra.mxu0 %v1541
    %1543 = vmatprep.subr.mxu0 0.0
    %v1544 = vand.u32 %v152, 4294901760
    %1545 = vmatpush1.xpose.msra.mxu0 %v1544
    %1546 = vmatprep.subr.mxu0 0.0
    %v1547 = vand.u32 %v153, 4294901760
    %1548 = vmatpush1.xpose.msra.mxu0 %v1547
    %1549 = vmatprep.subr.mxu0 0.0
    %v1550 = vand.u32 %v154, 4294901760
    %1551 = vmatpush1.xpose.msra.mxu0 %v1550
    %1552 = vmatprep.subr.mxu0 0.0
    %v1553 = vand.u32 %v155, 4294901760
    %1554 = vmatpush1.xpose.msra.mxu0 %v1553
    %1555 = vmatprep.subr.mxu0 0.0
    %v1556 = vand.u32 %v156, 4294901760
    %1557 = vmatpush1.xpose.msra.mxu0 %v1556
    %1558 = vmatprep.subr.mxu0 0.0
    %v1559 = vand.u32 %v157, 4294901760
    %1560 = vmatpush1.xpose.msra.mxu0 %v1559
    %1561 = vmatprep.subr.mxu0 0.0
    %v1562 = vand.u32 %v158, 4294901760
    %1563 = vmatpush1.xpose.msra.mxu0 %v1562
    %1564 = vmatprep.subr.mxu0 0.0
    %v1565 = vand.u32 %v159, 4294901760
    %1566 = vmatpush1.xpose.msra.mxu0 %v1565
    %1567 = vmatprep.subr.mxu0 0.0
    %v1568 = vand.u32 %v160, 4294901760
    %1569 = vmatpush1.xpose.msra.mxu0 %v1568
    %1570 = vmatprep.subr.mxu0 0.0
    %v1571 = vand.u32 %v161, 4294901760
    %1572 = vmatpush1.xpose.msra.mxu0 %v1571
    %1573 = vmatprep.subr.mxu0 0.0
    %v1574 = vand.u32 %v162, 4294901760
    %1575 = vmatpush1.xpose.msra.mxu0 %v1574
    %1576 = vmatprep.subr.mxu0 0.0
    %v1577 = vand.u32 %v163, 4294901760
    %1578 = vmatpush1.xpose.msra.mxu0 %v1577
    %1579 = vmatprep.subr.mxu0 0.0
    %v1580 = vand.u32 %v164, 4294901760
    %1581 = vmatpush1.xpose.msra.mxu0 %v1580
    %1582 = vmatprep.subr.mxu0 0.0
    %v1583 = vand.u32 %v165, 4294901760
    %1584 = vmatpush1.xpose.msra.mxu0 %v1583
    %1585 = vmatprep.subr.mxu0 0.0
    %v1586 = vand.u32 %v166, 4294901760
    %1587 = vmatpush1.xpose.msra.mxu0 %v1586
    %1588 = vmatprep.subr.mxu0 0.0
    %v1589 = vand.u32 %v167, 4294901760
    %1590 = vmatpush1.xpose.msra.mxu0 %v1589
    %1591 = vmatprep.subr.mxu0 0.0
    %v1592 = vand.u32 %v168, 4294901760
    %1593 = vmatpush1.xpose.msra.mxu0 %v1592
    %1594 = vmatprep.subr.mxu0 0.0
    %v1595 = vand.u32 %v169, 4294901760
    %1596 = vmatpush1.xpose.msra.mxu0 %v1595
    %1597 = vmatprep.subr.mxu0 0.0
    %v1598 = vand.u32 %v170, 4294901760
    %1599 = vmatpush1.xpose.msra.mxu0 %v1598
    %1600 = vmatprep.subr.mxu0 0.0
    %v1601 = vand.u32 %v171, 4294901760
    %1602 = vmatpush1.xpose.msra.mxu0 %v1601
    %1603 = vmatprep.subr.mxu0 0.0
    %v1604 = vand.u32 %v172, 4294901760
    %1605 = vmatpush1.xpose.msra.mxu0 %v1604
    %1606 = vmatprep.subr.mxu0 0.0
    %v1607 = vand.u32 %v173, 4294901760
    %1608 = vmatpush1.xpose.msra.mxu0 %v1607
    %1609 = vmatprep.subr.mxu0 0.0
    %v1610 = vand.u32 %v174, 4294901760
    %1611 = vmatpush1.xpose.msra.mxu0 %v1610
    %1612 = vmatprep.subr.mxu0 0.0
    %v1613 = vand.u32 %v175, 4294901760
    %1614 = vmatpush1.xpose.msra.mxu0 %v1613
    %1615 = vmatprep.subr.mxu0 0.0
    %v1616 = vand.u32 %v176, 4294901760
    %1617 = vmatpush1.xpose.msra.mxu0 %v1616
    %1618 = vmatprep.subr.mxu0 0.0
    %v1619 = vand.u32 %v177, 4294901760
    %1620 = vmatpush1.xpose.msra.mxu0 %v1619
    %1621 = vmatprep.subr.mxu0 0.0
    %v1622 = vand.u32 %v178, 4294901760
    %1623 = vmatpush1.xpose.msra.mxu0 %v1622
    %1624 = vmatprep.subr.mxu0 0.0
    %v1625 = vand.u32 %v179, 4294901760
    %1626 = vmatpush1.xpose.msra.mxu0 %v1625
    %1627 = vmatprep.mubr.f32.mxu0 0.0
    %v1628 = vand.u32 %v116, 4294901760
    %v1629 = vsub.f32 %v116, %v1628
    %v1630 = vand.u32 %v1629, 4294901760
    %1631 = vmatmul.mubr.f32.gmra.mrb[0].mxu0 %v1630
    %v1632 = vpop.f32.mrb[0].mxu0
    %v1633 = vadd.f32 %v1279, %v1632
    %v1634 = vpop.f32.mrb[0].mxu0
    %v1635 = vadd.f32 %v1281, %v1634
    %1636 = vmatprep.mubr.f32.mxu0 0.0
    %v1637 = vand.u32 %v117, 4294901760
    %v1638 = vsub.f32 %v117, %v1637
    %v1639 = vand.u32 %v1638, 4294901760
    %1640 = vmatmul.mubr.f32.gmra.mrb[0].mxu0 %v1639
    %v1641 = vpop.f32.mrb[0].mxu0
    %v1642 = vadd.f32 %v1287, %v1641
    %v1643 = vpop.f32.mrb[0].mxu0
    %v1644 = vadd.f32 %v1289, %v1643
    %1645 = vmatprep.mubr.f32.mxu0 0.0
    %v1646 = vand.u32 %v118, 4294901760
    %v1647 = vsub.f32 %v118, %v1646
    %v1648 = vand.u32 %v1647, 4294901760
    %1649 = vmatmul.mubr.f32.gmra.mrb[0].mxu0 %v1648
    %v1650 = vpop.f32.mrb[0].mxu0
    %v1651 = vadd.f32 %v1295, %v1650
    %v1652 = vpop.f32.mrb[0].mxu0
    %v1653 = vadd.f32 %v1297, %v1652
    %1654 = vmatprep.mubr.f32.mxu0 0.0
    %v1655 = vand.u32 %v119, 4294901760
    %v1656 = vsub.f32 %v119, %v1655
    %v1657 = vand.u32 %v1656, 4294901760
    %1658 = vmatmul.mubr.f32.gmra.mrb[0].mxu0 %v1657
    %v1659 = vpop.f32.mrb[0].mxu0
    %v1660 = vadd.f32 %v1303, %v1659
    %v1661 = vpop.f32.mrb[0].mxu0
    %v1662 = vadd.f32 %v1305, %v1661
    %1663 = vmatprep.mubr.f32.mxu0 0.0
    %v1664 = vand.u32 %v120, 4294901760
    %v1665 = vsub.f32 %v120, %v1664
    %v1666 = vand.u32 %v1665, 4294901760
    %1667 = vmatmul.mubr.f32.gmra.mrb[0].mxu0 %v1666
    %v1668 = vpop.f32.mrb[0].mxu0
    %v1669 = vadd.f32 %v1311, %v1668
    %v1670 = vpop.f32.mrb[0].mxu0
    %v1671 = vadd.f32 %v1313, %v1670
    %1672 = vmatprep.mubr.f32.mxu0 0.0
    %v1673 = vand.u32 %v121, 4294901760
    %v1674 = vsub.f32 %v121, %v1673
    %v1675 = vand.u32 %v1674, 4294901760
    %1676 = vmatmul.mubr.f32.gmra.mrb[0].mxu0 %v1675
    %v1677 = vpop.f32.mrb[0].mxu0
    %v1678 = vadd.f32 %v1319, %v1677
    %v1679 = vpop.f32.mrb[0].mxu0
    %v1680 = vadd.f32 %v1321, %v1679
    %1681 = vmatprep.mubr.f32.mxu0 0.0
    %v1682 = vand.u32 %v122, 4294901760
    %v1683 = vsub.f32 %v122, %v1682
    %v1684 = vand.u32 %v1683, 4294901760
    %1685 = vmatmul.mubr.f32.gmra.mrb[0].mxu0 %v1684
    %v1686 = vpop.f32.mrb[0].mxu0
    %v1687 = vadd.f32 %v1327, %v1686
    %v1688 = vpop.f32.mrb[0].mxu0
    %v1689 = vadd.f32 %v1329, %v1688
    %1690 = vmatprep.mubr.f32.mxu0 0.0
    %v1691 = vand.u32 %v123, 4294901760
    %v1692 = vsub.f32 %v123, %v1691
    %v1693 = vand.u32 %v1692, 4294901760
    %1694 = vmatmul.mubr.f32.gmra.mrb[0].mxu0 %v1693
    %v1695 = vpop.f32.mrb[0].mxu0
    %v1696 = vadd.f32 %v1335, %v1695
    %v1697 = vpop.f32.mrb[0].mxu0
    %v1698 = vadd.f32 %v1337, %v1697
    %1699 = vmatprep.mubr.f32.mxu0 0.0
    %v1700 = vand.u32 %v124, 4294901760
    %v1701 = vsub.f32 %v124, %v1700
    %v1702 = vand.u32 %v1701, 4294901760
    %1703 = vmatmul.mubr.f32.gmra.mrb[0].mxu0 %v1702
    %v1704 = vpop.f32.mrb[0].mxu0
    %v1705 = vadd.f32 %v1343, %v1704
    %v1706 = vpop.f32.mrb[0].mxu0
    %v1707 = vadd.f32 %v1345, %v1706
    %1708 = vmatprep.mubr.f32.mxu0 0.0
    %v1709 = vand.u32 %v125, 4294901760
    %v1710 = vsub.f32 %v125, %v1709
    %v1711 = vand.u32 %v1710, 4294901760
    %1712 = vmatmul.mubr.f32.gmra.mrb[0].mxu0 %v1711
    %v1713 = vpop.f32.mrb[0].mxu0
    %v1714 = vadd.f32 %v1351, %v1713
    %v1715 = vpop.f32.mrb[0].mxu0
    %v1716 = vadd.f32 %v1353, %v1715
    %1717 = vmatprep.mubr.f32.mxu0 0.0
    %v1718 = vand.u32 %v126, 4294901760
    %v1719 = vsub.f32 %v126, %v1718
    %v1720 = vand.u32 %v1719, 4294901760
    %1721 = vmatmul.mubr.f32.gmra.mrb[0].mxu0 %v1720
    %v1722 = vpop.f32.mrb[0].mxu0
    %v1723 = vadd.f32 %v1359, %v1722
    %v1724 = vpop.f32.mrb[0].mxu0
    %v1725 = vadd.f32 %v1361, %v1724
    %1726 = vmatprep.mubr.f32.mxu0 0.0
    %v1727 = vand.u32 %v127, 4294901760
    %v1728 = vsub.f32 %v127, %v1727
    %v1729 = vand.u32 %v1728, 4294901760
    %1730 = vmatmul.mubr.f32.gmra.mrb[0].mxu0 %v1729
    %v1731 = vpop.f32.mrb[0].mxu0
    %v1732 = vadd.f32 %v1367, %v1731
    %v1733 = vpop.f32.mrb[0].mxu0
    %v1734 = vadd.f32 %v1369, %v1733
    %1735 = vmatprep.mubr.f32.mxu0 0.0
    %v1736 = vand.u32 %v128, 4294901760
    %v1737 = vsub.f32 %v128, %v1736
    %v1738 = vand.u32 %v1737, 4294901760
    %1739 = vmatmul.mubr.f32.gmra.mrb[0].mxu0 %v1738
    %v1740 = vpop.f32.mrb[0].mxu0
    %v1741 = vadd.f32 %v1375, %v1740
    %v1742 = vpop.f32.mrb[0].mxu0
    %v1743 = vadd.f32 %v1377, %v1742
    %1744 = vmatprep.mubr.f32.mxu0 0.0
    %v1745 = vand.u32 %v129, 4294901760
    %v1746 = vsub.f32 %v129, %v1745
    %v1747 = vand.u32 %v1746, 4294901760
    %1748 = vmatmul.mubr.f32.gmra.mrb[0].mxu0 %v1747
    %v1749 = vpop.f32.mrb[0].mxu0
    %v1750 = vadd.f32 %v1383, %v1749
    %v1751 = vpop.f32.mrb[0].mxu0
    %v1752 = vadd.f32 %v1385, %v1751
    %1753 = vmatprep.mubr.f32.mxu0 0.0
    %v1754 = vand.u32 %v130, 4294901760
    %v1755 = vsub.f32 %v130, %v1754
    %v1756 = vand.u32 %v1755, 4294901760
    %1757 = vmatmul.mubr.f32.gmra.mrb[0].mxu0 %v1756
    %v1758 = vpop.f32.mrb[0].mxu0
    %v1759 = vadd.f32 %v1391, %v1758
    %v1760 = vpop.f32.mrb[0].mxu0
    %v1761 = vadd.f32 %v1393, %v1760
    %1762 = vmatprep.mubr.f32.mxu0 0.0
    %v1763 = vand.u32 %v131, 4294901760
    %v1764 = vsub.f32 %v131, %v1763
    %v1765 = vand.u32 %v1764, 4294901760
    %1766 = vmatmul.mubr.f32.gmra.mrb[0].mxu0 %v1765
    %v1767 = vpop.f32.mrb[0].mxu0
    %v1768 = vadd.f32 %v1399, %v1767
    %v1769 = vpop.f32.mrb[0].mxu0
    %v1770 = vadd.f32 %v1401, %v1769
    %1771 = vmatprep.mubr.f32.mxu0 0.0
    %v1772 = vand.u32 %v132, 4294901760
    %v1773 = vsub.f32 %v132, %v1772
    %v1774 = vand.u32 %v1773, 4294901760
    %1775 = vmatmul.mubr.f32.gmra.mrb[0].mxu0 %v1774
    %v1776 = vpop.f32.mrb[0].mxu0
    %v1777 = vadd.f32 %v1407, %v1776
    %v1778 = vpop.f32.mrb[0].mxu0
    %v1779 = vadd.f32 %v1409, %v1778
    %1780 = vmatprep.mubr.f32.mxu0 0.0
    %v1781 = vand.u32 %v133, 4294901760
    %v1782 = vsub.f32 %v133, %v1781
    %v1783 = vand.u32 %v1782, 4294901760
    %1784 = vmatmul.mubr.f32.gmra.mrb[0].mxu0 %v1783
    %v1785 = vpop.f32.mrb[0].mxu0
    %v1786 = vadd.f32 %v1415, %v1785
    %v1787 = vpop.f32.mrb[0].mxu0
    %v1788 = vadd.f32 %v1417, %v1787
    %1789 = vmatprep.mubr.f32.mxu0 0.0
    %v1790 = vand.u32 %v134, 4294901760
    %v1791 = vsub.f32 %v134, %v1790
    %v1792 = vand.u32 %v1791, 4294901760
    %1793 = vmatmul.mubr.f32.gmra.mrb[0].mxu0 %v1792
    %v1794 = vpop.f32.mrb[0].mxu0
    %v1795 = vadd.f32 %v1423, %v1794
    %v1796 = vpop.f32.mrb[0].mxu0
    %v1797 = vadd.f32 %v1425, %v1796
    %1798 = vmatprep.mubr.f32.mxu0 0.0
    %v1799 = vand.u32 %v135, 4294901760
    %v1800 = vsub.f32 %v135, %v1799
    %v1801 = vand.u32 %v1800, 4294901760
    %1802 = vmatmul.mubr.f32.gmra.mrb[0].mxu0 %v1801
    %v1803 = vpop.f32.mrb[0].mxu0
    %v1804 = vadd.f32 %v1431, %v1803
    %v1805 = vpop.f32.mrb[0].mxu0
    %v1806 = vadd.f32 %v1433, %v1805
    %1807 = vmatprep.mubr.f32.mxu0 0.0
    %v1808 = vand.u32 %v136, 4294901760
    %v1809 = vsub.f32 %v136, %v1808
    %v1810 = vand.u32 %v1809, 4294901760
    %1811 = vmatmul.mubr.f32.gmra.mrb[0].mxu0 %v1810
    %v1812 = vpop.f32.mrb[0].mxu0
    %v1813 = vadd.f32 %v1439, %v1812
    %v1814 = vpop.f32.mrb[0].mxu0
    %v1815 = vadd.f32 %v1441, %v1814
    %1816 = vmatprep.mubr.f32.mxu0 0.0
    %v1817 = vand.u32 %v137, 4294901760
    %v1818 = vsub.f32 %v137, %v1817
    %v1819 = vand.u32 %v1818, 4294901760
    %1820 = vmatmul.mubr.f32.gmra.mrb[0].mxu0 %v1819
    %v1821 = vpop.f32.mrb[0].mxu0
    %v1822 = vadd.f32 %v1447, %v1821
    %v1823 = vpop.f32.mrb[0].mxu0
    %v1824 = vadd.f32 %v1449, %v1823
    %1825 = vmatprep.mubr.f32.mxu0 0.0
    %v1826 = vand.u32 %v138, 4294901760
    %v1827 = vsub.f32 %v138, %v1826
    %v1828 = vand.u32 %v1827, 4294901760
    %1829 = vmatmul.mubr.f32.gmra.mrb[0].mxu0 %v1828
    %v1830 = vpop.f32.mrb[0].mxu0
    %v1831 = vadd.f32 %v1455, %v1830
    %v1832 = vpop.f32.mrb[0].mxu0
    %v1833 = vadd.f32 %v1457, %v1832
    %1834 = vmatprep.mubr.f32.mxu0 0.0
    %v1835 = vand.u32 %v139, 4294901760
    %v1836 = vsub.f32 %v139, %v1835
    %v1837 = vand.u32 %v1836, 4294901760
    %1838 = vmatmul.mubr.f32.gmra.mrb[0].mxu0 %v1837
    %v1839 = vpop.f32.mrb[0].mxu0
    %v1840 = vadd.f32 %v1463, %v1839
    %v1841 = vpop.f32.mrb[0].mxu0
    %v1842 = vadd.f32 %v1465, %v1841
    %1843 = vmatprep.mubr.f32.mxu0 0.0
    %v1844 = vand.u32 %v140, 4294901760
    %v1845 = vsub.f32 %v140, %v1844
    %v1846 = vand.u32 %v1845, 4294901760
    %1847 = vmatmul.mubr.f32.gmra.mrb[0].mxu0 %v1846
    %v1848 = vpop.f32.mrb[0].mxu0
    %v1849 = vadd.f32 %v1471, %v1848
    %v1850 = vpop.f32.mrb[0].mxu0
    %v1851 = vadd.f32 %v1473, %v1850
    %1852 = vmatprep.mubr.f32.mxu0 0.0
    %v1853 = vand.u32 %v141, 4294901760
    %v1854 = vsub.f32 %v141, %v1853
    %v1855 = vand.u32 %v1854, 4294901760
    %1856 = vmatmul.mubr.f32.gmra.mrb[0].mxu0 %v1855
    %v1857 = vpop.f32.mrb[0].mxu0
    %v1858 = vadd.f32 %v1479, %v1857
    %v1859 = vpop.f32.mrb[0].mxu0
    %v1860 = vadd.f32 %v1481, %v1859
    %1861 = vmatprep.mubr.f32.mxu0 0.0
    %v1862 = vand.u32 %v142, 4294901760
    %v1863 = vsub.f32 %v142, %v1862
    %v1864 = vand.u32 %v1863, 4294901760
    %1865 = vmatmul.mubr.f32.gmra.mrb[0].mxu0 %v1864
    %v1866 = vpop.f32.mrb[0].mxu0
    %v1867 = vadd.f32 %v1487, %v1866
    %v1868 = vpop.f32.mrb[0].mxu0
    %v1869 = vadd.f32 %v1489, %v1868
    %1870 = vmatprep.mubr.f32.mxu0 0.0
    %v1871 = vand.u32 %v143, 4294901760
    %v1872 = vsub.f32 %v143, %v1871
    %v1873 = vand.u32 %v1872, 4294901760
    %1874 = vmatmul.mubr.f32.gmra.mrb[0].mxu0 %v1873
    %v1875 = vpop.f32.mrb[0].mxu0
    %v1876 = vadd.f32 %v1495, %v1875
    %v1877 = vpop.f32.mrb[0].mxu0
    %v1878 = vadd.f32 %v1497, %v1877
    %1879 = vmatprep.mubr.f32.mxu0 0.0
    %v1880 = vand.u32 %v144, 4294901760
    %v1881 = vsub.f32 %v144, %v1880
    %v1882 = vand.u32 %v1881, 4294901760
    %1883 = vmatmul.mubr.f32.gmra.mrb[0].mxu0 %v1882
    %v1884 = vpop.f32.mrb[0].mxu0
    %v1885 = vadd.f32 %v1503, %v1884
    %v1886 = vpop.f32.mrb[0].mxu0
    %v1887 = vadd.f32 %v1505, %v1886
    %1888 = vmatprep.mubr.f32.mxu0 0.0
    %v1889 = vand.u32 %v145, 4294901760
    %v1890 = vsub.f32 %v145, %v1889
    %v1891 = vand.u32 %v1890, 4294901760
    %1892 = vmatmul.mubr.f32.gmra.mrb[0].mxu0 %v1891
    %v1893 = vpop.f32.mrb[0].mxu0
    %v1894 = vadd.f32 %v1511, %v1893
    %v1895 = vpop.f32.mrb[0].mxu0
    %v1896 = vadd.f32 %v1513, %v1895
    %1897 = vmatprep.mubr.f32.mxu0 0.0
    %v1898 = vand.u32 %v146, 4294901760
    %v1899 = vsub.f32 %v146, %v1898
    %v1900 = vand.u32 %v1899, 4294901760
    %1901 = vmatmul.mubr.f32.gmra.mrb[0].mxu0 %v1900
    %v1902 = vpop.f32.mrb[0].mxu0
    %v1903 = vadd.f32 %v1519, %v1902
    %v1904 = vpop.f32.mrb[0].mxu0
    %v1905 = vadd.f32 %v1521, %v1904
    %1906 = vmatprep.mubr.f32.mxu0 0.0
    %v1907 = vand.u32 %v147, 4294901760
    %v1908 = vsub.f32 %v147, %v1907
    %v1909 = vand.u32 %v1908, 4294901760
    %1910 = vmatmul.mubr.f32.gmra.mrb[0].mxu0 %v1909
    %v1911 = vpop.f32.mrb[0].mxu0
    %v1912 = vadd.f32 %v1527, %v1911
    %v1913 = vpop.f32.mrb[0].mxu0
    %v1914 = vadd.f32 %v1529, %v1913
    %1915 = vdwg.mxu0
    %1916 = vmatprep.subr.mxu0 0.0
    %v1917 = vand.u32 %v148, 4294901760
    %v1918 = vsub.f32 %v148, %v1917
    %v1919 = vand.u32 %v1918, 4294901760
    %1920 = vmatpush1.xpose.msra.mxu0 %v1919
    %1921 = vmatprep.subr.mxu0 0.0
    %v1922 = vand.u32 %v149, 4294901760
    %v1923 = vsub.f32 %v149, %v1922
    %v1924 = vand.u32 %v1923, 4294901760
    %1925 = vmatpush1.xpose.msra.mxu0 %v1924
    %1926 = vmatprep.subr.mxu0 0.0
    %v1927 = vand.u32 %v150, 4294901760
    %v1928 = vsub.f32 %v150, %v1927
    %v1929 = vand.u32 %v1928, 4294901760
    %1930 = vmatpush1.xpose.msra.mxu0 %v1929
    %1931 = vmatprep.subr.mxu0 0.0
    %v1932 = vand.u32 %v151, 4294901760
    %v1933 = vsub.f32 %v151, %v1932
    %v1934 = vand.u32 %v1933, 4294901760
    %1935 = vmatpush1.xpose.msra.mxu0 %v1934
    %1936 = vmatprep.subr.mxu0 0.0
    %v1937 = vand.u32 %v152, 4294901760
    %v1938 = vsub.f32 %v152, %v1937
    %v1939 = vand.u32 %v1938, 4294901760
    %1940 = vmatpush1.xpose.msra.mxu0 %v1939
    %1941 = vmatprep.subr.mxu0 0.0
    %v1942 = vand.u32 %v153, 4294901760
    %v1943 = vsub.f32 %v153, %v1942
    %v1944 = vand.u32 %v1943, 4294901760
    %1945 = vmatpush1.xpose.msra.mxu0 %v1944
    %1946 = vmatprep.subr.mxu0 0.0
    %v1947 = vand.u32 %v154, 4294901760
    %v1948 = vsub.f32 %v154, %v1947
    %v1949 = vand.u32 %v1948, 4294901760
    %1950 = vmatpush1.xpose.msra.mxu0 %v1949
    %1951 = vmatprep.subr.mxu0 0.0
    %v1952 = vand.u32 %v155, 4294901760
    %v1953 = vsub.f32 %v155, %v1952
    %v1954 = vand.u32 %v1953, 4294901760
    %1955 = vmatpush1.xpose.msra.mxu0 %v1954
    %1956 = vmatprep.subr.mxu0 0.0
    %v1957 = vand.u32 %v156, 4294901760
    %v1958 = vsub.f32 %v156, %v1957
    %v1959 = vand.u32 %v1958, 4294901760
    %1960 = vmatpush1.xpose.msra.mxu0 %v1959
    %1961 = vmatprep.subr.mxu0 0.0
    %v1962 = vand.u32 %v157, 4294901760
    %v1963 = vsub.f32 %v157, %v1962
    %v1964 = vand.u32 %v1963, 4294901760
    %1965 = vmatpush1.xpose.msra.mxu0 %v1964
    %1966 = vmatprep.subr.mxu0 0.0
    %v1967 = vand.u32 %v158, 4294901760
    %v1968 = vsub.f32 %v158, %v1967
    %v1969 = vand.u32 %v1968, 4294901760
    %1970 = vmatpush1.xpose.msra.mxu0 %v1969
    %1971 = vmatprep.subr.mxu0 0.0
    %v1972 = vand.u32 %v159, 4294901760
    %v1973 = vsub.f32 %v159, %v1972
    %v1974 = vand.u32 %v1973, 4294901760
    %1975 = vmatpush1.xpose.msra.mxu0 %v1974
    %1976 = vmatprep.subr.mxu0 0.0
    %v1977 = vand.u32 %v160, 4294901760
    %v1978 = vsub.f32 %v160, %v1977
    %v1979 = vand.u32 %v1978, 4294901760
    %1980 = vmatpush1.xpose.msra.mxu0 %v1979
    %1981 = vmatprep.subr.mxu0 0.0
    %v1982 = vand.u32 %v161, 4294901760
    %v1983 = vsub.f32 %v161, %v1982
    %v1984 = vand.u32 %v1983, 4294901760
    %1985 = vmatpush1.xpose.msra.mxu0 %v1984
    %1986 = vmatprep.subr.mxu0 0.0
    %v1987 = vand.u32 %v162, 4294901760
    %v1988 = vsub.f32 %v162, %v1987
    %v1989 = vand.u32 %v1988, 4294901760
    %1990 = vmatpush1.xpose.msra.mxu0 %v1989
    %1991 = vmatprep.subr.mxu0 0.0
    %v1992 = vand.u32 %v163, 4294901760
    %v1993 = vsub.f32 %v163, %v1992
    %v1994 = vand.u32 %v1993, 4294901760
    %1995 = vmatpush1.xpose.msra.mxu0 %v1994
    %1996 = vmatprep.subr.mxu0 0.0
    %v1997 = vand.u32 %v164, 4294901760
    %v1998 = vsub.f32 %v164, %v1997
    %v1999 = vand.u32 %v1998, 4294901760
    %2000 = vmatpush1.xpose.msra.mxu0 %v1999
    %2001 = vmatprep.subr.mxu0 0.0
    %v2002 = vand.u32 %v165, 4294901760
    %v2003 = vsub.f32 %v165, %v2002
    %v2004 = vand.u32 %v2003, 4294901760
    %2005 = vmatpush1.xpose.msra.mxu0 %v2004
    %2006 = vmatprep.subr.mxu0 0.0
    %v2007 = vand.u32 %v166, 4294901760
    %v2008 = vsub.f32 %v166, %v2007
    %v2009 = vand.u32 %v2008, 4294901760
    %2010 = vmatpush1.xpose.msra.mxu0 %v2009
    %2011 = vmatprep.subr.mxu0 0.0
    %v2012 = vand.u32 %v167, 4294901760
    %v2013 = vsub.f32 %v167, %v2012
    %v2014 = vand.u32 %v2013, 4294901760
    %2015 = vmatpush1.xpose.msra.mxu0 %v2014
    %2016 = vmatprep.subr.mxu0 0.0
    %v2017 = vand.u32 %v168, 4294901760
    %v2018 = vsub.f32 %v168, %v2017
    %v2019 = vand.u32 %v2018, 4294901760
    %2020 = vmatpush1.xpose.msra.mxu0 %v2019
    %2021 = vmatprep.subr.mxu0 0.0
    %v2022 = vand.u32 %v169, 4294901760
    %v2023 = vsub.f32 %v169, %v2022
    %v2024 = vand.u32 %v2023, 4294901760
    %2025 = vmatpush1.xpose.msra.mxu0 %v2024
    %2026 = vmatprep.subr.mxu0 0.0
    %v2027 = vand.u32 %v170, 4294901760
    %v2028 = vsub.f32 %v170, %v2027
    %v2029 = vand.u32 %v2028, 4294901760
    %2030 = vmatpush1.xpose.msra.mxu0 %v2029
    %2031 = vmatprep.subr.mxu0 0.0
    %v2032 = vand.u32 %v171, 4294901760
    %v2033 = vsub.f32 %v171, %v2032
    %v2034 = vand.u32 %v2033, 4294901760
    %2035 = vmatpush1.xpose.msra.mxu0 %v2034
    %2036 = vmatprep.subr.mxu0 0.0
    %v2037 = vand.u32 %v172, 4294901760
    %v2038 = vsub.f32 %v172, %v2037
    %v2039 = vand.u32 %v2038, 4294901760
    %2040 = vmatpush1.xpose.msra.mxu0 %v2039
    %2041 = vmatprep.subr.mxu0 0.0
    %v2042 = vand.u32 %v173, 4294901760
    %v2043 = vsub.f32 %v173, %v2042
    %v2044 = vand.u32 %v2043, 4294901760
    %2045 = vmatpush1.xpose.msra.mxu0 %v2044
    %2046 = vmatprep.subr.mxu0 0.0
    %v2047 = vand.u32 %v174, 4294901760
    %v2048 = vsub.f32 %v174, %v2047
    %v2049 = vand.u32 %v2048, 4294901760
    %2050 = vmatpush1.xpose.msra.mxu0 %v2049
    %2051 = vmatprep.subr.mxu0 0.0
    %v2052 = vand.u32 %v175, 4294901760
    %v2053 = vsub.f32 %v175, %v2052
    %v2054 = vand.u32 %v2053, 4294901760
    %2055 = vmatpush1.xpose.msra.mxu0 %v2054
    %2056 = vmatprep.subr.mxu0 0.0
    %v2057 = vand.u32 %v176, 4294901760
    %v2058 = vsub.f32 %v176, %v2057
    %v2059 = vand.u32 %v2058, 4294901760
    %2060 = vmatpush1.xpose.msra.mxu0 %v2059
    %2061 = vmatprep.subr.mxu0 0.0
    %v2062 = vand.u32 %v177, 4294901760
    %v2063 = vsub.f32 %v177, %v2062
    %v2064 = vand.u32 %v2063, 4294901760
    %2065 = vmatpush1.xpose.msra.mxu0 %v2064
    %2066 = vmatprep.subr.mxu0 0.0
    %v2067 = vand.u32 %v178, 4294901760
    %v2068 = vsub.f32 %v178, %v2067
    %v2069 = vand.u32 %v2068, 4294901760
    %2070 = vmatpush1.xpose.msra.mxu0 %v2069
    %2071 = vmatprep.subr.mxu0 0.0
    %v2072 = vand.u32 %v179, 4294901760
    %v2073 = vsub.f32 %v179, %v2072
    %v2074 = vand.u32 %v2073, 4294901760
    %2075 = vmatpush1.xpose.msra.mxu0 %v2074
    %2076 = vmatprep.mubr.f32.mxu0 0.0
    %v2077 = vand.u32 %v116, 4294901760
    %2078 = vmatmul.mubr.f32.gmra.mrb[0].mxu0 %v2077
    %v2079 = vpop.f32.mrb[0].mxu0
    %v2080 = vadd.f32 %v1633, %v2079
    %v2081 = vpop.f32.mrb[0].mxu0
    %v2082 = vadd.f32 %v1635, %v2081
    %2083 = vmatprep.mubr.f32.mxu0 0.0
    %v2084 = vand.u32 %v117, 4294901760
    %2085 = vmatmul.mubr.f32.gmra.mrb[0].mxu0 %v2084
    %v2086 = vpop.f32.mrb[0].mxu0
    %v2087 = vadd.f32 %v1642, %v2086
    %v2088 = vpop.f32.mrb[0].mxu0
    %v2089 = vadd.f32 %v1644, %v2088
    %2090 = vmatprep.mubr.f32.mxu0 0.0
    %v2091 = vand.u32 %v118, 4294901760
    %2092 = vmatmul.mubr.f32.gmra.mrb[0].mxu0 %v2091
    %v2093 = vpop.f32.mrb[0].mxu0
    %v2094 = vadd.f32 %v1651, %v2093
    %v2095 = vpop.f32.mrb[0].mxu0
    %v2096 = vadd.f32 %v1653, %v2095
    %2097 = vmatprep.mubr.f32.mxu0 0.0
    %v2098 = vand.u32 %v119, 4294901760
    %2099 = vmatmul.mubr.f32.gmra.mrb[0].mxu0 %v2098
    %v2100 = vpop.f32.mrb[0].mxu0
    %v2101 = vadd.f32 %v1660, %v2100
    %v2102 = vpop.f32.mrb[0].mxu0
    %v2103 = vadd.f32 %v1662, %v2102
    %2104 = vmatprep.mubr.f32.mxu0 0.0
    %v2105 = vand.u32 %v120, 4294901760
    %2106 = vmatmul.mubr.f32.gmra.mrb[0].mxu0 %v2105
    %v2107 = vpop.f32.mrb[0].mxu0
    %v2108 = vadd.f32 %v1669, %v2107
    %v2109 = vpop.f32.mrb[0].mxu0
    %v2110 = vadd.f32 %v1671, %v2109
    %2111 = vmatprep.mubr.f32.mxu0 0.0
    %v2112 = vand.u32 %v121, 4294901760
    %2113 = vmatmul.mubr.f32.gmra.mrb[0].mxu0 %v2112
    %v2114 = vpop.f32.mrb[0].mxu0
    %v2115 = vadd.f32 %v1678, %v2114
    %v2116 = vpop.f32.mrb[0].mxu0
    %v2117 = vadd.f32 %v1680, %v2116
    %2118 = vmatprep.mubr.f32.mxu0 0.0
    %v2119 = vand.u32 %v122, 4294901760
    %2120 = vmatmul.mubr.f32.gmra.mrb[0].mxu0 %v2119
    %v2121 = vpop.f32.mrb[0].mxu0
    %v2122 = vadd.f32 %v1687, %v2121
    %v2123 = vpop.f32.mrb[0].mxu0
    %v2124 = vadd.f32 %v1689, %v2123
    %2125 = vmatprep.mubr.f32.mxu0 0.0
    %v2126 = vand.u32 %v123, 4294901760
    %2127 = vmatmul.mubr.f32.gmra.mrb[0].mxu0 %v2126
    %v2128 = vpop.f32.mrb[0].mxu0
    %v2129 = vadd.f32 %v1696, %v2128
    %v2130 = vpop.f32.mrb[0].mxu0
    %v2131 = vadd.f32 %v1698, %v2130
    %2132 = vmatprep.mubr.f32.mxu0 0.0
    %v2133 = vand.u32 %v124, 4294901760
    %2134 = vmatmul.mubr.f32.gmra.mrb[0].mxu0 %v2133
    %v2135 = vpop.f32.mrb[0].mxu0
    %v2136 = vadd.f32 %v1705, %v2135
    %v2137 = vpop.f32.mrb[0].mxu0
    %v2138 = vadd.f32 %v1707, %v2137
    %2139 = vmatprep.mubr.f32.mxu0 0.0
    %v2140 = vand.u32 %v125, 4294901760
    %2141 = vmatmul.mubr.f32.gmra.mrb[0].mxu0 %v2140
    %v2142 = vpop.f32.mrb[0].mxu0
    %v2143 = vadd.f32 %v1714, %v2142
    %v2144 = vpop.f32.mrb[0].mxu0
    %v2145 = vadd.f32 %v1716, %v2144
    %2146 = vmatprep.mubr.f32.mxu0 0.0
    %v2147 = vand.u32 %v126, 4294901760
    %2148 = vmatmul.mubr.f32.gmra.mrb[0].mxu0 %v2147
    %v2149 = vpop.f32.mrb[0].mxu0
    %v2150 = vadd.f32 %v1723, %v2149
    %v2151 = vpop.f32.mrb[0].mxu0
    %v2152 = vadd.f32 %v1725, %v2151
    %2153 = vmatprep.mubr.f32.mxu0 0.0
    %v2154 = vand.u32 %v127, 4294901760
    %2155 = vmatmul.mubr.f32.gmra.mrb[0].mxu0 %v2154
    %v2156 = vpop.f32.mrb[0].mxu0
    %v2157 = vadd.f32 %v1732, %v2156
    %v2158 = vpop.f32.mrb[0].mxu0
    %v2159 = vadd.f32 %v1734, %v2158
    %2160 = vmatprep.mubr.f32.mxu0 0.0
    %v2161 = vand.u32 %v128, 4294901760
    %2162 = vmatmul.mubr.f32.gmra.mrb[0].mxu0 %v2161
    %v2163 = vpop.f32.mrb[0].mxu0
    %v2164 = vadd.f32 %v1741, %v2163
    %v2165 = vpop.f32.mrb[0].mxu0
    %v2166 = vadd.f32 %v1743, %v2165
    %2167 = vmatprep.mubr.f32.mxu0 0.0
    %v2168 = vand.u32 %v129, 4294901760
    %2169 = vmatmul.mubr.f32.gmra.mrb[0].mxu0 %v2168
    %v2170 = vpop.f32.mrb[0].mxu0
    %v2171 = vadd.f32 %v1750, %v2170
    %v2172 = vpop.f32.mrb[0].mxu0
    %v2173 = vadd.f32 %v1752, %v2172
    %2174 = vmatprep.mubr.f32.mxu0 0.0
    %v2175 = vand.u32 %v130, 4294901760
    %2176 = vmatmul.mubr.f32.gmra.mrb[0].mxu0 %v2175
    %v2177 = vpop.f32.mrb[0].mxu0
    %v2178 = vadd.f32 %v1759, %v2177
    %v2179 = vpop.f32.mrb[0].mxu0
    %v2180 = vadd.f32 %v1761, %v2179
    %2181 = vmatprep.mubr.f32.mxu0 0.0
    %v2182 = vand.u32 %v131, 4294901760
    %2183 = vmatmul.mubr.f32.gmra.mrb[0].mxu0 %v2182
    %v2184 = vpop.f32.mrb[0].mxu0
    %v2185 = vadd.f32 %v1768, %v2184
    %v2186 = vpop.f32.mrb[0].mxu0
    %v2187 = vadd.f32 %v1770, %v2186
    %2188 = vmatprep.mubr.f32.mxu0 0.0
    %v2189 = vand.u32 %v132, 4294901760
    %2190 = vmatmul.mubr.f32.gmra.mrb[0].mxu0 %v2189
    %v2191 = vpop.f32.mrb[0].mxu0
    %v2192 = vadd.f32 %v1777, %v2191
    %v2193 = vpop.f32.mrb[0].mxu0
    %v2194 = vadd.f32 %v1779, %v2193
    %2195 = vmatprep.mubr.f32.mxu0 0.0
    %v2196 = vand.u32 %v133, 4294901760
    %2197 = vmatmul.mubr.f32.gmra.mrb[0].mxu0 %v2196
    %v2198 = vpop.f32.mrb[0].mxu0
    %v2199 = vadd.f32 %v1786, %v2198
    %v2200 = vpop.f32.mrb[0].mxu0
    %v2201 = vadd.f32 %v1788, %v2200
    %2202 = vmatprep.mubr.f32.mxu0 0.0
    %v2203 = vand.u32 %v134, 4294901760
    %2204 = vmatmul.mubr.f32.gmra.mrb[0].mxu0 %v2203
    %v2205 = vpop.f32.mrb[0].mxu0
    %v2206 = vadd.f32 %v1795, %v2205
    %v2207 = vpop.f32.mrb[0].mxu0
    %v2208 = vadd.f32 %v1797, %v2207
    %2209 = vmatprep.mubr.f32.mxu0 0.0
    %v2210 = vand.u32 %v135, 4294901760
    %2211 = vmatmul.mubr.f32.gmra.mrb[0].mxu0 %v2210
    %v2212 = vpop.f32.mrb[0].mxu0
    %v2213 = vadd.f32 %v1804, %v2212
    %v2214 = vpop.f32.mrb[0].mxu0
    %v2215 = vadd.f32 %v1806, %v2214
    %2216 = vmatprep.mubr.f32.mxu0 0.0
    %v2217 = vand.u32 %v136, 4294901760
    %2218 = vmatmul.mubr.f32.gmra.mrb[0].mxu0 %v2217
    %v2219 = vpop.f32.mrb[0].mxu0
    %v2220 = vadd.f32 %v1813, %v2219
    %v2221 = vpop.f32.mrb[0].mxu0
    %v2222 = vadd.f32 %v1815, %v2221
    %2223 = vmatprep.mubr.f32.mxu0 0.0
    %v2224 = vand.u32 %v137, 4294901760
    %2225 = vmatmul.mubr.f32.gmra.mrb[0].mxu0 %v2224
    %v2226 = vpop.f32.mrb[0].mxu0
    %v2227 = vadd.f32 %v1822, %v2226
    %v2228 = vpop.f32.mrb[0].mxu0
    %v2229 = vadd.f32 %v1824, %v2228
    %2230 = vmatprep.mubr.f32.mxu0 0.0
    %v2231 = vand.u32 %v138, 4294901760
    %2232 = vmatmul.mubr.f32.gmra.mrb[0].mxu0 %v2231
    %v2233 = vpop.f32.mrb[0].mxu0
    %v2234 = vadd.f32 %v1831, %v2233
    %v2235 = vpop.f32.mrb[0].mxu0
    %v2236 = vadd.f32 %v1833, %v2235
    %2237 = vmatprep.mubr.f32.mxu0 0.0
    %v2238 = vand.u32 %v139, 4294901760
    %2239 = vmatmul.mubr.f32.gmra.mrb[0].mxu0 %v2238
    %v2240 = vpop.f32.mrb[0].mxu0
    %v2241 = vadd.f32 %v1840, %v2240
    %v2242 = vpop.f32.mrb[0].mxu0
    %v2243 = vadd.f32 %v1842, %v2242
    %2244 = vmatprep.mubr.f32.mxu0 0.0
    %v2245 = vand.u32 %v140, 4294901760
    %2246 = vmatmul.mubr.f32.gmra.mrb[0].mxu0 %v2245
    %v2247 = vpop.f32.mrb[0].mxu0
    %v2248 = vadd.f32 %v1849, %v2247
    %v2249 = vpop.f32.mrb[0].mxu0
    %v2250 = vadd.f32 %v1851, %v2249
    %2251 = vmatprep.mubr.f32.mxu0 0.0
    %v2252 = vand.u32 %v141, 4294901760
    %2253 = vmatmul.mubr.f32.gmra.mrb[0].mxu0 %v2252
    %v2254 = vpop.f32.mrb[0].mxu0
    %v2255 = vadd.f32 %v1858, %v2254
    %v2256 = vpop.f32.mrb[0].mxu0
    %v2257 = vadd.f32 %v1860, %v2256
    %2258 = vmatprep.mubr.f32.mxu0 0.0
    %v2259 = vand.u32 %v142, 4294901760
    %2260 = vmatmul.mubr.f32.gmra.mrb[0].mxu0 %v2259
    %v2261 = vpop.f32.mrb[0].mxu0
    %v2262 = vadd.f32 %v1867, %v2261
    %v2263 = vpop.f32.mrb[0].mxu0
    %v2264 = vadd.f32 %v1869, %v2263
    %2265 = vmatprep.mubr.f32.mxu0 0.0
    %v2266 = vand.u32 %v143, 4294901760
    %2267 = vmatmul.mubr.f32.gmra.mrb[0].mxu0 %v2266
    %v2268 = vpop.f32.mrb[0].mxu0
    %v2269 = vadd.f32 %v1876, %v2268
    %v2270 = vpop.f32.mrb[0].mxu0
    %v2271 = vadd.f32 %v1878, %v2270
    %2272 = vmatprep.mubr.f32.mxu0 0.0
    %v2273 = vand.u32 %v144, 4294901760
    %2274 = vmatmul.mubr.f32.gmra.mrb[0].mxu0 %v2273
    %v2275 = vpop.f32.mrb[0].mxu0
    %v2276 = vadd.f32 %v1885, %v2275
    %v2277 = vpop.f32.mrb[0].mxu0
    %v2278 = vadd.f32 %v1887, %v2277
    %2279 = vmatprep.mubr.f32.mxu0 0.0
    %v2280 = vand.u32 %v145, 4294901760
    %2281 = vmatmul.mubr.f32.gmra.mrb[0].mxu0 %v2280
    %v2282 = vpop.f32.mrb[0].mxu0
    %v2283 = vadd.f32 %v1894, %v2282
    %v2284 = vpop.f32.mrb[0].mxu0
    %v2285 = vadd.f32 %v1896, %v2284
    %2286 = vmatprep.mubr.f32.mxu0 0.0
    %v2287 = vand.u32 %v146, 4294901760
    %2288 = vmatmul.mubr.f32.gmra.mrb[0].mxu0 %v2287
    %v2289 = vpop.f32.mrb[0].mxu0
    %v2290 = vadd.f32 %v1903, %v2289
    %v2291 = vpop.f32.mrb[0].mxu0
    %v2292 = vadd.f32 %v1905, %v2291
    %2293 = vmatprep.mubr.f32.mxu0 0.0
    %v2294 = vand.u32 %v147, 4294901760
    %2295 = vmatmul.mubr.f32.gmra.mrb[0].mxu0 %v2294
    %v2296 = vpop.f32.mrb[0].mxu0
    %v2297 = vadd.f32 %v1912, %v2296
    %v2298 = vpop.f32.mrb[0].mxu0
    %v2299 = vadd.f32 %v1914, %v2298
    %2300 = vdwg.mxu0
    %2301 = vmatprep.subr.mxu0 0.0
    %v2302 = vand.u32 %v148, 4294901760
    %2303 = vmatpush1.xpose.msra.mxu0 %v2302
    %2304 = vmatprep.subr.mxu0 0.0
    %v2305 = vand.u32 %v149, 4294901760
    %2306 = vmatpush1.xpose.msra.mxu0 %v2305
    %2307 = vmatprep.subr.mxu0 0.0
    %v2308 = vand.u32 %v150, 4294901760
    %2309 = vmatpush1.xpose.msra.mxu0 %v2308
    %2310 = vmatprep.subr.mxu0 0.0
    %v2311 = vand.u32 %v151, 4294901760
    %2312 = vmatpush1.xpose.msra.mxu0 %v2311
    %2313 = vmatprep.subr.mxu0 0.0
    %v2314 = vand.u32 %v152, 4294901760
    %2315 = vmatpush1.xpose.msra.mxu0 %v2314
    %2316 = vmatprep.subr.mxu0 0.0
    %v2317 = vand.u32 %v153, 4294901760
    %2318 = vmatpush1.xpose.msra.mxu0 %v2317
    %2319 = vmatprep.subr.mxu0 0.0
    %v2320 = vand.u32 %v154, 4294901760
    %2321 = vmatpush1.xpose.msra.mxu0 %v2320
    %2322 = vmatprep.subr.mxu0 0.0
    %v2323 = vand.u32 %v155, 4294901760
    %2324 = vmatpush1.xpose.msra.mxu0 %v2323
    %2325 = vmatprep.subr.mxu0 0.0
    %v2326 = vand.u32 %v156, 4294901760
    %2327 = vmatpush1.xpose.msra.mxu0 %v2326
    %2328 = vmatprep.subr.mxu0 0.0
    %v2329 = vand.u32 %v157, 4294901760
    %2330 = vmatpush1.xpose.msra.mxu0 %v2329
    %2331 = vmatprep.subr.mxu0 0.0
    %v2332 = vand.u32 %v158, 4294901760
    %2333 = vmatpush1.xpose.msra.mxu0 %v2332
    %2334 = vmatprep.subr.mxu0 0.0
    %v2335 = vand.u32 %v159, 4294901760
    %2336 = vmatpush1.xpose.msra.mxu0 %v2335
    %2337 = vmatprep.subr.mxu0 0.0
    %v2338 = vand.u32 %v160, 4294901760
    %2339 = vmatpush1.xpose.msra.mxu0 %v2338
    %2340 = vmatprep.subr.mxu0 0.0
    %v2341 = vand.u32 %v161, 4294901760
    %2342 = vmatpush1.xpose.msra.mxu0 %v2341
    %2343 = vmatprep.subr.mxu0 0.0
    %v2344 = vand.u32 %v162, 4294901760
    %2345 = vmatpush1.xpose.msra.mxu0 %v2344
    %2346 = vmatprep.subr.mxu0 0.0
    %v2347 = vand.u32 %v163, 4294901760
    %2348 = vmatpush1.xpose.msra.mxu0 %v2347
    %2349 = vmatprep.subr.mxu0 0.0
    %v2350 = vand.u32 %v164, 4294901760
    %2351 = vmatpush1.xpose.msra.mxu0 %v2350
    %2352 = vmatprep.subr.mxu0 0.0
    %v2353 = vand.u32 %v165, 4294901760
    %2354 = vmatpush1.xpose.msra.mxu0 %v2353
    %2355 = vmatprep.subr.mxu0 0.0
    %v2356 = vand.u32 %v166, 4294901760
    %2357 = vmatpush1.xpose.msra.mxu0 %v2356
    %2358 = vmatprep.subr.mxu0 0.0
    %v2359 = vand.u32 %v167, 4294901760
    %2360 = vmatpush1.xpose.msra.mxu0 %v2359
    %2361 = vmatprep.subr.mxu0 0.0
    %v2362 = vand.u32 %v168, 4294901760
    %2363 = vmatpush1.xpose.msra.mxu0 %v2362
    %2364 = vmatprep.subr.mxu0 0.0
    %v2365 = vand.u32 %v169, 4294901760
    %2366 = vmatpush1.xpose.msra.mxu0 %v2365
    %2367 = vmatprep.subr.mxu0 0.0
    %v2368 = vand.u32 %v170, 4294901760
    %2369 = vmatpush1.xpose.msra.mxu0 %v2368
    %2370 = vmatprep.subr.mxu0 0.0
    %v2371 = vand.u32 %v171, 4294901760
    %2372 = vmatpush1.xpose.msra.mxu0 %v2371
    %2373 = vmatprep.subr.mxu0 0.0
    %v2374 = vand.u32 %v172, 4294901760
    %2375 = vmatpush1.xpose.msra.mxu0 %v2374
    %2376 = vmatprep.subr.mxu0 0.0
    %v2377 = vand.u32 %v173, 4294901760
    %2378 = vmatpush1.xpose.msra.mxu0 %v2377
    %2379 = vmatprep.subr.mxu0 0.0
    %v2380 = vand.u32 %v174, 4294901760
    %2381 = vmatpush1.xpose.msra.mxu0 %v2380
    %2382 = vmatprep.subr.mxu0 0.0
    %v2383 = vand.u32 %v175, 4294901760
    %2384 = vmatpush1.xpose.msra.mxu0 %v2383
    %2385 = vmatprep.subr.mxu0 0.0
    %v2386 = vand.u32 %v176, 4294901760
    %2387 = vmatpush1.xpose.msra.mxu0 %v2386
    %2388 = vmatprep.subr.mxu0 0.0
    %v2389 = vand.u32 %v177, 4294901760
    %2390 = vmatpush1.xpose.msra.mxu0 %v2389
    %2391 = vmatprep.subr.mxu0 0.0
    %v2392 = vand.u32 %v178, 4294901760
    %2393 = vmatpush1.xpose.msra.mxu0 %v2392
    %2394 = vmatprep.subr.mxu0 0.0
    %v2395 = vand.u32 %v179, 4294901760
    %2396 = vmatpush1.xpose.msra.mxu0 %v2395
    %2397 = vmatprep.mubr.f32.mxu0 0.0
    %v2398 = vand.u32 %v116, 4294901760
    %2399 = vmatmul.mubr.f32.gmra.mrb[0].mxu0 %v2398
    %v2400 = vpop.f32.mrb[0].mxu0
    %v2401 = vadd.f32 %v2080, %v2400
    %v2402 = vpop.f32.mrb[0].mxu0
    %v2403 = vadd.f32 %v2082, %v2402
    %2404 = vmatprep.mubr.f32.mxu0 0.0
    %v2405 = vand.u32 %v117, 4294901760
    %2406 = vmatmul.mubr.f32.gmra.mrb[0].mxu0 %v2405
    %v2407 = vpop.f32.mrb[0].mxu0
    %v2408 = vadd.f32 %v2087, %v2407
    %v2409 = vpop.f32.mrb[0].mxu0
    %v2410 = vadd.f32 %v2089, %v2409
    %2411 = vmatprep.mubr.f32.mxu0 0.0
    %v2412 = vand.u32 %v118, 4294901760
    %2413 = vmatmul.mubr.f32.gmra.mrb[0].mxu0 %v2412
    %v2414 = vpop.f32.mrb[0].mxu0
    %v2415 = vadd.f32 %v2094, %v2414
    %v2416 = vpop.f32.mrb[0].mxu0
    %v2417 = vadd.f32 %v2096, %v2416
    %2418 = vmatprep.mubr.f32.mxu0 0.0
    %v2419 = vand.u32 %v119, 4294901760
    %2420 = vmatmul.mubr.f32.gmra.mrb[0].mxu0 %v2419
    %v2421 = vpop.f32.mrb[0].mxu0
    %v2422 = vadd.f32 %v2101, %v2421
    %v2423 = vpop.f32.mrb[0].mxu0
    %v2424 = vadd.f32 %v2103, %v2423
    %2425 = vmatprep.mubr.f32.mxu0 0.0
    %v2426 = vand.u32 %v120, 4294901760
    %2427 = vmatmul.mubr.f32.gmra.mrb[0].mxu0 %v2426
    %v2428 = vpop.f32.mrb[0].mxu0
    %v2429 = vadd.f32 %v2108, %v2428
    %v2430 = vpop.f32.mrb[0].mxu0
    %v2431 = vadd.f32 %v2110, %v2430
    %2432 = vmatprep.mubr.f32.mxu0 0.0
    %v2433 = vand.u32 %v121, 4294901760
    %2434 = vmatmul.mubr.f32.gmra.mrb[0].mxu0 %v2433
    %v2435 = vpop.f32.mrb[0].mxu0
    %v2436 = vadd.f32 %v2115, %v2435
    %v2437 = vpop.f32.mrb[0].mxu0
    %v2438 = vadd.f32 %v2117, %v2437
    %2439 = vmatprep.mubr.f32.mxu0 0.0
    %v2440 = vand.u32 %v122, 4294901760
    %2441 = vmatmul.mubr.f32.gmra.mrb[0].mxu0 %v2440
    %v2442 = vpop.f32.mrb[0].mxu0
    %v2443 = vadd.f32 %v2122, %v2442
    %v2444 = vpop.f32.mrb[0].mxu0
    %v2445 = vadd.f32 %v2124, %v2444
    %2446 = vmatprep.mubr.f32.mxu0 0.0
    %v2447 = vand.u32 %v123, 4294901760
    %2448 = vmatmul.mubr.f32.gmra.mrb[0].mxu0 %v2447
    %v2449 = vpop.f32.mrb[0].mxu0
    %v2450 = vadd.f32 %v2129, %v2449
    %v2451 = vpop.f32.mrb[0].mxu0
    %v2452 = vadd.f32 %v2131, %v2451
    %2453 = vmatprep.mubr.f32.mxu0 0.0
    %v2454 = vand.u32 %v124, 4294901760
    %2455 = vmatmul.mubr.f32.gmra.mrb[0].mxu0 %v2454
    %v2456 = vpop.f32.mrb[0].mxu0
    %v2457 = vadd.f32 %v2136, %v2456
    %v2458 = vpop.f32.mrb[0].mxu0
    %v2459 = vadd.f32 %v2138, %v2458
    %2460 = vmatprep.mubr.f32.mxu0 0.0
    %v2461 = vand.u32 %v125, 4294901760
    %2462 = vmatmul.mubr.f32.gmra.mrb[0].mxu0 %v2461
    %v2463 = vpop.f32.mrb[0].mxu0
    %v2464 = vadd.f32 %v2143, %v2463
    %v2465 = vpop.f32.mrb[0].mxu0
    %v2466 = vadd.f32 %v2145, %v2465
    %2467 = vmatprep.mubr.f32.mxu0 0.0
    %v2468 = vand.u32 %v126, 4294901760
    %2469 = vmatmul.mubr.f32.gmra.mrb[0].mxu0 %v2468
    %v2470 = vpop.f32.mrb[0].mxu0
    %v2471 = vadd.f32 %v2150, %v2470
    %v2472 = vpop.f32.mrb[0].mxu0
    %v2473 = vadd.f32 %v2152, %v2472
    %2474 = vmatprep.mubr.f32.mxu0 0.0
    %v2475 = vand.u32 %v127, 4294901760
    %2476 = vmatmul.mubr.f32.gmra.mrb[0].mxu0 %v2475
    %v2477 = vpop.f32.mrb[0].mxu0
    %v2478 = vadd.f32 %v2157, %v2477
    %v2479 = vpop.f32.mrb[0].mxu0
    %v2480 = vadd.f32 %v2159, %v2479
    %2481 = vmatprep.mubr.f32.mxu0 0.0
    %v2482 = vand.u32 %v128, 4294901760
    %2483 = vmatmul.mubr.f32.gmra.mrb[0].mxu0 %v2482
    %v2484 = vpop.f32.mrb[0].mxu0
    %v2485 = vadd.f32 %v2164, %v2484
    %v2486 = vpop.f32.mrb[0].mxu0
    %v2487 = vadd.f32 %v2166, %v2486
    %2488 = vmatprep.mubr.f32.mxu0 0.0
    %v2489 = vand.u32 %v129, 4294901760
    %2490 = vmatmul.mubr.f32.gmra.mrb[0].mxu0 %v2489
    %v2491 = vpop.f32.mrb[0].mxu0
    %v2492 = vadd.f32 %v2171, %v2491
    %v2493 = vpop.f32.mrb[0].mxu0
    %v2494 = vadd.f32 %v2173, %v2493
    %2495 = vmatprep.mubr.f32.mxu0 0.0
    %v2496 = vand.u32 %v130, 4294901760
    %2497 = vmatmul.mubr.f32.gmra.mrb[0].mxu0 %v2496
    %v2498 = vpop.f32.mrb[0].mxu0
    %v2499 = vadd.f32 %v2178, %v2498
    %v2500 = vpop.f32.mrb[0].mxu0
    %v2501 = vadd.f32 %v2180, %v2500
    %2502 = vmatprep.mubr.f32.mxu0 0.0
    %v2503 = vand.u32 %v131, 4294901760
    %2504 = vmatmul.mubr.f32.gmra.mrb[0].mxu0 %v2503
    %v2505 = vpop.f32.mrb[0].mxu0
    %v2506 = vadd.f32 %v2185, %v2505
    %v2507 = vpop.f32.mrb[0].mxu0
    %v2508 = vadd.f32 %v2187, %v2507
    %2509 = vmatprep.mubr.f32.mxu0 0.0
    %v2510 = vand.u32 %v132, 4294901760
    %2511 = vmatmul.mubr.f32.gmra.mrb[0].mxu0 %v2510
    %v2512 = vpop.f32.mrb[0].mxu0
    %v2513 = vadd.f32 %v2192, %v2512
    %v2514 = vpop.f32.mrb[0].mxu0
    %v2515 = vadd.f32 %v2194, %v2514
    %2516 = vmatprep.mubr.f32.mxu0 0.0
    %v2517 = vand.u32 %v133, 4294901760
    %2518 = vmatmul.mubr.f32.gmra.mrb[0].mxu0 %v2517
    %v2519 = vpop.f32.mrb[0].mxu0
    %v2520 = vadd.f32 %v2199, %v2519
    %v2521 = vpop.f32.mrb[0].mxu0
    %v2522 = vadd.f32 %v2201, %v2521
    %2523 = vmatprep.mubr.f32.mxu0 0.0
    %v2524 = vand.u32 %v134, 4294901760
    %2525 = vmatmul.mubr.f32.gmra.mrb[0].mxu0 %v2524
    %v2526 = vpop.f32.mrb[0].mxu0
    %v2527 = vadd.f32 %v2206, %v2526
    %v2528 = vpop.f32.mrb[0].mxu0
    %v2529 = vadd.f32 %v2208, %v2528
    %2530 = vmatprep.mubr.f32.mxu0 0.0
    %v2531 = vand.u32 %v135, 4294901760
    %2532 = vmatmul.mubr.f32.gmra.mrb[0].mxu0 %v2531
    %v2533 = vpop.f32.mrb[0].mxu0
    %v2534 = vadd.f32 %v2213, %v2533
    %v2535 = vpop.f32.mrb[0].mxu0
    %v2536 = vadd.f32 %v2215, %v2535
    %2537 = vmatprep.mubr.f32.mxu0 0.0
    %v2538 = vand.u32 %v136, 4294901760
    %2539 = vmatmul.mubr.f32.gmra.mrb[0].mxu0 %v2538
    %v2540 = vpop.f32.mrb[0].mxu0
    %v2541 = vadd.f32 %v2220, %v2540
    %v2542 = vpop.f32.mrb[0].mxu0
    %v2543 = vadd.f32 %v2222, %v2542
    %2544 = vmatprep.mubr.f32.mxu0 0.0
    %v2545 = vand.u32 %v137, 4294901760
    %2546 = vmatmul.mubr.f32.gmra.mrb[0].mxu0 %v2545
    %v2547 = vpop.f32.mrb[0].mxu0
    %v2548 = vadd.f32 %v2227, %v2547
    %v2549 = vpop.f32.mrb[0].mxu0
    %v2550 = vadd.f32 %v2229, %v2549
    %2551 = vmatprep.mubr.f32.mxu0 0.0
    %v2552 = vand.u32 %v138, 4294901760
    %2553 = vmatmul.mubr.f32.gmra.mrb[0].mxu0 %v2552
    %v2554 = vpop.f32.mrb[0].mxu0
    %v2555 = vadd.f32 %v2234, %v2554
    %v2556 = vpop.f32.mrb[0].mxu0
    %v2557 = vadd.f32 %v2236, %v2556
    %2558 = vmatprep.mubr.f32.mxu0 0.0
    %v2559 = vand.u32 %v139, 4294901760
    %2560 = vmatmul.mubr.f32.gmra.mrb[0].mxu0 %v2559
    %v2561 = vpop.f32.mrb[0].mxu0
    %v2562 = vadd.f32 %v2241, %v2561
    %v2563 = vpop.f32.mrb[0].mxu0
    %v2564 = vadd.f32 %v2243, %v2563
    %2565 = vmatprep.mubr.f32.mxu0 0.0
    %v2566 = vand.u32 %v140, 4294901760
    %2567 = vmatmul.mubr.f32.gmra.mrb[0].mxu0 %v2566
    %v2568 = vpop.f32.mrb[0].mxu0
    %v2569 = vadd.f32 %v2248, %v2568
    %v2570 = vpop.f32.mrb[0].mxu0
    %v2571 = vadd.f32 %v2250, %v2570
    %2572 = vmatprep.mubr.f32.mxu0 0.0
    %v2573 = vand.u32 %v141, 4294901760
    %2574 = vmatmul.mubr.f32.gmra.mrb[0].mxu0 %v2573
    %v2575 = vpop.f32.mrb[0].mxu0
    %v2576 = vadd.f32 %v2255, %v2575
    %v2577 = vpop.f32.mrb[0].mxu0
    %v2578 = vadd.f32 %v2257, %v2577
    %2579 = vmatprep.mubr.f32.mxu0 0.0
    %v2580 = vand.u32 %v142, 4294901760
    %2581 = vmatmul.mubr.f32.gmra.mrb[0].mxu0 %v2580
    %v2582 = vpop.f32.mrb[0].mxu0
    %v2583 = vadd.f32 %v2262, %v2582
    %v2584 = vpop.f32.mrb[0].mxu0
    %v2585 = vadd.f32 %v2264, %v2584
    %2586 = vmatprep.mubr.f32.mxu0 0.0
    %v2587 = vand.u32 %v143, 4294901760
    %2588 = vmatmul.mubr.f32.gmra.mrb[0].mxu0 %v2587
    %v2589 = vpop.f32.mrb[0].mxu0
    %v2590 = vadd.f32 %v2269, %v2589
    %v2591 = vpop.f32.mrb[0].mxu0
    %v2592 = vadd.f32 %v2271, %v2591
    %2593 = vmatprep.mubr.f32.mxu0 0.0
    %v2594 = vand.u32 %v144, 4294901760
    %2595 = vmatmul.mubr.f32.gmra.mrb[0].mxu0 %v2594
    %v2596 = vpop.f32.mrb[0].mxu0
    %v2597 = vadd.f32 %v2276, %v2596
    %v2598 = vpop.f32.mrb[0].mxu0
    %v2599 = vadd.f32 %v2278, %v2598
    %2600 = vmatprep.mubr.f32.mxu0 0.0
    %v2601 = vand.u32 %v145, 4294901760
    %2602 = vmatmul.mubr.f32.gmra.mrb[0].mxu0 %v2601
    %v2603 = vpop.f32.mrb[0].mxu0
    %v2604 = vadd.f32 %v2283, %v2603
    %v2605 = vpop.f32.mrb[0].mxu0
    %v2606 = vadd.f32 %v2285, %v2605
    %2607 = vmatprep.mubr.f32.mxu0 0.0
    %v2608 = vand.u32 %v146, 4294901760
    %2609 = vmatmul.mubr.f32.gmra.mrb[0].mxu0 %v2608
    %v2610 = vpop.f32.mrb[0].mxu0
    %v2611 = vadd.f32 %v2290, %v2610
    %v2612 = vpop.f32.mrb[0].mxu0
    %v2613 = vadd.f32 %v2292, %v2612
    %2614 = vmatprep.mubr.f32.mxu0 0.0
    %v2615 = vand.u32 %v147, 4294901760
    %2616 = vmatmul.mubr.f32.gmra.mrb[0].mxu0 %v2615
    %v2617 = vpop.f32.mrb[0].mxu0
    %v2618 = vadd.f32 %v2297, %v2617
    %v2619 = vpop.f32.mrb[0].mxu0
    %v2620 = vadd.f32 %v2299, %v2619
    %2621 = vdwg.mxu0
    %2623 = vset.pattern.permute.xlu0 0
    %2624 = vperm.xlu0 %2623, %v180
    %v2625 = vpop.permute.xlu0 %2624
    %2628 = vset.pattern.permute.xlu0 0
    %2629 = vperm.xlu0 %2628, %v181
    %v2630 = vpop.permute.xlu0 %2629
    %2633 = vset.pattern.permute.xlu0 0
    %2634 = vperm.xlu0 %2633, %v182
    %v2635 = vpop.permute.xlu0 %2634
    %2638 = vset.pattern.permute.xlu0 0
    %2639 = vperm.xlu0 %2638, %v183
    %v2640 = vpop.permute.xlu0 %2639
    %2643 = vset.pattern.permute.xlu0 0
    %2644 = vperm.xlu0 %2643, %v184
    %v2645 = vpop.permute.xlu0 %2644
    %2648 = vset.pattern.permute.xlu0 0
    %2649 = vperm.xlu0 %2648, %v185
    %v2650 = vpop.permute.xlu0 %2649
    %2653 = vset.pattern.permute.xlu0 0
    %2654 = vperm.xlu0 %2653, %v186
    %v2655 = vpop.permute.xlu0 %2654
    %2658 = vset.pattern.permute.xlu0 0
    %2659 = vperm.xlu0 %2658, %v187
    %v2660 = vpop.permute.xlu0 %2659
    %2663 = vset.pattern.permute.xlu0 0
    %2664 = vperm.xlu0 %2663, %v188
    %v2665 = vpop.permute.xlu0 %2664
    %2668 = vset.pattern.permute.xlu0 0
    %2669 = vperm.xlu0 %2668, %v189
    %v2670 = vpop.permute.xlu0 %2669
    %2673 = vset.pattern.permute.xlu0 0
    %2674 = vperm.xlu0 %2673, %v190
    %v2675 = vpop.permute.xlu0 %2674
    %2678 = vset.pattern.permute.xlu0 0
    %2679 = vperm.xlu0 %2678, %v191
    %v2680 = vpop.permute.xlu0 %2679
    %2683 = vset.pattern.permute.xlu0 0
    %2684 = vperm.xlu0 %2683, %v192
    %v2685 = vpop.permute.xlu0 %2684
    %2688 = vset.pattern.permute.xlu0 0
    %2689 = vperm.xlu0 %2688, %v193
    %v2690 = vpop.permute.xlu0 %2689
    %2693 = vset.pattern.permute.xlu0 0
    %2694 = vperm.xlu0 %2693, %v194
    %v2695 = vpop.permute.xlu0 %2694
    %2698 = vset.pattern.permute.xlu0 0
    %2699 = vperm.xlu0 %2698, %v195
    %v2700 = vpop.permute.xlu0 %2699
    %2703 = vset.pattern.permute.xlu0 0
    %2704 = vperm.xlu0 %2703, %v196
    %v2705 = vpop.permute.xlu0 %2704
    %2708 = vset.pattern.permute.xlu0 0
    %2709 = vperm.xlu0 %2708, %v197
    %v2710 = vpop.permute.xlu0 %2709
    %2713 = vset.pattern.permute.xlu0 0
    %2714 = vperm.xlu0 %2713, %v198
    %v2715 = vpop.permute.xlu0 %2714
    %2718 = vset.pattern.permute.xlu0 0
    %2719 = vperm.xlu0 %2718, %v199
    %v2720 = vpop.permute.xlu0 %2719
    %2723 = vset.pattern.permute.xlu0 0
    %2724 = vperm.xlu0 %2723, %v200
    %v2725 = vpop.permute.xlu0 %2724
    %2728 = vset.pattern.permute.xlu0 0
    %2729 = vperm.xlu0 %2728, %v201
    %v2730 = vpop.permute.xlu0 %2729
    %2733 = vset.pattern.permute.xlu0 0
    %2734 = vperm.xlu0 %2733, %v202
    %v2735 = vpop.permute.xlu0 %2734
    %2738 = vset.pattern.permute.xlu0 0
    %2739 = vperm.xlu0 %2738, %v203
    %v2740 = vpop.permute.xlu0 %2739
    %2743 = vset.pattern.permute.xlu0 0
    %2744 = vperm.xlu0 %2743, %v204
    %v2745 = vpop.permute.xlu0 %2744
    %2748 = vset.pattern.permute.xlu0 0
    %2749 = vperm.xlu0 %2748, %v205
    %v2750 = vpop.permute.xlu0 %2749
    %2753 = vset.pattern.permute.xlu0 0
    %2754 = vperm.xlu0 %2753, %v206
    %v2755 = vpop.permute.xlu0 %2754
    %2758 = vset.pattern.permute.xlu0 0
    %2759 = vperm.xlu0 %2758, %v207
    %v2760 = vpop.permute.xlu0 %2759
    %2763 = vset.pattern.permute.xlu0 0
    %2764 = vperm.xlu0 %2763, %v208
    %v2765 = vpop.permute.xlu0 %2764
    %2768 = vset.pattern.permute.xlu0 0
    %2769 = vperm.xlu0 %2768, %v209
    %v2770 = vpop.permute.xlu0 %2769
    %2773 = vset.pattern.permute.xlu0 0
    %2774 = vperm.xlu0 %2773, %v210
    %v2775 = vpop.permute.xlu0 %2774
    %2778 = vset.pattern.permute.xlu0 0
    %2779 = vperm.xlu0 %2778, %v211
    %v2780 = vpop.permute.xlu0 %2779
    %v2783 = vlaneseq
    %v2784 = vshrl.u32 %v2783, 7
    %v2785 = vsub.s32 0, %v2784
    %v2786 = vrot.slane %v212, %v2785
    %v2787 = vlaneseq
    %v2788 = vshrl.u32 %v2787, 7
    %v2789 = vsub.s32 1, %v2788
    %v2790 = vrot.slane %v212, %v2789
    %v2793 = vadd.f32 %v2625, %v2786
    %v2794 = vadd.f32 %v2625, %v2790
    %v2795 = vadd.f32 %v2630, %v2786
    %v2796 = vadd.f32 %v2630, %v2790
    %v2797 = vadd.f32 %v2635, %v2786
    %v2798 = vadd.f32 %v2635, %v2790
    %v2799 = vadd.f32 %v2640, %v2786
    %v2800 = vadd.f32 %v2640, %v2790
    %v2801 = vadd.f32 %v2645, %v2786
    %v2802 = vadd.f32 %v2645, %v2790
    %v2803 = vadd.f32 %v2650, %v2786
    %v2804 = vadd.f32 %v2650, %v2790
    %v2805 = vadd.f32 %v2655, %v2786
    %v2806 = vadd.f32 %v2655, %v2790
    %v2807 = vadd.f32 %v2660, %v2786
    %v2808 = vadd.f32 %v2660, %v2790
    %v2809 = vadd.f32 %v2665, %v2786
    %v2810 = vadd.f32 %v2665, %v2790
    %v2811 = vadd.f32 %v2670, %v2786
    %v2812 = vadd.f32 %v2670, %v2790
    %v2813 = vadd.f32 %v2675, %v2786
    %v2814 = vadd.f32 %v2675, %v2790
    %v2815 = vadd.f32 %v2680, %v2786
    %v2816 = vadd.f32 %v2680, %v2790
    %v2817 = vadd.f32 %v2685, %v2786
    %v2818 = vadd.f32 %v2685, %v2790
    %v2819 = vadd.f32 %v2690, %v2786
    %v2820 = vadd.f32 %v2690, %v2790
    %v2821 = vadd.f32 %v2695, %v2786
    %v2822 = vadd.f32 %v2695, %v2790
    %v2823 = vadd.f32 %v2700, %v2786
    %v2824 = vadd.f32 %v2700, %v2790
    %v2825 = vadd.f32 %v2705, %v2786
    %v2826 = vadd.f32 %v2705, %v2790
    %v2827 = vadd.f32 %v2710, %v2786
    %v2828 = vadd.f32 %v2710, %v2790
    %v2829 = vadd.f32 %v2715, %v2786
    %v2830 = vadd.f32 %v2715, %v2790
    %v2831 = vadd.f32 %v2720, %v2786
    %v2832 = vadd.f32 %v2720, %v2790
    %v2833 = vadd.f32 %v2725, %v2786
    %v2834 = vadd.f32 %v2725, %v2790
    %v2835 = vadd.f32 %v2730, %v2786
    %v2836 = vadd.f32 %v2730, %v2790
    %v2837 = vadd.f32 %v2735, %v2786
    %v2838 = vadd.f32 %v2735, %v2790
    %v2839 = vadd.f32 %v2740, %v2786
    %v2840 = vadd.f32 %v2740, %v2790
    %v2841 = vadd.f32 %v2745, %v2786
    %v2842 = vadd.f32 %v2745, %v2790
    %v2843 = vadd.f32 %v2750, %v2786
    %v2844 = vadd.f32 %v2750, %v2790
    %v2845 = vadd.f32 %v2755, %v2786
    %v2846 = vadd.f32 %v2755, %v2790
    %v2847 = vadd.f32 %v2760, %v2786
    %v2848 = vadd.f32 %v2760, %v2790
    %v2849 = vadd.f32 %v2765, %v2786
    %v2850 = vadd.f32 %v2765, %v2790
    %v2851 = vadd.f32 %v2770, %v2786
    %v2852 = vadd.f32 %v2770, %v2790
    %v2853 = vadd.f32 %v2775, %v2786
    %v2854 = vadd.f32 %v2775, %v2790
    %v2855 = vadd.f32 %v2780, %v2786
    %v2856 = vadd.f32 %v2780, %v2790
    %v2857 = vmul.f32 %v2401, 2.0
    %v2858 = vmul.f32 %v2403, 2.0
    %v2859 = vmul.f32 %v2408, 2.0
    %v2860 = vmul.f32 %v2410, 2.0
    %v2861 = vmul.f32 %v2415, 2.0
    %v2862 = vmul.f32 %v2417, 2.0
    %v2863 = vmul.f32 %v2422, 2.0
    %v2864 = vmul.f32 %v2424, 2.0
    %v2865 = vmul.f32 %v2429, 2.0
    %v2866 = vmul.f32 %v2431, 2.0
    %v2867 = vmul.f32 %v2436, 2.0
    %v2868 = vmul.f32 %v2438, 2.0
    %v2869 = vmul.f32 %v2443, 2.0
    %v2870 = vmul.f32 %v2445, 2.0
    %v2871 = vmul.f32 %v2450, 2.0
    %v2872 = vmul.f32 %v2452, 2.0
    %v2873 = vmul.f32 %v2457, 2.0
    %v2874 = vmul.f32 %v2459, 2.0
    %v2875 = vmul.f32 %v2464, 2.0
    %v2876 = vmul.f32 %v2466, 2.0
    %v2877 = vmul.f32 %v2471, 2.0
    %v2878 = vmul.f32 %v2473, 2.0
    %v2879 = vmul.f32 %v2478, 2.0
    %v2880 = vmul.f32 %v2480, 2.0
    %v2881 = vmul.f32 %v2485, 2.0
    %v2882 = vmul.f32 %v2487, 2.0
    %v2883 = vmul.f32 %v2492, 2.0
    %v2884 = vmul.f32 %v2494, 2.0
    %v2885 = vmul.f32 %v2499, 2.0
    %v2886 = vmul.f32 %v2501, 2.0
    %v2887 = vmul.f32 %v2506, 2.0
    %v2888 = vmul.f32 %v2508, 2.0
    %v2889 = vmul.f32 %v2513, 2.0
    %v2890 = vmul.f32 %v2515, 2.0
    %v2891 = vmul.f32 %v2520, 2.0
    %v2892 = vmul.f32 %v2522, 2.0
    %v2893 = vmul.f32 %v2527, 2.0
    %v2894 = vmul.f32 %v2529, 2.0
    %v2895 = vmul.f32 %v2534, 2.0
    %v2896 = vmul.f32 %v2536, 2.0
    %v2897 = vmul.f32 %v2541, 2.0
    %v2898 = vmul.f32 %v2543, 2.0
    %v2899 = vmul.f32 %v2548, 2.0
    %v2900 = vmul.f32 %v2550, 2.0
    %v2901 = vmul.f32 %v2555, 2.0
    %v2902 = vmul.f32 %v2557, 2.0
    %v2903 = vmul.f32 %v2562, 2.0
    %v2904 = vmul.f32 %v2564, 2.0
    %v2905 = vmul.f32 %v2569, 2.0
    %v2906 = vmul.f32 %v2571, 2.0
    %v2907 = vmul.f32 %v2576, 2.0
    %v2908 = vmul.f32 %v2578, 2.0
    %v2909 = vmul.f32 %v2583, 2.0
    %v2910 = vmul.f32 %v2585, 2.0
    %v2911 = vmul.f32 %v2590, 2.0
    %v2912 = vmul.f32 %v2592, 2.0
    %v2913 = vmul.f32 %v2597, 2.0
    %v2914 = vmul.f32 %v2599, 2.0
    %v2915 = vmul.f32 %v2604, 2.0
    %v2916 = vmul.f32 %v2606, 2.0
    %v2917 = vmul.f32 %v2611, 2.0
    %v2918 = vmul.f32 %v2613, 2.0
    %v2919 = vmul.f32 %v2618, 2.0
    %v2920 = vmul.f32 %v2620, 2.0
    %v2921 = vsub.f32 %v2793, %v2857
    %v2922 = vsub.f32 %v2794, %v2858
    %v2923 = vsub.f32 %v2795, %v2859
    %v2924 = vsub.f32 %v2796, %v2860
    %v2925 = vsub.f32 %v2797, %v2861
    %v2926 = vsub.f32 %v2798, %v2862
    %v2927 = vsub.f32 %v2799, %v2863
    %v2928 = vsub.f32 %v2800, %v2864
    %v2929 = vsub.f32 %v2801, %v2865
    %v2930 = vsub.f32 %v2802, %v2866
    %v2931 = vsub.f32 %v2803, %v2867
    %v2932 = vsub.f32 %v2804, %v2868
    %v2933 = vsub.f32 %v2805, %v2869
    %v2934 = vsub.f32 %v2806, %v2870
    %v2935 = vsub.f32 %v2807, %v2871
    %v2936 = vsub.f32 %v2808, %v2872
    %v2937 = vsub.f32 %v2809, %v2873
    %v2938 = vsub.f32 %v2810, %v2874
    %v2939 = vsub.f32 %v2811, %v2875
    %v2940 = vsub.f32 %v2812, %v2876
    %v2941 = vsub.f32 %v2813, %v2877
    %v2942 = vsub.f32 %v2814, %v2878
    %v2943 = vsub.f32 %v2815, %v2879
    %v2944 = vsub.f32 %v2816, %v2880
    %v2945 = vsub.f32 %v2817, %v2881
    %v2946 = vsub.f32 %v2818, %v2882
    %v2947 = vsub.f32 %v2819, %v2883
    %v2948 = vsub.f32 %v2820, %v2884
    %v2949 = vsub.f32 %v2821, %v2885
    %v2950 = vsub.f32 %v2822, %v2886
    %v2951 = vsub.f32 %v2823, %v2887
    %v2952 = vsub.f32 %v2824, %v2888
    %v2953 = vsub.f32 %v2825, %v2889
    %v2954 = vsub.f32 %v2826, %v2890
    %v2955 = vsub.f32 %v2827, %v2891
    %v2956 = vsub.f32 %v2828, %v2892
    %v2957 = vsub.f32 %v2829, %v2893
    %v2958 = vsub.f32 %v2830, %v2894
    %v2959 = vsub.f32 %v2831, %v2895
    %v2960 = vsub.f32 %v2832, %v2896
    %v2961 = vsub.f32 %v2833, %v2897
    %v2962 = vsub.f32 %v2834, %v2898
    %v2963 = vsub.f32 %v2835, %v2899
    %v2964 = vsub.f32 %v2836, %v2900
    %v2965 = vsub.f32 %v2837, %v2901
    %v2966 = vsub.f32 %v2838, %v2902
    %v2967 = vsub.f32 %v2839, %v2903
    %v2968 = vsub.f32 %v2840, %v2904
    %v2969 = vsub.f32 %v2841, %v2905
    %v2970 = vsub.f32 %v2842, %v2906
    %v2971 = vsub.f32 %v2843, %v2907
    %v2972 = vsub.f32 %v2844, %v2908
    %v2973 = vsub.f32 %v2845, %v2909
    %v2974 = vsub.f32 %v2846, %v2910
    %v2975 = vsub.f32 %v2847, %v2911
    %v2976 = vsub.f32 %v2848, %v2912
    %v2977 = vsub.f32 %v2849, %v2913
    %v2978 = vsub.f32 %v2850, %v2914
    %v2979 = vsub.f32 %v2851, %v2915
    %v2980 = vsub.f32 %v2852, %v2916
    %v2981 = vsub.f32 %v2853, %v2917
    %v2982 = vsub.f32 %v2854, %v2918
    %v2983 = vsub.f32 %v2855, %v2919
    %v2984 = vsub.f32 %v2856, %v2920
    %v2985 = vmax.f32 %v2921, 0.0
    %v2986 = vmax.f32 %v2922, 0.0
    %v2987 = vmax.f32 %v2923, 0.0
    %v2988 = vmax.f32 %v2924, 0.0
    %v2989 = vmax.f32 %v2925, 0.0
    %v2990 = vmax.f32 %v2926, 0.0
    %v2991 = vmax.f32 %v2927, 0.0
    %v2992 = vmax.f32 %v2928, 0.0
    %v2993 = vmax.f32 %v2929, 0.0
    %v2994 = vmax.f32 %v2930, 0.0
    %v2995 = vmax.f32 %v2931, 0.0
    %v2996 = vmax.f32 %v2932, 0.0
    %v2997 = vmax.f32 %v2933, 0.0
    %v2998 = vmax.f32 %v2934, 0.0
    %v2999 = vmax.f32 %v2935, 0.0
    %v3000 = vmax.f32 %v2936, 0.0
    %v3001 = vmax.f32 %v2937, 0.0
    %v3002 = vmax.f32 %v2938, 0.0
    %v3003 = vmax.f32 %v2939, 0.0
    %v3004 = vmax.f32 %v2940, 0.0
    %v3005 = vmax.f32 %v2941, 0.0
    %v3006 = vmax.f32 %v2942, 0.0
    %v3007 = vmax.f32 %v2943, 0.0
    %v3008 = vmax.f32 %v2944, 0.0
    %v3009 = vmax.f32 %v2945, 0.0
    %v3010 = vmax.f32 %v2946, 0.0
    %v3011 = vmax.f32 %v2947, 0.0
    %v3012 = vmax.f32 %v2948, 0.0
    %v3013 = vmax.f32 %v2949, 0.0
    %v3014 = vmax.f32 %v2950, 0.0
    %v3015 = vmax.f32 %v2951, 0.0
    %v3016 = vmax.f32 %v2952, 0.0
    %v3017 = vmax.f32 %v2953, 0.0
    %v3018 = vmax.f32 %v2954, 0.0
    %v3019 = vmax.f32 %v2955, 0.0
    %v3020 = vmax.f32 %v2956, 0.0
    %v3021 = vmax.f32 %v2957, 0.0
    %v3022 = vmax.f32 %v2958, 0.0
    %v3023 = vmax.f32 %v2959, 0.0
    %v3024 = vmax.f32 %v2960, 0.0
    %v3025 = vmax.f32 %v2961, 0.0
    %v3026 = vmax.f32 %v2962, 0.0
    %v3027 = vmax.f32 %v2963, 0.0
    %v3028 = vmax.f32 %v2964, 0.0
    %v3029 = vmax.f32 %v2965, 0.0
    %v3030 = vmax.f32 %v2966, 0.0
    %v3031 = vmax.f32 %v2967, 0.0
    %v3032 = vmax.f32 %v2968, 0.0
    %v3033 = vmax.f32 %v2969, 0.0
    %v3034 = vmax.f32 %v2970, 0.0
    %v3035 = vmax.f32 %v2971, 0.0
    %v3036 = vmax.f32 %v2972, 0.0
    %v3037 = vmax.f32 %v2973, 0.0
    %v3038 = vmax.f32 %v2974, 0.0
    %v3039 = vmax.f32 %v2975, 0.0
    %v3040 = vmax.f32 %v2976, 0.0
    %v3041 = vmax.f32 %v2977, 0.0
    %v3042 = vmax.f32 %v2978, 0.0
    %v3043 = vmax.f32 %v2979, 0.0
    %v3044 = vmax.f32 %v2980, 0.0
    %v3045 = vmax.f32 %v2981, 0.0
    %v3046 = vmax.f32 %v2982, 0.0
    %v3047 = vmax.f32 %v2983, 0.0
    %v3048 = vmax.f32 %v2984, 0.0
    %v3049 = vrsqrt.pop %v2985
    %v3050 = vmul.f32 %v2985, %v3049
    %vm3051 = vcmp.eq.f32.partialorder %v2985, inf
    %v3052 = vsel %vm3051, %v2985, %v3050
    %vm3053 = vcmp.eq.f32.partialorder %v2985, 0.0
    %v3054 = vand.u32 %v2985, 2147483648
    %v3055 = vsel %vm3053, %v3054, %v3052
    %v3056 = vrsqrt.pop %v2986
    %v3057 = vmul.f32 %v2986, %v3056
    %vm3058 = vcmp.eq.f32.partialorder %v2986, inf
    %v3059 = vsel %vm3058, %v2986, %v3057
    %vm3060 = vcmp.eq.f32.partialorder %v2986, 0.0
    %v3061 = vand.u32 %v2986, 2147483648
    %v3062 = vsel %vm3060, %v3061, %v3059
    %v3063 = vrsqrt.pop %v2987
    %v3064 = vmul.f32 %v2987, %v3063
    %vm3065 = vcmp.eq.f32.partialorder %v2987, inf
    %v3066 = vsel %vm3065, %v2987, %v3064
    %vm3067 = vcmp.eq.f32.partialorder %v2987, 0.0
    %v3068 = vand.u32 %v2987, 2147483648
    %v3069 = vsel %vm3067, %v3068, %v3066
    %v3070 = vrsqrt.pop %v2988
    %v3071 = vmul.f32 %v2988, %v3070
    %vm3072 = vcmp.eq.f32.partialorder %v2988, inf
    %v3073 = vsel %vm3072, %v2988, %v3071
    %vm3074 = vcmp.eq.f32.partialorder %v2988, 0.0
    %v3075 = vand.u32 %v2988, 2147483648
    %v3076 = vsel %vm3074, %v3075, %v3073
    %v3077 = vrsqrt.pop %v2989
    %v3078 = vmul.f32 %v2989, %v3077
    %vm3079 = vcmp.eq.f32.partialorder %v2989, inf
    %v3080 = vsel %vm3079, %v2989, %v3078
    %vm3081 = vcmp.eq.f32.partialorder %v2989, 0.0
    %v3082 = vand.u32 %v2989, 2147483648
    %v3083 = vsel %vm3081, %v3082, %v3080
    %v3084 = vrsqrt.pop %v2990
    %v3085 = vmul.f32 %v2990, %v3084
    %vm3086 = vcmp.eq.f32.partialorder %v2990, inf
    %v3087 = vsel %vm3086, %v2990, %v3085
    %vm3088 = vcmp.eq.f32.partialorder %v2990, 0.0
    %v3089 = vand.u32 %v2990, 2147483648
    %v3090 = vsel %vm3088, %v3089, %v3087
    %v3091 = vrsqrt.pop %v2991
    %v3092 = vmul.f32 %v2991, %v3091
    %vm3093 = vcmp.eq.f32.partialorder %v2991, inf
    %v3094 = vsel %vm3093, %v2991, %v3092
    %vm3095 = vcmp.eq.f32.partialorder %v2991, 0.0
    %v3096 = vand.u32 %v2991, 2147483648
    %v3097 = vsel %vm3095, %v3096, %v3094
    %v3098 = vrsqrt.pop %v2992
    %v3099 = vmul.f32 %v2992, %v3098
    %vm3100 = vcmp.eq.f32.partialorder %v2992, inf
    %v3101 = vsel %vm3100, %v2992, %v3099
    %vm3102 = vcmp.eq.f32.partialorder %v2992, 0.0
    %v3103 = vand.u32 %v2992, 2147483648
    %v3104 = vsel %vm3102, %v3103, %v3101
    %v3105 = vrsqrt.pop %v2993
    %v3106 = vmul.f32 %v2993, %v3105
    %vm3107 = vcmp.eq.f32.partialorder %v2993, inf
    %v3108 = vsel %vm3107, %v2993, %v3106
    %vm3109 = vcmp.eq.f32.partialorder %v2993, 0.0
    %v3110 = vand.u32 %v2993, 2147483648
    %v3111 = vsel %vm3109, %v3110, %v3108
    %v3112 = vrsqrt.pop %v2994
    %v3113 = vmul.f32 %v2994, %v3112
    %vm3114 = vcmp.eq.f32.partialorder %v2994, inf
    %v3115 = vsel %vm3114, %v2994, %v3113
    %vm3116 = vcmp.eq.f32.partialorder %v2994, 0.0
    %v3117 = vand.u32 %v2994, 2147483648
    %v3118 = vsel %vm3116, %v3117, %v3115
    %v3119 = vrsqrt.pop %v2995
    %v3120 = vmul.f32 %v2995, %v3119
    %vm3121 = vcmp.eq.f32.partialorder %v2995, inf
    %v3122 = vsel %vm3121, %v2995, %v3120
    %vm3123 = vcmp.eq.f32.partialorder %v2995, 0.0
    %v3124 = vand.u32 %v2995, 2147483648
    %v3125 = vsel %vm3123, %v3124, %v3122
    %v3126 = vrsqrt.pop %v2996
    %v3127 = vmul.f32 %v2996, %v3126
    %vm3128 = vcmp.eq.f32.partialorder %v2996, inf
    %v3129 = vsel %vm3128, %v2996, %v3127
    %vm3130 = vcmp.eq.f32.partialorder %v2996, 0.0
    %v3131 = vand.u32 %v2996, 2147483648
    %v3132 = vsel %vm3130, %v3131, %v3129
    %v3133 = vrsqrt.pop %v2997
    %v3134 = vmul.f32 %v2997, %v3133
    %vm3135 = vcmp.eq.f32.partialorder %v2997, inf
    %v3136 = vsel %vm3135, %v2997, %v3134
    %vm3137 = vcmp.eq.f32.partialorder %v2997, 0.0
    %v3138 = vand.u32 %v2997, 2147483648
    %v3139 = vsel %vm3137, %v3138, %v3136
    %v3140 = vrsqrt.pop %v2998
    %v3141 = vmul.f32 %v2998, %v3140
    %vm3142 = vcmp.eq.f32.partialorder %v2998, inf
    %v3143 = vsel %vm3142, %v2998, %v3141
    %vm3144 = vcmp.eq.f32.partialorder %v2998, 0.0
    %v3145 = vand.u32 %v2998, 2147483648
    %v3146 = vsel %vm3144, %v3145, %v3143
    %v3147 = vrsqrt.pop %v2999
    %v3148 = vmul.f32 %v2999, %v3147
    %vm3149 = vcmp.eq.f32.partialorder %v2999, inf
    %v3150 = vsel %vm3149, %v2999, %v3148
    %vm3151 = vcmp.eq.f32.partialorder %v2999, 0.0
    %v3152 = vand.u32 %v2999, 2147483648
    %v3153 = vsel %vm3151, %v3152, %v3150
    %v3154 = vrsqrt.pop %v3000
    %v3155 = vmul.f32 %v3000, %v3154
    %vm3156 = vcmp.eq.f32.partialorder %v3000, inf
    %v3157 = vsel %vm3156, %v3000, %v3155
    %vm3158 = vcmp.eq.f32.partialorder %v3000, 0.0
    %v3159 = vand.u32 %v3000, 2147483648
    %v3160 = vsel %vm3158, %v3159, %v3157
    %v3161 = vrsqrt.pop %v3001
    %v3162 = vmul.f32 %v3001, %v3161
    %vm3163 = vcmp.eq.f32.partialorder %v3001, inf
    %v3164 = vsel %vm3163, %v3001, %v3162
    %vm3165 = vcmp.eq.f32.partialorder %v3001, 0.0
    %v3166 = vand.u32 %v3001, 2147483648
    %v3167 = vsel %vm3165, %v3166, %v3164
    %v3168 = vrsqrt.pop %v3002
    %v3169 = vmul.f32 %v3002, %v3168
    %vm3170 = vcmp.eq.f32.partialorder %v3002, inf
    %v3171 = vsel %vm3170, %v3002, %v3169
    %vm3172 = vcmp.eq.f32.partialorder %v3002, 0.0
    %v3173 = vand.u32 %v3002, 2147483648
    %v3174 = vsel %vm3172, %v3173, %v3171
    %v3175 = vrsqrt.pop %v3003
    %v3176 = vmul.f32 %v3003, %v3175
    %vm3177 = vcmp.eq.f32.partialorder %v3003, inf
    %v3178 = vsel %vm3177, %v3003, %v3176
    %vm3179 = vcmp.eq.f32.partialorder %v3003, 0.0
    %v3180 = vand.u32 %v3003, 2147483648
    %v3181 = vsel %vm3179, %v3180, %v3178
    %v3182 = vrsqrt.pop %v3004
    %v3183 = vmul.f32 %v3004, %v3182
    %vm3184 = vcmp.eq.f32.partialorder %v3004, inf
    %v3185 = vsel %vm3184, %v3004, %v3183
    %vm3186 = vcmp.eq.f32.partialorder %v3004, 0.0
    %v3187 = vand.u32 %v3004, 2147483648
    %v3188 = vsel %vm3186, %v3187, %v3185
    %v3189 = vrsqrt.pop %v3005
    %v3190 = vmul.f32 %v3005, %v3189
    %vm3191 = vcmp.eq.f32.partialorder %v3005, inf
    %v3192 = vsel %vm3191, %v3005, %v3190
    %vm3193 = vcmp.eq.f32.partialorder %v3005, 0.0
    %v3194 = vand.u32 %v3005, 2147483648
    %v3195 = vsel %vm3193, %v3194, %v3192
    %v3196 = vrsqrt.pop %v3006
    %v3197 = vmul.f32 %v3006, %v3196
    %vm3198 = vcmp.eq.f32.partialorder %v3006, inf
    %v3199 = vsel %vm3198, %v3006, %v3197
    %vm3200 = vcmp.eq.f32.partialorder %v3006, 0.0
    %v3201 = vand.u32 %v3006, 2147483648
    %v3202 = vsel %vm3200, %v3201, %v3199
    %v3203 = vrsqrt.pop %v3007
    %v3204 = vmul.f32 %v3007, %v3203
    %vm3205 = vcmp.eq.f32.partialorder %v3007, inf
    %v3206 = vsel %vm3205, %v3007, %v3204
    %vm3207 = vcmp.eq.f32.partialorder %v3007, 0.0
    %v3208 = vand.u32 %v3007, 2147483648
    %v3209 = vsel %vm3207, %v3208, %v3206
    %v3210 = vrsqrt.pop %v3008
    %v3211 = vmul.f32 %v3008, %v3210
    %vm3212 = vcmp.eq.f32.partialorder %v3008, inf
    %v3213 = vsel %vm3212, %v3008, %v3211
    %vm3214 = vcmp.eq.f32.partialorder %v3008, 0.0
    %v3215 = vand.u32 %v3008, 2147483648
    %v3216 = vsel %vm3214, %v3215, %v3213
    %v3217 = vrsqrt.pop %v3009
    %v3218 = vmul.f32 %v3009, %v3217
    %vm3219 = vcmp.eq.f32.partialorder %v3009, inf
    %v3220 = vsel %vm3219, %v3009, %v3218
    %vm3221 = vcmp.eq.f32.partialorder %v3009, 0.0
    %v3222 = vand.u32 %v3009, 2147483648
    %v3223 = vsel %vm3221, %v3222, %v3220
    %v3224 = vrsqrt.pop %v3010
    %v3225 = vmul.f32 %v3010, %v3224
    %vm3226 = vcmp.eq.f32.partialorder %v3010, inf
    %v3227 = vsel %vm3226, %v3010, %v3225
    %vm3228 = vcmp.eq.f32.partialorder %v3010, 0.0
    %v3229 = vand.u32 %v3010, 2147483648
    %v3230 = vsel %vm3228, %v3229, %v3227
    %v3231 = vrsqrt.pop %v3011
    %v3232 = vmul.f32 %v3011, %v3231
    %vm3233 = vcmp.eq.f32.partialorder %v3011, inf
    %v3234 = vsel %vm3233, %v3011, %v3232
    %vm3235 = vcmp.eq.f32.partialorder %v3011, 0.0
    %v3236 = vand.u32 %v3011, 2147483648
    %v3237 = vsel %vm3235, %v3236, %v3234
    %v3238 = vrsqrt.pop %v3012
    %v3239 = vmul.f32 %v3012, %v3238
    %vm3240 = vcmp.eq.f32.partialorder %v3012, inf
    %v3241 = vsel %vm3240, %v3012, %v3239
    %vm3242 = vcmp.eq.f32.partialorder %v3012, 0.0
    %v3243 = vand.u32 %v3012, 2147483648
    %v3244 = vsel %vm3242, %v3243, %v3241
    %v3245 = vrsqrt.pop %v3013
    %v3246 = vmul.f32 %v3013, %v3245
    %vm3247 = vcmp.eq.f32.partialorder %v3013, inf
    %v3248 = vsel %vm3247, %v3013, %v3246
    %vm3249 = vcmp.eq.f32.partialorder %v3013, 0.0
    %v3250 = vand.u32 %v3013, 2147483648
    %v3251 = vsel %vm3249, %v3250, %v3248
    %v3252 = vrsqrt.pop %v3014
    %v3253 = vmul.f32 %v3014, %v3252
    %vm3254 = vcmp.eq.f32.partialorder %v3014, inf
    %v3255 = vsel %vm3254, %v3014, %v3253
    %vm3256 = vcmp.eq.f32.partialorder %v3014, 0.0
    %v3257 = vand.u32 %v3014, 2147483648
    %v3258 = vsel %vm3256, %v3257, %v3255
    %v3259 = vrsqrt.pop %v3015
    %v3260 = vmul.f32 %v3015, %v3259
    %vm3261 = vcmp.eq.f32.partialorder %v3015, inf
    %v3262 = vsel %vm3261, %v3015, %v3260
    %vm3263 = vcmp.eq.f32.partialorder %v3015, 0.0
    %v3264 = vand.u32 %v3015, 2147483648
    %v3265 = vsel %vm3263, %v3264, %v3262
    %v3266 = vrsqrt.pop %v3016
    %v3267 = vmul.f32 %v3016, %v3266
    %vm3268 = vcmp.eq.f32.partialorder %v3016, inf
    %v3269 = vsel %vm3268, %v3016, %v3267
    %vm3270 = vcmp.eq.f32.partialorder %v3016, 0.0
    %v3271 = vand.u32 %v3016, 2147483648
    %v3272 = vsel %vm3270, %v3271, %v3269
    %v3273 = vrsqrt.pop %v3017
    %v3274 = vmul.f32 %v3017, %v3273
    %vm3275 = vcmp.eq.f32.partialorder %v3017, inf
    %v3276 = vsel %vm3275, %v3017, %v3274
    %vm3277 = vcmp.eq.f32.partialorder %v3017, 0.0
    %v3278 = vand.u32 %v3017, 2147483648
    %v3279 = vsel %vm3277, %v3278, %v3276
    %v3280 = vrsqrt.pop %v3018
    %v3281 = vmul.f32 %v3018, %v3280
    %vm3282 = vcmp.eq.f32.partialorder %v3018, inf
    %v3283 = vsel %vm3282, %v3018, %v3281
    %vm3284 = vcmp.eq.f32.partialorder %v3018, 0.0
    %v3285 = vand.u32 %v3018, 2147483648
    %v3286 = vsel %vm3284, %v3285, %v3283
    %v3287 = vrsqrt.pop %v3019
    %v3288 = vmul.f32 %v3019, %v3287
    %vm3289 = vcmp.eq.f32.partialorder %v3019, inf
    %v3290 = vsel %vm3289, %v3019, %v3288
    %vm3291 = vcmp.eq.f32.partialorder %v3019, 0.0
    %v3292 = vand.u32 %v3019, 2147483648
    %v3293 = vsel %vm3291, %v3292, %v3290
    %v3294 = vrsqrt.pop %v3020
    %v3295 = vmul.f32 %v3020, %v3294
    %vm3296 = vcmp.eq.f32.partialorder %v3020, inf
    %v3297 = vsel %vm3296, %v3020, %v3295
    %vm3298 = vcmp.eq.f32.partialorder %v3020, 0.0
    %v3299 = vand.u32 %v3020, 2147483648
    %v3300 = vsel %vm3298, %v3299, %v3297
    %v3301 = vrsqrt.pop %v3021
    %v3302 = vmul.f32 %v3021, %v3301
    %vm3303 = vcmp.eq.f32.partialorder %v3021, inf
    %v3304 = vsel %vm3303, %v3021, %v3302
    %vm3305 = vcmp.eq.f32.partialorder %v3021, 0.0
    %v3306 = vand.u32 %v3021, 2147483648
    %v3307 = vsel %vm3305, %v3306, %v3304
    %v3308 = vrsqrt.pop %v3022
    %v3309 = vmul.f32 %v3022, %v3308
    %vm3310 = vcmp.eq.f32.partialorder %v3022, inf
    %v3311 = vsel %vm3310, %v3022, %v3309
    %vm3312 = vcmp.eq.f32.partialorder %v3022, 0.0
    %v3313 = vand.u32 %v3022, 2147483648
    %v3314 = vsel %vm3312, %v3313, %v3311
    %v3315 = vrsqrt.pop %v3023
    %v3316 = vmul.f32 %v3023, %v3315
    %vm3317 = vcmp.eq.f32.partialorder %v3023, inf
    %v3318 = vsel %vm3317, %v3023, %v3316
    %vm3319 = vcmp.eq.f32.partialorder %v3023, 0.0
    %v3320 = vand.u32 %v3023, 2147483648
    %v3321 = vsel %vm3319, %v3320, %v3318
    %v3322 = vrsqrt.pop %v3024
    %v3323 = vmul.f32 %v3024, %v3322
    %vm3324 = vcmp.eq.f32.partialorder %v3024, inf
    %v3325 = vsel %vm3324, %v3024, %v3323
    %vm3326 = vcmp.eq.f32.partialorder %v3024, 0.0
    %v3327 = vand.u32 %v3024, 2147483648
    %v3328 = vsel %vm3326, %v3327, %v3325
    %v3329 = vrsqrt.pop %v3025
    %v3330 = vmul.f32 %v3025, %v3329
    %vm3331 = vcmp.eq.f32.partialorder %v3025, inf
    %v3332 = vsel %vm3331, %v3025, %v3330
    %vm3333 = vcmp.eq.f32.partialorder %v3025, 0.0
    %v3334 = vand.u32 %v3025, 2147483648
    %v3335 = vsel %vm3333, %v3334, %v3332
    %v3336 = vrsqrt.pop %v3026
    %v3337 = vmul.f32 %v3026, %v3336
    %vm3338 = vcmp.eq.f32.partialorder %v3026, inf
    %v3339 = vsel %vm3338, %v3026, %v3337
    %vm3340 = vcmp.eq.f32.partialorder %v3026, 0.0
    %v3341 = vand.u32 %v3026, 2147483648
    %v3342 = vsel %vm3340, %v3341, %v3339
    %v3343 = vrsqrt.pop %v3027
    %v3344 = vmul.f32 %v3027, %v3343
    %vm3345 = vcmp.eq.f32.partialorder %v3027, inf
    %v3346 = vsel %vm3345, %v3027, %v3344
    %vm3347 = vcmp.eq.f32.partialorder %v3027, 0.0
    %v3348 = vand.u32 %v3027, 2147483648
    %v3349 = vsel %vm3347, %v3348, %v3346
    %v3350 = vrsqrt.pop %v3028
    %v3351 = vmul.f32 %v3028, %v3350
    %vm3352 = vcmp.eq.f32.partialorder %v3028, inf
    %v3353 = vsel %vm3352, %v3028, %v3351
    %vm3354 = vcmp.eq.f32.partialorder %v3028, 0.0
    %v3355 = vand.u32 %v3028, 2147483648
    %v3356 = vsel %vm3354, %v3355, %v3353
    %v3357 = vrsqrt.pop %v3029
    %v3358 = vmul.f32 %v3029, %v3357
    %vm3359 = vcmp.eq.f32.partialorder %v3029, inf
    %v3360 = vsel %vm3359, %v3029, %v3358
    %vm3361 = vcmp.eq.f32.partialorder %v3029, 0.0
    %v3362 = vand.u32 %v3029, 2147483648
    %v3363 = vsel %vm3361, %v3362, %v3360
    %v3364 = vrsqrt.pop %v3030
    %v3365 = vmul.f32 %v3030, %v3364
    %vm3366 = vcmp.eq.f32.partialorder %v3030, inf
    %v3367 = vsel %vm3366, %v3030, %v3365
    %vm3368 = vcmp.eq.f32.partialorder %v3030, 0.0
    %v3369 = vand.u32 %v3030, 2147483648
    %v3370 = vsel %vm3368, %v3369, %v3367
    %v3371 = vrsqrt.pop %v3031
    %v3372 = vmul.f32 %v3031, %v3371
    %vm3373 = vcmp.eq.f32.partialorder %v3031, inf
    %v3374 = vsel %vm3373, %v3031, %v3372
    %vm3375 = vcmp.eq.f32.partialorder %v3031, 0.0
    %v3376 = vand.u32 %v3031, 2147483648
    %v3377 = vsel %vm3375, %v3376, %v3374
    %v3378 = vrsqrt.pop %v3032
    %v3379 = vmul.f32 %v3032, %v3378
    %vm3380 = vcmp.eq.f32.partialorder %v3032, inf
    %v3381 = vsel %vm3380, %v3032, %v3379
    %vm3382 = vcmp.eq.f32.partialorder %v3032, 0.0
    %v3383 = vand.u32 %v3032, 2147483648
    %v3384 = vsel %vm3382, %v3383, %v3381
    %v3385 = vrsqrt.pop %v3033
    %v3386 = vmul.f32 %v3033, %v3385
    %vm3387 = vcmp.eq.f32.partialorder %v3033, inf
    %v3388 = vsel %vm3387, %v3033, %v3386
    %vm3389 = vcmp.eq.f32.partialorder %v3033, 0.0
    %v3390 = vand.u32 %v3033, 2147483648
    %v3391 = vsel %vm3389, %v3390, %v3388
    %v3392 = vrsqrt.pop %v3034
    %v3393 = vmul.f32 %v3034, %v3392
    %vm3394 = vcmp.eq.f32.partialorder %v3034, inf
    %v3395 = vsel %vm3394, %v3034, %v3393
    %vm3396 = vcmp.eq.f32.partialorder %v3034, 0.0
    %v3397 = vand.u32 %v3034, 2147483648
    %v3398 = vsel %vm3396, %v3397, %v3395
    %v3399 = vrsqrt.pop %v3035
    %v3400 = vmul.f32 %v3035, %v3399
    %vm3401 = vcmp.eq.f32.partialorder %v3035, inf
    %v3402 = vsel %vm3401, %v3035, %v3400
    %vm3403 = vcmp.eq.f32.partialorder %v3035, 0.0
    %v3404 = vand.u32 %v3035, 2147483648
    %v3405 = vsel %vm3403, %v3404, %v3402
    %v3406 = vrsqrt.pop %v3036
    %v3407 = vmul.f32 %v3036, %v3406
    %vm3408 = vcmp.eq.f32.partialorder %v3036, inf
    %v3409 = vsel %vm3408, %v3036, %v3407
    %vm3410 = vcmp.eq.f32.partialorder %v3036, 0.0
    %v3411 = vand.u32 %v3036, 2147483648
    %v3412 = vsel %vm3410, %v3411, %v3409
    %v3413 = vrsqrt.pop %v3037
    %v3414 = vmul.f32 %v3037, %v3413
    %vm3415 = vcmp.eq.f32.partialorder %v3037, inf
    %v3416 = vsel %vm3415, %v3037, %v3414
    %vm3417 = vcmp.eq.f32.partialorder %v3037, 0.0
    %v3418 = vand.u32 %v3037, 2147483648
    %v3419 = vsel %vm3417, %v3418, %v3416
    %v3420 = vrsqrt.pop %v3038
    %v3421 = vmul.f32 %v3038, %v3420
    %vm3422 = vcmp.eq.f32.partialorder %v3038, inf
    %v3423 = vsel %vm3422, %v3038, %v3421
    %vm3424 = vcmp.eq.f32.partialorder %v3038, 0.0
    %v3425 = vand.u32 %v3038, 2147483648
    %v3426 = vsel %vm3424, %v3425, %v3423
    %v3427 = vrsqrt.pop %v3039
    %v3428 = vmul.f32 %v3039, %v3427
    %vm3429 = vcmp.eq.f32.partialorder %v3039, inf
    %v3430 = vsel %vm3429, %v3039, %v3428
    %vm3431 = vcmp.eq.f32.partialorder %v3039, 0.0
    %v3432 = vand.u32 %v3039, 2147483648
    %v3433 = vsel %vm3431, %v3432, %v3430
    %v3434 = vrsqrt.pop %v3040
    %v3435 = vmul.f32 %v3040, %v3434
    %vm3436 = vcmp.eq.f32.partialorder %v3040, inf
    %v3437 = vsel %vm3436, %v3040, %v3435
    %vm3438 = vcmp.eq.f32.partialorder %v3040, 0.0
    %v3439 = vand.u32 %v3040, 2147483648
    %v3440 = vsel %vm3438, %v3439, %v3437
    %v3441 = vrsqrt.pop %v3041
    %v3442 = vmul.f32 %v3041, %v3441
    %vm3443 = vcmp.eq.f32.partialorder %v3041, inf
    %v3444 = vsel %vm3443, %v3041, %v3442
    %vm3445 = vcmp.eq.f32.partialorder %v3041, 0.0
    %v3446 = vand.u32 %v3041, 2147483648
    %v3447 = vsel %vm3445, %v3446, %v3444
    %v3448 = vrsqrt.pop %v3042
    %v3449 = vmul.f32 %v3042, %v3448
    %vm3450 = vcmp.eq.f32.partialorder %v3042, inf
    %v3451 = vsel %vm3450, %v3042, %v3449
    %vm3452 = vcmp.eq.f32.partialorder %v3042, 0.0
    %v3453 = vand.u32 %v3042, 2147483648
    %v3454 = vsel %vm3452, %v3453, %v3451
    %v3455 = vrsqrt.pop %v3043
    %v3456 = vmul.f32 %v3043, %v3455
    %vm3457 = vcmp.eq.f32.partialorder %v3043, inf
    %v3458 = vsel %vm3457, %v3043, %v3456
    %vm3459 = vcmp.eq.f32.partialorder %v3043, 0.0
    %v3460 = vand.u32 %v3043, 2147483648
    %v3461 = vsel %vm3459, %v3460, %v3458
    %v3462 = vrsqrt.pop %v3044
    %v3463 = vmul.f32 %v3044, %v3462
    %vm3464 = vcmp.eq.f32.partialorder %v3044, inf
    %v3465 = vsel %vm3464, %v3044, %v3463
    %vm3466 = vcmp.eq.f32.partialorder %v3044, 0.0
    %v3467 = vand.u32 %v3044, 2147483648
    %v3468 = vsel %vm3466, %v3467, %v3465
    %v3469 = vrsqrt.pop %v3045
    %v3470 = vmul.f32 %v3045, %v3469
    %vm3471 = vcmp.eq.f32.partialorder %v3045, inf
    %v3472 = vsel %vm3471, %v3045, %v3470
    %vm3473 = vcmp.eq.f32.partialorder %v3045, 0.0
    %v3474 = vand.u32 %v3045, 2147483648
    %v3475 = vsel %vm3473, %v3474, %v3472
    %v3476 = vrsqrt.pop %v3046
    %v3477 = vmul.f32 %v3046, %v3476
    %vm3478 = vcmp.eq.f32.partialorder %v3046, inf
    %v3479 = vsel %vm3478, %v3046, %v3477
    %vm3480 = vcmp.eq.f32.partialorder %v3046, 0.0
    %v3481 = vand.u32 %v3046, 2147483648
    %v3482 = vsel %vm3480, %v3481, %v3479
    %v3483 = vrsqrt.pop %v3047
    %v3484 = vmul.f32 %v3047, %v3483
    %vm3485 = vcmp.eq.f32.partialorder %v3047, inf
    %v3486 = vsel %vm3485, %v3047, %v3484
    %vm3487 = vcmp.eq.f32.partialorder %v3047, 0.0
    %v3488 = vand.u32 %v3047, 2147483648
    %v3489 = vsel %vm3487, %v3488, %v3486
    %v3490 = vrsqrt.pop %v3048
    %v3491 = vmul.f32 %v3048, %v3490
    %vm3492 = vcmp.eq.f32.partialorder %v3048, inf
    %v3493 = vsel %vm3492, %v3048, %v3491
    %vm3494 = vcmp.eq.f32.partialorder %v3048, 0.0
    %v3495 = vand.u32 %v3048, 2147483648
    %v3496 = vsel %vm3494, %v3495, %v3493
    %3497 = vset.pattern.permute.xlu0 0
    %3498 = vperm.xlu0 %3497, %v215
    %v3499 = vpop.permute.xlu0 %3498
    %3500 = vset.pattern.permute.xlu0 0
    %3501 = vperm.xlu0 %3500, %v216
    %v3502 = vpop.permute.xlu0 %3501
    %3503 = vset.pattern.permute.xlu0 0
    %3504 = vperm.xlu0 %3503, %v217
    %v3505 = vpop.permute.xlu0 %3504
    %3506 = vset.pattern.permute.xlu0 0
    %3507 = vperm.xlu0 %3506, %v218
    %v3508 = vpop.permute.xlu0 %3507
    %3509 = vset.pattern.permute.xlu0 0
    %3510 = vperm.xlu0 %3509, %v219
    %v3511 = vpop.permute.xlu0 %3510
    %3512 = vset.pattern.permute.xlu0 0
    %3513 = vperm.xlu0 %3512, %v220
    %v3514 = vpop.permute.xlu0 %3513
    %3515 = vset.pattern.permute.xlu0 0
    %3516 = vperm.xlu0 %3515, %v221
    %v3517 = vpop.permute.xlu0 %3516
    %3518 = vset.pattern.permute.xlu0 0
    %3519 = vperm.xlu0 %3518, %v222
    %v3520 = vpop.permute.xlu0 %3519
    %3521 = vset.pattern.permute.xlu0 0
    %3522 = vperm.xlu0 %3521, %v223
    %v3523 = vpop.permute.xlu0 %3522
    %3524 = vset.pattern.permute.xlu0 0
    %3525 = vperm.xlu0 %3524, %v224
    %v3526 = vpop.permute.xlu0 %3525
    %3527 = vset.pattern.permute.xlu0 0
    %3528 = vperm.xlu0 %3527, %v225
    %v3529 = vpop.permute.xlu0 %3528
    %3530 = vset.pattern.permute.xlu0 0
    %3531 = vperm.xlu0 %3530, %v226
    %v3532 = vpop.permute.xlu0 %3531
    %3533 = vset.pattern.permute.xlu0 0
    %3534 = vperm.xlu0 %3533, %v227
    %v3535 = vpop.permute.xlu0 %3534
    %3536 = vset.pattern.permute.xlu0 0
    %3537 = vperm.xlu0 %3536, %v228
    %v3538 = vpop.permute.xlu0 %3537
    %3539 = vset.pattern.permute.xlu0 0
    %3540 = vperm.xlu0 %3539, %v229
    %v3541 = vpop.permute.xlu0 %3540
    %3542 = vset.pattern.permute.xlu0 0
    %3543 = vperm.xlu0 %3542, %v230
    %v3544 = vpop.permute.xlu0 %3543
    %3545 = vset.pattern.permute.xlu0 0
    %3546 = vperm.xlu0 %3545, %v231
    %v3547 = vpop.permute.xlu0 %3546
    %3548 = vset.pattern.permute.xlu0 0
    %3549 = vperm.xlu0 %3548, %v232
    %v3550 = vpop.permute.xlu0 %3549
    %3551 = vset.pattern.permute.xlu0 0
    %3552 = vperm.xlu0 %3551, %v233
    %v3553 = vpop.permute.xlu0 %3552
    %3554 = vset.pattern.permute.xlu0 0
    %3555 = vperm.xlu0 %3554, %v234
    %v3556 = vpop.permute.xlu0 %3555
    %3557 = vset.pattern.permute.xlu0 0
    %3558 = vperm.xlu0 %3557, %v235
    %v3559 = vpop.permute.xlu0 %3558
    %3560 = vset.pattern.permute.xlu0 0
    %3561 = vperm.xlu0 %3560, %v236
    %v3562 = vpop.permute.xlu0 %3561
    %3563 = vset.pattern.permute.xlu0 0
    %3564 = vperm.xlu0 %3563, %v237
    %v3565 = vpop.permute.xlu0 %3564
    %3566 = vset.pattern.permute.xlu0 0
    %3567 = vperm.xlu0 %3566, %v238
    %v3568 = vpop.permute.xlu0 %3567
    %3569 = vset.pattern.permute.xlu0 0
    %3570 = vperm.xlu0 %3569, %v239
    %v3571 = vpop.permute.xlu0 %3570
    %3572 = vset.pattern.permute.xlu0 0
    %3573 = vperm.xlu0 %3572, %v240
    %v3574 = vpop.permute.xlu0 %3573
    %3575 = vset.pattern.permute.xlu0 0
    %3576 = vperm.xlu0 %3575, %v241
    %v3577 = vpop.permute.xlu0 %3576
    %3578 = vset.pattern.permute.xlu0 0
    %3579 = vperm.xlu0 %3578, %v242
    %v3580 = vpop.permute.xlu0 %3579
    %3581 = vset.pattern.permute.xlu0 0
    %3582 = vperm.xlu0 %3581, %v243
    %v3583 = vpop.permute.xlu0 %3582
    %3584 = vset.pattern.permute.xlu0 0
    %3585 = vperm.xlu0 %3584, %v244
    %v3586 = vpop.permute.xlu0 %3585
    %3587 = vset.pattern.permute.xlu0 0
    %3588 = vperm.xlu0 %3587, %v245
    %v3589 = vpop.permute.xlu0 %3588
    %3590 = vset.pattern.permute.xlu0 0
    %3591 = vperm.xlu0 %3590, %v246
    %v3592 = vpop.permute.xlu0 %3591
    %v3593 = vlaneseq
    %v3594 = vshrl.u32 %v3593, 7
    %v3595 = vsub.s32 0, %v3594
    %v3596 = vrot.slane %v247, %v3595
    %v3597 = vlaneseq
    %v3598 = vshrl.u32 %v3597, 7
    %v3599 = vsub.s32 1, %v3598
    %v3600 = vrot.slane %v247, %v3599
    %vm3601 = vcmp.eq.s32.totalorder %v3499, %v3596
    %vm3602 = vcmp.eq.s32.totalorder %v3499, %v3600
    %vm3603 = vcmp.eq.s32.totalorder %v3502, %v3596
    %vm3604 = vcmp.eq.s32.totalorder %v3502, %v3600
    %vm3605 = vcmp.eq.s32.totalorder %v3505, %v3596
    %vm3606 = vcmp.eq.s32.totalorder %v3505, %v3600
    %vm3607 = vcmp.eq.s32.totalorder %v3508, %v3596
    %vm3608 = vcmp.eq.s32.totalorder %v3508, %v3600
    %vm3609 = vcmp.eq.s32.totalorder %v3511, %v3596
    %vm3610 = vcmp.eq.s32.totalorder %v3511, %v3600
    %vm3611 = vcmp.eq.s32.totalorder %v3514, %v3596
    %vm3612 = vcmp.eq.s32.totalorder %v3514, %v3600
    %vm3613 = vcmp.eq.s32.totalorder %v3517, %v3596
    %vm3614 = vcmp.eq.s32.totalorder %v3517, %v3600
    %vm3615 = vcmp.eq.s32.totalorder %v3520, %v3596
    %vm3616 = vcmp.eq.s32.totalorder %v3520, %v3600
    %vm3617 = vcmp.eq.s32.totalorder %v3523, %v3596
    %vm3618 = vcmp.eq.s32.totalorder %v3523, %v3600
    %vm3619 = vcmp.eq.s32.totalorder %v3526, %v3596
    %vm3620 = vcmp.eq.s32.totalorder %v3526, %v3600
    %vm3621 = vcmp.eq.s32.totalorder %v3529, %v3596
    %vm3622 = vcmp.eq.s32.totalorder %v3529, %v3600
    %vm3623 = vcmp.eq.s32.totalorder %v3532, %v3596
    %vm3624 = vcmp.eq.s32.totalorder %v3532, %v3600
    %vm3625 = vcmp.eq.s32.totalorder %v3535, %v3596
    %vm3626 = vcmp.eq.s32.totalorder %v3535, %v3600
    %vm3627 = vcmp.eq.s32.totalorder %v3538, %v3596
    %vm3628 = vcmp.eq.s32.totalorder %v3538, %v3600
    %vm3629 = vcmp.eq.s32.totalorder %v3541, %v3596
    %vm3630 = vcmp.eq.s32.totalorder %v3541, %v3600
    %vm3631 = vcmp.eq.s32.totalorder %v3544, %v3596
    %vm3632 = vcmp.eq.s32.totalorder %v3544, %v3600
    %vm3633 = vcmp.eq.s32.totalorder %v3547, %v3596
    %vm3634 = vcmp.eq.s32.totalorder %v3547, %v3600
    %vm3635 = vcmp.eq.s32.totalorder %v3550, %v3596
    %vm3636 = vcmp.eq.s32.totalorder %v3550, %v3600
    %vm3637 = vcmp.eq.s32.totalorder %v3553, %v3596
    %vm3638 = vcmp.eq.s32.totalorder %v3553, %v3600
    %vm3639 = vcmp.eq.s32.totalorder %v3556, %v3596
    %vm3640 = vcmp.eq.s32.totalorder %v3556, %v3600
    %vm3641 = vcmp.eq.s32.totalorder %v3559, %v3596
    %vm3642 = vcmp.eq.s32.totalorder %v3559, %v3600
    %vm3643 = vcmp.eq.s32.totalorder %v3562, %v3596
    %vm3644 = vcmp.eq.s32.totalorder %v3562, %v3600
    %vm3645 = vcmp.eq.s32.totalorder %v3565, %v3596
    %vm3646 = vcmp.eq.s32.totalorder %v3565, %v3600
    %vm3647 = vcmp.eq.s32.totalorder %v3568, %v3596
    %vm3648 = vcmp.eq.s32.totalorder %v3568, %v3600
    %vm3649 = vcmp.eq.s32.totalorder %v3571, %v3596
    %vm3650 = vcmp.eq.s32.totalorder %v3571, %v3600
    %vm3651 = vcmp.eq.s32.totalorder %v3574, %v3596
    %vm3652 = vcmp.eq.s32.totalorder %v3574, %v3600
    %vm3653 = vcmp.eq.s32.totalorder %v3577, %v3596
    %vm3654 = vcmp.eq.s32.totalorder %v3577, %v3600
    %vm3655 = vcmp.eq.s32.totalorder %v3580, %v3596
    %vm3656 = vcmp.eq.s32.totalorder %v3580, %v3600
    %vm3657 = vcmp.eq.s32.totalorder %v3583, %v3596
    %vm3658 = vcmp.eq.s32.totalorder %v3583, %v3600
    %vm3659 = vcmp.eq.s32.totalorder %v3586, %v3596
    %vm3660 = vcmp.eq.s32.totalorder %v3586, %v3600
    %vm3661 = vcmp.eq.s32.totalorder %v3589, %v3596
    %vm3662 = vcmp.eq.s32.totalorder %v3589, %v3600
    %vm3663 = vcmp.eq.s32.totalorder %v3592, %v3596
    %vm3664 = vcmp.eq.s32.totalorder %v3592, %v3600
    %v3665 = vsel %vm214, 1, 0
    %v3666 = vlaneseq
    %v3667 = vshrl.u32 %v3666, 7
    %v3668 = vsub.s32 0, %v3667
    %v3669 = vrot.slane %v3665, %v3668
    %v3670 = vlaneseq
    %v3671 = vshrl.u32 %v3670, 7
    %v3672 = vsub.s32 1, %v3671
    %v3673 = vrot.slane %v3665, %v3672
    %vm3674 = vcmp.eq.s32.totalorder %v3669, 1
    %vm3675 = vcmp.eq.s32.totalorder %v3673, 1
    %vm3676 = vmand %vm3601, %vm3674
    %vm3677 = vmand %vm3602, %vm3675
    %vm3678 = vmand %vm3603, %vm3674
    %vm3679 = vmand %vm3604, %vm3675
    %vm3680 = vmand %vm3605, %vm3674
    %vm3681 = vmand %vm3606, %vm3675
    %vm3682 = vmand %vm3607, %vm3674
    %vm3683 = vmand %vm3608, %vm3675
    %vm3684 = vmand %vm3609, %vm3674
    %vm3685 = vmand %vm3610, %vm3675
    %vm3686 = vmand %vm3611, %vm3674
    %vm3687 = vmand %vm3612, %vm3675
    %vm3688 = vmand %vm3613, %vm3674
    %vm3689 = vmand %vm3614, %vm3675
    %vm3690 = vmand %vm3615, %vm3674
    %vm3691 = vmand %vm3616, %vm3675
    %vm3692 = vmand %vm3617, %vm3674
    %vm3693 = vmand %vm3618, %vm3675
    %vm3694 = vmand %vm3619, %vm3674
    %vm3695 = vmand %vm3620, %vm3675
    %vm3696 = vmand %vm3621, %vm3674
    %vm3697 = vmand %vm3622, %vm3675
    %vm3698 = vmand %vm3623, %vm3674
    %vm3699 = vmand %vm3624, %vm3675
    %vm3700 = vmand %vm3625, %vm3674
    %vm3701 = vmand %vm3626, %vm3675
    %vm3702 = vmand %vm3627, %vm3674
    %vm3703 = vmand %vm3628, %vm3675
    %vm3704 = vmand %vm3629, %vm3674
    %vm3705 = vmand %vm3630, %vm3675
    %vm3706 = vmand %vm3631, %vm3674
    %vm3707 = vmand %vm3632, %vm3675
    %vm3708 = vmand %vm3633, %vm3674
    %vm3709 = vmand %vm3634, %vm3675
    %vm3710 = vmand %vm3635, %vm3674
    %vm3711 = vmand %vm3636, %vm3675
    %vm3712 = vmand %vm3637, %vm3674
    %vm3713 = vmand %vm3638, %vm3675
    %vm3714 = vmand %vm3639, %vm3674
    %vm3715 = vmand %vm3640, %vm3675
    %vm3716 = vmand %vm3641, %vm3674
    %vm3717 = vmand %vm3642, %vm3675
    %vm3718 = vmand %vm3643, %vm3674
    %vm3719 = vmand %vm3644, %vm3675
    %vm3720 = vmand %vm3645, %vm3674
    %vm3721 = vmand %vm3646, %vm3675
    %vm3722 = vmand %vm3647, %vm3674
    %vm3723 = vmand %vm3648, %vm3675
    %vm3724 = vmand %vm3649, %vm3674
    %vm3725 = vmand %vm3650, %vm3675
    %vm3726 = vmand %vm3651, %vm3674
    %vm3727 = vmand %vm3652, %vm3675
    %vm3728 = vmand %vm3653, %vm3674
    %vm3729 = vmand %vm3654, %vm3675
    %vm3730 = vmand %vm3655, %vm3674
    %vm3731 = vmand %vm3656, %vm3675
    %vm3732 = vmand %vm3657, %vm3674
    %vm3733 = vmand %vm3658, %vm3675
    %vm3734 = vmand %vm3659, %vm3674
    %vm3735 = vmand %vm3660, %vm3675
    %vm3736 = vmand %vm3661, %vm3674
    %vm3737 = vmand %vm3662, %vm3675
    %vm3738 = vmand %vm3663, %vm3674
    %vm3739 = vmand %vm3664, %vm3675
    %vm3740 = vmxor %vm3601, 1
    %vm3741 = vmxor %vm3602, 1
    %vm3742 = vmxor %vm3603, 1
    %vm3743 = vmxor %vm3604, 1
    %vm3744 = vmxor %vm3605, 1
    %vm3745 = vmxor %vm3606, 1
    %vm3746 = vmxor %vm3607, 1
    %vm3747 = vmxor %vm3608, 1
    %vm3748 = vmxor %vm3609, 1
    %vm3749 = vmxor %vm3610, 1
    %vm3750 = vmxor %vm3611, 1
    %vm3751 = vmxor %vm3612, 1
    %vm3752 = vmxor %vm3613, 1
    %vm3753 = vmxor %vm3614, 1
    %vm3754 = vmxor %vm3615, 1
    %vm3755 = vmxor %vm3616, 1
    %vm3756 = vmxor %vm3617, 1
    %vm3757 = vmxor %vm3618, 1
    %vm3758 = vmxor %vm3619, 1
    %vm3759 = vmxor %vm3620, 1
    %vm3760 = vmxor %vm3621, 1
    %vm3761 = vmxor %vm3622, 1
    %vm3762 = vmxor %vm3623, 1
    %vm3763 = vmxor %vm3624, 1
    %vm3764 = vmxor %vm3625, 1
    %vm3765 = vmxor %vm3626, 1
    %vm3766 = vmxor %vm3627, 1
    %vm3767 = vmxor %vm3628, 1
    %vm3768 = vmxor %vm3629, 1
    %vm3769 = vmxor %vm3630, 1
    %vm3770 = vmxor %vm3631, 1
    %vm3771 = vmxor %vm3632, 1
    %vm3772 = vmxor %vm3633, 1
    %vm3773 = vmxor %vm3634, 1
    %vm3774 = vmxor %vm3635, 1
    %vm3775 = vmxor %vm3636, 1
    %vm3776 = vmxor %vm3637, 1
    %vm3777 = vmxor %vm3638, 1
    %vm3778 = vmxor %vm3639, 1
    %vm3779 = vmxor %vm3640, 1
    %vm3780 = vmxor %vm3641, 1
    %vm3781 = vmxor %vm3642, 1
    %vm3782 = vmxor %vm3643, 1
    %vm3783 = vmxor %vm3644, 1
    %vm3784 = vmxor %vm3645, 1
    %vm3785 = vmxor %vm3646, 1
    %vm3786 = vmxor %vm3647, 1
    %vm3787 = vmxor %vm3648, 1
    %vm3788 = vmxor %vm3649, 1
    %vm3789 = vmxor %vm3650, 1
    %vm3790 = vmxor %vm3651, 1
    %vm3791 = vmxor %vm3652, 1
    %vm3792 = vmxor %vm3653, 1
    %vm3793 = vmxor %vm3654, 1
    %vm3794 = vmxor %vm3655, 1
    %vm3795 = vmxor %vm3656, 1
    %vm3796 = vmxor %vm3657, 1
    %vm3797 = vmxor %vm3658, 1
    %vm3798 = vmxor %vm3659, 1
    %vm3799 = vmxor %vm3660, 1
    %vm3800 = vmxor %vm3661, 1
    %vm3801 = vmxor %vm3662, 1
    %vm3802 = vmxor %vm3663, 1
    %vm3803 = vmxor %vm3664, 1
    %vm3804 = vmand %vm3740, %vm3674
    %vm3805 = vmand %vm3741, %vm3675
    %vm3806 = vmand %vm3742, %vm3674
    %vm3807 = vmand %vm3743, %vm3675
    %vm3808 = vmand %vm3744, %vm3674
    %vm3809 = vmand %vm3745, %vm3675
    %vm3810 = vmand %vm3746, %vm3674
    %vm3811 = vmand %vm3747, %vm3675
    %vm3812 = vmand %vm3748, %vm3674
    %vm3813 = vmand %vm3749, %vm3675
    %vm3814 = vmand %vm3750, %vm3674
    %vm3815 = vmand %vm3751, %vm3675
    %vm3816 = vmand %vm3752, %vm3674
    %vm3817 = vmand %vm3753, %vm3675
    %vm3818 = vmand %vm3754, %vm3674
    %vm3819 = vmand %vm3755, %vm3675
    %vm3820 = vmand %vm3756, %vm3674
    %vm3821 = vmand %vm3757, %vm3675
    %vm3822 = vmand %vm3758, %vm3674
    %vm3823 = vmand %vm3759, %vm3675
    %vm3824 = vmand %vm3760, %vm3674
    %vm3825 = vmand %vm3761, %vm3675
    %vm3826 = vmand %vm3762, %vm3674
    %vm3827 = vmand %vm3763, %vm3675
    %vm3828 = vmand %vm3764, %vm3674
    %vm3829 = vmand %vm3765, %vm3675
    %vm3830 = vmand %vm3766, %vm3674
    %vm3831 = vmand %vm3767, %vm3675
    %vm3832 = vmand %vm3768, %vm3674
    %vm3833 = vmand %vm3769, %vm3675
    %vm3834 = vmand %vm3770, %vm3674
    %vm3835 = vmand %vm3771, %vm3675
    %vm3836 = vmand %vm3772, %vm3674
    %vm3837 = vmand %vm3773, %vm3675
    %vm3838 = vmand %vm3774, %vm3674
    %vm3839 = vmand %vm3775, %vm3675
    %vm3840 = vmand %vm3776, %vm3674
    %vm3841 = vmand %vm3777, %vm3675
    %vm3842 = vmand %vm3778, %vm3674
    %vm3843 = vmand %vm3779, %vm3675
    %vm3844 = vmand %vm3780, %vm3674
    %vm3845 = vmand %vm3781, %vm3675
    %vm3846 = vmand %vm3782, %vm3674
    %vm3847 = vmand %vm3783, %vm3675
    %vm3848 = vmand %vm3784, %vm3674
    %vm3849 = vmand %vm3785, %vm3675
    %vm3850 = vmand %vm3786, %vm3674
    %vm3851 = vmand %vm3787, %vm3675
    %vm3852 = vmand %vm3788, %vm3674
    %vm3853 = vmand %vm3789, %vm3675
    %vm3854 = vmand %vm3790, %vm3674
    %vm3855 = vmand %vm3791, %vm3675
    %vm3856 = vmand %vm3792, %vm3674
    %vm3857 = vmand %vm3793, %vm3675
    %vm3858 = vmand %vm3794, %vm3674
    %vm3859 = vmand %vm3795, %vm3675
    %vm3860 = vmand %vm3796, %vm3674
    %vm3861 = vmand %vm3797, %vm3675
    %vm3862 = vmand %vm3798, %vm3674
    %vm3863 = vmand %vm3799, %vm3675
    %vm3864 = vmand %vm3800, %vm3674
    %vm3865 = vmand %vm3801, %vm3675
    %vm3866 = vmand %vm3802, %vm3674
    %vm3867 = vmand %vm3803, %vm3675
    %v3868 = vsel %vm3676, 1, 0
    %v3869 = vsel %vm3677, 1, 0
    %v3870 = vsel %vm3678, 1, 0
    %v3871 = vsel %vm3679, 1, 0
    %v3872 = vsel %vm3680, 1, 0
    %v3873 = vsel %vm3681, 1, 0
    %v3874 = vsel %vm3682, 1, 0
    %v3875 = vsel %vm3683, 1, 0
    %v3876 = vsel %vm3684, 1, 0
    %v3877 = vsel %vm3685, 1, 0
    %v3878 = vsel %vm3686, 1, 0
    %v3879 = vsel %vm3687, 1, 0
    %v3880 = vsel %vm3688, 1, 0
    %v3881 = vsel %vm3689, 1, 0
    %v3882 = vsel %vm3690, 1, 0
    %v3883 = vsel %vm3691, 1, 0
    %v3884 = vsel %vm3692, 1, 0
    %v3885 = vsel %vm3693, 1, 0
    %v3886 = vsel %vm3694, 1, 0
    %v3887 = vsel %vm3695, 1, 0
    %v3888 = vsel %vm3696, 1, 0
    %v3889 = vsel %vm3697, 1, 0
    %v3890 = vsel %vm3698, 1, 0
    %v3891 = vsel %vm3699, 1, 0
    %v3892 = vsel %vm3700, 1, 0
    %v3893 = vsel %vm3701, 1, 0
    %v3894 = vsel %vm3702, 1, 0
    %v3895 = vsel %vm3703, 1, 0
    %v3896 = vsel %vm3704, 1, 0
    %v3897 = vsel %vm3705, 1, 0
    %v3898 = vsel %vm3706, 1, 0
    %v3899 = vsel %vm3707, 1, 0
    %v3900 = vsel %vm3708, 1, 0
    %v3901 = vsel %vm3709, 1, 0
    %v3902 = vsel %vm3710, 1, 0
    %v3903 = vsel %vm3711, 1, 0
    %v3904 = vsel %vm3712, 1, 0
    %v3905 = vsel %vm3713, 1, 0
    %v3906 = vsel %vm3714, 1, 0
    %v3907 = vsel %vm3715, 1, 0
    %v3908 = vsel %vm3716, 1, 0
    %v3909 = vsel %vm3717, 1, 0
    %v3910 = vsel %vm3718, 1, 0
    %v3911 = vsel %vm3719, 1, 0
    %v3912 = vsel %vm3720, 1, 0
    %v3913 = vsel %vm3721, 1, 0
    %v3914 = vsel %vm3722, 1, 0
    %v3915 = vsel %vm3723, 1, 0
    %v3916 = vsel %vm3724, 1, 0
    %v3917 = vsel %vm3725, 1, 0
    %v3918 = vsel %vm3726, 1, 0
    %v3919 = vsel %vm3727, 1, 0
    %v3920 = vsel %vm3728, 1, 0
    %v3921 = vsel %vm3729, 1, 0
    %v3922 = vsel %vm3730, 1, 0
    %v3923 = vsel %vm3731, 1, 0
    %v3924 = vsel %vm3732, 1, 0
    %v3925 = vsel %vm3733, 1, 0
    %v3926 = vsel %vm3734, 1, 0
    %v3927 = vsel %vm3735, 1, 0
    %v3928 = vsel %vm3736, 1, 0
    %v3929 = vsel %vm3737, 1, 0
    %v3930 = vsel %vm3738, 1, 0
    %v3931 = vsel %vm3739, 1, 0
    %v3932 = vcvt.s32.f32 %v3868
    %v3933 = vcvt.s32.f32 %v3869
    %v3934 = vcvt.s32.f32 %v3870
    %v3935 = vcvt.s32.f32 %v3871
    %v3936 = vcvt.s32.f32 %v3872
    %v3937 = vcvt.s32.f32 %v3873
    %v3938 = vcvt.s32.f32 %v3874
    %v3939 = vcvt.s32.f32 %v3875
    %v3940 = vcvt.s32.f32 %v3876
    %v3941 = vcvt.s32.f32 %v3877
    %v3942 = vcvt.s32.f32 %v3878
    %v3943 = vcvt.s32.f32 %v3879
    %v3944 = vcvt.s32.f32 %v3880
    %v3945 = vcvt.s32.f32 %v3881
    %v3946 = vcvt.s32.f32 %v3882
    %v3947 = vcvt.s32.f32 %v3883
    %v3948 = vcvt.s32.f32 %v3884
    %v3949 = vcvt.s32.f32 %v3885
    %v3950 = vcvt.s32.f32 %v3886
    %v3951 = vcvt.s32.f32 %v3887
    %v3952 = vcvt.s32.f32 %v3888
    %v3953 = vcvt.s32.f32 %v3889
    %v3954 = vcvt.s32.f32 %v3890
    %v3955 = vcvt.s32.f32 %v3891
    %v3956 = vcvt.s32.f32 %v3892
    %v3957 = vcvt.s32.f32 %v3893
    %v3958 = vcvt.s32.f32 %v3894
    %v3959 = vcvt.s32.f32 %v3895
    %v3960 = vcvt.s32.f32 %v3896
    %v3961 = vcvt.s32.f32 %v3897
    %v3962 = vcvt.s32.f32 %v3898
    %v3963 = vcvt.s32.f32 %v3899
    %v3964 = vcvt.s32.f32 %v3900
    %v3965 = vcvt.s32.f32 %v3901
    %v3966 = vcvt.s32.f32 %v3902
    %v3967 = vcvt.s32.f32 %v3903
    %v3968 = vcvt.s32.f32 %v3904
    %v3969 = vcvt.s32.f32 %v3905
    %v3970 = vcvt.s32.f32 %v3906
    %v3971 = vcvt.s32.f32 %v3907
    %v3972 = vcvt.s32.f32 %v3908
    %v3973 = vcvt.s32.f32 %v3909
    %v3974 = vcvt.s32.f32 %v3910
    %v3975 = vcvt.s32.f32 %v3911
    %v3976 = vcvt.s32.f32 %v3912
    %v3977 = vcvt.s32.f32 %v3913
    %v3978 = vcvt.s32.f32 %v3914
    %v3979 = vcvt.s32.f32 %v3915
    %v3980 = vcvt.s32.f32 %v3916
    %v3981 = vcvt.s32.f32 %v3917
    %v3982 = vcvt.s32.f32 %v3918
    %v3983 = vcvt.s32.f32 %v3919
    %v3984 = vcvt.s32.f32 %v3920
    %v3985 = vcvt.s32.f32 %v3921
    %v3986 = vcvt.s32.f32 %v3922
    %v3987 = vcvt.s32.f32 %v3923
    %v3988 = vcvt.s32.f32 %v3924
    %v3989 = vcvt.s32.f32 %v3925
    %v3990 = vcvt.s32.f32 %v3926
    %v3991 = vcvt.s32.f32 %v3927
    %v3992 = vcvt.s32.f32 %v3928
    %v3993 = vcvt.s32.f32 %v3929
    %v3994 = vcvt.s32.f32 %v3930
    %v3995 = vcvt.s32.f32 %v3931
    %v3996 = vadd.f32 %v3932, %v3933
    %3997 = vadd.xlane.f32.xlu0 %v3996
    %v3998 = vpop.xlane.xlu0 %3997
    %v3999 = vadd.f32 %v3934, %v3935
    %4000 = vadd.xlane.f32.xlu0 %v3999
    %v4001 = vpop.xlane.xlu0 %4000
    %v4002 = vadd.f32 %v3936, %v3937
    %4003 = vadd.xlane.f32.xlu0 %v4002
    %v4004 = vpop.xlane.xlu0 %4003
    %v4005 = vadd.f32 %v3938, %v3939
    %4006 = vadd.xlane.f32.xlu0 %v4005
    %v4007 = vpop.xlane.xlu0 %4006
    %v4008 = vadd.f32 %v3940, %v3941
    %4009 = vadd.xlane.f32.xlu0 %v4008
    %v4010 = vpop.xlane.xlu0 %4009
    %v4011 = vadd.f32 %v3942, %v3943
    %4012 = vadd.xlane.f32.xlu0 %v4011
    %v4013 = vpop.xlane.xlu0 %4012
    %v4014 = vadd.f32 %v3944, %v3945
    %4015 = vadd.xlane.f32.xlu0 %v4014
    %v4016 = vpop.xlane.xlu0 %4015
    %v4017 = vadd.f32 %v3946, %v3947
    %4018 = vadd.xlane.f32.xlu0 %v4017
    %v4019 = vpop.xlane.xlu0 %4018
    %v4020 = vadd.f32 %v3948, %v3949
    %4021 = vadd.xlane.f32.xlu0 %v4020
    %v4022 = vpop.xlane.xlu0 %4021
    %v4023 = vadd.f32 %v3950, %v3951
    %4024 = vadd.xlane.f32.xlu0 %v4023
    %v4025 = vpop.xlane.xlu0 %4024
    %v4026 = vadd.f32 %v3952, %v3953
    %4027 = vadd.xlane.f32.xlu0 %v4026
    %v4028 = vpop.xlane.xlu0 %4027
    %v4029 = vadd.f32 %v3954, %v3955
    %4030 = vadd.xlane.f32.xlu0 %v4029
    %v4031 = vpop.xlane.xlu0 %4030
    %v4032 = vadd.f32 %v3956, %v3957
    %4033 = vadd.xlane.f32.xlu0 %v4032
    %v4034 = vpop.xlane.xlu0 %4033
    %v4035 = vadd.f32 %v3958, %v3959
    %4036 = vadd.xlane.f32.xlu0 %v4035
    %v4037 = vpop.xlane.xlu0 %4036
    %v4038 = vadd.f32 %v3960, %v3961
    %4039 = vadd.xlane.f32.xlu0 %v4038
    %v4040 = vpop.xlane.xlu0 %4039
    %v4041 = vadd.f32 %v3962, %v3963
    %4042 = vadd.xlane.f32.xlu0 %v4041
    %v4043 = vpop.xlane.xlu0 %4042
    %v4044 = vadd.f32 %v3964, %v3965
    %4045 = vadd.xlane.f32.xlu0 %v4044
    %v4046 = vpop.xlane.xlu0 %4045
    %v4047 = vadd.f32 %v3966, %v3967
    %4048 = vadd.xlane.f32.xlu0 %v4047
    %v4049 = vpop.xlane.xlu0 %4048
    %v4050 = vadd.f32 %v3968, %v3969
    %4051 = vadd.xlane.f32.xlu0 %v4050
    %v4052 = vpop.xlane.xlu0 %4051
    %v4053 = vadd.f32 %v3970, %v3971
    %4054 = vadd.xlane.f32.xlu0 %v4053
    %v4055 = vpop.xlane.xlu0 %4054
    %v4056 = vadd.f32 %v3972, %v3973
    %4057 = vadd.xlane.f32.xlu0 %v4056
    %v4058 = vpop.xlane.xlu0 %4057
    %v4059 = vadd.f32 %v3974, %v3975
    %4060 = vadd.xlane.f32.xlu0 %v4059
    %v4061 = vpop.xlane.xlu0 %4060
    %v4062 = vadd.f32 %v3976, %v3977
    %4063 = vadd.xlane.f32.xlu0 %v4062
    %v4064 = vpop.xlane.xlu0 %4063
    %v4065 = vadd.f32 %v3978, %v3979
    %4066 = vadd.xlane.f32.xlu0 %v4065
    %v4067 = vpop.xlane.xlu0 %4066
    %v4068 = vadd.f32 %v3980, %v3981
    %4069 = vadd.xlane.f32.xlu0 %v4068
    %v4070 = vpop.xlane.xlu0 %4069
    %v4071 = vadd.f32 %v3982, %v3983
    %4072 = vadd.xlane.f32.xlu0 %v4071
    %v4073 = vpop.xlane.xlu0 %4072
    %v4074 = vadd.f32 %v3984, %v3985
    %4075 = vadd.xlane.f32.xlu0 %v4074
    %v4076 = vpop.xlane.xlu0 %4075
    %v4077 = vadd.f32 %v3986, %v3987
    %4078 = vadd.xlane.f32.xlu0 %v4077
    %v4079 = vpop.xlane.xlu0 %4078
    %v4080 = vadd.f32 %v3988, %v3989
    %4081 = vadd.xlane.f32.xlu0 %v4080
    %v4082 = vpop.xlane.xlu0 %4081
    %v4083 = vadd.f32 %v3990, %v3991
    %4084 = vadd.xlane.f32.xlu0 %v4083
    %v4085 = vpop.xlane.xlu0 %4084
    %v4086 = vadd.f32 %v3992, %v3993
    %4087 = vadd.xlane.f32.xlu0 %v4086
    %v4088 = vpop.xlane.xlu0 %4087
    %v4089 = vadd.f32 %v3994, %v3995
    %4090 = vadd.xlane.f32.xlu0 %v4089
    %v4091 = vpop.xlane.xlu0 %4090
    %v4092 = vmul.f32 %v3055, %v3932
    %v4093 = vmul.f32 %v3062, %v3933
    %v4094 = vmul.f32 %v3069, %v3934
    %v4095 = vmul.f32 %v3076, %v3935
    %v4096 = vmul.f32 %v3083, %v3936
    %v4097 = vmul.f32 %v3090, %v3937
    %v4098 = vmul.f32 %v3097, %v3938
    %v4099 = vmul.f32 %v3104, %v3939
    %v4100 = vmul.f32 %v3111, %v3940
    %v4101 = vmul.f32 %v3118, %v3941
    %v4102 = vmul.f32 %v3125, %v3942
    %v4103 = vmul.f32 %v3132, %v3943
    %v4104 = vmul.f32 %v3139, %v3944
    %v4105 = vmul.f32 %v3146, %v3945
    %v4106 = vmul.f32 %v3153, %v3946
    %v4107 = vmul.f32 %v3160, %v3947
    %v4108 = vmul.f32 %v3167, %v3948
    %v4109 = vmul.f32 %v3174, %v3949
    %v4110 = vmul.f32 %v3181, %v3950
    %v4111 = vmul.f32 %v3188, %v3951
    %v4112 = vmul.f32 %v3195, %v3952
    %v4113 = vmul.f32 %v3202, %v3953
    %v4114 = vmul.f32 %v3209, %v3954
    %v4115 = vmul.f32 %v3216, %v3955
    %v4116 = vmul.f32 %v3223, %v3956
    %v4117 = vmul.f32 %v3230, %v3957
    %v4118 = vmul.f32 %v3237, %v3958
    %v4119 = vmul.f32 %v3244, %v3959
    %v4120 = vmul.f32 %v3251, %v3960
    %v4121 = vmul.f32 %v3258, %v3961
    %v4122 = vmul.f32 %v3265, %v3962
    %v4123 = vmul.f32 %v3272, %v3963
    %v4124 = vmul.f32 %v3279, %v3964
    %v4125 = vmul.f32 %v3286, %v3965
    %v4126 = vmul.f32 %v3293, %v3966
    %v4127 = vmul.f32 %v3300, %v3967
    %v4128 = vmul.f32 %v3307, %v3968
    %v4129 = vmul.f32 %v3314, %v3969
    %v4130 = vmul.f32 %v3321, %v3970
    %v4131 = vmul.f32 %v3328, %v3971
    %v4132 = vmul.f32 %v3335, %v3972
    %v4133 = vmul.f32 %v3342, %v3973
    %v4134 = vmul.f32 %v3349, %v3974
    %v4135 = vmul.f32 %v3356, %v3975
    %v4136 = vmul.f32 %v3363, %v3976
    %v4137 = vmul.f32 %v3370, %v3977
    %v4138 = vmul.f32 %v3377, %v3978
    %v4139 = vmul.f32 %v3384, %v3979
    %v4140 = vmul.f32 %v3391, %v3980
    %v4141 = vmul.f32 %v3398, %v3981
    %v4142 = vmul.f32 %v3405, %v3982
    %v4143 = vmul.f32 %v3412, %v3983
    %v4144 = vmul.f32 %v3419, %v3984
    %v4145 = vmul.f32 %v3426, %v3985
    %v4146 = vmul.f32 %v3433, %v3986
    %v4147 = vmul.f32 %v3440, %v3987
    %v4148 = vmul.f32 %v3447, %v3988
    %v4149 = vmul.f32 %v3454, %v3989
    %v4150 = vmul.f32 %v3461, %v3990
    %v4151 = vmul.f32 %v3468, %v3991
    %v4152 = vmul.f32 %v3475, %v3992
    %v4153 = vmul.f32 %v3482, %v3993
    %v4154 = vmul.f32 %v3489, %v3994
    %v4155 = vmul.f32 %v3496, %v3995
    %v4156 = vadd.f32 %v4092, %v4093
    %4157 = vadd.xlane.f32.xlu0 %v4156
    %v4158 = vpop.xlane.xlu0 %4157
    %v4159 = vadd.f32 %v4094, %v4095
    %4160 = vadd.xlane.f32.xlu0 %v4159
    %v4161 = vpop.xlane.xlu0 %4160
    %v4162 = vadd.f32 %v4096, %v4097
    %4163 = vadd.xlane.f32.xlu0 %v4162
    %v4164 = vpop.xlane.xlu0 %4163
    %v4165 = vadd.f32 %v4098, %v4099
    %4166 = vadd.xlane.f32.xlu0 %v4165
    %v4167 = vpop.xlane.xlu0 %4166
    %v4168 = vadd.f32 %v4100, %v4101
    %4169 = vadd.xlane.f32.xlu0 %v4168
    %v4170 = vpop.xlane.xlu0 %4169
    %v4171 = vadd.f32 %v4102, %v4103
    %4172 = vadd.xlane.f32.xlu0 %v4171
    %v4173 = vpop.xlane.xlu0 %4172
    %v4174 = vadd.f32 %v4104, %v4105
    %4175 = vadd.xlane.f32.xlu0 %v4174
    %v4176 = vpop.xlane.xlu0 %4175
    %v4177 = vadd.f32 %v4106, %v4107
    %4178 = vadd.xlane.f32.xlu0 %v4177
    %v4179 = vpop.xlane.xlu0 %4178
    %v4180 = vadd.f32 %v4108, %v4109
    %4181 = vadd.xlane.f32.xlu0 %v4180
    %v4182 = vpop.xlane.xlu0 %4181
    %v4183 = vadd.f32 %v4110, %v4111
    %4184 = vadd.xlane.f32.xlu0 %v4183
    %v4185 = vpop.xlane.xlu0 %4184
    %v4186 = vadd.f32 %v4112, %v4113
    %4187 = vadd.xlane.f32.xlu0 %v4186
    %v4188 = vpop.xlane.xlu0 %4187
    %v4189 = vadd.f32 %v4114, %v4115
    %4190 = vadd.xlane.f32.xlu0 %v4189
    %v4191 = vpop.xlane.xlu0 %4190
    %v4192 = vadd.f32 %v4116, %v4117
    %4193 = vadd.xlane.f32.xlu0 %v4192
    %v4194 = vpop.xlane.xlu0 %4193
    %v4195 = vadd.f32 %v4118, %v4119
    %4196 = vadd.xlane.f32.xlu0 %v4195
    %v4197 = vpop.xlane.xlu0 %4196
    %v4198 = vadd.f32 %v4120, %v4121
    %4199 = vadd.xlane.f32.xlu0 %v4198
    %v4200 = vpop.xlane.xlu0 %4199
    %v4201 = vadd.f32 %v4122, %v4123
    %4202 = vadd.xlane.f32.xlu0 %v4201
    %v4203 = vpop.xlane.xlu0 %4202
    %v4204 = vadd.f32 %v4124, %v4125
    %4205 = vadd.xlane.f32.xlu0 %v4204
    %v4206 = vpop.xlane.xlu0 %4205
    %v4207 = vadd.f32 %v4126, %v4127
    %4208 = vadd.xlane.f32.xlu0 %v4207
    %v4209 = vpop.xlane.xlu0 %4208
    %v4210 = vadd.f32 %v4128, %v4129
    %4211 = vadd.xlane.f32.xlu0 %v4210
    %v4212 = vpop.xlane.xlu0 %4211
    %v4213 = vadd.f32 %v4130, %v4131
    %4214 = vadd.xlane.f32.xlu0 %v4213
    %v4215 = vpop.xlane.xlu0 %4214
    %v4216 = vadd.f32 %v4132, %v4133
    %4217 = vadd.xlane.f32.xlu0 %v4216
    %v4218 = vpop.xlane.xlu0 %4217
    %v4219 = vadd.f32 %v4134, %v4135
    %4220 = vadd.xlane.f32.xlu0 %v4219
    %v4221 = vpop.xlane.xlu0 %4220
    %v4222 = vadd.f32 %v4136, %v4137
    %4223 = vadd.xlane.f32.xlu0 %v4222
    %v4224 = vpop.xlane.xlu0 %4223
    %v4225 = vadd.f32 %v4138, %v4139
    %4226 = vadd.xlane.f32.xlu0 %v4225
    %v4227 = vpop.xlane.xlu0 %4226
    %v4228 = vadd.f32 %v4140, %v4141
    %4229 = vadd.xlane.f32.xlu0 %v4228
    %v4230 = vpop.xlane.xlu0 %4229
    %v4231 = vadd.f32 %v4142, %v4143
    %4232 = vadd.xlane.f32.xlu0 %v4231
    %v4233 = vpop.xlane.xlu0 %4232
    %v4234 = vadd.f32 %v4144, %v4145
    %4235 = vadd.xlane.f32.xlu0 %v4234
    %v4236 = vpop.xlane.xlu0 %4235
    %v4237 = vadd.f32 %v4146, %v4147
    %4238 = vadd.xlane.f32.xlu0 %v4237
    %v4239 = vpop.xlane.xlu0 %4238
    %v4240 = vadd.f32 %v4148, %v4149
    %4241 = vadd.xlane.f32.xlu0 %v4240
    %v4242 = vpop.xlane.xlu0 %4241
    %v4243 = vadd.f32 %v4150, %v4151
    %4244 = vadd.xlane.f32.xlu0 %v4243
    %v4245 = vpop.xlane.xlu0 %4244
    %v4246 = vadd.f32 %v4152, %v4153
    %4247 = vadd.xlane.f32.xlu0 %v4246
    %v4248 = vpop.xlane.xlu0 %4247
    %v4249 = vadd.f32 %v4154, %v4155
    %4250 = vadd.xlane.f32.xlu0 %v4249
    %v4251 = vpop.xlane.xlu0 %4250
    %v4252 = vmax.f32 %v3998, 1.0
    %v4253 = vmax.f32 %v4001, 1.0
    %v4254 = vmax.f32 %v4004, 1.0
    %v4255 = vmax.f32 %v4007, 1.0
    %v4256 = vmax.f32 %v4010, 1.0
    %v4257 = vmax.f32 %v4013, 1.0
    %v4258 = vmax.f32 %v4016, 1.0
    %v4259 = vmax.f32 %v4019, 1.0
    %v4260 = vmax.f32 %v4022, 1.0
    %v4261 = vmax.f32 %v4025, 1.0
    %v4262 = vmax.f32 %v4028, 1.0
    %v4263 = vmax.f32 %v4031, 1.0
    %v4264 = vmax.f32 %v4034, 1.0
    %v4265 = vmax.f32 %v4037, 1.0
    %v4266 = vmax.f32 %v4040, 1.0
    %v4267 = vmax.f32 %v4043, 1.0
    %v4268 = vmax.f32 %v4046, 1.0
    %v4269 = vmax.f32 %v4049, 1.0
    %v4270 = vmax.f32 %v4052, 1.0
    %v4271 = vmax.f32 %v4055, 1.0
    %v4272 = vmax.f32 %v4058, 1.0
    %v4273 = vmax.f32 %v4061, 1.0
    %v4274 = vmax.f32 %v4064, 1.0
    %v4275 = vmax.f32 %v4067, 1.0
    %v4276 = vmax.f32 %v4070, 1.0
    %v4277 = vmax.f32 %v4073, 1.0
    %v4278 = vmax.f32 %v4076, 1.0
    %v4279 = vmax.f32 %v4079, 1.0
    %v4280 = vmax.f32 %v4082, 1.0
    %v4281 = vmax.f32 %v4085, 1.0
    %v4282 = vmax.f32 %v4088, 1.0
    %v4283 = vmax.f32 %v4091, 1.0
    %v4284 = vrcp.pop %v4252
    %v4285 = vmul.f32 %v4158, %v4284
    %v4286 = vrcp.pop %v4253
    %v4287 = vmul.f32 %v4161, %v4286
    %v4288 = vrcp.pop %v4254
    %v4289 = vmul.f32 %v4164, %v4288
    %v4290 = vrcp.pop %v4255
    %v4291 = vmul.f32 %v4167, %v4290
    %v4292 = vrcp.pop %v4256
    %v4293 = vmul.f32 %v4170, %v4292
    %v4294 = vrcp.pop %v4257
    %v4295 = vmul.f32 %v4173, %v4294
    %v4296 = vrcp.pop %v4258
    %v4297 = vmul.f32 %v4176, %v4296
    %v4298 = vrcp.pop %v4259
    %v4299 = vmul.f32 %v4179, %v4298
    %v4300 = vrcp.pop %v4260
    %v4301 = vmul.f32 %v4182, %v4300
    %v4302 = vrcp.pop %v4261
    %v4303 = vmul.f32 %v4185, %v4302
    %v4304 = vrcp.pop %v4262
    %v4305 = vmul.f32 %v4188, %v4304
    %v4306 = vrcp.pop %v4263
    %v4307 = vmul.f32 %v4191, %v4306
    %v4308 = vrcp.pop %v4264
    %v4309 = vmul.f32 %v4194, %v4308
    %v4310 = vrcp.pop %v4265
    %v4311 = vmul.f32 %v4197, %v4310
    %v4312 = vrcp.pop %v4266
    %v4313 = vmul.f32 %v4200, %v4312
    %v4314 = vrcp.pop %v4267
    %v4315 = vmul.f32 %v4203, %v4314
    %v4316 = vrcp.pop %v4268
    %v4317 = vmul.f32 %v4206, %v4316
    %v4318 = vrcp.pop %v4269
    %v4319 = vmul.f32 %v4209, %v4318
    %v4320 = vrcp.pop %v4270
    %v4321 = vmul.f32 %v4212, %v4320
    %v4322 = vrcp.pop %v4271
    %v4323 = vmul.f32 %v4215, %v4322
    %v4324 = vrcp.pop %v4272
    %v4325 = vmul.f32 %v4218, %v4324
    %v4326 = vrcp.pop %v4273
    %v4327 = vmul.f32 %v4221, %v4326
    %v4328 = vrcp.pop %v4274
    %v4329 = vmul.f32 %v4224, %v4328
    %v4330 = vrcp.pop %v4275
    %v4331 = vmul.f32 %v4227, %v4330
    %v4332 = vrcp.pop %v4276
    %v4333 = vmul.f32 %v4230, %v4332
    %v4334 = vrcp.pop %v4277
    %v4335 = vmul.f32 %v4233, %v4334
    %v4336 = vrcp.pop %v4278
    %v4337 = vmul.f32 %v4236, %v4336
    %v4338 = vrcp.pop %v4279
    %v4339 = vmul.f32 %v4239, %v4338
    %v4340 = vrcp.pop %v4280
    %v4341 = vmul.f32 %v4242, %v4340
    %v4342 = vrcp.pop %v4281
    %v4343 = vmul.f32 %v4245, %v4342
    %v4344 = vrcp.pop %v4282
    %v4345 = vmul.f32 %v4248, %v4344
    %v4346 = vrcp.pop %v4283
    %v4347 = vmul.f32 %v4251, %v4346
    %v4348 = vsel %vm3804, %v3055, 1e+30
    %v4349 = vsel %vm3805, %v3062, 1e+30
    %v4350 = vsel %vm3806, %v3069, 1e+30
    %v4351 = vsel %vm3807, %v3076, 1e+30
    %v4352 = vsel %vm3808, %v3083, 1e+30
    %v4353 = vsel %vm3809, %v3090, 1e+30
    %v4354 = vsel %vm3810, %v3097, 1e+30
    %v4355 = vsel %vm3811, %v3104, 1e+30
    %v4356 = vsel %vm3812, %v3111, 1e+30
    %v4357 = vsel %vm3813, %v3118, 1e+30
    %v4358 = vsel %vm3814, %v3125, 1e+30
    %v4359 = vsel %vm3815, %v3132, 1e+30
    %v4360 = vsel %vm3816, %v3139, 1e+30
    %v4361 = vsel %vm3817, %v3146, 1e+30
    %v4362 = vsel %vm3818, %v3153, 1e+30
    %v4363 = vsel %vm3819, %v3160, 1e+30
    %v4364 = vsel %vm3820, %v3167, 1e+30
    %v4365 = vsel %vm3821, %v3174, 1e+30
    %v4366 = vsel %vm3822, %v3181, 1e+30
    %v4367 = vsel %vm3823, %v3188, 1e+30
    %v4368 = vsel %vm3824, %v3195, 1e+30
    %v4369 = vsel %vm3825, %v3202, 1e+30
    %v4370 = vsel %vm3826, %v3209, 1e+30
    %v4371 = vsel %vm3827, %v3216, 1e+30
    %v4372 = vsel %vm3828, %v3223, 1e+30
    %v4373 = vsel %vm3829, %v3230, 1e+30
    %v4374 = vsel %vm3830, %v3237, 1e+30
    %v4375 = vsel %vm3831, %v3244, 1e+30
    %v4376 = vsel %vm3832, %v3251, 1e+30
    %v4377 = vsel %vm3833, %v3258, 1e+30
    %v4378 = vsel %vm3834, %v3265, 1e+30
    %v4379 = vsel %vm3835, %v3272, 1e+30
    %v4380 = vsel %vm3836, %v3279, 1e+30
    %v4381 = vsel %vm3837, %v3286, 1e+30
    %v4382 = vsel %vm3838, %v3293, 1e+30
    %v4383 = vsel %vm3839, %v3300, 1e+30
    %v4384 = vsel %vm3840, %v3307, 1e+30
    %v4385 = vsel %vm3841, %v3314, 1e+30
    %v4386 = vsel %vm3842, %v3321, 1e+30
    %v4387 = vsel %vm3843, %v3328, 1e+30
    %v4388 = vsel %vm3844, %v3335, 1e+30
    %v4389 = vsel %vm3845, %v3342, 1e+30
    %v4390 = vsel %vm3846, %v3349, 1e+30
    %v4391 = vsel %vm3847, %v3356, 1e+30
    %v4392 = vsel %vm3848, %v3363, 1e+30
    %v4393 = vsel %vm3849, %v3370, 1e+30
    %v4394 = vsel %vm3850, %v3377, 1e+30
    %v4395 = vsel %vm3851, %v3384, 1e+30
    %v4396 = vsel %vm3852, %v3391, 1e+30
    %v4397 = vsel %vm3853, %v3398, 1e+30
    %v4398 = vsel %vm3854, %v3405, 1e+30
    %v4399 = vsel %vm3855, %v3412, 1e+30
    %v4400 = vsel %vm3856, %v3419, 1e+30
    %v4401 = vsel %vm3857, %v3426, 1e+30
    %v4402 = vsel %vm3858, %v3433, 1e+30
    %v4403 = vsel %vm3859, %v3440, 1e+30
    %v4404 = vsel %vm3860, %v3447, 1e+30
    %v4405 = vsel %vm3861, %v3454, 1e+30
    %v4406 = vsel %vm3862, %v3461, 1e+30
    %v4407 = vsel %vm3863, %v3468, 1e+30
    %v4408 = vsel %vm3864, %v3475, 1e+30
    %v4409 = vsel %vm3865, %v3482, 1e+30
    %v4410 = vsel %vm3866, %v3489, 1e+30
    %v4411 = vsel %vm3867, %v3496, 1e+30
    %v4412 = vmin.f32 %v4348, %v4349
    %4413 = vmin.xlane.f32.xlu0 %v4412
    %v4414 = vpop.xlane.xlu0 %4413
    %v4415 = vmin.f32 %v4350, %v4351
    %4416 = vmin.xlane.f32.xlu0 %v4415
    %v4417 = vpop.xlane.xlu0 %4416
    %v4418 = vmin.f32 %v4352, %v4353
    %4419 = vmin.xlane.f32.xlu0 %v4418
    %v4420 = vpop.xlane.xlu0 %4419
    %v4421 = vmin.f32 %v4354, %v4355
    %4422 = vmin.xlane.f32.xlu0 %v4421
    %v4423 = vpop.xlane.xlu0 %4422
    %v4424 = vmin.f32 %v4356, %v4357
    %4425 = vmin.xlane.f32.xlu0 %v4424
    %v4426 = vpop.xlane.xlu0 %4425
    %v4427 = vmin.f32 %v4358, %v4359
    %4428 = vmin.xlane.f32.xlu0 %v4427
    %v4429 = vpop.xlane.xlu0 %4428
    %v4430 = vmin.f32 %v4360, %v4361
    %4431 = vmin.xlane.f32.xlu0 %v4430
    %v4432 = vpop.xlane.xlu0 %4431
    %v4433 = vmin.f32 %v4362, %v4363
    %4434 = vmin.xlane.f32.xlu0 %v4433
    %v4435 = vpop.xlane.xlu0 %4434
    %v4436 = vmin.f32 %v4364, %v4365
    %4437 = vmin.xlane.f32.xlu0 %v4436
    %v4438 = vpop.xlane.xlu0 %4437
    %v4439 = vmin.f32 %v4366, %v4367
    %4440 = vmin.xlane.f32.xlu0 %v4439
    %v4441 = vpop.xlane.xlu0 %4440
    %v4442 = vmin.f32 %v4368, %v4369
    %4443 = vmin.xlane.f32.xlu0 %v4442
    %v4444 = vpop.xlane.xlu0 %4443
    %v4445 = vmin.f32 %v4370, %v4371
    %4446 = vmin.xlane.f32.xlu0 %v4445
    %v4447 = vpop.xlane.xlu0 %4446
    %v4448 = vmin.f32 %v4372, %v4373
    %4449 = vmin.xlane.f32.xlu0 %v4448
    %v4450 = vpop.xlane.xlu0 %4449
    %v4451 = vmin.f32 %v4374, %v4375
    %4452 = vmin.xlane.f32.xlu0 %v4451
    %v4453 = vpop.xlane.xlu0 %4452
    %v4454 = vmin.f32 %v4376, %v4377
    %4455 = vmin.xlane.f32.xlu0 %v4454
    %v4456 = vpop.xlane.xlu0 %4455
    %v4457 = vmin.f32 %v4378, %v4379
    %4458 = vmin.xlane.f32.xlu0 %v4457
    %v4459 = vpop.xlane.xlu0 %4458
    %v4460 = vmin.f32 %v4380, %v4381
    %4461 = vmin.xlane.f32.xlu0 %v4460
    %v4462 = vpop.xlane.xlu0 %4461
    %v4463 = vmin.f32 %v4382, %v4383
    %4464 = vmin.xlane.f32.xlu0 %v4463
    %v4465 = vpop.xlane.xlu0 %4464
    %v4466 = vmin.f32 %v4384, %v4385
    %4467 = vmin.xlane.f32.xlu0 %v4466
    %v4468 = vpop.xlane.xlu0 %4467
    %v4469 = vmin.f32 %v4386, %v4387
    %4470 = vmin.xlane.f32.xlu0 %v4469
    %v4471 = vpop.xlane.xlu0 %4470
    %v4472 = vmin.f32 %v4388, %v4389
    %4473 = vmin.xlane.f32.xlu0 %v4472
    %v4474 = vpop.xlane.xlu0 %4473
    %v4475 = vmin.f32 %v4390, %v4391
    %4476 = vmin.xlane.f32.xlu0 %v4475
    %v4477 = vpop.xlane.xlu0 %4476
    %v4478 = vmin.f32 %v4392, %v4393
    %4479 = vmin.xlane.f32.xlu0 %v4478
    %v4480 = vpop.xlane.xlu0 %4479
    %v4481 = vmin.f32 %v4394, %v4395
    %4482 = vmin.xlane.f32.xlu0 %v4481
    %v4483 = vpop.xlane.xlu0 %4482
    %v4484 = vmin.f32 %v4396, %v4397
    %4485 = vmin.xlane.f32.xlu0 %v4484
    %v4486 = vpop.xlane.xlu0 %4485
    %v4487 = vmin.f32 %v4398, %v4399
    %4488 = vmin.xlane.f32.xlu0 %v4487
    %v4489 = vpop.xlane.xlu0 %4488
    %v4490 = vmin.f32 %v4400, %v4401
    %4491 = vmin.xlane.f32.xlu0 %v4490
    %v4492 = vpop.xlane.xlu0 %4491
    %v4493 = vmin.f32 %v4402, %v4403
    %4494 = vmin.xlane.f32.xlu0 %v4493
    %v4495 = vpop.xlane.xlu0 %4494
    %v4496 = vmin.f32 %v4404, %v4405
    %4497 = vmin.xlane.f32.xlu0 %v4496
    %v4498 = vpop.xlane.xlu0 %4497
    %v4499 = vmin.f32 %v4406, %v4407
    %4500 = vmin.xlane.f32.xlu0 %v4499
    %v4501 = vpop.xlane.xlu0 %4500
    %v4502 = vmin.f32 %v4408, %v4409
    %4503 = vmin.xlane.f32.xlu0 %v4502
    %v4504 = vpop.xlane.xlu0 %4503
    %v4505 = vmin.f32 %v4410, %v4411
    %4506 = vmin.xlane.f32.xlu0 %v4505
    %v4507 = vpop.xlane.xlu0 %4506
    %v4508 = vsub.f32 %v4285, %v4414
    %v4509 = vsub.f32 %v4287, %v4417
    %v4510 = vsub.f32 %v4289, %v4420
    %v4511 = vsub.f32 %v4291, %v4423
    %v4512 = vsub.f32 %v4293, %v4426
    %v4513 = vsub.f32 %v4295, %v4429
    %v4514 = vsub.f32 %v4297, %v4432
    %v4515 = vsub.f32 %v4299, %v4435
    %v4516 = vsub.f32 %v4301, %v4438
    %v4517 = vsub.f32 %v4303, %v4441
    %v4518 = vsub.f32 %v4305, %v4444
    %v4519 = vsub.f32 %v4307, %v4447
    %v4520 = vsub.f32 %v4309, %v4450
    %v4521 = vsub.f32 %v4311, %v4453
    %v4522 = vsub.f32 %v4313, %v4456
    %v4523 = vsub.f32 %v4315, %v4459
    %v4524 = vsub.f32 %v4317, %v4462
    %v4525 = vsub.f32 %v4319, %v4465
    %v4526 = vsub.f32 %v4321, %v4468
    %v4527 = vsub.f32 %v4323, %v4471
    %v4528 = vsub.f32 %v4325, %v4474
    %v4529 = vsub.f32 %v4327, %v4477
    %v4530 = vsub.f32 %v4329, %v4480
    %v4531 = vsub.f32 %v4331, %v4483
    %v4532 = vsub.f32 %v4333, %v4486
    %v4533 = vsub.f32 %v4335, %v4489
    %v4534 = vsub.f32 %v4337, %v4492
    %v4535 = vsub.f32 %v4339, %v4495
    %v4536 = vsub.f32 %v4341, %v4498
    %v4537 = vsub.f32 %v4343, %v4501
    %v4538 = vsub.f32 %v4345, %v4504
    %v4539 = vsub.f32 %v4347, %v4507
    %v4540 = vadd.f32 %v4508, 1.0
    %v4541 = vadd.f32 %v4509, 1.0
    %v4542 = vadd.f32 %v4510, 1.0
    %v4543 = vadd.f32 %v4511, 1.0
    %v4544 = vadd.f32 %v4512, 1.0
    %v4545 = vadd.f32 %v4513, 1.0
    %v4546 = vadd.f32 %v4514, 1.0
    %v4547 = vadd.f32 %v4515, 1.0
    %v4548 = vadd.f32 %v4516, 1.0
    %v4549 = vadd.f32 %v4517, 1.0
    %v4550 = vadd.f32 %v4518, 1.0
    %v4551 = vadd.f32 %v4519, 1.0
    %v4552 = vadd.f32 %v4520, 1.0
    %v4553 = vadd.f32 %v4521, 1.0
    %v4554 = vadd.f32 %v4522, 1.0
    %v4555 = vadd.f32 %v4523, 1.0
    %v4556 = vadd.f32 %v4524, 1.0
    %v4557 = vadd.f32 %v4525, 1.0
    %v4558 = vadd.f32 %v4526, 1.0
    %v4559 = vadd.f32 %v4527, 1.0
    %v4560 = vadd.f32 %v4528, 1.0
    %v4561 = vadd.f32 %v4529, 1.0
    %v4562 = vadd.f32 %v4530, 1.0
    %v4563 = vadd.f32 %v4531, 1.0
    %v4564 = vadd.f32 %v4532, 1.0
    %v4565 = vadd.f32 %v4533, 1.0
    %v4566 = vadd.f32 %v4534, 1.0
    %v4567 = vadd.f32 %v4535, 1.0
    %v4568 = vadd.f32 %v4536, 1.0
    %v4569 = vadd.f32 %v4537, 1.0
    %v4570 = vadd.f32 %v4538, 1.0
    %v4571 = vadd.f32 %v4539, 1.0
    %v4572 = vmax.f32 %v4540, 0.0
    %v4573 = vmax.f32 %v4541, 0.0
    %v4574 = vmax.f32 %v4542, 0.0
    %v4575 = vmax.f32 %v4543, 0.0
    %v4576 = vmax.f32 %v4544, 0.0
    %v4577 = vmax.f32 %v4545, 0.0
    %v4578 = vmax.f32 %v4546, 0.0
    %v4579 = vmax.f32 %v4547, 0.0
    %v4580 = vmax.f32 %v4548, 0.0
    %v4581 = vmax.f32 %v4549, 0.0
    %v4582 = vmax.f32 %v4550, 0.0
    %v4583 = vmax.f32 %v4551, 0.0
    %v4584 = vmax.f32 %v4552, 0.0
    %v4585 = vmax.f32 %v4553, 0.0
    %v4586 = vmax.f32 %v4554, 0.0
    %v4587 = vmax.f32 %v4555, 0.0
    %v4588 = vmax.f32 %v4556, 0.0
    %v4589 = vmax.f32 %v4557, 0.0
    %v4590 = vmax.f32 %v4558, 0.0
    %v4591 = vmax.f32 %v4559, 0.0
    %v4592 = vmax.f32 %v4560, 0.0
    %v4593 = vmax.f32 %v4561, 0.0
    %v4594 = vmax.f32 %v4562, 0.0
    %v4595 = vmax.f32 %v4563, 0.0
    %v4596 = vmax.f32 %v4564, 0.0
    %v4597 = vmax.f32 %v4565, 0.0
    %v4598 = vmax.f32 %v4566, 0.0
    %v4599 = vmax.f32 %v4567, 0.0
    %v4600 = vmax.f32 %v4568, 0.0
    %v4601 = vmax.f32 %v4569, 0.0
    %v4602 = vmax.f32 %v4570, 0.0
    %v4603 = vmax.f32 %v4571, 0.0
    %s4604 = smul.u32 0, 256
    %v4605 = vlaneseq
    %v4606 = vshrl.u32 %v4605, 7
    %v4607 = vadd.s32 %v4606, 8
    %v4608 = vadd.s32 %v4606, 16
    %v4609 = vadd.s32 %v4606, 24
    %v4610 = vadd.s32 %v4606, 32
    %v4611 = vadd.s32 %v4606, 40
    %v4612 = vadd.s32 %v4606, 48
    %v4613 = vadd.s32 %v4606, 56
    %v4614 = vadd.s32 %v4606, 64
    %v4615 = vadd.s32 %v4606, 72
    %v4616 = vadd.s32 %v4606, 80
    %v4617 = vadd.s32 %v4606, 88
    %v4618 = vadd.s32 %v4606, 96
    %v4619 = vadd.s32 %v4606, 104
    %v4620 = vadd.s32 %v4606, 112
    %v4621 = vadd.s32 %v4606, 120
    %v4622 = vadd.s32 %v4606, 128
    %v4623 = vadd.s32 %v4606, 136
    %v4624 = vadd.s32 %v4606, 144
    %v4625 = vadd.s32 %v4606, 152
    %v4626 = vadd.s32 %v4606, 160
    %v4627 = vadd.s32 %v4606, 168
    %v4628 = vadd.s32 %v4606, 176
    %v4629 = vadd.s32 %v4606, 184
    %v4630 = vadd.s32 %v4606, 192
    %v4631 = vadd.s32 %v4606, 200
    %v4632 = vadd.s32 %v4606, 208
    %v4633 = vadd.s32 %v4606, 216
    %v4634 = vadd.s32 %v4606, 224
    %v4635 = vadd.s32 %v4606, 232
    %v4636 = vadd.s32 %v4606, 240
    %v4637 = vadd.s32 %v4606, 248
    %v4638 = vstv %s4604
    %v4639 = vadd.s32 %v4638, %v4606
    %v4640 = vadd.s32 %v4638, %v4607
    %v4641 = vadd.s32 %v4638, %v4608
    %v4642 = vadd.s32 %v4638, %v4609
    %v4643 = vadd.s32 %v4638, %v4610
    %v4644 = vadd.s32 %v4638, %v4611
    %v4645 = vadd.s32 %v4638, %v4612
    %v4646 = vadd.s32 %v4638, %v4613
    %v4647 = vadd.s32 %v4638, %v4614
    %v4648 = vadd.s32 %v4638, %v4615
    %v4649 = vadd.s32 %v4638, %v4616
    %v4650 = vadd.s32 %v4638, %v4617
    %v4651 = vadd.s32 %v4638, %v4618
    %v4652 = vadd.s32 %v4638, %v4619
    %v4653 = vadd.s32 %v4638, %v4620
    %v4654 = vadd.s32 %v4638, %v4621
    %v4655 = vadd.s32 %v4638, %v4622
    %v4656 = vadd.s32 %v4638, %v4623
    %v4657 = vadd.s32 %v4638, %v4624
    %v4658 = vadd.s32 %v4638, %v4625
    %v4659 = vadd.s32 %v4638, %v4626
    %v4660 = vadd.s32 %v4638, %v4627
    %v4661 = vadd.s32 %v4638, %v4628
    %v4662 = vadd.s32 %v4638, %v4629
    %v4663 = vadd.s32 %v4638, %v4630
    %v4664 = vadd.s32 %v4638, %v4631
    %v4665 = vadd.s32 %v4638, %v4632
    %v4666 = vadd.s32 %v4638, %v4633
    %v4667 = vadd.s32 %v4638, %v4634
    %v4668 = vadd.s32 %v4638, %v4635
    %v4669 = vadd.s32 %v4638, %v4636
    %v4670 = vadd.s32 %v4638, %v4637
    %vm4671 = vcmp.lt.s32.totalorder %v4639, 8
    %vm4672 = vcmp.lt.s32.totalorder %v4640, 8
    %vm4673 = vcmp.lt.s32.totalorder %v4641, 8
    %vm4674 = vcmp.lt.s32.totalorder %v4642, 8
    %vm4675 = vcmp.lt.s32.totalorder %v4643, 8
    %vm4676 = vcmp.lt.s32.totalorder %v4644, 8
    %vm4677 = vcmp.lt.s32.totalorder %v4645, 8
    %vm4678 = vcmp.lt.s32.totalorder %v4646, 8
    %vm4679 = vcmp.lt.s32.totalorder %v4647, 8
    %vm4680 = vcmp.lt.s32.totalorder %v4648, 8
    %vm4681 = vcmp.lt.s32.totalorder %v4649, 8
    %vm4682 = vcmp.lt.s32.totalorder %v4650, 8
    %vm4683 = vcmp.lt.s32.totalorder %v4651, 8
    %vm4684 = vcmp.lt.s32.totalorder %v4652, 8
    %vm4685 = vcmp.lt.s32.totalorder %v4653, 8
    %vm4686 = vcmp.lt.s32.totalorder %v4654, 8
    %vm4687 = vcmp.lt.s32.totalorder %v4655, 8
    %vm4688 = vcmp.lt.s32.totalorder %v4656, 8
    %vm4689 = vcmp.lt.s32.totalorder %v4657, 8
    %vm4690 = vcmp.lt.s32.totalorder %v4658, 8
    %vm4691 = vcmp.lt.s32.totalorder %v4659, 8
    %vm4692 = vcmp.lt.s32.totalorder %v4660, 8
    %vm4693 = vcmp.lt.s32.totalorder %v4661, 8
    %vm4694 = vcmp.lt.s32.totalorder %v4662, 8
    %vm4695 = vcmp.lt.s32.totalorder %v4663, 8
    %vm4696 = vcmp.lt.s32.totalorder %v4664, 8
    %vm4697 = vcmp.lt.s32.totalorder %v4665, 8
    %vm4698 = vcmp.lt.s32.totalorder %v4666, 8
    %vm4699 = vcmp.lt.s32.totalorder %v4667, 8
    %vm4700 = vcmp.lt.s32.totalorder %v4668, 8
    %vm4701 = vcmp.lt.s32.totalorder %v4669, 8
    %vm4702 = vcmp.lt.s32.totalorder %v4670, 8
    %v4703 = vsel %vm4671, 1, 0
    %v4704 = vsel %vm4672, 1, 0
    %v4705 = vsel %vm4673, 1, 0
    %v4706 = vsel %vm4674, 1, 0
    %v4707 = vsel %vm4675, 1, 0
    %v4708 = vsel %vm4676, 1, 0
    %v4709 = vsel %vm4677, 1, 0
    %v4710 = vsel %vm4678, 1, 0
    %v4711 = vsel %vm4679, 1, 0
    %v4712 = vsel %vm4680, 1, 0
    %v4713 = vsel %vm4681, 1, 0
    %v4714 = vsel %vm4682, 1, 0
    %v4715 = vsel %vm4683, 1, 0
    %v4716 = vsel %vm4684, 1, 0
    %v4717 = vsel %vm4685, 1, 0
    %v4718 = vsel %vm4686, 1, 0
    %v4719 = vsel %vm4687, 1, 0
    %v4720 = vsel %vm4688, 1, 0
    %v4721 = vsel %vm4689, 1, 0
    %v4722 = vsel %vm4690, 1, 0
    %v4723 = vsel %vm4691, 1, 0
    %v4724 = vsel %vm4692, 1, 0
    %v4725 = vsel %vm4693, 1, 0
    %v4726 = vsel %vm4694, 1, 0
    %v4727 = vsel %vm4695, 1, 0
    %v4728 = vsel %vm4696, 1, 0
    %v4729 = vsel %vm4697, 1, 0
    %v4730 = vsel %vm4698, 1, 0
    %v4731 = vsel %vm4699, 1, 0
    %v4732 = vsel %vm4700, 1, 0
    %v4733 = vsel %vm4701, 1, 0
    %v4734 = vsel %vm4702, 1, 0
    %v4735 = vcvt.s32.f32 %v4703
    %v4736 = vcvt.s32.f32 %v4704
    %v4737 = vcvt.s32.f32 %v4705
    %v4738 = vcvt.s32.f32 %v4706
    %v4739 = vcvt.s32.f32 %v4707
    %v4740 = vcvt.s32.f32 %v4708
    %v4741 = vcvt.s32.f32 %v4709
    %v4742 = vcvt.s32.f32 %v4710
    %v4743 = vcvt.s32.f32 %v4711
    %v4744 = vcvt.s32.f32 %v4712
    %v4745 = vcvt.s32.f32 %v4713
    %v4746 = vcvt.s32.f32 %v4714
    %v4747 = vcvt.s32.f32 %v4715
    %v4748 = vcvt.s32.f32 %v4716
    %v4749 = vcvt.s32.f32 %v4717
    %v4750 = vcvt.s32.f32 %v4718
    %v4751 = vcvt.s32.f32 %v4719
    %v4752 = vcvt.s32.f32 %v4720
    %v4753 = vcvt.s32.f32 %v4721
    %v4754 = vcvt.s32.f32 %v4722
    %v4755 = vcvt.s32.f32 %v4723
    %v4756 = vcvt.s32.f32 %v4724
    %v4757 = vcvt.s32.f32 %v4725
    %v4758 = vcvt.s32.f32 %v4726
    %v4759 = vcvt.s32.f32 %v4727
    %v4760 = vcvt.s32.f32 %v4728
    %v4761 = vcvt.s32.f32 %v4729
    %v4762 = vcvt.s32.f32 %v4730
    %v4763 = vcvt.s32.f32 %v4731
    %v4764 = vcvt.s32.f32 %v4732
    %v4765 = vcvt.s32.f32 %v4733
    %v4766 = vcvt.s32.f32 %v4734
    %v4767 = vmul.f32 %v4572, %v4735
    %v4768 = vmul.f32 %v4573, %v4736
    %v4769 = vmul.f32 %v4574, %v4737
    %v4770 = vmul.f32 %v4575, %v4738
    %v4771 = vmul.f32 %v4576, %v4739
    %v4772 = vmul.f32 %v4577, %v4740
    %v4773 = vmul.f32 %v4578, %v4741
    %v4774 = vmul.f32 %v4579, %v4742
    %v4775 = vmul.f32 %v4580, %v4743
    %v4776 = vmul.f32 %v4581, %v4744
    %v4777 = vmul.f32 %v4582, %v4745
    %v4778 = vmul.f32 %v4583, %v4746
    %v4779 = vmul.f32 %v4584, %v4747
    %v4780 = vmul.f32 %v4585, %v4748
    %v4781 = vmul.f32 %v4586, %v4749
    %v4782 = vmul.f32 %v4587, %v4750
    %v4783 = vmul.f32 %v4588, %v4751
    %v4784 = vmul.f32 %v4589, %v4752
    %v4785 = vmul.f32 %v4590, %v4753
    %v4786 = vmul.f32 %v4591, %v4754
    %v4787 = vmul.f32 %v4592, %v4755
    %v4788 = vmul.f32 %v4593, %v4756
    %v4789 = vmul.f32 %v4594, %v4757
    %v4790 = vmul.f32 %v4595, %v4758
    %v4791 = vmul.f32 %v4596, %v4759
    %v4792 = vmul.f32 %v4597, %v4760
    %v4793 = vmul.f32 %v4598, %v4761
    %v4794 = vmul.f32 %v4599, %v4762
    %v4795 = vmul.f32 %v4600, %v4763
    %v4796 = vmul.f32 %v4601, %v4764
    %v4797 = vmul.f32 %v4602, %v4765
    %v4798 = vmul.f32 %v4603, %v4766
    %vm4799 = vcmask 7168
    %4800 = vst.msk [vmem:[#allocation14] sm:$0xff] %vm4799, %v4767
    %4801 = vst.msk [vmem:[#allocation14 + $0x8] sm:$0xff] %vm4799, %v4768
    %4802 = vst.msk [vmem:[#allocation14 + $0x10] sm:$0xff] %vm4799, %v4769
    %4803 = vst.msk [vmem:[#allocation14 + $0x18] sm:$0xff] %vm4799, %v4770
    %4804 = vst.msk [vmem:[#allocation14 + $0x20] sm:$0xff] %vm4799, %v4771
    %4805 = vst.msk [vmem:[#allocation14 + $0x28] sm:$0xff] %vm4799, %v4772
    %4806 = vst.msk [vmem:[#allocation14 + $0x30] sm:$0xff] %vm4799, %v4773
    %4807 = vst.msk [vmem:[#allocation14 + $0x38] sm:$0xff] %vm4799, %v4774
    %4808 = vst.msk [vmem:[#allocation14 + $0x40] sm:$0xff] %vm4799, %v4775
    %4809 = vst.msk [vmem:[#allocation14 + $0x48] sm:$0xff] %vm4799, %v4776
    %4810 = vst.msk [vmem:[#allocation14 + $0x50] sm:$0xff] %vm4799, %v4777
    %4811 = vst.msk [vmem:[#allocation14 + $0x58] sm:$0xff] %vm4799, %v4778
    %4812 = vst.msk [vmem:[#allocation14 + $0x60] sm:$0xff] %vm4799, %v4779
    %4813 = vst.msk [vmem:[#allocation14 + $0x68] sm:$0xff] %vm4799, %v4780
    %4814 = vst.msk [vmem:[#allocation14 + $0x70] sm:$0xff] %vm4799, %v4781
    %4815 = vst.msk [vmem:[#allocation14 + $0x78] sm:$0xff] %vm4799, %v4782
    %4816 = vst.msk [vmem:[#allocation14 + $0x80] sm:$0xff] %vm4799, %v4783
    %4817 = vst.msk [vmem:[#allocation14 + $0x88] sm:$0xff] %vm4799, %v4784
    %4818 = vst.msk [vmem:[#allocation14 + $0x90] sm:$0xff] %vm4799, %v4785
    %4819 = vst.msk [vmem:[#allocation14 + $0x98] sm:$0xff] %vm4799, %v4786
    %4820 = vst.msk [vmem:[#allocation14 + $0xa0] sm:$0xff] %vm4799, %v4787
    %4821 = vst.msk [vmem:[#allocation14 + $0xa8] sm:$0xff] %vm4799, %v4788
    %4822 = vst.msk [vmem:[#allocation14 + $0xb0] sm:$0xff] %vm4799, %v4789
    %4823 = vst.msk [vmem:[#allocation14 + $0xb8] sm:$0xff] %vm4799, %v4790
    %4824 = vst.msk [vmem:[#allocation14 + $0xc0] sm:$0xff] %vm4799, %v4791
    %4825 = vst.msk [vmem:[#allocation14 + $0xc8] sm:$0xff] %vm4799, %v4792
    %4826 = vst.msk [vmem:[#allocation14 + $0xd0] sm:$0xff] %vm4799, %v4793
    %4827 = vst.msk [vmem:[#allocation14 + $0xd8] sm:$0xff] %vm4799, %v4794
    %4828 = vst.msk [vmem:[#allocation14 + $0xe0] sm:$0xff] %vm4799, %v4795
    %4829 = vst.msk [vmem:[#allocation14 + $0xe8] sm:$0xff] %vm4799, %v4796
    %4830 = vst.msk [vmem:[#allocation14 + $0xf0] sm:$0xff] %vm4799, %v4797
    %4831 = vst.msk [vmem:[#allocation14 + $0xf8] sm:$0xff] %vm4799, %v4798
    // Predicated region
    $region58: #{tpu_custom_call.1} parent=1 // pred_check
      _
    $region59: #{tpu_custom_call.1} parent=1 // pred_check_branch
      %4833 = sbr.rel (0) target = $region61
    $region60: #{tpu_custom_call.1} parent=1 // pred_region
      %s4835 = ssub.s32 4096, 4096
      %4836 = vsyncadd [#allocation4], %s4835
      %s4837 = sshll.u32 [#allocation14], 4
      %s4838 = int_to_ptr.vmem [resolvable:$true] %s4837
      %4843 = dma.vmem_to_hbm [thread:$0]  %s4838, 4096, %s7, [#allocation4], 128, 128, 8
    $region61: #{tpu_custom_call.1} parent=1 // pred_fallthru
      _
    // Predicated region
    $region62: #{tpu_custom_call.1} parent=1 // pred_check
      _
    $region63: #{tpu_custom_call.1} parent=1 // pred_check_branch
      %4845 = sbr.rel (0) target = $region65
    $region64: #{tpu_custom_call.1} parent=1 // pred_region
      %4846 = dma.done [#allocation4], 4096
    $region65: #{tpu_custom_call.1} parent=1 // pred_fallthru
      _
    %4847 = vsyncpa [#allocation3], 1
    %4848 = vsyncpa [#allocation6], 1
    %4849 = vsyncpa [#allocation9], 1
    %4850 = vsyncpa [#allocation12], 1
    %4851 = vsyncpa [#allocation4], 1

</llo_original>
